<compile_context>
chip_gen: v6e
topology: v6e:2x2x1
jax: 0.10.0
libtpu: 0.0.40
codegen_flags: <defaults>
</compile_context>

<pallas_src>
import functools

import jax
import jax.numpy as jnp
from jax.experimental import pallas as pl
from jax.experimental.pallas import tpu as pltpu

EPS = 1e-5
FORGET_BIAS = 1.0


def _round_up(x, m):
    return (x + m - 1) // m * m


# ----------------------------------------------------------------------------
# Fused cell kernel (one grid step == one batch element)
# ----------------------------------------------------------------------------
def _cell_kernel(slab_ref, ct_ref, mrow_ref, mstat_ref,
                 wA_ref, bA_ref, gA_ref, aA_ref, pA_ref,
                 wB_ref, bB_ref, gB_ref, aB_ref, pB_ref,
                 wC_ref, bC_ref, gC_ref, aC_ref, pC_ref,
                 h_ref, c_ref, m_ref,
                 *, C, K, Wp, NB, LP):
    f32 = jnp.float32
    bf16 = jnp.bfloat16

    mrow = mrow_ref[...]      # (1, NB)  1.0 at valid flat columns, else 0.0
    mstat = mstat_ref[...]    # (NB, 8)  mask replicated into 8 columns (GN stats)

    def conv_gn(slab, w_ref, b_ref, g_ref, a_ref, p_ref):
        """Transposed conv (+bias) + GroupNorm (group size C), fully lane-dense.

        slab : (Cin, LP) bf16, padded-grid flat layout (zeros in the halo ring).
        out  : (Cout, NB) f32; only mask==1 columns are meaningful.
        """
        def tap_dot(dy, dx):
            s = dy * Wp + dx                       # static lane shift per tap
            return jnp.dot(w_ref[dy * K + dx], slab[:, s:s + NB],
                           preferred_element_type=f32)

        taps = [(dy, dx) for dy in range(K) for dx in range(K)]
        y = tap_dot(*taps[0])
        for dy, dx in taps[1:]:
            y = y + tap_dot(dy, dx)                # f32 accumulation
        y = y + b_ref[...]                         # (Cout, 1) bias column

        # Group statistics over the valid columns via tiny matmuls:
        # p_ref is the (Cout, Cout) group-broadcast matrix pre-scaled by 1/(HW*C).
        rs = jnp.dot(y, mstat, preferred_element_type=f32)              # (Cout, 8)
        mean = jnp.dot(p_ref[...], rs, preferred_element_type=f32)[:, 0:1]
        d = y - mean
        vs = jnp.dot(d * d, mstat, preferred_element_type=f32)          # (Cout, 8)
        var = jnp.dot(p_ref[...], vs, preferred_element_type=f32)[:, 0:1]
        return d * (jax.lax.rsqrt(var + EPS) * g_ref[...]) + a_ref[...]

    # ---- Stage A: conv_x | conv_h | conv_c | conv_m as one block-diag conv+GN ---
    slabA = slab_ref[0].astype(bf16)               # (CinA, LP)
    ct = ct_ref[0]                                 # (C, NB), zero at invalid cols
    F = conv_gn(slabA, wA_ref, bA_ref, gA_ref, aA_ref, pA_ref)   # (17C, NB)
    # rows: x=[i,g,f,o,i',g',f'] 0:7C | h=[i,g,f,o] 7C:11C | c=[i,g,f] 11C:14C
    #       m=[i,f,m] 14C:17C

    s1 = F[0:3 * C] + F[7 * C:10 * C] + F[11 * C:14 * C]         # one wide add x2
    i = jax.nn.sigmoid(s1[0:C])
    g = jnp.tanh(s1[C:2 * C])
    f = jax.nn.sigmoid(s1[2 * C:3 * C] + FORGET_BIAS)
    c_new = (f * ct + i * g) * mrow                # mask garbage (halo) columns

    # 'same' padding for the in-kernel convs: shift base layout into the padded
    # grid with a single lane-concat of constant zero margins (no scratch zeroing).
    PS = (K // 2) * Wp + (K // 2)                  # base -> padded-grid lane offset
    zl1 = jnp.zeros((C, PS), bf16)
    zr1 = jnp.zeros((C, LP - NB - PS), bf16)

    # ---- Stage B: conv_cnew + GN ------------------------------------------------
    slabB = jnp.concatenate([zl1, c_new.astype(bf16), zr1], axis=-1)   # (C, LP)
    c2m = conv_gn(slabB, wB_ref, bB_ref, gB_ref, aB_ref, pB_ref)       # (4C, NB)
    # rows: [i', g', f', o]

    s2 = c2m[0:3 * C] + F[4 * C:7 * C]
    ii = jax.nn.sigmoid(s2[0:C] + F[14 * C:15 * C])
    gg = jnp.tanh(s2[C:2 * C])
    ff = jax.nn.sigmoid(s2[2 * C:3 * C] + F[15 * C:16 * C] + FORGET_BIAS)
    m_new = (ff * jnp.tanh(F[16 * C:17 * C]) + ii * gg) * mrow

    # ---- Stage C: conv_mnew | conv_cell fused, input = [c_new ; m_new] -----------
    cm = jnp.concatenate([c_new, m_new], axis=0).astype(bf16)          # (2C, NB)
    zl2 = jnp.zeros((2 * C, PS), bf16)
    zr2 = jnp.zeros((2 * C, LP - NB - PS), bf16)
    slabC = jnp.concatenate([zl2, cm, zr2], axis=-1)                   # (2C, LP)
    S = conv_gn(slabC, wC_ref, bC_ref, gC_ref, aC_ref, pC_ref)         # (2C, NB)
    # rows: [o_m 0:C | cell C:2C]

    o = jnp.tanh(F[3 * C:4 * C] + F[10 * C:11 * C] + c2m[3 * C:4 * C] + S[0:C])
    h_new = o * jnp.tanh(S[C:2 * C])

    h_ref[0] = h_new
    c_ref[0] = c_new
    m_ref[0] = m_new


# ----------------------------------------------------------------------------
# Weight / constant packing (plain JAX glue, done once)
# ----------------------------------------------------------------------------
def _pack_params(params, C, K, HW, cin_a_pad):
    KK = K * K

    def col(x):
        return x.reshape(-1, 1).astype(jnp.float32)

    def taps_t(w):  # HWIO (K,K,cin,cout) -> (KK, cout, cin)
        return jnp.transpose(w.reshape(KK, w.shape[2], w.shape[3]), (0, 2, 1))

    def pn(cout):   # group-broadcast matrix, group size C, pre-scaled
        gid = jnp.arange(cout) // C
        return (gid[:, None] == gid[None, :]).astype(jnp.float32) / float(HW * C)

    wx, bx, gx, ax = params["conv_x"]
    wh, bh, gh, ah = params["conv_h"]
    wc, bc, gc, ac = params["conv_c"]
    wm, bm, gm, am = params["conv_m"]
    wn, bn, gn_, an = params["conv_cnew"]
    wo, bo, go, ao = params["conv_mnew"]
    wl, bl, gl, al = params["conv_cell"]

    # Stage A: block-diag over [x, h, c, m] inputs -> fused Cout = 17*C.
    tx, th, tc, tm = taps_t(wx), taps_t(wh), taps_t(wc), taps_t(wm)
    cinx = tx.shape[2]
    wA = jnp.zeros((KK, 17 * C, cin_a_pad), jnp.float32)
    wA = wA.at[:, 0:7 * C, 0:cinx].set(tx)
    wA = wA.at[:, 7 * C:11 * C, cinx:cinx + C].set(th)
    wA = wA.at[:, 11 * C:14 * C, cinx + C:cinx + 2 * C].set(tc)
    wA = wA.at[:, 14 * C:17 * C, cinx + 2 * C:cinx + 3 * C].set(tm)
    wA = wA.astype(jnp.bfloat16)
    bA = col(jnp.concatenate([bx, bh, bc, bm]))
    gA = col(jnp.concatenate([gx, gh, gc, gm]))
    aA = col(jnp.concatenate([ax, ah, ac, am]))
    pA = pn(17 * C)

    # Stage B: conv_cnew only.
    wB = taps_t(wn).astype(jnp.bfloat16)                     # (KK, 4C, C)
    bB, gB, aB, pB = col(bn), col(gn_), col(an), pn(4 * C)

    # Stage C: conv_mnew (reads m_new only) | conv_cell (reads [c_new, m_new]).
    to_, tl = taps_t(wo), taps_t(wl)                         # (KK,C,C), (KK,C,2C)
    wC = jnp.zeros((KK, 2 * C, 2 * C), jnp.float32)
    wC = wC.at[:, 0:C, C:2 * C].set(to_)
    wC = wC.at[:, C:2 * C, 0:2 * C].set(tl)
    wC = wC.astype(jnp.bfloat16)
    bC = col(jnp.concatenate([bo, bl]))
    gC = col(jnp.concatenate([go, gl]))
    aC = col(jnp.concatenate([ao, al]))
    pC = pn(2 * C)

    return (wA, bA, gA, aA, pA, wB, bB, gB, aB, pB, wC, bC, gC, aC, pC)


# ----------------------------------------------------------------------------
# Wrapper (inputs and outputs are NCHW, matching the PyTorch module)
# ----------------------------------------------------------------------------
def causal_lstm_cell(params, x_t, h_t, c_t, m_t, num_hidden, filter_size=3):
    C = num_hidden
    K = filter_size
    p = K // 2
    N, _, H, W = x_t.shape
    Wp, Hp = W + 2 * p, H + 2 * p
    NB = _round_up(H * Wp, 128)                    # lane width of all activations
    LP = _round_up(NB + (K - 1) * (Wp + 1), 128)   # lane width of conv-input slabs
    CIN_A = _round_up(x_t.shape[1] + 3 * C, 8)

    packed = _pack_params(params, C, K, H * W, CIN_A)

    # Stage-A conv input: [x|h|c|m] on channels, zero-padded spatially on all
    # sides, channel-padded to a sublane multiple, flattened and lane-padded.
    s = jnp.concatenate([x_t, h_t, c_t, m_t], axis=1)
    s = jnp.pad(s, ((0, 0), (0, CIN_A - s.shape[1]), (p, p), (p, p)))
    slabA = jnp.pad(s.reshape(N, CIN_A, Hp * Wp),
                    ((0, 0), (0, 0), (0, LP - Hp * Wp)))

    # c_t in base layout: value of c_t[:, oy, ox] at flat column oy*Wp + ox.
    ctb = jnp.pad(c_t, ((0, 0), (0, 0), (0, 0), (0, Wp - W)))
    ctb = jnp.pad(ctb.reshape(N, C, H * Wp), ((0, 0), (0, 0), (0, NB - H * Wp)))

    # Valid-column masks (precomputed; no in-kernel iota/compare work).
    idx = jnp.arange(NB)
    valid = ((idx % Wp) < W) & (idx < H * Wp)
    mrow = valid.astype(jnp.float32).reshape(1, NB)
    mstat = jnp.broadcast_to(mrow.reshape(NB, 1), (NB, 8)).astype(jnp.float32)

    kern = functools.partial(_cell_kernel, C=C, K=K, Wp=Wp, NB=NB, LP=LP)

    def batched(a):
        nd = a.ndim
        return pl.BlockSpec((1,) + tuple(a.shape[1:]),
                            lambda b: (b,) + (0,) * (nd - 1))

    def whole(a):
        nd = a.ndim
        return pl.BlockSpec(tuple(a.shape), lambda b: (0,) * nd)

    out_spec = pl.BlockSpec((1, C, NB), lambda b: (b, 0, 0))
    out_state = jax.ShapeDtypeStruct((N, C, NB), jnp.float32)

    ins = (slabA, ctb, mrow, mstat) + packed
    in_specs = [batched(slabA), batched(ctb)] + [whole(a) for a in ins[2:]]

    h, c, m = pl.pallas_call(
        kern,
        grid=(N,),
        in_specs=in_specs,
        out_specs=(out_spec, out_spec, out_spec),
        out_shape=(out_state, out_state, out_state),
        compiler_params=pltpu.CompilerParams(
            dimension_semantics=("parallel",)),
    )(*ins)

    # Un-flatten the lane-dense slabs back to NCHW (wrapper-side, free in XLA).
    def unflat(a):
        return a[:, :, :H * Wp].reshape(N, C, H, Wp)[:, :, :, :W]

    return unflat(h), unflat(c), unflat(m)


# ----------------------------------------------------------------------------
# Pure-JAX reference (NHWC, f32, Precision.HIGHEST) — correctness check only
# ----------------------------------------------------------------------------
def _conv_gn_ref(x, w, b, gamma, beta, groups):
    y = jax.lax.conv_general_dilated(
        x, w, (1, 1), "SAME",
        dimension_numbers=("NHWC", "HWIO", "NHWC"),
        precision=jax.lax.Precision.HIGHEST)
    y = y + b.reshape(1, 1, 1, -1)
    N, H, W, Cc = y.shape
    Cg = Cc // groups
    yr = y.reshape(N, H * W, groups, Cg)
    mean = yr.mean(axis=(1, 3), keepdims=True)
    var = ((yr - mean) ** 2).mean(axis=(1, 3), keepdims=True)
    yn = ((yr - mean) / jnp.sqrt(var + EPS)).reshape(N, H, W, Cc)
    return yn * gamma.reshape(1, 1, 1, -1) + beta.reshape(1, 1, 1, -1)


def _forward_ref(params, x_t, h_t, c_t, m_t, C):
    sp = lambda a, n: [a[..., i * C:(i + 1) * C] for i in range(n)]
    h_cc = _conv_gn_ref(h_t, *params["conv_h"], groups=4)
    x_cc = _conv_gn_ref(x_t, *params["conv_x"], groups=7)
    c_cc = _conv_gn_ref(c_t, *params["conv_c"], groups=3)
    m_cc = _conv_gn_ref(m_t, *params["conv_m"], groups=3)
    i_h, g_h, f_h, o_h = sp(h_cc, 4)
    i_c, g_c, f_c = sp(c_cc, 3)
    i_m, f_m, m_m = sp(m_cc, 3)
    i_x, g_x, f_x, o_x, i_x_, g_x_, f_x_ = sp(x_cc, 7)
    i = jax.nn.sigmoid(i_x + i_h + i_c)
    f = jax.nn.sigmoid(f_x + f_h + f_c + FORGET_BIAS)
    g = jnp.tanh(g_x + g_h + g_c)
    c_new = f * c_t + i * g
    c2m = _conv_gn_ref(c_new, *params["conv_cnew"], groups=4)
    i_c2, g_c2, f_c2, o_c2 = sp(c2m, 4)
    ii = jax.nn.sigmoid(i_c2 + i_x_ + i_m)
    ff = jax.nn.sigmoid(f_c2 + f_x_ + f_m + FORGET_BIAS)
    gg = jnp.tanh(g_c2 + g_x_)
    m_new = ff * jnp.tanh(m_m) + ii * gg
    o_m = _conv_gn_ref(m_new, *params["conv_mnew"], groups=1)
    o = jnp.tanh(o_x + o_h + o_c2 + o_m)
    cell = _conv_gn_ref(jnp.concatenate([c_new, m_new], -1),
                        *params["conv_cell"], groups=1)
    h_new = o * jnp.tanh(cell)
    return h_new, c_new, m_new


# ----------------------------------------------------------------------------
# Main
# ----------------------------------------------------------------------------
if __name__ == "__main__":
    B, IN_CH, C, HW, K = 2, 4, 8, 16, 3  # batch, in_channel, num_hidden, width, filter

    key = jax.random.PRNGKey(0)
    keys = jax.random.split(key, 12)

    # NCHW, matching the PyTorch module.
    x_t = jax.random.normal(keys[0], (B, IN_CH, HW, HW), jnp.float32)
    h_t = jax.random.normal(keys[1], (B, C, HW, HW), jnp.float32)
    c_t = jax.random.normal(keys[2], (B, C, HW, HW), jnp.float32)
    m_t = jax.random.normal(keys[3], (B, C, HW, HW), jnp.float32)

    def make_conv(k, cin, cout):
        kw, kb, kg, kbt = jax.random.split(k, 4)
        w = jax.random.normal(kw, (K, K, cin, cout), jnp.float32) * 0.1
        b = jax.random.normal(kb, (cout,), jnp.float32) * 0.1
        gamma = 1.0 + 0.1 * jax.random.normal(kg, (cout,), jnp.float32)
        beta = 0.1 * jax.random.normal(kbt, (cout,), jnp.float32)
        return (w, b, gamma, beta)

    params = {
        "conv_x": make_conv(keys[4], IN_CH, 7 * C),
        "conv_h": make_conv(keys[5], C, 4 * C),
        "conv_c": make_conv(keys[6], C, 3 * C),
        "conv_m": make_conv(keys[7], C, 3 * C),
        "conv_cnew": make_conv(keys[8], C, 4 * C),
        "conv_mnew": make_conv(keys[9], C, C),
        "conv_cell": make_conv(keys[10], 2 * C, C),
    }

    fwd = jax.jit(functools.partial(causal_lstm_cell, num_hidden=C, filter_size=K))
    h_new, c_new, m_new = jax.block_until_ready(fwd(params, x_t, h_t, c_t, m_t))

    # Reference is f32 / Precision.HIGHEST; the kernel deliberately uses bf16 MXU
    # operands (per perf guidance), so the tolerance absorbs the precision delta.
    nhwc = lambda a: jnp.transpose(a, (0, 2, 3, 1))
    nchw = lambda a: jnp.transpose(a, (0, 3, 1, 2))
    h_r, c_r, m_r = _forward_ref(params, nhwc(x_t), nhwc(h_t), nhwc(c_t),
                                 nhwc(m_t), C)
    h_r, c_r, m_r = nchw(h_r), nchw(c_r), nchw(m_r)
    TOL = 1e-1
    for got, ref in ((h_new, h_r), (c_new, c_r), (m_new, m_r)):
        err = float(jnp.max(jnp.abs(got - ref)))
        if err > TOL:
            raise AssertionError(f"mismatch vs reference, max abs err = {err}")

    print("KERNEL_OK")
</pallas_src>

<mosaic_0001>
module attributes {stable_mosaic.version = 11 : i64} {
  func.func @_cell_kernel(%arg0: i32, %arg1: memref<1x32x512xf32, #tpu.memory_space<vmem>>, %arg2: memref<1x8x384xf32, #tpu.memory_space<vmem>>, %arg3: memref<1x384xf32, #tpu.memory_space<vmem>>, %arg4: memref<384x8xf32, #tpu.memory_space<vmem>>, %arg5: memref<9x136x32xbf16, #tpu.memory_space<vmem>>, %arg6: memref<136x1xf32, #tpu.memory_space<vmem>>, %arg7: memref<136x1xf32, #tpu.memory_space<vmem>>, %arg8: memref<136x1xf32, #tpu.memory_space<vmem>>, %arg9: memref<136x136xf32, #tpu.memory_space<vmem>>, %arg10: memref<9x32x8xbf16, #tpu.memory_space<vmem>>, %arg11: memref<32x1xf32, #tpu.memory_space<vmem>>, %arg12: memref<32x1xf32, #tpu.memory_space<vmem>>, %arg13: memref<32x1xf32, #tpu.memory_space<vmem>>, %arg14: memref<32x32xf32, #tpu.memory_space<vmem>>, %arg15: memref<9x16x16xbf16, #tpu.memory_space<vmem>>, %arg16: memref<16x1xf32, #tpu.memory_space<vmem>>, %arg17: memref<16x1xf32, #tpu.memory_space<vmem>>, %arg18: memref<16x1xf32, #tpu.memory_space<vmem>>, %arg19: memref<16x16xf32, #tpu.memory_space<vmem>>, %arg20: memref<1x8x384xf32, #tpu.memory_space<vmem>>, %arg21: memref<1x8x384xf32, #tpu.memory_space<vmem>>, %arg22: memref<1x8x384xf32, #tpu.memory_space<vmem>>) attributes {dimension_semantics = [#tpu.dimension_semantics<parallel>], iteration_bounds = array<i64: 2>, scalar_prefetch = 0 : i64, scratch_operands = 0 : i64, tpu.core_type = #tpu.core_type<tc>, window_params = [{transform_indices = @transform_0, window_bounds = array<i64: 1, 32, 512>}, {transform_indices = @transform_1, window_bounds = array<i64: 1, 8, 384>}, {pipeline_mode = #tpu.pipeline_mode<synchronous>, transform_indices = @transform_2, window_bounds = array<i64: 1, 384>}, {pipeline_mode = #tpu.pipeline_mode<synchronous>, transform_indices = @transform_3, window_bounds = array<i64: 384, 8>}, {pipeline_mode = #tpu.pipeline_mode<synchronous>, transform_indices = @transform_4, window_bounds = array<i64: 9, 136, 32>}, {pipeline_mode = #tpu.pipeline_mode<synchronous>, transform_indices = @transform_5, window_bounds = array<i64: 136, 1>}, {pipeline_mode = #tpu.pipeline_mode<synchronous>, transform_indices = @transform_6, window_bounds = array<i64: 136, 1>}, {pipeline_mode = #tpu.pipeline_mode<synchronous>, transform_indices = @transform_7, window_bounds = array<i64: 136, 1>}, {pipeline_mode = #tpu.pipeline_mode<synchronous>, transform_indices = @transform_8, window_bounds = array<i64: 136, 136>}, {pipeline_mode = #tpu.pipeline_mode<synchronous>, transform_indices = @transform_9, window_bounds = array<i64: 9, 32, 8>}, {pipeline_mode = #tpu.pipeline_mode<synchronous>, transform_indices = @transform_10, window_bounds = array<i64: 32, 1>}, {pipeline_mode = #tpu.pipeline_mode<synchronous>, transform_indices = @transform_11, window_bounds = array<i64: 32, 1>}, {pipeline_mode = #tpu.pipeline_mode<synchronous>, transform_indices = @transform_12, window_bounds = array<i64: 32, 1>}, {pipeline_mode = #tpu.pipeline_mode<synchronous>, transform_indices = @transform_13, window_bounds = array<i64: 32, 32>}, {pipeline_mode = #tpu.pipeline_mode<synchronous>, transform_indices = @transform_14, window_bounds = array<i64: 9, 16, 16>}, {pipeline_mode = #tpu.pipeline_mode<synchronous>, transform_indices = @transform_15, window_bounds = array<i64: 16, 1>}, {pipeline_mode = #tpu.pipeline_mode<synchronous>, transform_indices = @transform_16, window_bounds = array<i64: 16, 1>}, {pipeline_mode = #tpu.pipeline_mode<synchronous>, transform_indices = @transform_17, window_bounds = array<i64: 16, 1>}, {pipeline_mode = #tpu.pipeline_mode<synchronous>, transform_indices = @transform_18, window_bounds = array<i64: 16, 16>}, {transform_indices = @transform_19, window_bounds = array<i64: 1, 8, 384>}, {transform_indices = @transform_20, window_bounds = array<i64: 1, 8, 384>}, {transform_indices = @transform_21, window_bounds = array<i64: 1, 8, 384>}]} {
    %c0 = arith.constant 0 : index
    %c0_0 = arith.constant 0 : index
    %0 = vector.load %arg3[%c0, %c0_0] : memref<1x384xf32, #tpu.memory_space<vmem>>, vector<1x384xf32>
    %c0_1 = arith.constant 0 : index
    %c0_2 = arith.constant 0 : index
    %1 = vector.load %arg4[%c0_1, %c0_2] : memref<384x8xf32, #tpu.memory_space<vmem>>, vector<384x8xf32>
    %c0_3 = arith.constant 0 : index
    %c0_4 = arith.constant 0 : index
    %c0_5 = arith.constant 0 : index
    %2 = vector.load %arg1[%c0_3, %c0_4, %c0_5] : memref<1x32x512xf32, #tpu.memory_space<vmem>>, vector<1x32x512xf32>
    %3 = vector.shape_cast %2 : vector<1x32x512xf32> to vector<32x512xf32>
    %4 = arith.truncf %3 : vector<32x512xf32> to vector<32x512xbf16>
    %c0_6 = arith.constant 0 : index
    %c0_7 = arith.constant 0 : index
    %c0_8 = arith.constant 0 : index
    %5 = vector.load %arg2[%c0_6, %c0_7, %c0_8] : memref<1x8x384xf32, #tpu.memory_space<vmem>>, vector<1x8x384xf32>
    %6 = vector.shape_cast %5 : vector<1x8x384xf32> to vector<8x384xf32>
    %c0_9 = arith.constant 0 : index
    %c0_10 = arith.constant 0 : index
    %c0_11 = arith.constant 0 : index
    %7 = vector.load %arg5[%c0_9, %c0_10, %c0_11] : memref<9x136x32xbf16, #tpu.memory_space<vmem>>, vector<1x136x32xbf16>
    %8 = vector.shape_cast %7 : vector<1x136x32xbf16> to vector<136x32xbf16>
    %9 = vector.extract_strided_slice %4 {offsets = [0, 0], sizes = [32, 384], strides = [1, 1]} : vector<32x512xbf16> to vector<32x384xbf16>
    %cst = arith.constant dense<0.000000e+00> : vector<136x384xf32>
    %10 = tpu.matmul %8, %9, %cst {dimension_numbers = #tpu.dot_dimension_numbers<[1], [0], [0], [1], [0, 0, 1, 1], [], []>} : vector<136x32xbf16>, vector<32x384xbf16>, vector<136x384xf32> -> vector<136x384xf32>
    %c1 = arith.constant 1 : index
    %c0_12 = arith.constant 0 : index
    %c0_13 = arith.constant 0 : index
    %11 = vector.load %arg5[%c1, %c0_12, %c0_13] : memref<9x136x32xbf16, #tpu.memory_space<vmem>>, vector<1x136x32xbf16>
    %12 = vector.shape_cast %11 : vector<1x136x32xbf16> to vector<136x32xbf16>
    %13 = vector.extract_strided_slice %4 {offsets = [0, 1], sizes = [32, 384], strides = [1, 1]} : vector<32x512xbf16> to vector<32x384xbf16>
    %cst_14 = arith.constant dense<0.000000e+00> : vector<136x384xf32>
    %14 = tpu.matmul %12, %13, %cst_14 {dimension_numbers = #tpu.dot_dimension_numbers<[1], [0], [0], [1], [0, 0, 1, 1], [], []>} : vector<136x32xbf16>, vector<32x384xbf16>, vector<136x384xf32> -> vector<136x384xf32>
    %15 = arith.addf %10, %14 : vector<136x384xf32>
    %c2 = arith.constant 2 : index
    %c0_15 = arith.constant 0 : index
    %c0_16 = arith.constant 0 : index
    %16 = vector.load %arg5[%c2, %c0_15, %c0_16] : memref<9x136x32xbf16, #tpu.memory_space<vmem>>, vector<1x136x32xbf16>
    %17 = vector.shape_cast %16 : vector<1x136x32xbf16> to vector<136x32xbf16>
    %18 = vector.extract_strided_slice %4 {offsets = [0, 2], sizes = [32, 384], strides = [1, 1]} : vector<32x512xbf16> to vector<32x384xbf16>
    %cst_17 = arith.constant dense<0.000000e+00> : vector<136x384xf32>
    %19 = tpu.matmul %17, %18, %cst_17 {dimension_numbers = #tpu.dot_dimension_numbers<[1], [0], [0], [1], [0, 0, 1, 1], [], []>} : vector<136x32xbf16>, vector<32x384xbf16>, vector<136x384xf32> -> vector<136x384xf32>
    %20 = arith.addf %15, %19 : vector<136x384xf32>
    %c3 = arith.constant 3 : index
    %c0_18 = arith.constant 0 : index
    %c0_19 = arith.constant 0 : index
    %21 = vector.load %arg5[%c3, %c0_18, %c0_19] : memref<9x136x32xbf16, #tpu.memory_space<vmem>>, vector<1x136x32xbf16>
    %22 = vector.shape_cast %21 : vector<1x136x32xbf16> to vector<136x32xbf16>
    %23 = vector.extract_strided_slice %4 {offsets = [0, 18], sizes = [32, 384], strides = [1, 1]} : vector<32x512xbf16> to vector<32x384xbf16>
    %cst_20 = arith.constant dense<0.000000e+00> : vector<136x384xf32>
    %24 = tpu.matmul %22, %23, %cst_20 {dimension_numbers = #tpu.dot_dimension_numbers<[1], [0], [0], [1], [0, 0, 1, 1], [], []>} : vector<136x32xbf16>, vector<32x384xbf16>, vector<136x384xf32> -> vector<136x384xf32>
    %25 = arith.addf %20, %24 : vector<136x384xf32>
    %c4 = arith.constant 4 : index
    %c0_21 = arith.constant 0 : index
    %c0_22 = arith.constant 0 : index
    %26 = vector.load %arg5[%c4, %c0_21, %c0_22] : memref<9x136x32xbf16, #tpu.memory_space<vmem>>, vector<1x136x32xbf16>
    %27 = vector.shape_cast %26 : vector<1x136x32xbf16> to vector<136x32xbf16>
    %28 = vector.extract_strided_slice %4 {offsets = [0, 19], sizes = [32, 384], strides = [1, 1]} : vector<32x512xbf16> to vector<32x384xbf16>
    %cst_23 = arith.constant dense<0.000000e+00> : vector<136x384xf32>
    %29 = tpu.matmul %27, %28, %cst_23 {dimension_numbers = #tpu.dot_dimension_numbers<[1], [0], [0], [1], [0, 0, 1, 1], [], []>} : vector<136x32xbf16>, vector<32x384xbf16>, vector<136x384xf32> -> vector<136x384xf32>
    %30 = arith.addf %25, %29 : vector<136x384xf32>
    %c5 = arith.constant 5 : index
    %c0_24 = arith.constant 0 : index
    %c0_25 = arith.constant 0 : index
    %31 = vector.load %arg5[%c5, %c0_24, %c0_25] : memref<9x136x32xbf16, #tpu.memory_space<vmem>>, vector<1x136x32xbf16>
    %32 = vector.shape_cast %31 : vector<1x136x32xbf16> to vector<136x32xbf16>
    %33 = vector.extract_strided_slice %4 {offsets = [0, 20], sizes = [32, 384], strides = [1, 1]} : vector<32x512xbf16> to vector<32x384xbf16>
    %cst_26 = arith.constant dense<0.000000e+00> : vector<136x384xf32>
    %34 = tpu.matmul %32, %33, %cst_26 {dimension_numbers = #tpu.dot_dimension_numbers<[1], [0], [0], [1], [0, 0, 1, 1], [], []>} : vector<136x32xbf16>, vector<32x384xbf16>, vector<136x384xf32> -> vector<136x384xf32>
    %35 = arith.addf %30, %34 : vector<136x384xf32>
    %c6 = arith.constant 6 : index
    %c0_27 = arith.constant 0 : index
    %c0_28 = arith.constant 0 : index
    %36 = vector.load %arg5[%c6, %c0_27, %c0_28] : memref<9x136x32xbf16, #tpu.memory_space<vmem>>, vector<1x136x32xbf16>
    %37 = vector.shape_cast %36 : vector<1x136x32xbf16> to vector<136x32xbf16>
    %38 = vector.extract_strided_slice %4 {offsets = [0, 36], sizes = [32, 384], strides = [1, 1]} : vector<32x512xbf16> to vector<32x384xbf16>
    %cst_29 = arith.constant dense<0.000000e+00> : vector<136x384xf32>
    %39 = tpu.matmul %37, %38, %cst_29 {dimension_numbers = #tpu.dot_dimension_numbers<[1], [0], [0], [1], [0, 0, 1, 1], [], []>} : vector<136x32xbf16>, vector<32x384xbf16>, vector<136x384xf32> -> vector<136x384xf32>
    %40 = arith.addf %35, %39 : vector<136x384xf32>
    %c7 = arith.constant 7 : index
    %c0_30 = arith.constant 0 : index
    %c0_31 = arith.constant 0 : index
    %41 = vector.load %arg5[%c7, %c0_30, %c0_31] : memref<9x136x32xbf16, #tpu.memory_space<vmem>>, vector<1x136x32xbf16>
    %42 = vector.shape_cast %41 : vector<1x136x32xbf16> to vector<136x32xbf16>
    %43 = vector.extract_strided_slice %4 {offsets = [0, 37], sizes = [32, 384], strides = [1, 1]} : vector<32x512xbf16> to vector<32x384xbf16>
    %cst_32 = arith.constant dense<0.000000e+00> : vector<136x384xf32>
    %44 = tpu.matmul %42, %43, %cst_32 {dimension_numbers = #tpu.dot_dimension_numbers<[1], [0], [0], [1], [0, 0, 1, 1], [], []>} : vector<136x32xbf16>, vector<32x384xbf16>, vector<136x384xf32> -> vector<136x384xf32>
    %45 = arith.addf %40, %44 : vector<136x384xf32>
    %c8 = arith.constant 8 : index
    %c0_33 = arith.constant 0 : index
    %c0_34 = arith.constant 0 : index
    %46 = vector.load %arg5[%c8, %c0_33, %c0_34] : memref<9x136x32xbf16, #tpu.memory_space<vmem>>, vector<1x136x32xbf16>
    %47 = vector.shape_cast %46 : vector<1x136x32xbf16> to vector<136x32xbf16>
    %48 = vector.extract_strided_slice %4 {offsets = [0, 38], sizes = [32, 384], strides = [1, 1]} : vector<32x512xbf16> to vector<32x384xbf16>
    %cst_35 = arith.constant dense<0.000000e+00> : vector<136x384xf32>
    %49 = tpu.matmul %47, %48, %cst_35 {dimension_numbers = #tpu.dot_dimension_numbers<[1], [0], [0], [1], [0, 0, 1, 1], [], []>} : vector<136x32xbf16>, vector<32x384xbf16>, vector<136x384xf32> -> vector<136x384xf32>
    %50 = arith.addf %45, %49 : vector<136x384xf32>
    %c0_36 = arith.constant 0 : index
    %c0_37 = arith.constant 0 : index
    %51 = vector.load %arg6[%c0_36, %c0_37] : memref<136x1xf32, #tpu.memory_space<vmem>>, vector<136x1xf32>
    %52 = vector.broadcast %51 : vector<136x1xf32> to vector<136x384xf32>
    %53 = arith.addf %50, %52 : vector<136x384xf32>
    %cst_38 = arith.constant dense<0.000000e+00> : vector<136x8xf32>
    %54 = tpu.matmul %53, %1, %cst_38 {dimension_numbers = #tpu.dot_dimension_numbers<[1], [0], [0], [1], [0, 0, 1, 1], [], []>} : vector<136x384xf32>, vector<384x8xf32>, vector<136x8xf32> -> vector<136x8xf32>
    %c0_39 = arith.constant 0 : index
    %c0_40 = arith.constant 0 : index
    %55 = vector.load %arg9[%c0_39, %c0_40] : memref<136x136xf32, #tpu.memory_space<vmem>>, vector<136x136xf32>
    %cst_41 = arith.constant dense<0.000000e+00> : vector<136x8xf32>
    %56 = tpu.matmul %55, %54, %cst_41 {dimension_numbers = #tpu.dot_dimension_numbers<[1], [0], [0], [1], [0, 0, 1, 1], [], []>} : vector<136x136xf32>, vector<136x8xf32>, vector<136x8xf32> -> vector<136x8xf32>
    %57 = vector.extract_strided_slice %56 {offsets = [0, 0], sizes = [136, 1], strides = [1, 1]} : vector<136x8xf32> to vector<136x1xf32>
    %58 = vector.broadcast %57 : vector<136x1xf32> to vector<136x384xf32>
    %59 = arith.subf %53, %58 : vector<136x384xf32>
    %60 = arith.mulf %59, %59 : vector<136x384xf32>
    %cst_42 = arith.constant dense<0.000000e+00> : vector<136x8xf32>
    %61 = tpu.matmul %60, %1, %cst_42 {dimension_numbers = #tpu.dot_dimension_numbers<[1], [0], [0], [1], [0, 0, 1, 1], [], []>} : vector<136x384xf32>, vector<384x8xf32>, vector<136x8xf32> -> vector<136x8xf32>
    %c0_43 = arith.constant 0 : index
    %c0_44 = arith.constant 0 : index
    %62 = vector.load %arg9[%c0_43, %c0_44] : memref<136x136xf32, #tpu.memory_space<vmem>>, vector<136x136xf32>
    %cst_45 = arith.constant dense<0.000000e+00> : vector<136x8xf32>
    %63 = tpu.matmul %62, %61, %cst_45 {dimension_numbers = #tpu.dot_dimension_numbers<[1], [0], [0], [1], [0, 0, 1, 1], [], []>} : vector<136x136xf32>, vector<136x8xf32>, vector<136x8xf32> -> vector<136x8xf32>
    %64 = vector.extract_strided_slice %63 {offsets = [0, 0], sizes = [136, 1], strides = [1, 1]} : vector<136x8xf32> to vector<136x1xf32>
    %cst_46 = arith.constant 9.99999974E-6 : f32
    %65 = vector.broadcast %cst_46 : f32 to vector<136x1xf32>
    %66 = arith.addf %64, %65 : vector<136x1xf32>
    %67 = math.rsqrt %66 : vector<136x1xf32>
    %c0_47 = arith.constant 0 : index
    %c0_48 = arith.constant 0 : index
    %68 = vector.load %arg7[%c0_47, %c0_48] : memref<136x1xf32, #tpu.memory_space<vmem>>, vector<136x1xf32>
    %69 = arith.mulf %67, %68 : vector<136x1xf32>
    %70 = vector.broadcast %69 : vector<136x1xf32> to vector<136x384xf32>
    %71 = arith.mulf %59, %70 : vector<136x384xf32>
    %c0_49 = arith.constant 0 : index
    %c0_50 = arith.constant 0 : index
    %72 = vector.load %arg8[%c0_49, %c0_50] : memref<136x1xf32, #tpu.memory_space<vmem>>, vector<136x1xf32>
    %73 = vector.broadcast %72 : vector<136x1xf32> to vector<136x384xf32>
    %74 = arith.addf %71, %73 : vector<136x384xf32>
    %75 = vector.extract_strided_slice %74 {offsets = [0, 0], sizes = [24, 384], strides = [1, 1]} : vector<136x384xf32> to vector<24x384xf32>
    %76 = vector.extract_strided_slice %74 {offsets = [56, 0], sizes = [24, 384], strides = [1, 1]} : vector<136x384xf32> to vector<24x384xf32>
    %77 = arith.addf %75, %76 : vector<24x384xf32>
    %78 = vector.extract_strided_slice %74 {offsets = [88, 0], sizes = [24, 384], strides = [1, 1]} : vector<136x384xf32> to vector<24x384xf32>
    %79 = arith.addf %77, %78 : vector<24x384xf32>
    %80 = vector.extract_strided_slice %79 {offsets = [0, 0], sizes = [8, 384], strides = [1, 1]} : vector<24x384xf32> to vector<8x384xf32>
    %81 = arith.negf %80 : vector<8x384xf32>
    %82 = math.exp %81 : vector<8x384xf32>
    %cst_51 = arith.constant 1.000000e+00 : f32
    %83 = vector.broadcast %cst_51 : f32 to vector<8x384xf32>
    %84 = arith.addf %83, %82 : vector<8x384xf32>
    %85 = arith.divf %83, %84 : vector<8x384xf32>
    %86 = vector.extract_strided_slice %79 {offsets = [8, 0], sizes = [8, 384], strides = [1, 1]} : vector<24x384xf32> to vector<8x384xf32>
    %87 = math.tanh %86 : vector<8x384xf32>
    %88 = vector.extract_strided_slice %79 {offsets = [16, 0], sizes = [8, 384], strides = [1, 1]} : vector<24x384xf32> to vector<8x384xf32>
    %cst_52 = arith.constant 1.000000e+00 : f32
    %89 = vector.broadcast %cst_52 : f32 to vector<8x384xf32>
    %90 = arith.addf %88, %89 : vector<8x384xf32>
    %91 = arith.negf %90 : vector<8x384xf32>
    %92 = math.exp %91 : vector<8x384xf32>
    %cst_53 = arith.constant 1.000000e+00 : f32
    %93 = vector.broadcast %cst_53 : f32 to vector<8x384xf32>
    %94 = arith.addf %93, %92 : vector<8x384xf32>
    %95 = arith.divf %93, %94 : vector<8x384xf32>
    %96 = arith.mulf %95, %6 : vector<8x384xf32>
    %97 = arith.mulf %85, %87 : vector<8x384xf32>
    %98 = arith.addf %96, %97 : vector<8x384xf32>
    %99 = vector.broadcast %0 : vector<1x384xf32> to vector<8x384xf32>
    %100 = arith.mulf %98, %99 : vector<8x384xf32>
    %cst_54 = arith.constant 0.000000e+00 : bf16
    %101 = vector.broadcast %cst_54 : bf16 to vector<8x19xbf16>
    %cst_55 = arith.constant 0.000000e+00 : bf16
    %102 = vector.broadcast %cst_55 : bf16 to vector<8x109xbf16>
    %103 = arith.truncf %100 : vector<8x384xf32> to vector<8x384xbf16>
    %104 = tpu.concatenate %101, %103, %102 in 1 : vector<8x19xbf16>, vector<8x384xbf16>, vector<8x109xbf16> -> vector<8x512xbf16>
    %c0_56 = arith.constant 0 : index
    %c0_57 = arith.constant 0 : index
    %c0_58 = arith.constant 0 : index
    %105 = vector.load %arg10[%c0_56, %c0_57, %c0_58] : memref<9x32x8xbf16, #tpu.memory_space<vmem>>, vector<1x32x8xbf16>
    %106 = vector.shape_cast %105 : vector<1x32x8xbf16> to vector<32x8xbf16>
    %107 = vector.extract_strided_slice %104 {offsets = [0, 0], sizes = [8, 384], strides = [1, 1]} : vector<8x512xbf16> to vector<8x384xbf16>
    %cst_59 = arith.constant dense<0.000000e+00> : vector<32x384xf32>
    %108 = tpu.matmul %106, %107, %cst_59 {dimension_numbers = #tpu.dot_dimension_numbers<[1], [0], [0], [1], [0, 0, 1, 1], [], []>} : vector<32x8xbf16>, vector<8x384xbf16>, vector<32x384xf32> -> vector<32x384xf32>
    %c1_60 = arith.constant 1 : index
    %c0_61 = arith.constant 0 : index
    %c0_62 = arith.constant 0 : index
    %109 = vector.load %arg10[%c1_60, %c0_61, %c0_62] : memref<9x32x8xbf16, #tpu.memory_space<vmem>>, vector<1x32x8xbf16>
    %110 = vector.shape_cast %109 : vector<1x32x8xbf16> to vector<32x8xbf16>
    %111 = vector.extract_strided_slice %104 {offsets = [0, 1], sizes = [8, 384], strides = [1, 1]} : vector<8x512xbf16> to vector<8x384xbf16>
    %cst_63 = arith.constant dense<0.000000e+00> : vector<32x384xf32>
    %112 = tpu.matmul %110, %111, %cst_63 {dimension_numbers = #tpu.dot_dimension_numbers<[1], [0], [0], [1], [0, 0, 1, 1], [], []>} : vector<32x8xbf16>, vector<8x384xbf16>, vector<32x384xf32> -> vector<32x384xf32>
    %113 = arith.addf %108, %112 : vector<32x384xf32>
    %c2_64 = arith.constant 2 : index
    %c0_65 = arith.constant 0 : index
    %c0_66 = arith.constant 0 : index
    %114 = vector.load %arg10[%c2_64, %c0_65, %c0_66] : memref<9x32x8xbf16, #tpu.memory_space<vmem>>, vector<1x32x8xbf16>
    %115 = vector.shape_cast %114 : vector<1x32x8xbf16> to vector<32x8xbf16>
    %116 = vector.extract_strided_slice %104 {offsets = [0, 2], sizes = [8, 384], strides = [1, 1]} : vector<8x512xbf16> to vector<8x384xbf16>
    %cst_67 = arith.constant dense<0.000000e+00> : vector<32x384xf32>
    %117 = tpu.matmul %115, %116, %cst_67 {dimension_numbers = #tpu.dot_dimension_numbers<[1], [0], [0], [1], [0, 0, 1, 1], [], []>} : vector<32x8xbf16>, vector<8x384xbf16>, vector<32x384xf32> -> vector<32x384xf32>
    %118 = arith.addf %113, %117 : vector<32x384xf32>
    %c3_68 = arith.constant 3 : index
    %c0_69 = arith.constant 0 : index
    %c0_70 = arith.constant 0 : index
    %119 = vector.load %arg10[%c3_68, %c0_69, %c0_70] : memref<9x32x8xbf16, #tpu.memory_space<vmem>>, vector<1x32x8xbf16>
    %120 = vector.shape_cast %119 : vector<1x32x8xbf16> to vector<32x8xbf16>
    %121 = vector.extract_strided_slice %104 {offsets = [0, 18], sizes = [8, 384], strides = [1, 1]} : vector<8x512xbf16> to vector<8x384xbf16>
    %cst_71 = arith.constant dense<0.000000e+00> : vector<32x384xf32>
    %122 = tpu.matmul %120, %121, %cst_71 {dimension_numbers = #tpu.dot_dimension_numbers<[1], [0], [0], [1], [0, 0, 1, 1], [], []>} : vector<32x8xbf16>, vector<8x384xbf16>, vector<32x384xf32> -> vector<32x384xf32>
    %123 = arith.addf %118, %122 : vector<32x384xf32>
    %c4_72 = arith.constant 4 : index
    %c0_73 = arith.constant 0 : index
    %c0_74 = arith.constant 0 : index
    %124 = vector.load %arg10[%c4_72, %c0_73, %c0_74] : memref<9x32x8xbf16, #tpu.memory_space<vmem>>, vector<1x32x8xbf16>
    %125 = vector.shape_cast %124 : vector<1x32x8xbf16> to vector<32x8xbf16>
    %126 = vector.extract_strided_slice %104 {offsets = [0, 19], sizes = [8, 384], strides = [1, 1]} : vector<8x512xbf16> to vector<8x384xbf16>
    %cst_75 = arith.constant dense<0.000000e+00> : vector<32x384xf32>
    %127 = tpu.matmul %125, %126, %cst_75 {dimension_numbers = #tpu.dot_dimension_numbers<[1], [0], [0], [1], [0, 0, 1, 1], [], []>} : vector<32x8xbf16>, vector<8x384xbf16>, vector<32x384xf32> -> vector<32x384xf32>
    %128 = arith.addf %123, %127 : vector<32x384xf32>
    %c5_76 = arith.constant 5 : index
    %c0_77 = arith.constant 0 : index
    %c0_78 = arith.constant 0 : index
    %129 = vector.load %arg10[%c5_76, %c0_77, %c0_78] : memref<9x32x8xbf16, #tpu.memory_space<vmem>>, vector<1x32x8xbf16>
    %130 = vector.shape_cast %129 : vector<1x32x8xbf16> to vector<32x8xbf16>
    %131 = vector.extract_strided_slice %104 {offsets = [0, 20], sizes = [8, 384], strides = [1, 1]} : vector<8x512xbf16> to vector<8x384xbf16>
    %cst_79 = arith.constant dense<0.000000e+00> : vector<32x384xf32>
    %132 = tpu.matmul %130, %131, %cst_79 {dimension_numbers = #tpu.dot_dimension_numbers<[1], [0], [0], [1], [0, 0, 1, 1], [], []>} : vector<32x8xbf16>, vector<8x384xbf16>, vector<32x384xf32> -> vector<32x384xf32>
    %133 = arith.addf %128, %132 : vector<32x384xf32>
    %c6_80 = arith.constant 6 : index
    %c0_81 = arith.constant 0 : index
    %c0_82 = arith.constant 0 : index
    %134 = vector.load %arg10[%c6_80, %c0_81, %c0_82] : memref<9x32x8xbf16, #tpu.memory_space<vmem>>, vector<1x32x8xbf16>
    %135 = vector.shape_cast %134 : vector<1x32x8xbf16> to vector<32x8xbf16>
    %136 = vector.extract_strided_slice %104 {offsets = [0, 36], sizes = [8, 384], strides = [1, 1]} : vector<8x512xbf16> to vector<8x384xbf16>
    %cst_83 = arith.constant dense<0.000000e+00> : vector<32x384xf32>
    %137 = tpu.matmul %135, %136, %cst_83 {dimension_numbers = #tpu.dot_dimension_numbers<[1], [0], [0], [1], [0, 0, 1, 1], [], []>} : vector<32x8xbf16>, vector<8x384xbf16>, vector<32x384xf32> -> vector<32x384xf32>
    %138 = arith.addf %133, %137 : vector<32x384xf32>
    %c7_84 = arith.constant 7 : index
    %c0_85 = arith.constant 0 : index
    %c0_86 = arith.constant 0 : index
    %139 = vector.load %arg10[%c7_84, %c0_85, %c0_86] : memref<9x32x8xbf16, #tpu.memory_space<vmem>>, vector<1x32x8xbf16>
    %140 = vector.shape_cast %139 : vector<1x32x8xbf16> to vector<32x8xbf16>
    %141 = vector.extract_strided_slice %104 {offsets = [0, 37], sizes = [8, 384], strides = [1, 1]} : vector<8x512xbf16> to vector<8x384xbf16>
    %cst_87 = arith.constant dense<0.000000e+00> : vector<32x384xf32>
    %142 = tpu.matmul %140, %141, %cst_87 {dimension_numbers = #tpu.dot_dimension_numbers<[1], [0], [0], [1], [0, 0, 1, 1], [], []>} : vector<32x8xbf16>, vector<8x384xbf16>, vector<32x384xf32> -> vector<32x384xf32>
    %143 = arith.addf %138, %142 : vector<32x384xf32>
    %c8_88 = arith.constant 8 : index
    %c0_89 = arith.constant 0 : index
    %c0_90 = arith.constant 0 : index
    %144 = vector.load %arg10[%c8_88, %c0_89, %c0_90] : memref<9x32x8xbf16, #tpu.memory_space<vmem>>, vector<1x32x8xbf16>
    %145 = vector.shape_cast %144 : vector<1x32x8xbf16> to vector<32x8xbf16>
    %146 = vector.extract_strided_slice %104 {offsets = [0, 38], sizes = [8, 384], strides = [1, 1]} : vector<8x512xbf16> to vector<8x384xbf16>
    %cst_91 = arith.constant dense<0.000000e+00> : vector<32x384xf32>
    %147 = tpu.matmul %145, %146, %cst_91 {dimension_numbers = #tpu.dot_dimension_numbers<[1], [0], [0], [1], [0, 0, 1, 1], [], []>} : vector<32x8xbf16>, vector<8x384xbf16>, vector<32x384xf32> -> vector<32x384xf32>
    %148 = arith.addf %143, %147 : vector<32x384xf32>
    %c0_92 = arith.constant 0 : index
    %c0_93 = arith.constant 0 : index
    %149 = vector.load %arg11[%c0_92, %c0_93] : memref<32x1xf32, #tpu.memory_space<vmem>>, vector<32x1xf32>
    %150 = vector.broadcast %149 : vector<32x1xf32> to vector<32x384xf32>
    %151 = arith.addf %148, %150 : vector<32x384xf32>
    %cst_94 = arith.constant dense<0.000000e+00> : vector<32x8xf32>
    %152 = tpu.matmul %151, %1, %cst_94 {dimension_numbers = #tpu.dot_dimension_numbers<[1], [0], [0], [1], [0, 0, 1, 1], [], []>} : vector<32x384xf32>, vector<384x8xf32>, vector<32x8xf32> -> vector<32x8xf32>
    %c0_95 = arith.constant 0 : index
    %c0_96 = arith.constant 0 : index
    %153 = vector.load %arg14[%c0_95, %c0_96] : memref<32x32xf32, #tpu.memory_space<vmem>>, vector<32x32xf32>
    %cst_97 = arith.constant dense<0.000000e+00> : vector<32x8xf32>
    %154 = tpu.matmul %153, %152, %cst_97 {dimension_numbers = #tpu.dot_dimension_numbers<[1], [0], [0], [1], [0, 0, 1, 1], [], []>} : vector<32x32xf32>, vector<32x8xf32>, vector<32x8xf32> -> vector<32x8xf32>
    %155 = vector.extract_strided_slice %154 {offsets = [0, 0], sizes = [32, 1], strides = [1, 1]} : vector<32x8xf32> to vector<32x1xf32>
    %156 = vector.broadcast %155 : vector<32x1xf32> to vector<32x384xf32>
    %157 = arith.subf %151, %156 : vector<32x384xf32>
    %158 = arith.mulf %157, %157 : vector<32x384xf32>
    %cst_98 = arith.constant dense<0.000000e+00> : vector<32x8xf32>
    %159 = tpu.matmul %158, %1, %cst_98 {dimension_numbers = #tpu.dot_dimension_numbers<[1], [0], [0], [1], [0, 0, 1, 1], [], []>} : vector<32x384xf32>, vector<384x8xf32>, vector<32x8xf32> -> vector<32x8xf32>
    %c0_99 = arith.constant 0 : index
    %c0_100 = arith.constant 0 : index
    %160 = vector.load %arg14[%c0_99, %c0_100] : memref<32x32xf32, #tpu.memory_space<vmem>>, vector<32x32xf32>
    %cst_101 = arith.constant dense<0.000000e+00> : vector<32x8xf32>
    %161 = tpu.matmul %160, %159, %cst_101 {dimension_numbers = #tpu.dot_dimension_numbers<[1], [0], [0], [1], [0, 0, 1, 1], [], []>} : vector<32x32xf32>, vector<32x8xf32>, vector<32x8xf32> -> vector<32x8xf32>
    %162 = vector.extract_strided_slice %161 {offsets = [0, 0], sizes = [32, 1], strides = [1, 1]} : vector<32x8xf32> to vector<32x1xf32>
    %cst_102 = arith.constant 9.99999974E-6 : f32
    %163 = vector.broadcast %cst_102 : f32 to vector<32x1xf32>
    %164 = arith.addf %162, %163 : vector<32x1xf32>
    %165 = math.rsqrt %164 : vector<32x1xf32>
    %c0_103 = arith.constant 0 : index
    %c0_104 = arith.constant 0 : index
    %166 = vector.load %arg12[%c0_103, %c0_104] : memref<32x1xf32, #tpu.memory_space<vmem>>, vector<32x1xf32>
    %167 = arith.mulf %165, %166 : vector<32x1xf32>
    %168 = vector.broadcast %167 : vector<32x1xf32> to vector<32x384xf32>
    %169 = arith.mulf %157, %168 : vector<32x384xf32>
    %c0_105 = arith.constant 0 : index
    %c0_106 = arith.constant 0 : index
    %170 = vector.load %arg13[%c0_105, %c0_106] : memref<32x1xf32, #tpu.memory_space<vmem>>, vector<32x1xf32>
    %171 = vector.broadcast %170 : vector<32x1xf32> to vector<32x384xf32>
    %172 = arith.addf %169, %171 : vector<32x384xf32>
    %173 = vector.extract_strided_slice %172 {offsets = [0, 0], sizes = [24, 384], strides = [1, 1]} : vector<32x384xf32> to vector<24x384xf32>
    %174 = vector.extract_strided_slice %74 {offsets = [32, 0], sizes = [24, 384], strides = [1, 1]} : vector<136x384xf32> to vector<24x384xf32>
    %175 = arith.addf %173, %174 : vector<24x384xf32>
    %176 = vector.extract_strided_slice %175 {offsets = [0, 0], sizes = [8, 384], strides = [1, 1]} : vector<24x384xf32> to vector<8x384xf32>
    %177 = vector.extract_strided_slice %74 {offsets = [112, 0], sizes = [8, 384], strides = [1, 1]} : vector<136x384xf32> to vector<8x384xf32>
    %178 = arith.addf %176, %177 : vector<8x384xf32>
    %179 = arith.negf %178 : vector<8x384xf32>
    %180 = math.exp %179 : vector<8x384xf32>
    %cst_107 = arith.constant 1.000000e+00 : f32
    %181 = vector.broadcast %cst_107 : f32 to vector<8x384xf32>
    %182 = arith.addf %181, %180 : vector<8x384xf32>
    %183 = arith.divf %181, %182 : vector<8x384xf32>
    %184 = vector.extract_strided_slice %175 {offsets = [8, 0], sizes = [8, 384], strides = [1, 1]} : vector<24x384xf32> to vector<8x384xf32>
    %185 = math.tanh %184 : vector<8x384xf32>
    %186 = vector.extract_strided_slice %175 {offsets = [16, 0], sizes = [8, 384], strides = [1, 1]} : vector<24x384xf32> to vector<8x384xf32>
    %187 = vector.extract_strided_slice %74 {offsets = [120, 0], sizes = [8, 384], strides = [1, 1]} : vector<136x384xf32> to vector<8x384xf32>
    %188 = arith.addf %186, %187 : vector<8x384xf32>
    %cst_108 = arith.constant 1.000000e+00 : f32
    %189 = vector.broadcast %cst_108 : f32 to vector<8x384xf32>
    %190 = arith.addf %188, %189 : vector<8x384xf32>
    %191 = arith.negf %190 : vector<8x384xf32>
    %192 = math.exp %191 : vector<8x384xf32>
    %cst_109 = arith.constant 1.000000e+00 : f32
    %193 = vector.broadcast %cst_109 : f32 to vector<8x384xf32>
    %194 = arith.addf %193, %192 : vector<8x384xf32>
    %195 = arith.divf %193, %194 : vector<8x384xf32>
    %196 = vector.extract_strided_slice %74 {offsets = [128, 0], sizes = [8, 384], strides = [1, 1]} : vector<136x384xf32> to vector<8x384xf32>
    %197 = math.tanh %196 : vector<8x384xf32>
    %198 = arith.mulf %195, %197 : vector<8x384xf32>
    %199 = arith.mulf %183, %185 : vector<8x384xf32>
    %200 = arith.addf %198, %199 : vector<8x384xf32>
    %201 = vector.broadcast %0 : vector<1x384xf32> to vector<8x384xf32>
    %202 = arith.mulf %200, %201 : vector<8x384xf32>
    %203 = tpu.concatenate %100, %202 in 0 : vector<8x384xf32>, vector<8x384xf32> -> vector<16x384xf32>
    %204 = arith.truncf %203 : vector<16x384xf32> to vector<16x384xbf16>
    %cst_110 = arith.constant 0.000000e+00 : bf16
    %205 = vector.broadcast %cst_110 : bf16 to vector<16x19xbf16>
    %cst_111 = arith.constant 0.000000e+00 : bf16
    %206 = vector.broadcast %cst_111 : bf16 to vector<16x109xbf16>
    %207 = tpu.concatenate %205, %204, %206 in 1 : vector<16x19xbf16>, vector<16x384xbf16>, vector<16x109xbf16> -> vector<16x512xbf16>
    %c0_112 = arith.constant 0 : index
    %c0_113 = arith.constant 0 : index
    %c0_114 = arith.constant 0 : index
    %208 = vector.load %arg15[%c0_112, %c0_113, %c0_114] : memref<9x16x16xbf16, #tpu.memory_space<vmem>>, vector<1x16x16xbf16>
    %209 = vector.shape_cast %208 : vector<1x16x16xbf16> to vector<16x16xbf16>
    %210 = vector.extract_strided_slice %207 {offsets = [0, 0], sizes = [16, 384], strides = [1, 1]} : vector<16x512xbf16> to vector<16x384xbf16>
    %cst_115 = arith.constant dense<0.000000e+00> : vector<16x384xf32>
    %211 = tpu.matmul %209, %210, %cst_115 {dimension_numbers = #tpu.dot_dimension_numbers<[1], [0], [0], [1], [0, 0, 1, 1], [], []>} : vector<16x16xbf16>, vector<16x384xbf16>, vector<16x384xf32> -> vector<16x384xf32>
    %c1_116 = arith.constant 1 : index
    %c0_117 = arith.constant 0 : index
    %c0_118 = arith.constant 0 : index
    %212 = vector.load %arg15[%c1_116, %c0_117, %c0_118] : memref<9x16x16xbf16, #tpu.memory_space<vmem>>, vector<1x16x16xbf16>
    %213 = vector.shape_cast %212 : vector<1x16x16xbf16> to vector<16x16xbf16>
    %214 = vector.extract_strided_slice %207 {offsets = [0, 1], sizes = [16, 384], strides = [1, 1]} : vector<16x512xbf16> to vector<16x384xbf16>
    %cst_119 = arith.constant dense<0.000000e+00> : vector<16x384xf32>
    %215 = tpu.matmul %213, %214, %cst_119 {dimension_numbers = #tpu.dot_dimension_numbers<[1], [0], [0], [1], [0, 0, 1, 1], [], []>} : vector<16x16xbf16>, vector<16x384xbf16>, vector<16x384xf32> -> vector<16x384xf32>
    %216 = arith.addf %211, %215 : vector<16x384xf32>
    %c2_120 = arith.constant 2 : index
    %c0_121 = arith.constant 0 : index
    %c0_122 = arith.constant 0 : index
    %217 = vector.load %arg15[%c2_120, %c0_121, %c0_122] : memref<9x16x16xbf16, #tpu.memory_space<vmem>>, vector<1x16x16xbf16>
    %218 = vector.shape_cast %217 : vector<1x16x16xbf16> to vector<16x16xbf16>
    %219 = vector.extract_strided_slice %207 {offsets = [0, 2], sizes = [16, 384], strides = [1, 1]} : vector<16x512xbf16> to vector<16x384xbf16>
    %cst_123 = arith.constant dense<0.000000e+00> : vector<16x384xf32>
    %220 = tpu.matmul %218, %219, %cst_123 {dimension_numbers = #tpu.dot_dimension_numbers<[1], [0], [0], [1], [0, 0, 1, 1], [], []>} : vector<16x16xbf16>, vector<16x384xbf16>, vector<16x384xf32> -> vector<16x384xf32>
    %221 = arith.addf %216, %220 : vector<16x384xf32>
    %c3_124 = arith.constant 3 : index
    %c0_125 = arith.constant 0 : index
    %c0_126 = arith.constant 0 : index
    %222 = vector.load %arg15[%c3_124, %c0_125, %c0_126] : memref<9x16x16xbf16, #tpu.memory_space<vmem>>, vector<1x16x16xbf16>
    %223 = vector.shape_cast %222 : vector<1x16x16xbf16> to vector<16x16xbf16>
    %224 = vector.extract_strided_slice %207 {offsets = [0, 18], sizes = [16, 384], strides = [1, 1]} : vector<16x512xbf16> to vector<16x384xbf16>
    %cst_127 = arith.constant dense<0.000000e+00> : vector<16x384xf32>
    %225 = tpu.matmul %223, %224, %cst_127 {dimension_numbers = #tpu.dot_dimension_numbers<[1], [0], [0], [1], [0, 0, 1, 1], [], []>} : vector<16x16xbf16>, vector<16x384xbf16>, vector<16x384xf32> -> vector<16x384xf32>
    %226 = arith.addf %221, %225 : vector<16x384xf32>
    %c4_128 = arith.constant 4 : index
    %c0_129 = arith.constant 0 : index
    %c0_130 = arith.constant 0 : index
    %227 = vector.load %arg15[%c4_128, %c0_129, %c0_130] : memref<9x16x16xbf16, #tpu.memory_space<vmem>>, vector<1x16x16xbf16>
    %228 = vector.shape_cast %227 : vector<1x16x16xbf16> to vector<16x16xbf16>
    %229 = vector.extract_strided_slice %207 {offsets = [0, 19], sizes = [16, 384], strides = [1, 1]} : vector<16x512xbf16> to vector<16x384xbf16>
    %cst_131 = arith.constant dense<0.000000e+00> : vector<16x384xf32>
    %230 = tpu.matmul %228, %229, %cst_131 {dimension_numbers = #tpu.dot_dimension_numbers<[1], [0], [0], [1], [0, 0, 1, 1], [], []>} : vector<16x16xbf16>, vector<16x384xbf16>, vector<16x384xf32> -> vector<16x384xf32>
    %231 = arith.addf %226, %230 : vector<16x384xf32>
    %c5_132 = arith.constant 5 : index
    %c0_133 = arith.constant 0 : index
    %c0_134 = arith.constant 0 : index
    %232 = vector.load %arg15[%c5_132, %c0_133, %c0_134] : memref<9x16x16xbf16, #tpu.memory_space<vmem>>, vector<1x16x16xbf16>
    %233 = vector.shape_cast %232 : vector<1x16x16xbf16> to vector<16x16xbf16>
    %234 = vector.extract_strided_slice %207 {offsets = [0, 20], sizes = [16, 384], strides = [1, 1]} : vector<16x512xbf16> to vector<16x384xbf16>
    %cst_135 = arith.constant dense<0.000000e+00> : vector<16x384xf32>
    %235 = tpu.matmul %233, %234, %cst_135 {dimension_numbers = #tpu.dot_dimension_numbers<[1], [0], [0], [1], [0, 0, 1, 1], [], []>} : vector<16x16xbf16>, vector<16x384xbf16>, vector<16x384xf32> -> vector<16x384xf32>
    %236 = arith.addf %231, %235 : vector<16x384xf32>
    %c6_136 = arith.constant 6 : index
    %c0_137 = arith.constant 0 : index
    %c0_138 = arith.constant 0 : index
    %237 = vector.load %arg15[%c6_136, %c0_137, %c0_138] : memref<9x16x16xbf16, #tpu.memory_space<vmem>>, vector<1x16x16xbf16>
    %238 = vector.shape_cast %237 : vector<1x16x16xbf16> to vector<16x16xbf16>
    %239 = vector.extract_strided_slice %207 {offsets = [0, 36], sizes = [16, 384], strides = [1, 1]} : vector<16x512xbf16> to vector<16x384xbf16>
    %cst_139 = arith.constant dense<0.000000e+00> : vector<16x384xf32>
    %240 = tpu.matmul %238, %239, %cst_139 {dimension_numbers = #tpu.dot_dimension_numbers<[1], [0], [0], [1], [0, 0, 1, 1], [], []>} : vector<16x16xbf16>, vector<16x384xbf16>, vector<16x384xf32> -> vector<16x384xf32>
    %241 = arith.addf %236, %240 : vector<16x384xf32>
    %c7_140 = arith.constant 7 : index
    %c0_141 = arith.constant 0 : index
    %c0_142 = arith.constant 0 : index
    %242 = vector.load %arg15[%c7_140, %c0_141, %c0_142] : memref<9x16x16xbf16, #tpu.memory_space<vmem>>, vector<1x16x16xbf16>
    %243 = vector.shape_cast %242 : vector<1x16x16xbf16> to vector<16x16xbf16>
    %244 = vector.extract_strided_slice %207 {offsets = [0, 37], sizes = [16, 384], strides = [1, 1]} : vector<16x512xbf16> to vector<16x384xbf16>
    %cst_143 = arith.constant dense<0.000000e+00> : vector<16x384xf32>
    %245 = tpu.matmul %243, %244, %cst_143 {dimension_numbers = #tpu.dot_dimension_numbers<[1], [0], [0], [1], [0, 0, 1, 1], [], []>} : vector<16x16xbf16>, vector<16x384xbf16>, vector<16x384xf32> -> vector<16x384xf32>
    %246 = arith.addf %241, %245 : vector<16x384xf32>
    %c8_144 = arith.constant 8 : index
    %c0_145 = arith.constant 0 : index
    %c0_146 = arith.constant 0 : index
    %247 = vector.load %arg15[%c8_144, %c0_145, %c0_146] : memref<9x16x16xbf16, #tpu.memory_space<vmem>>, vector<1x16x16xbf16>
    %248 = vector.shape_cast %247 : vector<1x16x16xbf16> to vector<16x16xbf16>
    %249 = vector.extract_strided_slice %207 {offsets = [0, 38], sizes = [16, 384], strides = [1, 1]} : vector<16x512xbf16> to vector<16x384xbf16>
    %cst_147 = arith.constant dense<0.000000e+00> : vector<16x384xf32>
    %250 = tpu.matmul %248, %249, %cst_147 {dimension_numbers = #tpu.dot_dimension_numbers<[1], [0], [0], [1], [0, 0, 1, 1], [], []>} : vector<16x16xbf16>, vector<16x384xbf16>, vector<16x384xf32> -> vector<16x384xf32>
    %251 = arith.addf %246, %250 : vector<16x384xf32>
    %c0_148 = arith.constant 0 : index
    %c0_149 = arith.constant 0 : index
    %252 = vector.load %arg16[%c0_148, %c0_149] : memref<16x1xf32, #tpu.memory_space<vmem>>, vector<16x1xf32>
    %253 = vector.broadcast %252 : vector<16x1xf32> to vector<16x384xf32>
    %254 = arith.addf %251, %253 : vector<16x384xf32>
    %cst_150 = arith.constant dense<0.000000e+00> : vector<16x8xf32>
    %255 = tpu.matmul %254, %1, %cst_150 {dimension_numbers = #tpu.dot_dimension_numbers<[1], [0], [0], [1], [0, 0, 1, 1], [], []>} : vector<16x384xf32>, vector<384x8xf32>, vector<16x8xf32> -> vector<16x8xf32>
    %c0_151 = arith.constant 0 : index
    %c0_152 = arith.constant 0 : index
    %256 = vector.load %arg19[%c0_151, %c0_152] : memref<16x16xf32, #tpu.memory_space<vmem>>, vector<16x16xf32>
    %cst_153 = arith.constant dense<0.000000e+00> : vector<16x8xf32>
    %257 = tpu.matmul %256, %255, %cst_153 {dimension_numbers = #tpu.dot_dimension_numbers<[1], [0], [0], [1], [0, 0, 1, 1], [], []>} : vector<16x16xf32>, vector<16x8xf32>, vector<16x8xf32> -> vector<16x8xf32>
    %258 = vector.extract_strided_slice %257 {offsets = [0, 0], sizes = [16, 1], strides = [1, 1]} : vector<16x8xf32> to vector<16x1xf32>
    %259 = vector.broadcast %258 : vector<16x1xf32> to vector<16x384xf32>
    %260 = arith.subf %254, %259 : vector<16x384xf32>
    %261 = arith.mulf %260, %260 : vector<16x384xf32>
    %cst_154 = arith.constant dense<0.000000e+00> : vector<16x8xf32>
    %262 = tpu.matmul %261, %1, %cst_154 {dimension_numbers = #tpu.dot_dimension_numbers<[1], [0], [0], [1], [0, 0, 1, 1], [], []>} : vector<16x384xf32>, vector<384x8xf32>, vector<16x8xf32> -> vector<16x8xf32>
    %c0_155 = arith.constant 0 : index
    %c0_156 = arith.constant 0 : index
    %263 = vector.load %arg19[%c0_155, %c0_156] : memref<16x16xf32, #tpu.memory_space<vmem>>, vector<16x16xf32>
    %cst_157 = arith.constant dense<0.000000e+00> : vector<16x8xf32>
    %264 = tpu.matmul %263, %262, %cst_157 {dimension_numbers = #tpu.dot_dimension_numbers<[1], [0], [0], [1], [0, 0, 1, 1], [], []>} : vector<16x16xf32>, vector<16x8xf32>, vector<16x8xf32> -> vector<16x8xf32>
    %265 = vector.extract_strided_slice %264 {offsets = [0, 0], sizes = [16, 1], strides = [1, 1]} : vector<16x8xf32> to vector<16x1xf32>
    %cst_158 = arith.constant 9.99999974E-6 : f32
    %266 = vector.broadcast %cst_158 : f32 to vector<16x1xf32>
    %267 = arith.addf %265, %266 : vector<16x1xf32>
    %268 = math.rsqrt %267 : vector<16x1xf32>
    %c0_159 = arith.constant 0 : index
    %c0_160 = arith.constant 0 : index
    %269 = vector.load %arg17[%c0_159, %c0_160] : memref<16x1xf32, #tpu.memory_space<vmem>>, vector<16x1xf32>
    %270 = arith.mulf %268, %269 : vector<16x1xf32>
    %271 = vector.broadcast %270 : vector<16x1xf32> to vector<16x384xf32>
    %272 = arith.mulf %260, %271 : vector<16x384xf32>
    %c0_161 = arith.constant 0 : index
    %c0_162 = arith.constant 0 : index
    %273 = vector.load %arg18[%c0_161, %c0_162] : memref<16x1xf32, #tpu.memory_space<vmem>>, vector<16x1xf32>
    %274 = vector.broadcast %273 : vector<16x1xf32> to vector<16x384xf32>
    %275 = arith.addf %272, %274 : vector<16x384xf32>
    %276 = vector.extract_strided_slice %74 {offsets = [24, 0], sizes = [8, 384], strides = [1, 1]} : vector<136x384xf32> to vector<8x384xf32>
    %277 = vector.extract_strided_slice %74 {offsets = [80, 0], sizes = [8, 384], strides = [1, 1]} : vector<136x384xf32> to vector<8x384xf32>
    %278 = arith.addf %276, %277 : vector<8x384xf32>
    %279 = vector.extract_strided_slice %172 {offsets = [24, 0], sizes = [8, 384], strides = [1, 1]} : vector<32x384xf32> to vector<8x384xf32>
    %280 = arith.addf %278, %279 : vector<8x384xf32>
    %281 = vector.extract_strided_slice %275 {offsets = [0, 0], sizes = [8, 384], strides = [1, 1]} : vector<16x384xf32> to vector<8x384xf32>
    %282 = arith.addf %280, %281 : vector<8x384xf32>
    %283 = math.tanh %282 : vector<8x384xf32>
    %284 = vector.extract_strided_slice %275 {offsets = [8, 0], sizes = [8, 384], strides = [1, 1]} : vector<16x384xf32> to vector<8x384xf32>
    %285 = math.tanh %284 : vector<8x384xf32>
    %286 = arith.mulf %283, %285 : vector<8x384xf32>
    %c0_163 = arith.constant 0 : index
    %c0_164 = arith.constant 0 : index
    %c0_165 = arith.constant 0 : index
    %287 = vector.load %arg20[%c0_163, %c0_164, %c0_165] : memref<1x8x384xf32, #tpu.memory_space<vmem>>, vector<1x8x384xf32>
    %288 = vector.shape_cast %287 : vector<1x8x384xf32> to vector<8x384xf32>
    %289 = vector.shape_cast %286 : vector<8x384xf32> to vector<1x8x384xf32>
    tpu.vector_store %arg20[%c0_163, %c0_164, %c0_165], %289 {strides = array<i32>} : memref<1x8x384xf32, #tpu.memory_space<vmem>>, vector<1x8x384xf32>,
    %c0_166 = arith.constant 0 : index
    %c0_167 = arith.constant 0 : index
    %c0_168 = arith.constant 0 : index
    %290 = vector.load %arg21[%c0_166, %c0_167, %c0_168] : memref<1x8x384xf32, #tpu.memory_space<vmem>>, vector<1x8x384xf32>
    %291 = vector.shape_cast %290 : vector<1x8x384xf32> to vector<8x384xf32>
    %292 = vector.shape_cast %100 : vector<8x384xf32> to vector<1x8x384xf32>
    tpu.vector_store %arg21[%c0_166, %c0_167, %c0_168], %292 {strides = array<i32>} : memref<1x8x384xf32, #tpu.memory_space<vmem>>, vector<1x8x384xf32>,
    %c0_169 = arith.constant 0 : index
    %c0_170 = arith.constant 0 : index
    %c0_171 = arith.constant 0 : index
    %293 = vector.load %arg22[%c0_169, %c0_170, %c0_171] : memref<1x8x384xf32, #tpu.memory_space<vmem>>, vector<1x8x384xf32>
    %294 = vector.shape_cast %293 : vector<1x8x384xf32> to vector<8x384xf32>
    %295 = vector.shape_cast %202 : vector<8x384xf32> to vector<1x8x384xf32>
    tpu.vector_store %arg22[%c0_169, %c0_170, %c0_171], %295 {strides = array<i32>} : memref<1x8x384xf32, #tpu.memory_space<vmem>>, vector<1x8x384xf32>,
    return
  }
  func.func @transform_0(%arg0: i32) -> (i32, i32, i32) {
    %c0_i32 = arith.constant 0 : i32
    %c0_i32_0 = arith.constant 0 : i32
    %c0_i32_1 = arith.constant 0 : i32
    return %arg0, %c0_i32, %c0_i32_0 : i32, i32, i32
  }
  func.func @transform_1(%arg0: i32) -> (i32, i32, i32) {
    %c0_i32 = arith.constant 0 : i32
    %c0_i32_0 = arith.constant 0 : i32
    %c0_i32_1 = arith.constant 0 : i32
    return %arg0, %c0_i32, %c0_i32_0 : i32, i32, i32
  }
  func.func @transform_2(%arg0: i32) -> (i32, i32) {
    %c0_i32 = arith.constant 0 : i32
    %c0_i32_0 = arith.constant 0 : i32
    %c0_i32_1 = arith.constant 0 : i32
    return %c0_i32, %c0_i32_0 : i32, i32
  }
  func.func @transform_3(%arg0: i32) -> (i32, i32) {
    %c0_i32 = arith.constant 0 : i32
    %c0_i32_0 = arith.constant 0 : i32
    %c0_i32_1 = arith.constant 0 : i32
    return %c0_i32, %c0_i32_0 : i32, i32
  }
  func.func @transform_4(%arg0: i32) -> (i32, i32, i32) {
    %c0_i32 = arith.constant 0 : i32
    %c0_i32_0 = arith.constant 0 : i32
    %c0_i32_1 = arith.constant 0 : i32
    %c0_i32_2 = arith.constant 0 : i32
    return %c0_i32, %c0_i32_0, %c0_i32_1 : i32, i32, i32
  }
  func.func @transform_5(%arg0: i32) -> (i32, i32) {
    %c0_i32 = arith.constant 0 : i32
    %c0_i32_0 = arith.constant 0 : i32
    %c0_i32_1 = arith.constant 0 : i32
    return %c0_i32, %c0_i32_0 : i32, i32
  }
  func.func @transform_6(%arg0: i32) -> (i32, i32) {
    %c0_i32 = arith.constant 0 : i32
    %c0_i32_0 = arith.constant 0 : i32
    %c0_i32_1 = arith.constant 0 : i32
    return %c0_i32, %c0_i32_0 : i32, i32
  }
  func.func @transform_7(%arg0: i32) -> (i32, i32) {
    %c0_i32 = arith.constant 0 : i32
    %c0_i32_0 = arith.constant 0 : i32
    %c0_i32_1 = arith.constant 0 : i32
    return %c0_i32, %c0_i32_0 : i32, i32
  }
  func.func @transform_8(%arg0: i32) -> (i32, i32) {
    %c0_i32 = arith.constant 0 : i32
    %c0_i32_0 = arith.constant 0 : i32
    %c0_i32_1 = arith.constant 0 : i32
    return %c0_i32, %c0_i32_0 : i32, i32
  }
  func.func @transform_9(%arg0: i32) -> (i32, i32, i32) {
    %c0_i32 = arith.constant 0 : i32
    %c0_i32_0 = arith.constant 0 : i32
    %c0_i32_1 = arith.constant 0 : i32
    %c0_i32_2 = arith.constant 0 : i32
    return %c0_i32, %c0_i32_0, %c0_i32_1 : i32, i32, i32
  }
  func.func @transform_10(%arg0: i32) -> (i32, i32) {
    %c0_i32 = arith.constant 0 : i32
    %c0_i32_0 = arith.constant 0 : i32
    %c0_i32_1 = arith.constant 0 : i32
    return %c0_i32, %c0_i32_0 : i32, i32
  }
  func.func @transform_11(%arg0: i32) -> (i32, i32) {
    %c0_i32 = arith.constant 0 : i32
    %c0_i32_0 = arith.constant 0 : i32
    %c0_i32_1 = arith.constant 0 : i32
    return %c0_i32, %c0_i32_0 : i32, i32
  }
  func.func @transform_12(%arg0: i32) -> (i32, i32) {
    %c0_i32 = arith.constant 0 : i32
    %c0_i32_0 = arith.constant 0 : i32
    %c0_i32_1 = arith.constant 0 : i32
    return %c0_i32, %c0_i32_0 : i32, i32
  }
  func.func @transform_13(%arg0: i32) -> (i32, i32) {
    %c0_i32 = arith.constant 0 : i32
    %c0_i32_0 = arith.constant 0 : i32
    %c0_i32_1 = arith.constant 0 : i32
    return %c0_i32, %c0_i32_0 : i32, i32
  }
  func.func @transform_14(%arg0: i32) -> (i32, i32, i32) {
    %c0_i32 = arith.constant 0 : i32
    %c0_i32_0 = arith.constant 0 : i32
    %c0_i32_1 = arith.constant 0 : i32
    %c0_i32_2 = arith.constant 0 : i32
    return %c0_i32, %c0_i32_0, %c0_i32_1 : i32, i32, i32
  }
  func.func @transform_15(%arg0: i32) -> (i32, i32) {
    %c0_i32 = arith.constant 0 : i32
    %c0_i32_0 = arith.constant 0 : i32
    %c0_i32_1 = arith.constant 0 : i32
    return %c0_i32, %c0_i32_0 : i32, i32
  }
  func.func @transform_16(%arg0: i32) -> (i32, i32) {
    %c0_i32 = arith.constant 0 : i32
    %c0_i32_0 = arith.constant 0 : i32
    %c0_i32_1 = arith.constant 0 : i32
    return %c0_i32, %c0_i32_0 : i32, i32
  }
  func.func @transform_17(%arg0: i32) -> (i32, i32) {
    %c0_i32 = arith.constant 0 : i32
    %c0_i32_0 = arith.constant 0 : i32
    %c0_i32_1 = arith.constant 0 : i32
    return %c0_i32, %c0_i32_0 : i32, i32
  }
  func.func @transform_18(%arg0: i32) -> (i32, i32) {
    %c0_i32 = arith.constant 0 : i32
    %c0_i32_0 = arith.constant 0 : i32
    %c0_i32_1 = arith.constant 0 : i32
    return %c0_i32, %c0_i32_0 : i32, i32
  }
  func.func @transform_19(%arg0: i32) -> (i32, i32, i32) {
    %c0_i32 = arith.constant 0 : i32
    %c0_i32_0 = arith.constant 0 : i32
    %c0_i32_1 = arith.constant 0 : i32
    return %arg0, %c0_i32, %c0_i32_0 : i32, i32, i32
  }
  func.func @transform_20(%arg0: i32) -> (i32, i32, i32) {
    %c0_i32 = arith.constant 0 : i32
    %c0_i32_0 = arith.constant 0 : i32
    %c0_i32_1 = arith.constant 0 : i32
    return %arg0, %c0_i32, %c0_i32_0 : i32, i32, i32
  }
  func.func @transform_21(%arg0: i32) -> (i32, i32, i32) {
    %c0_i32 = arith.constant 0 : i32
    %c0_i32_0 = arith.constant 0 : i32
    %c0_i32_1 = arith.constant 0 : i32
    return %arg0, %c0_i32, %c0_i32_0 : i32, i32, i32
  }
}

</mosaic_0001>

<llo_original>
// kernel: causal_lstm_cell.1
$region0: #{causal_lstm_cell.1}
  #allocation0 [shape = 'u32[]', space=smem, size = 0x4, offset = 0x4, fixed_abs, tag = 'smem constant byte address 0x4 - core index']
  #allocation1 [shape = 'u32[144,128]{1,0:T(1,128)}', space=vmem, size = 0x12000, scoped, tag = 'internal scratch']
  %s0 = inlined_call_operand.vmem [shape: f32[2,32,512], index: 0, kind: input, shape index: {}]
  %s1 = inlined_call_operand.vmem [shape: f32[2,8,384], index: 1, kind: input, shape index: {}]
  %s2 = inlined_call_operand.vmem [shape: f32[1,384], index: 2, kind: input, shape index: {}]
  %s3 = inlined_call_operand.vmem [shape: f32[384,8], index: 3, kind: input, shape index: {}]
  %s4 = inlined_call_operand.vmem [shape: bf16[9,136,32], index: 4, kind: input, shape index: {}]
  %s5 = inlined_call_operand.vmem [shape: f32[136,1], index: 5, kind: input, shape index: {}]
  %s6 = inlined_call_operand.vmem [shape: f32[136,1], index: 6, kind: input, shape index: {}]
  %s7 = inlined_call_operand.vmem [shape: f32[136,1], index: 7, kind: input, shape index: {}]
  %s8 = inlined_call_operand.vmem [shape: f32[136,136], index: 8, kind: input, shape index: {}]
  %s9 = inlined_call_operand.vmem [shape: bf16[9,32,8], index: 9, kind: input, shape index: {}]
  %s10 = inlined_call_operand.vmem [shape: f32[32,1], index: 10, kind: input, shape index: {}]
  %s11 = inlined_call_operand.vmem [shape: f32[32,1], index: 11, kind: input, shape index: {}]
  %s12 = inlined_call_operand.vmem [shape: f32[32,1], index: 12, kind: input, shape index: {}]
  %s13 = inlined_call_operand.vmem [shape: f32[32,32], index: 13, kind: input, shape index: {}]
  %s14 = inlined_call_operand.vmem [shape: bf16[9,16,16], index: 14, kind: input, shape index: {}]
  %s15 = inlined_call_operand.vmem [shape: f32[16,1], index: 15, kind: input, shape index: {}]
  %s16 = inlined_call_operand.vmem [shape: f32[16,1], index: 16, kind: input, shape index: {}]
  %s17 = inlined_call_operand.vmem [shape: f32[16,1], index: 17, kind: input, shape index: {}]
  %s18 = inlined_call_operand.vmem [shape: f32[16,16], index: 18, kind: input, shape index: {}]
  %s19 = inlined_call_operand.vmem [shape: f32[2,8,384], index: 19, kind: output, shape index: {0}]
  %s20 = inlined_call_operand.vmem [shape: f32[2,8,384], index: 20, kind: output, shape index: {1}]
  %s21 = inlined_call_operand.vmem [shape: f32[2,8,384], index: 21, kind: output, shape index: {2}]
  %22 = xla_tuple %s19, %s20, %s21
  %s23 = sld [smem:[#allocation0]]
  $region125: #{causal_lstm_cell.1} parent=0
    _
  %s25 = ssub.s32 1, %s23
  %s26 = scalar_select 0, %s25, %s23
  loop: start=0, step=1, limit=4
  $region2: #{causal_lstm_cell.1} parent=0 // loop_pre_header
    _
  $region3: #{causal_lstm_cell.1} parent=0 // loop_header
    %s28 = sphi 0, %s32
    %p29 = scmp.ge.s32.totalorder %s28, 4
    %s38 = sphi 0, %s40
    %s41 = sphi 0, %s38
    %s42 = sphi 0, %s41
    %s58 = sphi 0, %s42
    %s64 = sphi 0, %s66
    %s67 = sphi 0, %s64
    %s68 = sphi 0, %s67
    %s84 = sphi 0, %s68
    %s88 = sphi 0, %s88
    %s90 = sphi 0, %s88
    %s91 = sphi 0, %s90
    %s105 = sphi 0, %s91
    %s109 = sphi 0, %s109
    %s111 = sphi 0, %s109
    %s112 = sphi 0, %s111
    %s126 = sphi 0, %s112
    %s130 = sphi 0, %s130
    %s132 = sphi 0, %s130
    %s133 = sphi 0, %s132
    %s147 = sphi 0, %s133
    %s151 = sphi 0, %s151
    %s153 = sphi 0, %s151
    %s154 = sphi 0, %s153
    %s168 = sphi 0, %s154
    %s172 = sphi 0, %s172
    %s174 = sphi 0, %s172
    %s175 = sphi 0, %s174
    %s189 = sphi 0, %s175
    %s193 = sphi 0, %s193
    %s195 = sphi 0, %s193
    %s196 = sphi 0, %s195
    %s210 = sphi 0, %s196
    %s214 = sphi 0, %s214
    %s216 = sphi 0, %s214
    %s217 = sphi 0, %s216
    %s231 = sphi 0, %s217
    %s235 = sphi 0, %s235
    %s237 = sphi 0, %s235
    %s238 = sphi 0, %s237
    %s252 = sphi 0, %s238
    %s256 = sphi 0, %s256
    %s258 = sphi 0, %s256
    %s259 = sphi 0, %s258
    %s273 = sphi 0, %s259
    %s277 = sphi 0, %s277
    %s279 = sphi 0, %s277
    %s280 = sphi 0, %s279
    %s294 = sphi 0, %s280
    %s298 = sphi 0, %s298
    %s300 = sphi 0, %s298
    %s301 = sphi 0, %s300
    %s315 = sphi 0, %s301
    %s319 = sphi 0, %s319
    %s321 = sphi 0, %s319
    %s322 = sphi 0, %s321
    %s336 = sphi 0, %s322
    %s340 = sphi 0, %s340
    %s342 = sphi 0, %s340
    %s343 = sphi 0, %s342
    %s357 = sphi 0, %s343
    %s361 = sphi 0, %s361
    %s363 = sphi 0, %s361
    %s364 = sphi 0, %s363
    %s378 = sphi 0, %s364
    %s382 = sphi 0, %s382
    %s384 = sphi 0, %s382
    %s385 = sphi 0, %s384
    %s399 = sphi 0, %s385
    %s403 = sphi 0, %s403
    %s405 = sphi 0, %s403
    %s406 = sphi 0, %s405
    %s420 = sphi 0, %s406
    %s424 = sphi 0, %s424
    %s426 = sphi 0, %s424
    %s427 = sphi 0, %s426
    %s441 = sphi 0, %s427
    %s447 = sphi 0, %s449
    %s450 = sphi 0, %s447
    %s451 = sphi 0, %s450
    %s467 = sphi 0, %s451
    %s473 = sphi 0, %s475
    %s476 = sphi 0, %s473
    %s477 = sphi 0, %s476
    %s493 = sphi 0, %s477
    %s499 = sphi 0, %s501
    %s502 = sphi 0, %s499
    %s503 = sphi 0, %s502
    %s519 = sphi 0, %s503
  $region4: #{causal_lstm_cell.1} parent=0 // loop_header_branch
    %31 = sbr.rel (%p29) target = $region8
  $region5: #{causal_lstm_cell.1} parent=0 // loop_body
    %s33 = ssub.s32 %s28, 1
    %s34 = ssub.s32 %s28, 2
    %s35 = sadd.s32 %s28, 1
    %s36 = ssub.s32 %s28, %s35
    %p37 = scmp.eq.s32.totalorder %s36, 0
    %s39 = sadd.s32 %s38, 1
    %s40 = scalar_select %p37, %s38, %s39
    %p43 = pneg %p37
    %p44 = scmp.eq.s32.totalorder %s28, 1
    %p45 = por %p43, %p44
    %p46 = scmp.ne.s32.totalorder %s38, %s41
    %p47 = scmp.eq.s32.totalorder %s28, 0
    %p48 = por %p46, %p47
    %p49 = scmp.ne.s32.totalorder %s38, %s41
    %p50 = scmp.eq.s32.totalorder %s33, 1
    %p51 = por %p49, %p50
    %p52 = scmp.ne.s32.totalorder %s41, %s42
    %p53 = scmp.eq.s32.totalorder %s33, 0
    %p54 = por %p52, %p53
    %p55 = scmp.ne.s32.totalorder %s41, %s42
    %p56 = scmp.eq.s32.totalorder %s34, 1
    %p57 = por %p55, %p56
    %p59 = scmp.ne.s32.totalorder %s42, %s58
    %p60 = scmp.eq.s32.totalorder %s34, 0
    %p61 = por %p59, %p60
    %s62 = ssub.s32 %s28, %s35
    %p63 = scmp.eq.s32.totalorder %s62, 0
    %s65 = sadd.s32 %s64, 1
    %s66 = scalar_select %p63, %s64, %s65
    %p69 = pneg %p63
    %p70 = scmp.eq.s32.totalorder %s28, 1
    %p71 = por %p69, %p70
    %p72 = scmp.ne.s32.totalorder %s64, %s67
    %p73 = scmp.eq.s32.totalorder %s28, 0
    %p74 = por %p72, %p73
    %p75 = scmp.ne.s32.totalorder %s64, %s67
    %p76 = scmp.eq.s32.totalorder %s33, 1
    %p77 = por %p75, %p76
    %p78 = scmp.ne.s32.totalorder %s67, %s68
    %p79 = scmp.eq.s32.totalorder %s33, 0
    %p80 = por %p78, %p79
    %p81 = scmp.ne.s32.totalorder %s67, %s68
    %p82 = scmp.eq.s32.totalorder %s34, 1
    %p83 = por %p81, %p82
    %p85 = scmp.ne.s32.totalorder %s68, %s84
    %p86 = scmp.eq.s32.totalorder %s34, 0
    %p87 = por %p85, %p86
    %s89 = sadd.s32 %s88, 1
    %p92 = scmp.eq.s32.totalorder %s28, 1
    %p93 = scmp.ne.s32.totalorder %s88, %s90
    %p94 = scmp.eq.s32.totalorder %s28, 0
    %p95 = por %p93, %p94
    %p96 = scmp.ne.s32.totalorder %s88, %s90
    %p97 = scmp.eq.s32.totalorder %s33, 1
    %p98 = por %p96, %p97
    %p99 = scmp.ne.s32.totalorder %s90, %s91
    %p100 = scmp.eq.s32.totalorder %s33, 0
    %p101 = por %p99, %p100
    %p102 = scmp.ne.s32.totalorder %s90, %s91
    %p103 = scmp.eq.s32.totalorder %s34, 1
    %p104 = por %p102, %p103
    %p106 = scmp.ne.s32.totalorder %s91, %s105
    %p107 = scmp.eq.s32.totalorder %s34, 0
    %p108 = por %p106, %p107
    %s110 = sadd.s32 %s109, 1
    %p113 = scmp.eq.s32.totalorder %s28, 1
    %p114 = scmp.ne.s32.totalorder %s109, %s111
    %p115 = scmp.eq.s32.totalorder %s28, 0
    %p116 = por %p114, %p115
    %p117 = scmp.ne.s32.totalorder %s109, %s111
    %p118 = scmp.eq.s32.totalorder %s33, 1
    %p119 = por %p117, %p118
    %p120 = scmp.ne.s32.totalorder %s111, %s112
    %p121 = scmp.eq.s32.totalorder %s33, 0
    %p122 = por %p120, %p121
    %p123 = scmp.ne.s32.totalorder %s111, %s112
    %p124 = scmp.eq.s32.totalorder %s34, 1
    %p125 = por %p123, %p124
    %p127 = scmp.ne.s32.totalorder %s112, %s126
    %p128 = scmp.eq.s32.totalorder %s34, 0
    %p129 = por %p127, %p128
    %s131 = sadd.s32 %s130, 1
    %p134 = scmp.eq.s32.totalorder %s28, 1
    %p135 = scmp.ne.s32.totalorder %s130, %s132
    %p136 = scmp.eq.s32.totalorder %s28, 0
    %p137 = por %p135, %p136
    %p138 = scmp.ne.s32.totalorder %s130, %s132
    %p139 = scmp.eq.s32.totalorder %s33, 1
    %p140 = por %p138, %p139
    %p141 = scmp.ne.s32.totalorder %s132, %s133
    %p142 = scmp.eq.s32.totalorder %s33, 0
    %p143 = por %p141, %p142
    %p144 = scmp.ne.s32.totalorder %s132, %s133
    %p145 = scmp.eq.s32.totalorder %s34, 1
    %p146 = por %p144, %p145
    %p148 = scmp.ne.s32.totalorder %s133, %s147
    %p149 = scmp.eq.s32.totalorder %s34, 0
    %p150 = por %p148, %p149
    %s152 = sadd.s32 %s151, 1
    %p155 = scmp.eq.s32.totalorder %s28, 1
    %p156 = scmp.ne.s32.totalorder %s151, %s153
    %p157 = scmp.eq.s32.totalorder %s28, 0
    %p158 = por %p156, %p157
    %p159 = scmp.ne.s32.totalorder %s151, %s153
    %p160 = scmp.eq.s32.totalorder %s33, 1
    %p161 = por %p159, %p160
    %p162 = scmp.ne.s32.totalorder %s153, %s154
    %p163 = scmp.eq.s32.totalorder %s33, 0
    %p164 = por %p162, %p163
    %p165 = scmp.ne.s32.totalorder %s153, %s154
    %p166 = scmp.eq.s32.totalorder %s34, 1
    %p167 = por %p165, %p166
    %p169 = scmp.ne.s32.totalorder %s154, %s168
    %p170 = scmp.eq.s32.totalorder %s34, 0
    %p171 = por %p169, %p170
    %s173 = sadd.s32 %s172, 1
    %p176 = scmp.eq.s32.totalorder %s28, 1
    %p177 = scmp.ne.s32.totalorder %s172, %s174
    %p178 = scmp.eq.s32.totalorder %s28, 0
    %p179 = por %p177, %p178
    %p180 = scmp.ne.s32.totalorder %s172, %s174
    %p181 = scmp.eq.s32.totalorder %s33, 1
    %p182 = por %p180, %p181
    %p183 = scmp.ne.s32.totalorder %s174, %s175
    %p184 = scmp.eq.s32.totalorder %s33, 0
    %p185 = por %p183, %p184
    %p186 = scmp.ne.s32.totalorder %s174, %s175
    %p187 = scmp.eq.s32.totalorder %s34, 1
    %p188 = por %p186, %p187
    %p190 = scmp.ne.s32.totalorder %s175, %s189
    %p191 = scmp.eq.s32.totalorder %s34, 0
    %p192 = por %p190, %p191
    %s194 = sadd.s32 %s193, 1
    %p197 = scmp.eq.s32.totalorder %s28, 1
    %p198 = scmp.ne.s32.totalorder %s193, %s195
    %p199 = scmp.eq.s32.totalorder %s28, 0
    %p200 = por %p198, %p199
    %p201 = scmp.ne.s32.totalorder %s193, %s195
    %p202 = scmp.eq.s32.totalorder %s33, 1
    %p203 = por %p201, %p202
    %p204 = scmp.ne.s32.totalorder %s195, %s196
    %p205 = scmp.eq.s32.totalorder %s33, 0
    %p206 = por %p204, %p205
    %p207 = scmp.ne.s32.totalorder %s195, %s196
    %p208 = scmp.eq.s32.totalorder %s34, 1
    %p209 = por %p207, %p208
    %p211 = scmp.ne.s32.totalorder %s196, %s210
    %p212 = scmp.eq.s32.totalorder %s34, 0
    %p213 = por %p211, %p212
    %s215 = sadd.s32 %s214, 1
    %p218 = scmp.eq.s32.totalorder %s28, 1
    %p219 = scmp.ne.s32.totalorder %s214, %s216
    %p220 = scmp.eq.s32.totalorder %s28, 0
    %p221 = por %p219, %p220
    %p222 = scmp.ne.s32.totalorder %s214, %s216
    %p223 = scmp.eq.s32.totalorder %s33, 1
    %p224 = por %p222, %p223
    %p225 = scmp.ne.s32.totalorder %s216, %s217
    %p226 = scmp.eq.s32.totalorder %s33, 0
    %p227 = por %p225, %p226
    %p228 = scmp.ne.s32.totalorder %s216, %s217
    %p229 = scmp.eq.s32.totalorder %s34, 1
    %p230 = por %p228, %p229
    %p232 = scmp.ne.s32.totalorder %s217, %s231
    %p233 = scmp.eq.s32.totalorder %s34, 0
    %p234 = por %p232, %p233
    %s236 = sadd.s32 %s235, 1
    %p239 = scmp.eq.s32.totalorder %s28, 1
    %p240 = scmp.ne.s32.totalorder %s235, %s237
    %p241 = scmp.eq.s32.totalorder %s28, 0
    %p242 = por %p240, %p241
    %p243 = scmp.ne.s32.totalorder %s235, %s237
    %p244 = scmp.eq.s32.totalorder %s33, 1
    %p245 = por %p243, %p244
    %p246 = scmp.ne.s32.totalorder %s237, %s238
    %p247 = scmp.eq.s32.totalorder %s33, 0
    %p248 = por %p246, %p247
    %p249 = scmp.ne.s32.totalorder %s237, %s238
    %p250 = scmp.eq.s32.totalorder %s34, 1
    %p251 = por %p249, %p250
    %p253 = scmp.ne.s32.totalorder %s238, %s252
    %p254 = scmp.eq.s32.totalorder %s34, 0
    %p255 = por %p253, %p254
    %s257 = sadd.s32 %s256, 1
    %p260 = scmp.eq.s32.totalorder %s28, 1
    %p261 = scmp.ne.s32.totalorder %s256, %s258
    %p262 = scmp.eq.s32.totalorder %s28, 0
    %p263 = por %p261, %p262
    %p264 = scmp.ne.s32.totalorder %s256, %s258
    %p265 = scmp.eq.s32.totalorder %s33, 1
    %p266 = por %p264, %p265
    %p267 = scmp.ne.s32.totalorder %s258, %s259
    %p268 = scmp.eq.s32.totalorder %s33, 0
    %p269 = por %p267, %p268
    %p270 = scmp.ne.s32.totalorder %s258, %s259
    %p271 = scmp.eq.s32.totalorder %s34, 1
    %p272 = por %p270, %p271
    %p274 = scmp.ne.s32.totalorder %s259, %s273
    %p275 = scmp.eq.s32.totalorder %s34, 0
    %p276 = por %p274, %p275
    %s278 = sadd.s32 %s277, 1
    %p281 = scmp.eq.s32.totalorder %s28, 1
    %p282 = scmp.ne.s32.totalorder %s277, %s279
    %p283 = scmp.eq.s32.totalorder %s28, 0
    %p284 = por %p282, %p283
    %p285 = scmp.ne.s32.totalorder %s277, %s279
    %p286 = scmp.eq.s32.totalorder %s33, 1
    %p287 = por %p285, %p286
    %p288 = scmp.ne.s32.totalorder %s279, %s280
    %p289 = scmp.eq.s32.totalorder %s33, 0
    %p290 = por %p288, %p289
    %p291 = scmp.ne.s32.totalorder %s279, %s280
    %p292 = scmp.eq.s32.totalorder %s34, 1
    %p293 = por %p291, %p292
    %p295 = scmp.ne.s32.totalorder %s280, %s294
    %p296 = scmp.eq.s32.totalorder %s34, 0
    %p297 = por %p295, %p296
    %s299 = sadd.s32 %s298, 1
    %p302 = scmp.eq.s32.totalorder %s28, 1
    %p303 = scmp.ne.s32.totalorder %s298, %s300
    %p304 = scmp.eq.s32.totalorder %s28, 0
    %p305 = por %p303, %p304
    %p306 = scmp.ne.s32.totalorder %s298, %s300
    %p307 = scmp.eq.s32.totalorder %s33, 1
    %p308 = por %p306, %p307
    %p309 = scmp.ne.s32.totalorder %s300, %s301
    %p310 = scmp.eq.s32.totalorder %s33, 0
    %p311 = por %p309, %p310
    %p312 = scmp.ne.s32.totalorder %s300, %s301
    %p313 = scmp.eq.s32.totalorder %s34, 1
    %p314 = por %p312, %p313
    %p316 = scmp.ne.s32.totalorder %s301, %s315
    %p317 = scmp.eq.s32.totalorder %s34, 0
    %p318 = por %p316, %p317
    %s320 = sadd.s32 %s319, 1
    %p323 = scmp.eq.s32.totalorder %s28, 1
    %p324 = scmp.ne.s32.totalorder %s319, %s321
    %p325 = scmp.eq.s32.totalorder %s28, 0
    %p326 = por %p324, %p325
    %p327 = scmp.ne.s32.totalorder %s319, %s321
    %p328 = scmp.eq.s32.totalorder %s33, 1
    %p329 = por %p327, %p328
    %p330 = scmp.ne.s32.totalorder %s321, %s322
    %p331 = scmp.eq.s32.totalorder %s33, 0
    %p332 = por %p330, %p331
    %p333 = scmp.ne.s32.totalorder %s321, %s322
    %p334 = scmp.eq.s32.totalorder %s34, 1
    %p335 = por %p333, %p334
    %p337 = scmp.ne.s32.totalorder %s322, %s336
    %p338 = scmp.eq.s32.totalorder %s34, 0
    %p339 = por %p337, %p338
    %s341 = sadd.s32 %s340, 1
    %p344 = scmp.eq.s32.totalorder %s28, 1
    %p345 = scmp.ne.s32.totalorder %s340, %s342
    %p346 = scmp.eq.s32.totalorder %s28, 0
    %p347 = por %p345, %p346
    %p348 = scmp.ne.s32.totalorder %s340, %s342
    %p349 = scmp.eq.s32.totalorder %s33, 1
    %p350 = por %p348, %p349
    %p351 = scmp.ne.s32.totalorder %s342, %s343
    %p352 = scmp.eq.s32.totalorder %s33, 0
    %p353 = por %p351, %p352
    %p354 = scmp.ne.s32.totalorder %s342, %s343
    %p355 = scmp.eq.s32.totalorder %s34, 1
    %p356 = por %p354, %p355
    %p358 = scmp.ne.s32.totalorder %s343, %s357
    %p359 = scmp.eq.s32.totalorder %s34, 0
    %p360 = por %p358, %p359
    %s362 = sadd.s32 %s361, 1
    %p365 = scmp.eq.s32.totalorder %s28, 1
    %p366 = scmp.ne.s32.totalorder %s361, %s363
    %p367 = scmp.eq.s32.totalorder %s28, 0
    %p368 = por %p366, %p367
    %p369 = scmp.ne.s32.totalorder %s361, %s363
    %p370 = scmp.eq.s32.totalorder %s33, 1
    %p371 = por %p369, %p370
    %p372 = scmp.ne.s32.totalorder %s363, %s364
    %p373 = scmp.eq.s32.totalorder %s33, 0
    %p374 = por %p372, %p373
    %p375 = scmp.ne.s32.totalorder %s363, %s364
    %p376 = scmp.eq.s32.totalorder %s34, 1
    %p377 = por %p375, %p376
    %p379 = scmp.ne.s32.totalorder %s364, %s378
    %p380 = scmp.eq.s32.totalorder %s34, 0
    %p381 = por %p379, %p380
    %s383 = sadd.s32 %s382, 1
    %p386 = scmp.eq.s32.totalorder %s28, 1
    %p387 = scmp.ne.s32.totalorder %s382, %s384
    %p388 = scmp.eq.s32.totalorder %s28, 0
    %p389 = por %p387, %p388
    %p390 = scmp.ne.s32.totalorder %s382, %s384
    %p391 = scmp.eq.s32.totalorder %s33, 1
    %p392 = por %p390, %p391
    %p393 = scmp.ne.s32.totalorder %s384, %s385
    %p394 = scmp.eq.s32.totalorder %s33, 0
    %p395 = por %p393, %p394
    %p396 = scmp.ne.s32.totalorder %s384, %s385
    %p397 = scmp.eq.s32.totalorder %s34, 1
    %p398 = por %p396, %p397
    %p400 = scmp.ne.s32.totalorder %s385, %s399
    %p401 = scmp.eq.s32.totalorder %s34, 0
    %p402 = por %p400, %p401
    %s404 = sadd.s32 %s403, 1
    %p407 = scmp.eq.s32.totalorder %s28, 1
    %p408 = scmp.ne.s32.totalorder %s403, %s405
    %p409 = scmp.eq.s32.totalorder %s28, 0
    %p410 = por %p408, %p409
    %p411 = scmp.ne.s32.totalorder %s403, %s405
    %p412 = scmp.eq.s32.totalorder %s33, 1
    %p413 = por %p411, %p412
    %p414 = scmp.ne.s32.totalorder %s405, %s406
    %p415 = scmp.eq.s32.totalorder %s33, 0
    %p416 = por %p414, %p415
    %p417 = scmp.ne.s32.totalorder %s405, %s406
    %p418 = scmp.eq.s32.totalorder %s34, 1
    %p419 = por %p417, %p418
    %p421 = scmp.ne.s32.totalorder %s406, %s420
    %p422 = scmp.eq.s32.totalorder %s34, 0
    %p423 = por %p421, %p422
    %s425 = sadd.s32 %s424, 1
    %p428 = scmp.eq.s32.totalorder %s28, 1
    %p429 = scmp.ne.s32.totalorder %s424, %s426
    %p430 = scmp.eq.s32.totalorder %s28, 0
    %p431 = por %p429, %p430
    %p432 = scmp.ne.s32.totalorder %s424, %s426
    %p433 = scmp.eq.s32.totalorder %s33, 1
    %p434 = por %p432, %p433
    %p435 = scmp.ne.s32.totalorder %s426, %s427
    %p436 = scmp.eq.s32.totalorder %s33, 0
    %p437 = por %p435, %p436
    %p438 = scmp.ne.s32.totalorder %s426, %s427
    %p439 = scmp.eq.s32.totalorder %s34, 1
    %p440 = por %p438, %p439
    %p442 = scmp.ne.s32.totalorder %s427, %s441
    %p443 = scmp.eq.s32.totalorder %s34, 0
    %p444 = por %p442, %p443
    %s445 = ssub.s32 %s28, %s35
    %p446 = scmp.eq.s32.totalorder %s445, 0
    %s448 = sadd.s32 %s447, 1
    %s449 = scalar_select %p446, %s447, %s448
    %p452 = pneg %p446
    %p453 = scmp.eq.s32.totalorder %s28, 1
    %p454 = por %p452, %p453
    %p455 = scmp.ne.s32.totalorder %s447, %s450
    %p456 = scmp.eq.s32.totalorder %s28, 0
    %p457 = por %p455, %p456
    %p458 = scmp.ne.s32.totalorder %s447, %s450
    %p459 = scmp.eq.s32.totalorder %s33, 1
    %p460 = por %p458, %p459
    %p461 = scmp.ne.s32.totalorder %s450, %s451
    %p462 = scmp.eq.s32.totalorder %s33, 0
    %p463 = por %p461, %p462
    %p464 = scmp.ne.s32.totalorder %s450, %s451
    %p465 = scmp.eq.s32.totalorder %s34, 1
    %p466 = por %p464, %p465
    %p468 = scmp.ne.s32.totalorder %s451, %s467
    %p469 = scmp.eq.s32.totalorder %s34, 0
    %p470 = por %p468, %p469
    %s471 = ssub.s32 %s28, %s35
    %p472 = scmp.eq.s32.totalorder %s471, 0
    %s474 = sadd.s32 %s473, 1
    %s475 = scalar_select %p472, %s473, %s474
    %p478 = pneg %p472
    %p479 = scmp.eq.s32.totalorder %s28, 1
    %p480 = por %p478, %p479
    %p481 = scmp.ne.s32.totalorder %s473, %s476
    %p482 = scmp.eq.s32.totalorder %s28, 0
    %p483 = por %p481, %p482
    %p484 = scmp.ne.s32.totalorder %s473, %s476
    %p485 = scmp.eq.s32.totalorder %s33, 1
    %p486 = por %p484, %p485
    %p487 = scmp.ne.s32.totalorder %s476, %s477
    %p488 = scmp.eq.s32.totalorder %s33, 0
    %p489 = por %p487, %p488
    %p490 = scmp.ne.s32.totalorder %s476, %s477
    %p491 = scmp.eq.s32.totalorder %s34, 1
    %p492 = por %p490, %p491
    %p494 = scmp.ne.s32.totalorder %s477, %s493
    %p495 = scmp.eq.s32.totalorder %s34, 0
    %p496 = por %p494, %p495
    %s497 = ssub.s32 %s28, %s35
    %p498 = scmp.eq.s32.totalorder %s497, 0
    %s500 = sadd.s32 %s499, 1
    %s501 = scalar_select %p498, %s499, %s500
    %p504 = pneg %p498
    %p505 = scmp.eq.s32.totalorder %s28, 1
    %p506 = por %p504, %p505
    %p507 = scmp.ne.s32.totalorder %s499, %s502
    %p508 = scmp.eq.s32.totalorder %s28, 0
    %p509 = por %p507, %p508
    %p510 = scmp.ne.s32.totalorder %s499, %s502
    %p511 = scmp.eq.s32.totalorder %s33, 1
    %p512 = por %p510, %p511
    %p513 = scmp.ne.s32.totalorder %s502, %s503
    %p514 = scmp.eq.s32.totalorder %s33, 0
    %p515 = por %p513, %p514
    %p516 = scmp.ne.s32.totalorder %s502, %s503
    %p517 = scmp.eq.s32.totalorder %s34, 1
    %p518 = por %p516, %p517
    %p520 = scmp.ne.s32.totalorder %s503, %s519
    %p521 = scmp.eq.s32.totalorder %s34, 0
    %p522 = por %p520, %p521
    %p523 = scmp.le.s32.totalorder 1, %s28
    %p524 = scmp.lt.s32.totalorder %s28, 3
    %p525 = pnand %p523, %p524
    %p526 = pneg %p525
    // Predicated region
    $region9: #{causal_lstm_cell.1} parent=5 // pred_check
      _
    $region10: #{causal_lstm_cell.1} parent=5 // pred_check_branch
      %528 = sbr.rel (%p525) target = $region12
    $region11: #{causal_lstm_cell.1} parent=5 // pred_region
      %s529 = ssub.s32 %s28, 1
      // Predicated region
      $region13: #{causal_lstm_cell.1} parent=11 // pred_check
        %p530 = pneg %p101
      $region14: #{causal_lstm_cell.1} parent=11 // pred_check_branch
        %532 = sbr.rel (%p530) target = $region16
      $region15: #{causal_lstm_cell.1} parent=11 // pred_region
        _
      $region16: #{causal_lstm_cell.1} parent=11 // pred_fallthru
        _
      // Predicated region
      $region17: #{causal_lstm_cell.1} parent=11 // pred_check
        %p533 = pneg %p122
      $region18: #{causal_lstm_cell.1} parent=11 // pred_check_branch
        %535 = sbr.rel (%p533) target = $region20
      $region19: #{causal_lstm_cell.1} parent=11 // pred_region
        _
      $region20: #{causal_lstm_cell.1} parent=11 // pred_fallthru
        _
      // Predicated region
      $region21: #{causal_lstm_cell.1} parent=11 // pred_check
        %p536 = pneg %p143
      $region22: #{causal_lstm_cell.1} parent=11 // pred_check_branch
        %538 = sbr.rel (%p536) target = $region24
      $region23: #{causal_lstm_cell.1} parent=11 // pred_region
        _
      $region24: #{causal_lstm_cell.1} parent=11 // pred_fallthru
        _
      // Predicated region
      $region25: #{causal_lstm_cell.1} parent=11 // pred_check
        %p539 = pneg %p164
      $region26: #{causal_lstm_cell.1} parent=11 // pred_check_branch
        %541 = sbr.rel (%p539) target = $region28
      $region27: #{causal_lstm_cell.1} parent=11 // pred_region
        _
      $region28: #{causal_lstm_cell.1} parent=11 // pred_fallthru
        _
      // Predicated region
      $region29: #{causal_lstm_cell.1} parent=11 // pred_check
        %p542 = pneg %p185
      $region30: #{causal_lstm_cell.1} parent=11 // pred_check_branch
        %544 = sbr.rel (%p542) target = $region32
      $region31: #{causal_lstm_cell.1} parent=11 // pred_region
        _
      $region32: #{causal_lstm_cell.1} parent=11 // pred_fallthru
        _
      // Predicated region
      $region33: #{causal_lstm_cell.1} parent=11 // pred_check
        %p545 = pneg %p206
      $region34: #{causal_lstm_cell.1} parent=11 // pred_check_branch
        %547 = sbr.rel (%p545) target = $region36
      $region35: #{causal_lstm_cell.1} parent=11 // pred_region
        _
      $region36: #{causal_lstm_cell.1} parent=11 // pred_fallthru
        _
      // Predicated region
      $region37: #{causal_lstm_cell.1} parent=11 // pred_check
        %p548 = pneg %p227
      $region38: #{causal_lstm_cell.1} parent=11 // pred_check_branch
        %550 = sbr.rel (%p548) target = $region40
      $region39: #{causal_lstm_cell.1} parent=11 // pred_region
        _
      $region40: #{causal_lstm_cell.1} parent=11 // pred_fallthru
        _
      // Predicated region
      $region41: #{causal_lstm_cell.1} parent=11 // pred_check
        %p551 = pneg %p248
      $region42: #{causal_lstm_cell.1} parent=11 // pred_check_branch
        %553 = sbr.rel (%p551) target = $region44
      $region43: #{causal_lstm_cell.1} parent=11 // pred_region
        _
      $region44: #{causal_lstm_cell.1} parent=11 // pred_fallthru
        _
      // Predicated region
      $region45: #{causal_lstm_cell.1} parent=11 // pred_check
        %p554 = pneg %p269
      $region46: #{causal_lstm_cell.1} parent=11 // pred_check_branch
        %556 = sbr.rel (%p554) target = $region48
      $region47: #{causal_lstm_cell.1} parent=11 // pred_region
        _
      $region48: #{causal_lstm_cell.1} parent=11 // pred_fallthru
        _
      // Predicated region
      $region49: #{causal_lstm_cell.1} parent=11 // pred_check
        %p557 = pneg %p290
      $region50: #{causal_lstm_cell.1} parent=11 // pred_check_branch
        %559 = sbr.rel (%p557) target = $region52
      $region51: #{causal_lstm_cell.1} parent=11 // pred_region
        _
      $region52: #{causal_lstm_cell.1} parent=11 // pred_fallthru
        _
      // Predicated region
      $region53: #{causal_lstm_cell.1} parent=11 // pred_check
        %p560 = pneg %p311
      $region54: #{causal_lstm_cell.1} parent=11 // pred_check_branch
        %562 = sbr.rel (%p560) target = $region56
      $region55: #{causal_lstm_cell.1} parent=11 // pred_region
        _
      $region56: #{causal_lstm_cell.1} parent=11 // pred_fallthru
        _
      // Predicated region
      $region57: #{causal_lstm_cell.1} parent=11 // pred_check
        %p563 = pneg %p332
      $region58: #{causal_lstm_cell.1} parent=11 // pred_check_branch
        %565 = sbr.rel (%p563) target = $region60
      $region59: #{causal_lstm_cell.1} parent=11 // pred_region
        _
      $region60: #{causal_lstm_cell.1} parent=11 // pred_fallthru
        _
      // Predicated region
      $region61: #{causal_lstm_cell.1} parent=11 // pred_check
        %p566 = pneg %p353
      $region62: #{causal_lstm_cell.1} parent=11 // pred_check_branch
        %568 = sbr.rel (%p566) target = $region64
      $region63: #{causal_lstm_cell.1} parent=11 // pred_region
        _
      $region64: #{causal_lstm_cell.1} parent=11 // pred_fallthru
        _
      // Predicated region
      $region65: #{causal_lstm_cell.1} parent=11 // pred_check
        %p569 = pneg %p374
      $region66: #{causal_lstm_cell.1} parent=11 // pred_check_branch
        %571 = sbr.rel (%p569) target = $region68
      $region67: #{causal_lstm_cell.1} parent=11 // pred_region
        _
      $region68: #{causal_lstm_cell.1} parent=11 // pred_fallthru
        _
      // Predicated region
      $region69: #{causal_lstm_cell.1} parent=11 // pred_check
        %p572 = pneg %p395
      $region70: #{causal_lstm_cell.1} parent=11 // pred_check_branch
        %574 = sbr.rel (%p572) target = $region72
      $region71: #{causal_lstm_cell.1} parent=11 // pred_region
        _
      $region72: #{causal_lstm_cell.1} parent=11 // pred_fallthru
        _
      // Predicated region
      $region73: #{causal_lstm_cell.1} parent=11 // pred_check
        %p575 = pneg %p416
      $region74: #{causal_lstm_cell.1} parent=11 // pred_check_branch
        %577 = sbr.rel (%p575) target = $region76
      $region75: #{causal_lstm_cell.1} parent=11 // pred_region
        _
      $region76: #{causal_lstm_cell.1} parent=11 // pred_fallthru
        _
      // Predicated region
      $region77: #{causal_lstm_cell.1} parent=11 // pred_check
        %p578 = pneg %p437
      $region78: #{causal_lstm_cell.1} parent=11 // pred_check_branch
        %580 = sbr.rel (%p578) target = $region80
      $region79: #{causal_lstm_cell.1} parent=11 // pred_region
        _
      $region80: #{causal_lstm_cell.1} parent=11 // pred_fallthru
        _
    $region12: #{causal_lstm_cell.1} parent=5 // pred_fallthru
      _
    %p581 = scmp.lt.s32.totalorder %s28, 2
    // Predicated region
    $region81: #{causal_lstm_cell.1} parent=5 // pred_check
      %p582 = pneg %p581
    $region82: #{causal_lstm_cell.1} parent=5 // pred_check_branch
      %584 = sbr.rel (%p582) target = $region84
    $region83: #{causal_lstm_cell.1} parent=5 // pred_region
      // Predicated region
      $region85: #{causal_lstm_cell.1} parent=83 // pred_check
        %p585 = pneg %p48
      $region86: #{causal_lstm_cell.1} parent=83 // pred_check_branch
        %587 = sbr.rel (%p585) target = $region88
      $region87: #{causal_lstm_cell.1} parent=83 // pred_region
        %p588 = scmp.lt.s32.totalorder %s28, 1
        %s589 = scalar_select %p588, %s28, 1
        %s590 = smul.addr %s589, 16
        %s591 = smul.addr %s590, 8
        %s592 = scalar_lea.vmem %s0, %s591
      $region88: #{causal_lstm_cell.1} parent=83 // pred_fallthru
        _
      // Predicated region
      $region89: #{causal_lstm_cell.1} parent=83 // pred_check
        %p593 = pneg %p74
      $region90: #{causal_lstm_cell.1} parent=83 // pred_check_branch
        %595 = sbr.rel (%p593) target = $region92
      $region91: #{causal_lstm_cell.1} parent=83 // pred_region
        %p596 = scmp.lt.s32.totalorder %s28, 1
        %s597 = scalar_select %p596, %s28, 1
        %s598 = smul.addr %s597, 3
        %s599 = smul.addr %s598, 8
        %s600 = scalar_lea.vmem %s1, %s599
      $region92: #{causal_lstm_cell.1} parent=83 // pred_fallthru
        _
    $region84: #{causal_lstm_cell.1} parent=5 // pred_fallthru
      _
    %p601 = scmp.le.s32.totalorder 1, %s28
    %p602 = scmp.lt.s32.totalorder %s28, 3
    %p603 = pnand %p601, %p602
    %p604 = pneg %p603
    // Predicated region
    $region93: #{causal_lstm_cell.1} parent=5 // pred_check
      _
    $region94: #{causal_lstm_cell.1} parent=5 // pred_check_branch
      %606 = sbr.rel (%p603) target = $region96
    $region95: #{causal_lstm_cell.1} parent=5 // pred_region
      %s607 = ssub.s32 %s28, 1
      %p608 = scmp.lt.s32.totalorder %s33, 1
      %s609 = scalar_select %p608, %s33, 1
      %s610 = smul.addr %s609, 16
      %s611 = smul.addr %s610, 8
      %s612 = scalar_lea.vmem %s0, %s611
      %p613 = pneg %p54
      %p614 = pneg %p51
      %p615 = scmp.lt.s32.totalorder %s33, 1
      %s616 = scalar_select %p615, %s33, 1
      %s617 = smul.addr %s616, 3
      %s618 = smul.addr %s617, 8
      %s619 = scalar_lea.vmem %s1, %s618
      %p620 = pneg %p80
      %p621 = pneg %p77
      %p622 = pneg %p101
      %p623 = pneg %p98
      %p624 = pneg %p122
      %p625 = pneg %p119
      %p626 = pneg %p143
      %p627 = pneg %p140
      %p628 = pneg %p164
      %p629 = pneg %p161
      %p630 = pneg %p185
      %p631 = pneg %p182
      %p632 = pneg %p206
      %p633 = pneg %p203
      %p634 = pneg %p227
      %p635 = pneg %p224
      %p636 = pneg %p248
      %p637 = pneg %p245
      %p638 = pneg %p269
      %p639 = pneg %p266
      %p640 = pneg %p290
      %p641 = pneg %p287
      %p642 = pneg %p311
      %p643 = pneg %p308
      %p644 = pneg %p332
      %p645 = pneg %p329
      %p646 = pneg %p353
      %p647 = pneg %p350
      %p648 = pneg %p374
      %p649 = pneg %p371
      %p650 = pneg %p395
      %p651 = pneg %p392
      %p652 = pneg %p416
      %p653 = pneg %p413
      %p654 = pneg %p437
      %p655 = pneg %p434
      %p656 = pneg %p463
      %p657 = pneg %p460
      %p658 = scmp.lt.s32.totalorder %s33, 1
      %s659 = scalar_select %p658, %s33, 1
      %s660 = smul.addr %s659, 3
      %s661 = smul.addr %s660, 8
      %s662 = scalar_lea.vmem %s19, %s661
      %p663 = pneg %p489
      %p664 = pneg %p486
      %p665 = scmp.lt.s32.totalorder %s33, 1
      %s666 = scalar_select %p665, %s33, 1
      %s667 = smul.addr %s666, 3
      %s668 = smul.addr %s667, 8
      %s669 = scalar_lea.vmem %s20, %s668
      %p670 = pneg %p515
      %p671 = pneg %p512
      %p672 = scmp.lt.s32.totalorder %s33, 1
      %s673 = scalar_select %p672, %s33, 1
      %s674 = smul.addr %s673, 3
      %s675 = smul.addr %s674, 8
      %s676 = scalar_lea.vmem %s21, %s675
      %p677 = scmp.lt.s32.totalorder %s33, 1
      %s678 = scalar_select %p677, %s33, 1
      %s679 = smul.addr %s678, 16
      %s680 = smul.addr %s679, 8
      %s681 = scalar_lea.vmem %s0, %s680
      %p682 = scmp.lt.s32.totalorder %s33, 1
      %s683 = scalar_select %p682, %s33, 1
      %s684 = smul.addr %s683, 3
      %s685 = smul.addr %s684, 8
      %s686 = scalar_lea.vmem %s1, %s685
      %p687 = scmp.lt.s32.totalorder %s33, 1
      %s688 = scalar_select %p687, %s33, 1
      %s689 = smul.addr %s688, 3
      %s690 = smul.addr %s689, 8
      %s691 = scalar_lea.vmem %s19, %s690
      %p692 = scmp.lt.s32.totalorder %s33, 1
      %s693 = scalar_select %p692, %s33, 1
      %s694 = smul.addr %s693, 3
      %s695 = smul.addr %s694, 8
      %s696 = scalar_lea.vmem %s20, %s695
      %p697 = scmp.lt.s32.totalorder %s33, 1
      %s698 = scalar_select %p697, %s33, 1
      %s699 = smul.addr %s698, 3
      %s700 = smul.addr %s699, 8
      %s701 = scalar_lea.vmem %s21, %s700
      %v703 = vld [vmem:[%s2] sm:$0x7]
      %v704 = vld [vmem:[%s3] sm:$0xff]
      %v705 = vld [vmem:[%s3 + $0x8] sm:$0xff]
      %v706 = vld [vmem:[%s3 + $0x10] sm:$0xff]
      %v707 = vld [vmem:[%s3 + $0x18] sm:$0xff]
      %v708 = vld [vmem:[%s3 + $0x20] sm:$0xff]
      %v709 = vld [vmem:[%s3 + $0x28] sm:$0xff]
      %v710 = vld [vmem:[%s3 + $0x30] sm:$0xff]
      %v711 = vld [vmem:[%s3 + $0x38] sm:$0xff]
      %v712 = vld [vmem:[%s3 + $0x40] sm:$0xff]
      %v713 = vld [vmem:[%s3 + $0x48] sm:$0xff]
      %v714 = vld [vmem:[%s3 + $0x50] sm:$0xff]
      %v715 = vld [vmem:[%s3 + $0x58] sm:$0xff]
      %v716 = vld [vmem:[%s3 + $0x60] sm:$0xff]
      %v717 = vld [vmem:[%s3 + $0x68] sm:$0xff]
      %v718 = vld [vmem:[%s3 + $0x70] sm:$0xff]
      %v719 = vld [vmem:[%s3 + $0x78] sm:$0xff]
      %v720 = vld [vmem:[%s3 + $0x80] sm:$0xff]
      %v721 = vld [vmem:[%s3 + $0x88] sm:$0xff]
      %v722 = vld [vmem:[%s3 + $0x90] sm:$0xff]
      %v723 = vld [vmem:[%s3 + $0x98] sm:$0xff]
      %v724 = vld [vmem:[%s3 + $0xa0] sm:$0xff]
      %v725 = vld [vmem:[%s3 + $0xa8] sm:$0xff]
      %v726 = vld [vmem:[%s3 + $0xb0] sm:$0xff]
      %v727 = vld [vmem:[%s3 + $0xb8] sm:$0xff]
      %v728 = vld [vmem:[%s3 + $0xc0] sm:$0xff]
      %v729 = vld [vmem:[%s3 + $0xc8] sm:$0xff]
      %v730 = vld [vmem:[%s3 + $0xd0] sm:$0xff]
      %v731 = vld [vmem:[%s3 + $0xd8] sm:$0xff]
      %v732 = vld [vmem:[%s3 + $0xe0] sm:$0xff]
      %v733 = vld [vmem:[%s3 + $0xe8] sm:$0xff]
      %v734 = vld [vmem:[%s3 + $0xf0] sm:$0xff]
      %v735 = vld [vmem:[%s3 + $0xf8] sm:$0xff]
      %v736 = vld [vmem:[%s3 + $0x100] sm:$0xff]
      %v737 = vld [vmem:[%s3 + $0x108] sm:$0xff]
      %v738 = vld [vmem:[%s3 + $0x110] sm:$0xff]
      %v739 = vld [vmem:[%s3 + $0x118] sm:$0xff]
      %v740 = vld [vmem:[%s3 + $0x120] sm:$0xff]
      %v741 = vld [vmem:[%s3 + $0x128] sm:$0xff]
      %v742 = vld [vmem:[%s3 + $0x130] sm:$0xff]
      %v743 = vld [vmem:[%s3 + $0x138] sm:$0xff]
      %v744 = vld [vmem:[%s3 + $0x140] sm:$0xff]
      %v745 = vld [vmem:[%s3 + $0x148] sm:$0xff]
      %v746 = vld [vmem:[%s3 + $0x150] sm:$0xff]
      %v747 = vld [vmem:[%s3 + $0x158] sm:$0xff]
      %v748 = vld [vmem:[%s3 + $0x160] sm:$0xff]
      %v749 = vld [vmem:[%s3 + $0x168] sm:$0xff]
      %v750 = vld [vmem:[%s3 + $0x170] sm:$0xff]
      %v751 = vld [vmem:[%s3 + $0x178] sm:$0xff]
      %v752 = vld [vmem:[%s681] sm:$0xff]
      %v753 = vld [vmem:[%s681 + $0x8] sm:$0xff]
      %v754 = vld [vmem:[%s681 + $0x10] sm:$0xff]
      %v755 = vld [vmem:[%s681 + $0x18] sm:$0xff]
      %v756 = vld [vmem:[%s681 + $0x20] sm:$0xff]
      %v757 = vld [vmem:[%s681 + $0x28] sm:$0xff]
      %v758 = vld [vmem:[%s681 + $0x30] sm:$0xff]
      %v759 = vld [vmem:[%s681 + $0x38] sm:$0xff]
      %v760 = vld [vmem:[%s681 + $0x40] sm:$0xff]
      %v761 = vld [vmem:[%s681 + $0x48] sm:$0xff]
      %v762 = vld [vmem:[%s681 + $0x50] sm:$0xff]
      %v763 = vld [vmem:[%s681 + $0x58] sm:$0xff]
      %v764 = vld [vmem:[%s681 + $0x60] sm:$0xff]
      %v765 = vld [vmem:[%s681 + $0x68] sm:$0xff]
      %v766 = vld [vmem:[%s681 + $0x70] sm:$0xff]
      %v767 = vld [vmem:[%s681 + $0x78] sm:$0xff]
      %v768 = vpack.c.bf16 %v756, %v752
      %v769 = vpack.c.bf16 %v757, %v753
      %v770 = vpack.c.bf16 %v758, %v754
      %v771 = vpack.c.bf16 %v759, %v755
      %v772 = vpack.c.bf16 %v764, %v760
      %v773 = vpack.c.bf16 %v765, %v761
      %v774 = vpack.c.bf16 %v766, %v762
      %v775 = vpack.c.bf16 %v767, %v763
      %v776 = vld [vmem:[%s686] sm:$0xff]
      %v777 = vld [vmem:[%s686 + $0x8] sm:$0xff]
      %v778 = vld [vmem:[%s686 + $0x10] sm:$0xff]
      %v779 = vld [vmem:[%s4] sm:$0xf]
      %v780 = vld [vmem:[%s4 + $0x4] sm:$0xf]
      %v781 = vld [vmem:[%s4 + $0x8] sm:$0xf]
      %v782 = vld [vmem:[%s4 + $0xc] sm:$0xf]
      %v783 = vld [vmem:[%s4 + $0x10] sm:$0xf]
      %v784 = vld [vmem:[%s4 + $0x14] sm:$0xf]
      %v785 = vld [vmem:[%s4 + $0x18] sm:$0xf]
      %v786 = vld [vmem:[%s4 + $0x1c] sm:$0xf]
      %v787 = vld [vmem:[%s4 + $0x20] sm:$0xf]
      %v788 = vld [vmem:[%s4 + $0x24] sm:$0xf]
      %v789 = vld [vmem:[%s4 + $0x28] sm:$0xf]
      %v790 = vld [vmem:[%s4 + $0x2c] sm:$0xf]
      %v791 = vld [vmem:[%s4 + $0x30] sm:$0xf]
      %v792 = vld [vmem:[%s4 + $0x34] sm:$0xf]
      %v793 = vld [vmem:[%s4 + $0x38] sm:$0xf]
      %v794 = vld [vmem:[%s4 + $0x3c] sm:$0xf]
      %v795 = vld [vmem:[%s4 + $0x40] sm:$0xf]
      %s796 = scalar_lea.vmem %s4, 68
      %v797 = vld [vmem:[%s796] sm:$0xf]
      %v798 = vld [vmem:[%s796 + $0x4] sm:$0xf]
      %v799 = vld [vmem:[%s796 + $0x8] sm:$0xf]
      %v800 = vld [vmem:[%s796 + $0xc] sm:$0xf]
      %v801 = vld [vmem:[%s796 + $0x10] sm:$0xf]
      %v802 = vld [vmem:[%s796 + $0x14] sm:$0xf]
      %v803 = vld [vmem:[%s796 + $0x18] sm:$0xf]
      %v804 = vld [vmem:[%s796 + $0x1c] sm:$0xf]
      %v805 = vld [vmem:[%s796 + $0x20] sm:$0xf]
      %v806 = vld [vmem:[%s796 + $0x24] sm:$0xf]
      %v807 = vld [vmem:[%s796 + $0x28] sm:$0xf]
      %v808 = vld [vmem:[%s796 + $0x2c] sm:$0xf]
      %v809 = vld [vmem:[%s796 + $0x30] sm:$0xf]
      %v810 = vld [vmem:[%s796 + $0x34] sm:$0xf]
      %v811 = vld [vmem:[%s796 + $0x38] sm:$0xf]
      %v812 = vld [vmem:[%s796 + $0x3c] sm:$0xf]
      %v813 = vld [vmem:[%s796 + $0x40] sm:$0xf]
      %v831 = vunpack.c.l.b16 %v797
      %v832 = vunpack.c.l.b16 %v798
      %v833 = vunpack.c.l.b16 %v799
      %v834 = vunpack.c.l.b16 %v800
      %v835 = vunpack.c.l.b16 %v801
      %v836 = vunpack.c.l.b16 %v802
      %v837 = vunpack.c.l.b16 %v803
      %v838 = vunpack.c.l.b16 %v804
      %v839 = vunpack.c.l.b16 %v805
      %v840 = vunpack.c.l.b16 %v806
      %v841 = vunpack.c.l.b16 %v807
      %v842 = vunpack.c.l.b16 %v808
      %v843 = vunpack.c.l.b16 %v809
      %v844 = vunpack.c.l.b16 %v810
      %v845 = vunpack.c.l.b16 %v811
      %v846 = vunpack.c.l.b16 %v812
      %v847 = vunpack.c.l.b16 %v813
      %v848 = vpack.c.b16 %v832, %v831
      %v849 = vpack.c.b16 %v834, %v833
      %v850 = vpack.c.b16 %v836, %v835
      %v851 = vpack.c.b16 %v838, %v837
      %v852 = vpack.c.b16 %v840, %v839
      %v853 = vpack.c.b16 %v842, %v841
      %v854 = vpack.c.b16 %v844, %v843
      %v855 = vpack.c.b16 %v846, %v845
      %v856 = vpack.c.b16 %v847, %v847
      %865 = vrot.lane.b32.xlu0 %v768, 127
      %v866 = vpop.permute.xlu0 %865
      %867 = vrot.lane.b32.xlu0 %v769, 127
      %v868 = vpop.permute.xlu0 %867
      %869 = vrot.lane.b32.xlu0 %v770, 127
      %v870 = vpop.permute.xlu0 %869
      %871 = vrot.lane.b32.xlu0 %v771, 127
      %v872 = vpop.permute.xlu0 %871
      %873 = vrot.lane.b32.xlu0 %v772, 127
      %v874 = vpop.permute.xlu0 %873
      %875 = vrot.lane.b32.xlu0 %v773, 127
      %v876 = vpop.permute.xlu0 %875
      %877 = vrot.lane.b32.xlu0 %v774, 127
      %v878 = vpop.permute.xlu0 %877
      %879 = vrot.lane.b32.xlu0 %v775, 127
      %v880 = vpop.permute.xlu0 %879
      %vm881 = vcmask 1039360
      %v882 = vsel %vm881, %v866, %v868
      %v883 = vsel %vm881, %v868, %v870
      %v884 = vsel %vm881, %v870, %v872
      %v885 = vsel %vm881, %v874, %v876
      %v886 = vsel %vm881, %v876, %v878
      %v887 = vsel %vm881, %v878, %v880
      %vm894 = vcmask 261120
      %v896 = vsel %vm894, %v848, 0
      %v899 = vsel %vm894, %v849, 0
      %v902 = vsel %vm894, %v850, 0
      %v905 = vsel %vm894, %v851, 0
      %v908 = vsel %vm894, %v852, 0
      %v911 = vsel %vm894, %v853, 0
      %v914 = vsel %vm894, %v854, 0
      %v917 = vsel %vm894, %v855, 0
      %v920 = vsel %vm894, %v856, 0
      %922 = vmatprep.subr.bf16.mxu0 0
      %923 = vmatpush1.bf16.msra.mxu0 0
      %924 = vmatprep.subr.bf16.mxu0 0
      %925 = vmatpush1.bf16.msra.mxu0 0
      %926 = vmatprep.subr.bf16.mxu0 0
      %927 = vmatpush1.bf16.msra.mxu0 0
      %928 = vmatprep.subr.bf16.mxu0 0
      %929 = vmatpush1.bf16.msra.mxu0 0
      %930 = vmatprep.subr.bf16.mxu0 0
      %931 = vmatpush1.bf16.msra.mxu0 0
      %932 = vmatprep.subr.bf16.mxu0 0
      %933 = vmatpush1.bf16.msra.mxu0 0
      %934 = vmatprep.subr.bf16.mxu0 %v886
      %935 = vmatpush1.bf16.msra.mxu0 %v885
      %936 = vmatprep.subr.bf16.mxu0 %v883
      %937 = vmatpush1.bf16.msra.mxu0 %v882
      %938 = vmatprep.subr.bf16.mxu0 0
      %939 = vmatpush2.bf16.msra.mxu0 0
      %940 = vmatprep.subr.bf16.mxu0 0
      %941 = vmatpush2.bf16.msra.mxu0 0
      %942 = vmatprep.subr.bf16.mxu0 0
      %943 = vmatpush2.bf16.msra.mxu0 0
      %944 = vmatprep.subr.bf16.mxu0 0
      %945 = vmatpush2.bf16.msra.mxu0 0
      %946 = vmatprep.subr.bf16.mxu0 0
      %947 = vmatpush2.bf16.msra.mxu0 0
      %948 = vmatprep.subr.bf16.mxu0 0
      %949 = vmatpush2.bf16.msra.mxu0 0
      %950 = vmatprep.subr.bf16.mxu0 0
      %951 = vmatpush2.bf16.msra.mxu0 0
      %952 = vmatprep.subr.bf16.mxu0 0
      %953 = vmatpush2.bf16.msra.mxu0 0
      %954 = vmatprep.mubr.bf16.mxu0 0
      %955 = vmatmul.mubr.bf16.gmra.mxu0 %v896
      %v956 = vpop.f32.mrf.mxu0
      %v957 = vadd.f32 0.0, %v956
      %v958 = vpop.f32.mrf.mxu0
      %v959 = vadd.f32 0.0, %v958
      %v960 = vpop.f32.mrf.mxu0
      %v961 = vadd.f32 0.0, %v960
      %v962 = vpop.f32.mrf.mxu0
      %v963 = vadd.f32 0.0, %v962
      %964 = vmatprep.mubr.bf16.mxu0 0
      %965 = vmatmul.mubr.bf16.gmra.mxu0 %v899
      %v966 = vpop.f32.mrf.mxu0
      %v967 = vadd.f32 0.0, %v966
      %v968 = vpop.f32.mrf.mxu0
      %v969 = vadd.f32 0.0, %v968
      %v970 = vpop.f32.mrf.mxu0
      %v971 = vadd.f32 0.0, %v970
      %v972 = vpop.f32.mrf.mxu0
      %v973 = vadd.f32 0.0, %v972
      %974 = vmatprep.mubr.bf16.mxu0 0
      %975 = vmatmul.mubr.bf16.gmra.mxu0 %v902
      %v976 = vpop.f32.mrf.mxu0
      %v977 = vadd.f32 0.0, %v976
      %v978 = vpop.f32.mrf.mxu0
      %v979 = vadd.f32 0.0, %v978
      %v980 = vpop.f32.mrf.mxu0
      %v981 = vadd.f32 0.0, %v980
      %v982 = vpop.f32.mrf.mxu0
      %v983 = vadd.f32 0.0, %v982
      %984 = vmatprep.mubr.bf16.mxu0 0
      %985 = vmatmul.mubr.bf16.gmra.mxu0 %v905
      %v986 = vpop.f32.mrf.mxu0
      %v987 = vadd.f32 0.0, %v986
      %v988 = vpop.f32.mrf.mxu0
      %v989 = vadd.f32 0.0, %v988
      %v990 = vpop.f32.mrf.mxu0
      %v991 = vadd.f32 0.0, %v990
      %v992 = vpop.f32.mrf.mxu0
      %v993 = vadd.f32 0.0, %v992
      %994 = vmatprep.mubr.bf16.mxu0 0
      %995 = vmatmul.mubr.bf16.gmra.mxu0 %v908
      %v996 = vpop.f32.mrf.mxu0
      %v997 = vadd.f32 0.0, %v996
      %v998 = vpop.f32.mrf.mxu0
      %v999 = vadd.f32 0.0, %v998
      %v1000 = vpop.f32.mrf.mxu0
      %v1001 = vadd.f32 0.0, %v1000
      %v1002 = vpop.f32.mrf.mxu0
      %v1003 = vadd.f32 0.0, %v1002
      %1004 = vmatprep.mubr.bf16.mxu0 0
      %1005 = vmatmul.mubr.bf16.gmra.mxu0 %v911
      %v1006 = vpop.f32.mrf.mxu0
      %v1007 = vadd.f32 0.0, %v1006
      %v1008 = vpop.f32.mrf.mxu0
      %v1009 = vadd.f32 0.0, %v1008
      %v1010 = vpop.f32.mrf.mxu0
      %v1011 = vadd.f32 0.0, %v1010
      %v1012 = vpop.f32.mrf.mxu0
      %v1013 = vadd.f32 0.0, %v1012
      %1014 = vmatprep.mubr.bf16.mxu0 0
      %1015 = vmatmul.mubr.bf16.gmra.mxu0 %v914
      %v1016 = vpop.f32.mrf.mxu0
      %v1017 = vadd.f32 0.0, %v1016
      %v1018 = vpop.f32.mrf.mxu0
      %v1019 = vadd.f32 0.0, %v1018
      %v1020 = vpop.f32.mrf.mxu0
      %v1021 = vadd.f32 0.0, %v1020
      %v1022 = vpop.f32.mrf.mxu0
      %v1023 = vadd.f32 0.0, %v1022
      %1024 = vmatprep.mubr.bf16.mxu0 0
      %1025 = vmatmul.mubr.bf16.gmra.mxu0 %v917
      %v1026 = vpop.f32.mrf.mxu0
      %v1027 = vadd.f32 0.0, %v1026
      %v1028 = vpop.f32.mrf.mxu0
      %v1029 = vadd.f32 0.0, %v1028
      %v1030 = vpop.f32.mrf.mxu0
      %v1031 = vadd.f32 0.0, %v1030
      %v1032 = vpop.f32.mrf.mxu0
      %v1033 = vadd.f32 0.0, %v1032
      %1034 = vmatprep.mubr.bf16.mxu0 0
      %1035 = vmatmul.mubr.bf16.gmra.mxu0 %v920
      %v1036 = vpop.f32.mrf.mxu0
      %v1037 = vadd.f32 0.0, %v1036
      %v1038 = vpop.f32.mrf.mxu0
      %v1039 = vadd.f32 0.0, %v1038
      %v1040 = vpop.f32.mrf.mxu0
      %v1041 = vpop.f32.mrf.mxu0
      %1042 = vdwg.mxu0
      %1043 = vmatprep.subr.bf16.mxu0 0
      %1044 = vmatpush1.bf16.msra.mxu0 0
      %1045 = vmatprep.subr.bf16.mxu0 0
      %1046 = vmatpush1.bf16.msra.mxu0 0
      %1047 = vmatprep.subr.bf16.mxu0 0
      %1048 = vmatpush1.bf16.msra.mxu0 0
      %1049 = vmatprep.subr.bf16.mxu0 0
      %1050 = vmatpush1.bf16.msra.mxu0 0
      %1051 = vmatprep.subr.bf16.mxu0 0
      %1052 = vmatpush1.bf16.msra.mxu0 0
      %1053 = vmatprep.subr.bf16.mxu0 0
      %1054 = vmatpush1.bf16.msra.mxu0 0
      %1055 = vmatprep.subr.bf16.mxu0 0
      %1056 = vmatpush1.bf16.msra.mxu0 %v887
      %1057 = vmatprep.subr.bf16.mxu0 0
      %1058 = vmatpush1.bf16.msra.mxu0 %v884
      %1059 = vmatprep.subr.bf16.mxu0 0
      %1060 = vmatpush2.bf16.msra.mxu0 0
      %1061 = vmatprep.subr.bf16.mxu0 0
      %1062 = vmatpush2.bf16.msra.mxu0 0
      %1063 = vmatprep.subr.bf16.mxu0 0
      %1064 = vmatpush2.bf16.msra.mxu0 0
      %1065 = vmatprep.subr.bf16.mxu0 0
      %1066 = vmatpush2.bf16.msra.mxu0 0
      %1067 = vmatprep.subr.bf16.mxu0 0
      %1068 = vmatpush2.bf16.msra.mxu0 0
      %1069 = vmatprep.subr.bf16.mxu0 0
      %1070 = vmatpush2.bf16.msra.mxu0 0
      %1071 = vmatprep.subr.bf16.mxu0 0
      %1072 = vmatpush2.bf16.msra.mxu0 0
      %1073 = vmatprep.subr.bf16.mxu0 0
      %1074 = vmatpush2.bf16.msra.mxu0 0
      %1075 = vmatprep.mubr.bf16.mxu0 0
      %1076 = vmatmul.mubr.bf16.gmra.mxu0 %v896
      %v1077 = vpop.f32.mrf.mxu0
      %v1078 = vadd.f32 0.0, %v1077
      %v1079 = vpop.f32.mrf.mxu0
      %v1080 = vpop.f32.mrf.mxu0
      %v1081 = vadd.f32 0.0, %v1080
      %v1082 = vpop.f32.mrf.mxu0
      %1083 = vmatprep.mubr.bf16.mxu0 0
      %1084 = vmatmul.mubr.bf16.gmra.mxu0 %v899
      %v1085 = vpop.f32.mrf.mxu0
      %v1086 = vadd.f32 0.0, %v1085
      %v1087 = vpop.f32.mrf.mxu0
      %v1088 = vpop.f32.mrf.mxu0
      %v1089 = vadd.f32 0.0, %v1088
      %v1090 = vpop.f32.mrf.mxu0
      %1091 = vmatprep.mubr.bf16.mxu0 0
      %1092 = vmatmul.mubr.bf16.gmra.mxu0 %v902
      %v1093 = vpop.f32.mrf.mxu0
      %v1094 = vadd.f32 0.0, %v1093
      %v1095 = vpop.f32.mrf.mxu0
      %v1096 = vpop.f32.mrf.mxu0
      %v1097 = vadd.f32 0.0, %v1096
      %v1098 = vpop.f32.mrf.mxu0
      %1099 = vmatprep.mubr.bf16.mxu0 0
      %1100 = vmatmul.mubr.bf16.gmra.mxu0 %v905
      %v1101 = vpop.f32.mrf.mxu0
      %v1102 = vadd.f32 0.0, %v1101
      %v1103 = vpop.f32.mrf.mxu0
      %v1104 = vpop.f32.mrf.mxu0
      %v1105 = vadd.f32 0.0, %v1104
      %v1106 = vpop.f32.mrf.mxu0
      %1107 = vmatprep.mubr.bf16.mxu0 0
      %1108 = vmatmul.mubr.bf16.gmra.mxu0 %v908
      %v1109 = vpop.f32.mrf.mxu0
      %v1110 = vadd.f32 0.0, %v1109
      %v1111 = vpop.f32.mrf.mxu0
      %v1112 = vpop.f32.mrf.mxu0
      %v1113 = vadd.f32 0.0, %v1112
      %v1114 = vpop.f32.mrf.mxu0
      %1115 = vmatprep.mubr.bf16.mxu0 0
      %1116 = vmatmul.mubr.bf16.gmra.mxu0 %v911
      %v1117 = vpop.f32.mrf.mxu0
      %v1118 = vadd.f32 0.0, %v1117
      %v1119 = vpop.f32.mrf.mxu0
      %v1120 = vpop.f32.mrf.mxu0
      %v1121 = vadd.f32 0.0, %v1120
      %v1122 = vpop.f32.mrf.mxu0
      %1123 = vmatprep.mubr.bf16.mxu0 0
      %1124 = vmatmul.mubr.bf16.gmra.mxu0 %v914
      %v1125 = vpop.f32.mrf.mxu0
      %v1126 = vadd.f32 0.0, %v1125
      %v1127 = vpop.f32.mrf.mxu0
      %v1128 = vpop.f32.mrf.mxu0
      %v1129 = vadd.f32 0.0, %v1128
      %v1130 = vpop.f32.mrf.mxu0
      %1131 = vmatprep.mubr.bf16.mxu0 0
      %1132 = vmatmul.mubr.bf16.gmra.mxu0 %v917
      %v1133 = vpop.f32.mrf.mxu0
      %v1134 = vadd.f32 0.0, %v1133
      %v1135 = vpop.f32.mrf.mxu0
      %v1136 = vpop.f32.mrf.mxu0
      %v1137 = vadd.f32 0.0, %v1136
      %v1138 = vpop.f32.mrf.mxu0
      %1139 = vmatprep.mubr.bf16.mxu0 0
      %1140 = vmatmul.mubr.bf16.gmra.mxu0 %v920
      %v1141 = vpop.f32.mrf.mxu0
      %v1142 = vadd.f32 0.0, %v1141
      %v1143 = vpop.f32.mrf.mxu0
      %v1144 = vpop.f32.mrf.mxu0
      %v1145 = vpop.f32.mrf.mxu0
      %1146 = vdwg.mxu0
      %v1164 = vunpack.c.l.b16 %v779
      %v1165 = vunpack.c.l.b16 %v780
      %v1166 = vunpack.c.l.b16 %v781
      %v1167 = vunpack.c.l.b16 %v782
      %v1168 = vunpack.c.l.b16 %v783
      %v1169 = vunpack.c.l.b16 %v784
      %v1170 = vunpack.c.l.b16 %v785
      %v1171 = vunpack.c.l.b16 %v786
      %v1172 = vunpack.c.l.b16 %v787
      %v1173 = vunpack.c.l.b16 %v788
      %v1174 = vunpack.c.l.b16 %v789
      %v1175 = vunpack.c.l.b16 %v790
      %v1176 = vunpack.c.l.b16 %v791
      %v1177 = vunpack.c.l.b16 %v792
      %v1178 = vunpack.c.l.b16 %v793
      %v1179 = vunpack.c.l.b16 %v794
      %v1180 = vunpack.c.l.b16 %v795
      %v1181 = vpack.c.b16 %v1165, %v1164
      %v1182 = vpack.c.b16 %v1167, %v1166
      %v1183 = vpack.c.b16 %v1169, %v1168
      %v1184 = vpack.c.b16 %v1171, %v1170
      %v1185 = vpack.c.b16 %v1173, %v1172
      %v1186 = vpack.c.b16 %v1175, %v1174
      %v1187 = vpack.c.b16 %v1177, %v1176
      %v1188 = vpack.c.b16 %v1179, %v1178
      %v1189 = vpack.c.b16 %v1180, %v1180
      %v1191 = vsel %vm894, %v1181, 0
      %v1194 = vsel %vm894, %v1182, 0
      %v1197 = vsel %vm894, %v1183, 0
      %v1200 = vsel %vm894, %v1184, 0
      %v1203 = vsel %vm894, %v1185, 0
      %v1206 = vsel %vm894, %v1186, 0
      %v1209 = vsel %vm894, %v1187, 0
      %v1212 = vsel %vm894, %v1188, 0
      %v1215 = vsel %vm894, %v1189, 0
      %1217 = vmatprep.subr.bf16.mxu0 0
      %1218 = vmatpush1.bf16.msra.mxu0 0
      %1219 = vmatprep.subr.bf16.mxu0 0
      %1220 = vmatpush1.bf16.msra.mxu0 0
      %1221 = vmatprep.subr.bf16.mxu0 0
      %1222 = vmatpush1.bf16.msra.mxu0 0
      %1223 = vmatprep.subr.bf16.mxu0 0
      %1224 = vmatpush1.bf16.msra.mxu0 0
      %1225 = vmatprep.subr.bf16.mxu0 0
      %1226 = vmatpush1.bf16.msra.mxu0 0
      %1227 = vmatprep.subr.bf16.mxu0 0
      %1228 = vmatpush1.bf16.msra.mxu0 0
      %1229 = vmatprep.subr.bf16.mxu0 %v773
      %1230 = vmatpush1.bf16.msra.mxu0 %v772
      %1231 = vmatprep.subr.bf16.mxu0 %v769
      %1232 = vmatpush1.bf16.msra.mxu0 %v768
      %1233 = vmatprep.subr.bf16.mxu0 0
      %1234 = vmatpush2.bf16.msra.mxu0 0
      %1235 = vmatprep.subr.bf16.mxu0 0
      %1236 = vmatpush2.bf16.msra.mxu0 0
      %1237 = vmatprep.subr.bf16.mxu0 0
      %1238 = vmatpush2.bf16.msra.mxu0 0
      %1239 = vmatprep.subr.bf16.mxu0 0
      %1240 = vmatpush2.bf16.msra.mxu0 0
      %1241 = vmatprep.subr.bf16.mxu0 0
      %1242 = vmatpush2.bf16.msra.mxu0 0
      %1243 = vmatprep.subr.bf16.mxu0 0
      %1244 = vmatpush2.bf16.msra.mxu0 0
      %1245 = vmatprep.subr.bf16.mxu0 0
      %1246 = vmatpush2.bf16.msra.mxu0 0
      %1247 = vmatprep.subr.bf16.mxu0 0
      %1248 = vmatpush2.bf16.msra.mxu0 0
      %1249 = vmatprep.mubr.bf16.mxu0 0
      %1250 = vmatmul.mubr.bf16.gmra.mxu0 %v1191
      %v1251 = vpop.f32.mrf.mxu0
      %v1252 = vadd.f32 %v957, %v1251
      %v1253 = vpop.f32.mrf.mxu0
      %v1254 = vadd.f32 %v959, %v1253
      %v1255 = vpop.f32.mrf.mxu0
      %v1256 = vadd.f32 %v961, %v1255
      %v1257 = vpop.f32.mrf.mxu0
      %v1258 = vadd.f32 %v963, %v1257
      %1259 = vmatprep.mubr.bf16.mxu0 0
      %1260 = vmatmul.mubr.bf16.gmra.mxu0 %v1194
      %v1261 = vpop.f32.mrf.mxu0
      %v1262 = vadd.f32 %v967, %v1261
      %v1263 = vpop.f32.mrf.mxu0
      %v1264 = vadd.f32 %v969, %v1263
      %v1265 = vpop.f32.mrf.mxu0
      %v1266 = vadd.f32 %v971, %v1265
      %v1267 = vpop.f32.mrf.mxu0
      %v1268 = vadd.f32 %v973, %v1267
      %1269 = vmatprep.mubr.bf16.mxu0 0
      %1270 = vmatmul.mubr.bf16.gmra.mxu0 %v1197
      %v1271 = vpop.f32.mrf.mxu0
      %v1272 = vadd.f32 %v977, %v1271
      %v1273 = vpop.f32.mrf.mxu0
      %v1274 = vadd.f32 %v979, %v1273
      %v1275 = vpop.f32.mrf.mxu0
      %v1276 = vadd.f32 %v981, %v1275
      %v1277 = vpop.f32.mrf.mxu0
      %v1278 = vadd.f32 %v983, %v1277
      %1279 = vmatprep.mubr.bf16.mxu0 0
      %1280 = vmatmul.mubr.bf16.gmra.mxu0 %v1200
      %v1281 = vpop.f32.mrf.mxu0
      %v1282 = vadd.f32 %v987, %v1281
      %v1283 = vpop.f32.mrf.mxu0
      %v1284 = vadd.f32 %v989, %v1283
      %v1285 = vpop.f32.mrf.mxu0
      %v1286 = vadd.f32 %v991, %v1285
      %v1287 = vpop.f32.mrf.mxu0
      %v1288 = vadd.f32 %v993, %v1287
      %1289 = vmatprep.mubr.bf16.mxu0 0
      %1290 = vmatmul.mubr.bf16.gmra.mxu0 %v1203
      %v1291 = vpop.f32.mrf.mxu0
      %v1292 = vadd.f32 %v997, %v1291
      %v1293 = vpop.f32.mrf.mxu0
      %v1294 = vadd.f32 %v999, %v1293
      %v1295 = vpop.f32.mrf.mxu0
      %v1296 = vadd.f32 %v1001, %v1295
      %v1297 = vpop.f32.mrf.mxu0
      %v1298 = vadd.f32 %v1003, %v1297
      %1299 = vmatprep.mubr.bf16.mxu0 0
      %1300 = vmatmul.mubr.bf16.gmra.mxu0 %v1206
      %v1301 = vpop.f32.mrf.mxu0
      %v1302 = vadd.f32 %v1007, %v1301
      %v1303 = vpop.f32.mrf.mxu0
      %v1304 = vadd.f32 %v1009, %v1303
      %v1305 = vpop.f32.mrf.mxu0
      %v1306 = vadd.f32 %v1011, %v1305
      %v1307 = vpop.f32.mrf.mxu0
      %v1308 = vadd.f32 %v1013, %v1307
      %1309 = vmatprep.mubr.bf16.mxu0 0
      %1310 = vmatmul.mubr.bf16.gmra.mxu0 %v1209
      %v1311 = vpop.f32.mrf.mxu0
      %v1312 = vadd.f32 %v1017, %v1311
      %v1313 = vpop.f32.mrf.mxu0
      %v1314 = vadd.f32 %v1019, %v1313
      %v1315 = vpop.f32.mrf.mxu0
      %v1316 = vadd.f32 %v1021, %v1315
      %v1317 = vpop.f32.mrf.mxu0
      %v1318 = vadd.f32 %v1023, %v1317
      %1319 = vmatprep.mubr.bf16.mxu0 0
      %1320 = vmatmul.mubr.bf16.gmra.mxu0 %v1212
      %v1321 = vpop.f32.mrf.mxu0
      %v1322 = vadd.f32 %v1027, %v1321
      %v1323 = vpop.f32.mrf.mxu0
      %v1324 = vadd.f32 %v1029, %v1323
      %v1325 = vpop.f32.mrf.mxu0
      %v1326 = vadd.f32 %v1031, %v1325
      %v1327 = vpop.f32.mrf.mxu0
      %v1328 = vadd.f32 %v1033, %v1327
      %1329 = vmatprep.mubr.bf16.mxu0 0
      %1330 = vmatmul.mubr.bf16.gmra.mxu0 %v1215
      %v1331 = vpop.f32.mrf.mxu0
      %v1332 = vadd.f32 %v1037, %v1331
      %v1333 = vpop.f32.mrf.mxu0
      %v1334 = vadd.f32 %v1039, %v1333
      %v1335 = vpop.f32.mrf.mxu0
      %v1336 = vpop.f32.mrf.mxu0
      %1337 = vdwg.mxu0
      %1338 = vmatprep.subr.bf16.mxu0 0
      %1339 = vmatpush1.bf16.msra.mxu0 0
      %1340 = vmatprep.subr.bf16.mxu0 0
      %1341 = vmatpush1.bf16.msra.mxu0 0
      %1342 = vmatprep.subr.bf16.mxu0 0
      %1343 = vmatpush1.bf16.msra.mxu0 0
      %1344 = vmatprep.subr.bf16.mxu0 0
      %1345 = vmatpush1.bf16.msra.mxu0 0
      %1346 = vmatprep.subr.bf16.mxu0 0
      %1347 = vmatpush1.bf16.msra.mxu0 0
      %1348 = vmatprep.subr.bf16.mxu0 0
      %1349 = vmatpush1.bf16.msra.mxu0 0
      %1350 = vmatprep.subr.bf16.mxu0 0
      %1351 = vmatpush1.bf16.msra.mxu0 %v774
      %1352 = vmatprep.subr.bf16.mxu0 0
      %1353 = vmatpush1.bf16.msra.mxu0 %v770
      %1354 = vmatprep.subr.bf16.mxu0 0
      %1355 = vmatpush2.bf16.msra.mxu0 0
      %1356 = vmatprep.subr.bf16.mxu0 0
      %1357 = vmatpush2.bf16.msra.mxu0 0
      %1358 = vmatprep.subr.bf16.mxu0 0
      %1359 = vmatpush2.bf16.msra.mxu0 0
      %1360 = vmatprep.subr.bf16.mxu0 0
      %1361 = vmatpush2.bf16.msra.mxu0 0
      %1362 = vmatprep.subr.bf16.mxu0 0
      %1363 = vmatpush2.bf16.msra.mxu0 0
      %1364 = vmatprep.subr.bf16.mxu0 0
      %1365 = vmatpush2.bf16.msra.mxu0 0
      %1366 = vmatprep.subr.bf16.mxu0 0
      %1367 = vmatpush2.bf16.msra.mxu0 0
      %1368 = vmatprep.subr.bf16.mxu0 0
      %1369 = vmatpush2.bf16.msra.mxu0 0
      %1370 = vmatprep.mubr.bf16.mxu0 0
      %1371 = vmatmul.mubr.bf16.gmra.mxu0 %v1191
      %v1372 = vpop.f32.mrf.mxu0
      %v1373 = vadd.f32 %v1078, %v1372
      %v1374 = vpop.f32.mrf.mxu0
      %v1375 = vpop.f32.mrf.mxu0
      %v1376 = vadd.f32 %v1081, %v1375
      %v1377 = vpop.f32.mrf.mxu0
      %1378 = vmatprep.mubr.bf16.mxu0 0
      %1379 = vmatmul.mubr.bf16.gmra.mxu0 %v1194
      %v1380 = vpop.f32.mrf.mxu0
      %v1381 = vadd.f32 %v1086, %v1380
      %v1382 = vpop.f32.mrf.mxu0
      %v1383 = vpop.f32.mrf.mxu0
      %v1384 = vadd.f32 %v1089, %v1383
      %v1385 = vpop.f32.mrf.mxu0
      %1386 = vmatprep.mubr.bf16.mxu0 0
      %1387 = vmatmul.mubr.bf16.gmra.mxu0 %v1197
      %v1388 = vpop.f32.mrf.mxu0
      %v1389 = vadd.f32 %v1094, %v1388
      %v1390 = vpop.f32.mrf.mxu0
      %v1391 = vpop.f32.mrf.mxu0
      %v1392 = vadd.f32 %v1097, %v1391
      %v1393 = vpop.f32.mrf.mxu0
      %1394 = vmatprep.mubr.bf16.mxu0 0
      %1395 = vmatmul.mubr.bf16.gmra.mxu0 %v1200
      %v1396 = vpop.f32.mrf.mxu0
      %v1397 = vadd.f32 %v1102, %v1396
      %v1398 = vpop.f32.mrf.mxu0
      %v1399 = vpop.f32.mrf.mxu0
      %v1400 = vadd.f32 %v1105, %v1399
      %v1401 = vpop.f32.mrf.mxu0
      %1402 = vmatprep.mubr.bf16.mxu0 0
      %1403 = vmatmul.mubr.bf16.gmra.mxu0 %v1203
      %v1404 = vpop.f32.mrf.mxu0
      %v1405 = vadd.f32 %v1110, %v1404
      %v1406 = vpop.f32.mrf.mxu0
      %v1407 = vpop.f32.mrf.mxu0
      %v1408 = vadd.f32 %v1113, %v1407
      %v1409 = vpop.f32.mrf.mxu0
      %1410 = vmatprep.mubr.bf16.mxu0 0
      %1411 = vmatmul.mubr.bf16.gmra.mxu0 %v1206
      %v1412 = vpop.f32.mrf.mxu0
      %v1413 = vadd.f32 %v1118, %v1412
      %v1414 = vpop.f32.mrf.mxu0
      %v1415 = vpop.f32.mrf.mxu0
      %v1416 = vadd.f32 %v1121, %v1415
      %v1417 = vpop.f32.mrf.mxu0
      %1418 = vmatprep.mubr.bf16.mxu0 0
      %1419 = vmatmul.mubr.bf16.gmra.mxu0 %v1209
      %v1420 = vpop.f32.mrf.mxu0
      %v1421 = vadd.f32 %v1126, %v1420
      %v1422 = vpop.f32.mrf.mxu0
      %v1423 = vpop.f32.mrf.mxu0
      %v1424 = vadd.f32 %v1129, %v1423
      %v1425 = vpop.f32.mrf.mxu0
      %1426 = vmatprep.mubr.bf16.mxu0 0
      %1427 = vmatmul.mubr.bf16.gmra.mxu0 %v1212
      %v1428 = vpop.f32.mrf.mxu0
      %v1429 = vadd.f32 %v1134, %v1428
      %v1430 = vpop.f32.mrf.mxu0
      %v1431 = vpop.f32.mrf.mxu0
      %v1432 = vadd.f32 %v1137, %v1431
      %v1433 = vpop.f32.mrf.mxu0
      %1434 = vmatprep.mubr.bf16.mxu0 0
      %1435 = vmatmul.mubr.bf16.gmra.mxu0 %v1215
      %v1436 = vpop.f32.mrf.mxu0
      %v1437 = vadd.f32 %v1142, %v1436
      %v1438 = vpop.f32.mrf.mxu0
      %v1439 = vpop.f32.mrf.mxu0
      %v1440 = vpop.f32.mrf.mxu0
      %1441 = vdwg.mxu0
      %s1442 = scalar_lea.vmem %s4, 136
      %v1443 = vld [vmem:[%s1442] sm:$0xf]
      %v1444 = vld [vmem:[%s1442 + $0x4] sm:$0xf]
      %v1445 = vld [vmem:[%s1442 + $0x8] sm:$0xf]
      %v1446 = vld [vmem:[%s1442 + $0xc] sm:$0xf]
      %v1447 = vld [vmem:[%s1442 + $0x10] sm:$0xf]
      %v1448 = vld [vmem:[%s1442 + $0x14] sm:$0xf]
      %v1449 = vld [vmem:[%s1442 + $0x18] sm:$0xf]
      %v1450 = vld [vmem:[%s1442 + $0x1c] sm:$0xf]
      %v1451 = vld [vmem:[%s1442 + $0x20] sm:$0xf]
      %v1452 = vld [vmem:[%s1442 + $0x24] sm:$0xf]
      %v1453 = vld [vmem:[%s1442 + $0x28] sm:$0xf]
      %v1454 = vld [vmem:[%s1442 + $0x2c] sm:$0xf]
      %v1455 = vld [vmem:[%s1442 + $0x30] sm:$0xf]
      %v1456 = vld [vmem:[%s1442 + $0x34] sm:$0xf]
      %v1457 = vld [vmem:[%s1442 + $0x38] sm:$0xf]
      %v1458 = vld [vmem:[%s1442 + $0x3c] sm:$0xf]
      %v1459 = vld [vmem:[%s1442 + $0x40] sm:$0xf]
      %v1477 = vunpack.c.l.b16 %v1443
      %v1478 = vunpack.c.l.b16 %v1444
      %v1479 = vunpack.c.l.b16 %v1445
      %v1480 = vunpack.c.l.b16 %v1446
      %v1481 = vunpack.c.l.b16 %v1447
      %v1482 = vunpack.c.l.b16 %v1448
      %v1483 = vunpack.c.l.b16 %v1449
      %v1484 = vunpack.c.l.b16 %v1450
      %v1485 = vunpack.c.l.b16 %v1451
      %v1486 = vunpack.c.l.b16 %v1452
      %v1487 = vunpack.c.l.b16 %v1453
      %v1488 = vunpack.c.l.b16 %v1454
      %v1489 = vunpack.c.l.b16 %v1455
      %v1490 = vunpack.c.l.b16 %v1456
      %v1491 = vunpack.c.l.b16 %v1457
      %v1492 = vunpack.c.l.b16 %v1458
      %v1493 = vunpack.c.l.b16 %v1459
      %v1494 = vpack.c.b16 %v1478, %v1477
      %v1495 = vpack.c.b16 %v1480, %v1479
      %v1496 = vpack.c.b16 %v1482, %v1481
      %v1497 = vpack.c.b16 %v1484, %v1483
      %v1498 = vpack.c.b16 %v1486, %v1485
      %v1499 = vpack.c.b16 %v1488, %v1487
      %v1500 = vpack.c.b16 %v1490, %v1489
      %v1501 = vpack.c.b16 %v1492, %v1491
      %v1502 = vpack.c.b16 %v1493, %v1493
      %1503 = vrot.lane.b32.xlu0 %v768, 126
      %v1504 = vpop.permute.xlu0 %1503
      %1505 = vrot.lane.b32.xlu0 %v769, 126
      %v1506 = vpop.permute.xlu0 %1505
      %1507 = vrot.lane.b32.xlu0 %v770, 126
      %v1508 = vpop.permute.xlu0 %1507
      %1509 = vrot.lane.b32.xlu0 %v771, 126
      %v1510 = vpop.permute.xlu0 %1509
      %1511 = vrot.lane.b32.xlu0 %v772, 126
      %v1512 = vpop.permute.xlu0 %1511
      %1513 = vrot.lane.b32.xlu0 %v773, 126
      %v1514 = vpop.permute.xlu0 %1513
      %1515 = vrot.lane.b32.xlu0 %v774, 126
      %v1516 = vpop.permute.xlu0 %1515
      %1517 = vrot.lane.b32.xlu0 %v775, 126
      %v1518 = vpop.permute.xlu0 %1517
      %vm1519 = vcmask 1031168
      %v1520 = vsel %vm1519, %v1504, %v1506
      %v1521 = vsel %vm1519, %v1506, %v1508
      %v1522 = vsel %vm1519, %v1508, %v1510
      %v1523 = vsel %vm1519, %v1512, %v1514
      %v1524 = vsel %vm1519, %v1514, %v1516
      %v1525 = vsel %vm1519, %v1516, %v1518
      %v1533 = vsel %vm894, %v1494, 0
      %v1536 = vsel %vm894, %v1495, 0
      %v1539 = vsel %vm894, %v1496, 0
      %v1542 = vsel %vm894, %v1497, 0
      %v1545 = vsel %vm894, %v1498, 0
      %v1548 = vsel %vm894, %v1499, 0
      %v1551 = vsel %vm894, %v1500, 0
      %v1554 = vsel %vm894, %v1501, 0
      %v1557 = vsel %vm894, %v1502, 0
      %1559 = vmatprep.subr.bf16.mxu0 0
      %1560 = vmatpush1.bf16.msra.mxu0 0
      %1561 = vmatprep.subr.bf16.mxu0 0
      %1562 = vmatpush1.bf16.msra.mxu0 0
      %1563 = vmatprep.subr.bf16.mxu0 0
      %1564 = vmatpush1.bf16.msra.mxu0 0
      %1565 = vmatprep.subr.bf16.mxu0 0
      %1566 = vmatpush1.bf16.msra.mxu0 0
      %1567 = vmatprep.subr.bf16.mxu0 0
      %1568 = vmatpush1.bf16.msra.mxu0 0
      %1569 = vmatprep.subr.bf16.mxu0 0
      %1570 = vmatpush1.bf16.msra.mxu0 0
      %1571 = vmatprep.subr.bf16.mxu0 %v1524
      %1572 = vmatpush1.bf16.msra.mxu0 %v1523
      %1573 = vmatprep.subr.bf16.mxu0 %v1521
      %1574 = vmatpush1.bf16.msra.mxu0 %v1520
      %1575 = vmatprep.subr.bf16.mxu0 0
      %1576 = vmatpush2.bf16.msra.mxu0 0
      %1577 = vmatprep.subr.bf16.mxu0 0
      %1578 = vmatpush2.bf16.msra.mxu0 0
      %1579 = vmatprep.subr.bf16.mxu0 0
      %1580 = vmatpush2.bf16.msra.mxu0 0
      %1581 = vmatprep.subr.bf16.mxu0 0
      %1582 = vmatpush2.bf16.msra.mxu0 0
      %1583 = vmatprep.subr.bf16.mxu0 0
      %1584 = vmatpush2.bf16.msra.mxu0 0
      %1585 = vmatprep.subr.bf16.mxu0 0
      %1586 = vmatpush2.bf16.msra.mxu0 0
      %1587 = vmatprep.subr.bf16.mxu0 0
      %1588 = vmatpush2.bf16.msra.mxu0 0
      %1589 = vmatprep.subr.bf16.mxu0 0
      %1590 = vmatpush2.bf16.msra.mxu0 0
      %1591 = vmatprep.mubr.bf16.mxu0 0
      %1592 = vmatmul.mubr.bf16.gmra.mxu0 %v1533
      %v1593 = vpop.f32.mrf.mxu0
      %v1594 = vadd.f32 0.0, %v1593
      %v1595 = vpop.f32.mrf.mxu0
      %v1596 = vadd.f32 0.0, %v1595
      %v1597 = vpop.f32.mrf.mxu0
      %v1598 = vadd.f32 0.0, %v1597
      %v1599 = vpop.f32.mrf.mxu0
      %v1600 = vadd.f32 0.0, %v1599
      %1601 = vmatprep.mubr.bf16.mxu0 0
      %1602 = vmatmul.mubr.bf16.gmra.mxu0 %v1536
      %v1603 = vpop.f32.mrf.mxu0
      %v1604 = vadd.f32 0.0, %v1603
      %v1605 = vpop.f32.mrf.mxu0
      %v1606 = vadd.f32 0.0, %v1605
      %v1607 = vpop.f32.mrf.mxu0
      %v1608 = vadd.f32 0.0, %v1607
      %v1609 = vpop.f32.mrf.mxu0
      %v1610 = vadd.f32 0.0, %v1609
      %1611 = vmatprep.mubr.bf16.mxu0 0
      %1612 = vmatmul.mubr.bf16.gmra.mxu0 %v1539
      %v1613 = vpop.f32.mrf.mxu0
      %v1614 = vadd.f32 0.0, %v1613
      %v1615 = vpop.f32.mrf.mxu0
      %v1616 = vadd.f32 0.0, %v1615
      %v1617 = vpop.f32.mrf.mxu0
      %v1618 = vadd.f32 0.0, %v1617
      %v1619 = vpop.f32.mrf.mxu0
      %v1620 = vadd.f32 0.0, %v1619
      %1621 = vmatprep.mubr.bf16.mxu0 0
      %1622 = vmatmul.mubr.bf16.gmra.mxu0 %v1542
      %v1623 = vpop.f32.mrf.mxu0
      %v1624 = vadd.f32 0.0, %v1623
      %v1625 = vpop.f32.mrf.mxu0
      %v1626 = vadd.f32 0.0, %v1625
      %v1627 = vpop.f32.mrf.mxu0
      %v1628 = vadd.f32 0.0, %v1627
      %v1629 = vpop.f32.mrf.mxu0
      %v1630 = vadd.f32 0.0, %v1629
      %1631 = vmatprep.mubr.bf16.mxu0 0
      %1632 = vmatmul.mubr.bf16.gmra.mxu0 %v1545
      %v1633 = vpop.f32.mrf.mxu0
      %v1634 = vadd.f32 0.0, %v1633
      %v1635 = vpop.f32.mrf.mxu0
      %v1636 = vadd.f32 0.0, %v1635
      %v1637 = vpop.f32.mrf.mxu0
      %v1638 = vadd.f32 0.0, %v1637
      %v1639 = vpop.f32.mrf.mxu0
      %v1640 = vadd.f32 0.0, %v1639
      %1641 = vmatprep.mubr.bf16.mxu0 0
      %1642 = vmatmul.mubr.bf16.gmra.mxu0 %v1548
      %v1643 = vpop.f32.mrf.mxu0
      %v1644 = vadd.f32 0.0, %v1643
      %v1645 = vpop.f32.mrf.mxu0
      %v1646 = vadd.f32 0.0, %v1645
      %v1647 = vpop.f32.mrf.mxu0
      %v1648 = vadd.f32 0.0, %v1647
      %v1649 = vpop.f32.mrf.mxu0
      %v1650 = vadd.f32 0.0, %v1649
      %1651 = vmatprep.mubr.bf16.mxu0 0
      %1652 = vmatmul.mubr.bf16.gmra.mxu0 %v1551
      %v1653 = vpop.f32.mrf.mxu0
      %v1654 = vadd.f32 0.0, %v1653
      %v1655 = vpop.f32.mrf.mxu0
      %v1656 = vadd.f32 0.0, %v1655
      %v1657 = vpop.f32.mrf.mxu0
      %v1658 = vadd.f32 0.0, %v1657
      %v1659 = vpop.f32.mrf.mxu0
      %v1660 = vadd.f32 0.0, %v1659
      %1661 = vmatprep.mubr.bf16.mxu0 0
      %1662 = vmatmul.mubr.bf16.gmra.mxu0 %v1554
      %v1663 = vpop.f32.mrf.mxu0
      %v1664 = vadd.f32 0.0, %v1663
      %v1665 = vpop.f32.mrf.mxu0
      %v1666 = vadd.f32 0.0, %v1665
      %v1667 = vpop.f32.mrf.mxu0
      %v1668 = vadd.f32 0.0, %v1667
      %v1669 = vpop.f32.mrf.mxu0
      %v1670 = vadd.f32 0.0, %v1669
      %1671 = vmatprep.mubr.bf16.mxu0 0
      %1672 = vmatmul.mubr.bf16.gmra.mxu0 %v1557
      %v1673 = vpop.f32.mrf.mxu0
      %v1674 = vadd.f32 0.0, %v1673
      %v1675 = vpop.f32.mrf.mxu0
      %v1676 = vadd.f32 0.0, %v1675
      %v1677 = vpop.f32.mrf.mxu0
      %v1678 = vpop.f32.mrf.mxu0
      %1679 = vdwg.mxu0
      %1680 = vmatprep.subr.bf16.mxu0 0
      %1681 = vmatpush1.bf16.msra.mxu0 0
      %1682 = vmatprep.subr.bf16.mxu0 0
      %1683 = vmatpush1.bf16.msra.mxu0 0
      %1684 = vmatprep.subr.bf16.mxu0 0
      %1685 = vmatpush1.bf16.msra.mxu0 0
      %1686 = vmatprep.subr.bf16.mxu0 0
      %1687 = vmatpush1.bf16.msra.mxu0 0
      %1688 = vmatprep.subr.bf16.mxu0 0
      %1689 = vmatpush1.bf16.msra.mxu0 0
      %1690 = vmatprep.subr.bf16.mxu0 0
      %1691 = vmatpush1.bf16.msra.mxu0 0
      %1692 = vmatprep.subr.bf16.mxu0 0
      %1693 = vmatpush1.bf16.msra.mxu0 %v1525
      %1694 = vmatprep.subr.bf16.mxu0 0
      %1695 = vmatpush1.bf16.msra.mxu0 %v1522
      %1696 = vmatprep.subr.bf16.mxu0 0
      %1697 = vmatpush2.bf16.msra.mxu0 0
      %1698 = vmatprep.subr.bf16.mxu0 0
      %1699 = vmatpush2.bf16.msra.mxu0 0
      %1700 = vmatprep.subr.bf16.mxu0 0
      %1701 = vmatpush2.bf16.msra.mxu0 0
      %1702 = vmatprep.subr.bf16.mxu0 0
      %1703 = vmatpush2.bf16.msra.mxu0 0
      %1704 = vmatprep.subr.bf16.mxu0 0
      %1705 = vmatpush2.bf16.msra.mxu0 0
      %1706 = vmatprep.subr.bf16.mxu0 0
      %1707 = vmatpush2.bf16.msra.mxu0 0
      %1708 = vmatprep.subr.bf16.mxu0 0
      %1709 = vmatpush2.bf16.msra.mxu0 0
      %1710 = vmatprep.subr.bf16.mxu0 0
      %1711 = vmatpush2.bf16.msra.mxu0 0
      %1712 = vmatprep.mubr.bf16.mxu0 0
      %1713 = vmatmul.mubr.bf16.gmra.mxu0 %v1533
      %v1714 = vpop.f32.mrf.mxu0
      %v1715 = vadd.f32 0.0, %v1714
      %v1716 = vpop.f32.mrf.mxu0
      %v1717 = vpop.f32.mrf.mxu0
      %v1718 = vadd.f32 0.0, %v1717
      %v1719 = vpop.f32.mrf.mxu0
      %1720 = vmatprep.mubr.bf16.mxu0 0
      %1721 = vmatmul.mubr.bf16.gmra.mxu0 %v1536
      %v1722 = vpop.f32.mrf.mxu0
      %v1723 = vadd.f32 0.0, %v1722
      %v1724 = vpop.f32.mrf.mxu0
      %v1725 = vpop.f32.mrf.mxu0
      %v1726 = vadd.f32 0.0, %v1725
      %v1727 = vpop.f32.mrf.mxu0
      %1728 = vmatprep.mubr.bf16.mxu0 0
      %1729 = vmatmul.mubr.bf16.gmra.mxu0 %v1539
      %v1730 = vpop.f32.mrf.mxu0
      %v1731 = vadd.f32 0.0, %v1730
      %v1732 = vpop.f32.mrf.mxu0
      %v1733 = vpop.f32.mrf.mxu0
      %v1734 = vadd.f32 0.0, %v1733
      %v1735 = vpop.f32.mrf.mxu0
      %1736 = vmatprep.mubr.bf16.mxu0 0
      %1737 = vmatmul.mubr.bf16.gmra.mxu0 %v1542
      %v1738 = vpop.f32.mrf.mxu0
      %v1739 = vadd.f32 0.0, %v1738
      %v1740 = vpop.f32.mrf.mxu0
      %v1741 = vpop.f32.mrf.mxu0
      %v1742 = vadd.f32 0.0, %v1741
      %v1743 = vpop.f32.mrf.mxu0
      %1744 = vmatprep.mubr.bf16.mxu0 0
      %1745 = vmatmul.mubr.bf16.gmra.mxu0 %v1545
      %v1746 = vpop.f32.mrf.mxu0
      %v1747 = vadd.f32 0.0, %v1746
      %v1748 = vpop.f32.mrf.mxu0
      %v1749 = vpop.f32.mrf.mxu0
      %v1750 = vadd.f32 0.0, %v1749
      %v1751 = vpop.f32.mrf.mxu0
      %1752 = vmatprep.mubr.bf16.mxu0 0
      %1753 = vmatmul.mubr.bf16.gmra.mxu0 %v1548
      %v1754 = vpop.f32.mrf.mxu0
      %v1755 = vadd.f32 0.0, %v1754
      %v1756 = vpop.f32.mrf.mxu0
      %v1757 = vpop.f32.mrf.mxu0
      %v1758 = vadd.f32 0.0, %v1757
      %v1759 = vpop.f32.mrf.mxu0
      %1760 = vmatprep.mubr.bf16.mxu0 0
      %1761 = vmatmul.mubr.bf16.gmra.mxu0 %v1551
      %v1762 = vpop.f32.mrf.mxu0
      %v1763 = vadd.f32 0.0, %v1762
      %v1764 = vpop.f32.mrf.mxu0
      %v1765 = vpop.f32.mrf.mxu0
      %v1766 = vadd.f32 0.0, %v1765
      %v1767 = vpop.f32.mrf.mxu0
      %1768 = vmatprep.mubr.bf16.mxu0 0
      %1769 = vmatmul.mubr.bf16.gmra.mxu0 %v1554
      %v1770 = vpop.f32.mrf.mxu0
      %v1771 = vadd.f32 0.0, %v1770
      %v1772 = vpop.f32.mrf.mxu0
      %v1773 = vpop.f32.mrf.mxu0
      %v1774 = vadd.f32 0.0, %v1773
      %v1775 = vpop.f32.mrf.mxu0
      %1776 = vmatprep.mubr.bf16.mxu0 0
      %1777 = vmatmul.mubr.bf16.gmra.mxu0 %v1557
      %v1778 = vpop.f32.mrf.mxu0
      %v1779 = vadd.f32 0.0, %v1778
      %v1780 = vpop.f32.mrf.mxu0
      %v1781 = vpop.f32.mrf.mxu0
      %v1782 = vpop.f32.mrf.mxu0
      %1783 = vdwg.mxu0
      %v1784 = vadd.f32 %v1252, %v1594
      %v1785 = vadd.f32 %v1254, %v1596
      %v1786 = vadd.f32 %v1373, %v1715
      %v1787 = vadd.f32 %v1256, %v1598
      %v1788 = vadd.f32 %v1258, %v1600
      %v1789 = vadd.f32 %v1376, %v1718
      %v1790 = vadd.f32 %v1262, %v1604
      %v1791 = vadd.f32 %v1264, %v1606
      %v1792 = vadd.f32 %v1381, %v1723
      %v1793 = vadd.f32 %v1266, %v1608
      %v1794 = vadd.f32 %v1268, %v1610
      %v1795 = vadd.f32 %v1384, %v1726
      %v1796 = vadd.f32 %v1272, %v1614
      %v1797 = vadd.f32 %v1274, %v1616
      %v1798 = vadd.f32 %v1389, %v1731
      %v1799 = vadd.f32 %v1276, %v1618
      %v1800 = vadd.f32 %v1278, %v1620
      %v1801 = vadd.f32 %v1392, %v1734
      %v1802 = vadd.f32 %v1282, %v1624
      %v1803 = vadd.f32 %v1284, %v1626
      %v1804 = vadd.f32 %v1397, %v1739
      %v1805 = vadd.f32 %v1286, %v1628
      %v1806 = vadd.f32 %v1288, %v1630
      %v1807 = vadd.f32 %v1400, %v1742
      %v1808 = vadd.f32 %v1292, %v1634
      %v1809 = vadd.f32 %v1294, %v1636
      %v1810 = vadd.f32 %v1405, %v1747
      %v1811 = vadd.f32 %v1296, %v1638
      %v1812 = vadd.f32 %v1298, %v1640
      %v1813 = vadd.f32 %v1408, %v1750
      %v1814 = vadd.f32 %v1302, %v1644
      %v1815 = vadd.f32 %v1304, %v1646
      %v1816 = vadd.f32 %v1413, %v1755
      %v1817 = vadd.f32 %v1306, %v1648
      %v1818 = vadd.f32 %v1308, %v1650
      %v1819 = vadd.f32 %v1416, %v1758
      %v1820 = vadd.f32 %v1312, %v1654
      %v1821 = vadd.f32 %v1314, %v1656
      %v1822 = vadd.f32 %v1421, %v1763
      %v1823 = vadd.f32 %v1316, %v1658
      %v1824 = vadd.f32 %v1318, %v1660
      %v1825 = vadd.f32 %v1424, %v1766
      %v1826 = vadd.f32 %v1322, %v1664
      %v1827 = vadd.f32 %v1324, %v1666
      %v1828 = vadd.f32 %v1429, %v1771
      %v1829 = vadd.f32 %v1326, %v1668
      %v1830 = vadd.f32 %v1328, %v1670
      %v1831 = vadd.f32 %v1432, %v1774
      %v1832 = vadd.f32 %v1332, %v1674
      %v1833 = vadd.f32 %v1334, %v1676
      %v1834 = vadd.f32 %v1437, %v1779
      %s1835 = scalar_lea.vmem %s4, 204
      %v1836 = vld [vmem:[%s1835] sm:$0xf]
      %v1837 = vld [vmem:[%s1835 + $0x4] sm:$0xf]
      %v1838 = vld [vmem:[%s1835 + $0x8] sm:$0xf]
      %v1839 = vld [vmem:[%s1835 + $0xc] sm:$0xf]
      %v1840 = vld [vmem:[%s1835 + $0x10] sm:$0xf]
      %v1841 = vld [vmem:[%s1835 + $0x14] sm:$0xf]
      %v1842 = vld [vmem:[%s1835 + $0x18] sm:$0xf]
      %v1843 = vld [vmem:[%s1835 + $0x1c] sm:$0xf]
      %v1844 = vld [vmem:[%s1835 + $0x20] sm:$0xf]
      %v1845 = vld [vmem:[%s1835 + $0x24] sm:$0xf]
      %v1846 = vld [vmem:[%s1835 + $0x28] sm:$0xf]
      %v1847 = vld [vmem:[%s1835 + $0x2c] sm:$0xf]
      %v1848 = vld [vmem:[%s1835 + $0x30] sm:$0xf]
      %v1849 = vld [vmem:[%s1835 + $0x34] sm:$0xf]
      %v1850 = vld [vmem:[%s1835 + $0x38] sm:$0xf]
      %v1851 = vld [vmem:[%s1835 + $0x3c] sm:$0xf]
      %v1852 = vld [vmem:[%s1835 + $0x40] sm:$0xf]
      %v1870 = vunpack.c.l.b16 %v1836
      %v1871 = vunpack.c.l.b16 %v1837
      %v1872 = vunpack.c.l.b16 %v1838
      %v1873 = vunpack.c.l.b16 %v1839
      %v1874 = vunpack.c.l.b16 %v1840
      %v1875 = vunpack.c.l.b16 %v1841
      %v1876 = vunpack.c.l.b16 %v1842
      %v1877 = vunpack.c.l.b16 %v1843
      %v1878 = vunpack.c.l.b16 %v1844
      %v1879 = vunpack.c.l.b16 %v1845
      %v1880 = vunpack.c.l.b16 %v1846
      %v1881 = vunpack.c.l.b16 %v1847
      %v1882 = vunpack.c.l.b16 %v1848
      %v1883 = vunpack.c.l.b16 %v1849
      %v1884 = vunpack.c.l.b16 %v1850
      %v1885 = vunpack.c.l.b16 %v1851
      %v1886 = vunpack.c.l.b16 %v1852
      %v1887 = vpack.c.b16 %v1871, %v1870
      %v1888 = vpack.c.b16 %v1873, %v1872
      %v1889 = vpack.c.b16 %v1875, %v1874
      %v1890 = vpack.c.b16 %v1877, %v1876
      %v1891 = vpack.c.b16 %v1879, %v1878
      %v1892 = vpack.c.b16 %v1881, %v1880
      %v1893 = vpack.c.b16 %v1883, %v1882
      %v1894 = vpack.c.b16 %v1885, %v1884
      %v1895 = vpack.c.b16 %v1886, %v1886
      %1896 = vrot.lane.b32.xlu0 %v768, 110
      %v1897 = vpop.permute.xlu0 %1896
      %1898 = vrot.lane.b32.xlu0 %v769, 110
      %v1899 = vpop.permute.xlu0 %1898
      %1900 = vrot.lane.b32.xlu0 %v770, 110
      %v1901 = vpop.permute.xlu0 %1900
      %1902 = vrot.lane.b32.xlu0 %v771, 110
      %v1903 = vpop.permute.xlu0 %1902
      %1904 = vrot.lane.b32.xlu0 %v772, 110
      %v1905 = vpop.permute.xlu0 %1904
      %1906 = vrot.lane.b32.xlu0 %v773, 110
      %v1907 = vpop.permute.xlu0 %1906
      %1908 = vrot.lane.b32.xlu0 %v774, 110
      %v1909 = vpop.permute.xlu0 %1908
      %1910 = vrot.lane.b32.xlu0 %v775, 110
      %v1911 = vpop.permute.xlu0 %1910
      %vm1912 = vcmask 900096
      %v1913 = vsel %vm1912, %v1897, %v1899
      %v1914 = vsel %vm1912, %v1899, %v1901
      %v1915 = vsel %vm1912, %v1901, %v1903
      %v1916 = vsel %vm1912, %v1905, %v1907
      %v1917 = vsel %vm1912, %v1907, %v1909
      %v1918 = vsel %vm1912, %v1909, %v1911
      %v1926 = vsel %vm894, %v1887, 0
      %v1929 = vsel %vm894, %v1888, 0
      %v1932 = vsel %vm894, %v1889, 0
      %v1935 = vsel %vm894, %v1890, 0
      %v1938 = vsel %vm894, %v1891, 0
      %v1941 = vsel %vm894, %v1892, 0
      %v1944 = vsel %vm894, %v1893, 0
      %v1947 = vsel %vm894, %v1894, 0
      %v1950 = vsel %vm894, %v1895, 0
      %1952 = vmatprep.subr.bf16.mxu0 0
      %1953 = vmatpush1.bf16.msra.mxu0 0
      %1954 = vmatprep.subr.bf16.mxu0 0
      %1955 = vmatpush1.bf16.msra.mxu0 0
      %1956 = vmatprep.subr.bf16.mxu0 0
      %1957 = vmatpush1.bf16.msra.mxu0 0
      %1958 = vmatprep.subr.bf16.mxu0 0
      %1959 = vmatpush1.bf16.msra.mxu0 0
      %1960 = vmatprep.subr.bf16.mxu0 0
      %1961 = vmatpush1.bf16.msra.mxu0 0
      %1962 = vmatprep.subr.bf16.mxu0 0
      %1963 = vmatpush1.bf16.msra.mxu0 0
      %1964 = vmatprep.subr.bf16.mxu0 %v1917
      %1965 = vmatpush1.bf16.msra.mxu0 %v1916
      %1966 = vmatprep.subr.bf16.mxu0 %v1914
      %1967 = vmatpush1.bf16.msra.mxu0 %v1913
      %1968 = vmatprep.subr.bf16.mxu0 0
      %1969 = vmatpush2.bf16.msra.mxu0 0
      %1970 = vmatprep.subr.bf16.mxu0 0
      %1971 = vmatpush2.bf16.msra.mxu0 0
      %1972 = vmatprep.subr.bf16.mxu0 0
      %1973 = vmatpush2.bf16.msra.mxu0 0
      %1974 = vmatprep.subr.bf16.mxu0 0
      %1975 = vmatpush2.bf16.msra.mxu0 0
      %1976 = vmatprep.subr.bf16.mxu0 0
      %1977 = vmatpush2.bf16.msra.mxu0 0
      %1978 = vmatprep.subr.bf16.mxu0 0
      %1979 = vmatpush2.bf16.msra.mxu0 0
      %1980 = vmatprep.subr.bf16.mxu0 0
      %1981 = vmatpush2.bf16.msra.mxu0 0
      %1982 = vmatprep.subr.bf16.mxu0 0
      %1983 = vmatpush2.bf16.msra.mxu0 0
      %1984 = vmatprep.mubr.bf16.mxu0 0
      %1985 = vmatmul.mubr.bf16.gmra.mxu0 %v1926
      %v1986 = vpop.f32.mrf.mxu0
      %v1987 = vadd.f32 0.0, %v1986
      %v1988 = vpop.f32.mrf.mxu0
      %v1989 = vadd.f32 0.0, %v1988
      %v1990 = vpop.f32.mrf.mxu0
      %v1991 = vadd.f32 0.0, %v1990
      %v1992 = vpop.f32.mrf.mxu0
      %v1993 = vadd.f32 0.0, %v1992
      %1994 = vmatprep.mubr.bf16.mxu0 0
      %1995 = vmatmul.mubr.bf16.gmra.mxu0 %v1929
      %v1996 = vpop.f32.mrf.mxu0
      %v1997 = vadd.f32 0.0, %v1996
      %v1998 = vpop.f32.mrf.mxu0
      %v1999 = vadd.f32 0.0, %v1998
      %v2000 = vpop.f32.mrf.mxu0
      %v2001 = vadd.f32 0.0, %v2000
      %v2002 = vpop.f32.mrf.mxu0
      %v2003 = vadd.f32 0.0, %v2002
      %2004 = vmatprep.mubr.bf16.mxu0 0
      %2005 = vmatmul.mubr.bf16.gmra.mxu0 %v1932
      %v2006 = vpop.f32.mrf.mxu0
      %v2007 = vadd.f32 0.0, %v2006
      %v2008 = vpop.f32.mrf.mxu0
      %v2009 = vadd.f32 0.0, %v2008
      %v2010 = vpop.f32.mrf.mxu0
      %v2011 = vadd.f32 0.0, %v2010
      %v2012 = vpop.f32.mrf.mxu0
      %v2013 = vadd.f32 0.0, %v2012
      %2014 = vmatprep.mubr.bf16.mxu0 0
      %2015 = vmatmul.mubr.bf16.gmra.mxu0 %v1935
      %v2016 = vpop.f32.mrf.mxu0
      %v2017 = vadd.f32 0.0, %v2016
      %v2018 = vpop.f32.mrf.mxu0
      %v2019 = vadd.f32 0.0, %v2018
      %v2020 = vpop.f32.mrf.mxu0
      %v2021 = vadd.f32 0.0, %v2020
      %v2022 = vpop.f32.mrf.mxu0
      %v2023 = vadd.f32 0.0, %v2022
      %2024 = vmatprep.mubr.bf16.mxu0 0
      %2025 = vmatmul.mubr.bf16.gmra.mxu0 %v1938
      %v2026 = vpop.f32.mrf.mxu0
      %v2027 = vadd.f32 0.0, %v2026
      %v2028 = vpop.f32.mrf.mxu0
      %v2029 = vadd.f32 0.0, %v2028
      %v2030 = vpop.f32.mrf.mxu0
      %v2031 = vadd.f32 0.0, %v2030
      %v2032 = vpop.f32.mrf.mxu0
      %v2033 = vadd.f32 0.0, %v2032
      %2034 = vmatprep.mubr.bf16.mxu0 0
      %2035 = vmatmul.mubr.bf16.gmra.mxu0 %v1941
      %v2036 = vpop.f32.mrf.mxu0
      %v2037 = vadd.f32 0.0, %v2036
      %v2038 = vpop.f32.mrf.mxu0
      %v2039 = vadd.f32 0.0, %v2038
      %v2040 = vpop.f32.mrf.mxu0
      %v2041 = vadd.f32 0.0, %v2040
      %v2042 = vpop.f32.mrf.mxu0
      %v2043 = vadd.f32 0.0, %v2042
      %2044 = vmatprep.mubr.bf16.mxu0 0
      %2045 = vmatmul.mubr.bf16.gmra.mxu0 %v1944
      %v2046 = vpop.f32.mrf.mxu0
      %v2047 = vadd.f32 0.0, %v2046
      %v2048 = vpop.f32.mrf.mxu0
      %v2049 = vadd.f32 0.0, %v2048
      %v2050 = vpop.f32.mrf.mxu0
      %v2051 = vadd.f32 0.0, %v2050
      %v2052 = vpop.f32.mrf.mxu0
      %v2053 = vadd.f32 0.0, %v2052
      %2054 = vmatprep.mubr.bf16.mxu0 0
      %2055 = vmatmul.mubr.bf16.gmra.mxu0 %v1947
      %v2056 = vpop.f32.mrf.mxu0
      %v2057 = vadd.f32 0.0, %v2056
      %v2058 = vpop.f32.mrf.mxu0
      %v2059 = vadd.f32 0.0, %v2058
      %v2060 = vpop.f32.mrf.mxu0
      %v2061 = vadd.f32 0.0, %v2060
      %v2062 = vpop.f32.mrf.mxu0
      %v2063 = vadd.f32 0.0, %v2062
      %2064 = vmatprep.mubr.bf16.mxu0 0
      %2065 = vmatmul.mubr.bf16.gmra.mxu0 %v1950
      %v2066 = vpop.f32.mrf.mxu0
      %v2067 = vadd.f32 0.0, %v2066
      %v2068 = vpop.f32.mrf.mxu0
      %v2069 = vadd.f32 0.0, %v2068
      %v2070 = vpop.f32.mrf.mxu0
      %v2071 = vpop.f32.mrf.mxu0
      %2072 = vdwg.mxu0
      %2073 = vmatprep.subr.bf16.mxu0 0
      %2074 = vmatpush1.bf16.msra.mxu0 0
      %2075 = vmatprep.subr.bf16.mxu0 0
      %2076 = vmatpush1.bf16.msra.mxu0 0
      %2077 = vmatprep.subr.bf16.mxu0 0
      %2078 = vmatpush1.bf16.msra.mxu0 0
      %2079 = vmatprep.subr.bf16.mxu0 0
      %2080 = vmatpush1.bf16.msra.mxu0 0
      %2081 = vmatprep.subr.bf16.mxu0 0
      %2082 = vmatpush1.bf16.msra.mxu0 0
      %2083 = vmatprep.subr.bf16.mxu0 0
      %2084 = vmatpush1.bf16.msra.mxu0 0
      %2085 = vmatprep.subr.bf16.mxu0 0
      %2086 = vmatpush1.bf16.msra.mxu0 %v1918
      %2087 = vmatprep.subr.bf16.mxu0 0
      %2088 = vmatpush1.bf16.msra.mxu0 %v1915
      %2089 = vmatprep.subr.bf16.mxu0 0
      %2090 = vmatpush2.bf16.msra.mxu0 0
      %2091 = vmatprep.subr.bf16.mxu0 0
      %2092 = vmatpush2.bf16.msra.mxu0 0
      %2093 = vmatprep.subr.bf16.mxu0 0
      %2094 = vmatpush2.bf16.msra.mxu0 0
      %2095 = vmatprep.subr.bf16.mxu0 0
      %2096 = vmatpush2.bf16.msra.mxu0 0
      %2097 = vmatprep.subr.bf16.mxu0 0
      %2098 = vmatpush2.bf16.msra.mxu0 0
      %2099 = vmatprep.subr.bf16.mxu0 0
      %2100 = vmatpush2.bf16.msra.mxu0 0
      %2101 = vmatprep.subr.bf16.mxu0 0
      %2102 = vmatpush2.bf16.msra.mxu0 0
      %2103 = vmatprep.subr.bf16.mxu0 0
      %2104 = vmatpush2.bf16.msra.mxu0 0
      %2105 = vmatprep.mubr.bf16.mxu0 0
      %2106 = vmatmul.mubr.bf16.gmra.mxu0 %v1926
      %v2107 = vpop.f32.mrf.mxu0
      %v2108 = vadd.f32 0.0, %v2107
      %v2109 = vpop.f32.mrf.mxu0
      %v2110 = vpop.f32.mrf.mxu0
      %v2111 = vadd.f32 0.0, %v2110
      %v2112 = vpop.f32.mrf.mxu0
      %2113 = vmatprep.mubr.bf16.mxu0 0
      %2114 = vmatmul.mubr.bf16.gmra.mxu0 %v1929
      %v2115 = vpop.f32.mrf.mxu0
      %v2116 = vadd.f32 0.0, %v2115
      %v2117 = vpop.f32.mrf.mxu0
      %v2118 = vpop.f32.mrf.mxu0
      %v2119 = vadd.f32 0.0, %v2118
      %v2120 = vpop.f32.mrf.mxu0
      %2121 = vmatprep.mubr.bf16.mxu0 0
      %2122 = vmatmul.mubr.bf16.gmra.mxu0 %v1932
      %v2123 = vpop.f32.mrf.mxu0
      %v2124 = vadd.f32 0.0, %v2123
      %v2125 = vpop.f32.mrf.mxu0
      %v2126 = vpop.f32.mrf.mxu0
      %v2127 = vadd.f32 0.0, %v2126
      %v2128 = vpop.f32.mrf.mxu0
      %2129 = vmatprep.mubr.bf16.mxu0 0
      %2130 = vmatmul.mubr.bf16.gmra.mxu0 %v1935
      %v2131 = vpop.f32.mrf.mxu0
      %v2132 = vadd.f32 0.0, %v2131
      %v2133 = vpop.f32.mrf.mxu0
      %v2134 = vpop.f32.mrf.mxu0
      %v2135 = vadd.f32 0.0, %v2134
      %v2136 = vpop.f32.mrf.mxu0
      %2137 = vmatprep.mubr.bf16.mxu0 0
      %2138 = vmatmul.mubr.bf16.gmra.mxu0 %v1938
      %v2139 = vpop.f32.mrf.mxu0
      %v2140 = vadd.f32 0.0, %v2139
      %v2141 = vpop.f32.mrf.mxu0
      %v2142 = vpop.f32.mrf.mxu0
      %v2143 = vadd.f32 0.0, %v2142
      %v2144 = vpop.f32.mrf.mxu0
      %2145 = vmatprep.mubr.bf16.mxu0 0
      %2146 = vmatmul.mubr.bf16.gmra.mxu0 %v1941
      %v2147 = vpop.f32.mrf.mxu0
      %v2148 = vadd.f32 0.0, %v2147
      %v2149 = vpop.f32.mrf.mxu0
      %v2150 = vpop.f32.mrf.mxu0
      %v2151 = vadd.f32 0.0, %v2150
      %v2152 = vpop.f32.mrf.mxu0
      %2153 = vmatprep.mubr.bf16.mxu0 0
      %2154 = vmatmul.mubr.bf16.gmra.mxu0 %v1944
      %v2155 = vpop.f32.mrf.mxu0
      %v2156 = vadd.f32 0.0, %v2155
      %v2157 = vpop.f32.mrf.mxu0
      %v2158 = vpop.f32.mrf.mxu0
      %v2159 = vadd.f32 0.0, %v2158
      %v2160 = vpop.f32.mrf.mxu0
      %2161 = vmatprep.mubr.bf16.mxu0 0
      %2162 = vmatmul.mubr.bf16.gmra.mxu0 %v1947
      %v2163 = vpop.f32.mrf.mxu0
      %v2164 = vadd.f32 0.0, %v2163
      %v2165 = vpop.f32.mrf.mxu0
      %v2166 = vpop.f32.mrf.mxu0
      %v2167 = vadd.f32 0.0, %v2166
      %v2168 = vpop.f32.mrf.mxu0
      %2169 = vmatprep.mubr.bf16.mxu0 0
      %2170 = vmatmul.mubr.bf16.gmra.mxu0 %v1950
      %v2171 = vpop.f32.mrf.mxu0
      %v2172 = vadd.f32 0.0, %v2171
      %v2173 = vpop.f32.mrf.mxu0
      %v2174 = vpop.f32.mrf.mxu0
      %v2175 = vpop.f32.mrf.mxu0
      %2176 = vdwg.mxu0
      %v2177 = vadd.f32 %v1784, %v1987
      %v2178 = vadd.f32 %v1785, %v1989
      %v2179 = vadd.f32 %v1786, %v2108
      %v2180 = vadd.f32 %v1787, %v1991
      %v2181 = vadd.f32 %v1788, %v1993
      %v2182 = vadd.f32 %v1789, %v2111
      %v2183 = vadd.f32 %v1790, %v1997
      %v2184 = vadd.f32 %v1791, %v1999
      %v2185 = vadd.f32 %v1792, %v2116
      %v2186 = vadd.f32 %v1793, %v2001
      %v2187 = vadd.f32 %v1794, %v2003
      %v2188 = vadd.f32 %v1795, %v2119
      %v2189 = vadd.f32 %v1796, %v2007
      %v2190 = vadd.f32 %v1797, %v2009
      %v2191 = vadd.f32 %v1798, %v2124
      %v2192 = vadd.f32 %v1799, %v2011
      %v2193 = vadd.f32 %v1800, %v2013
      %v2194 = vadd.f32 %v1801, %v2127
      %v2195 = vadd.f32 %v1802, %v2017
      %v2196 = vadd.f32 %v1803, %v2019
      %v2197 = vadd.f32 %v1804, %v2132
      %v2198 = vadd.f32 %v1805, %v2021
      %v2199 = vadd.f32 %v1806, %v2023
      %v2200 = vadd.f32 %v1807, %v2135
      %v2201 = vadd.f32 %v1808, %v2027
      %v2202 = vadd.f32 %v1809, %v2029
      %v2203 = vadd.f32 %v1810, %v2140
      %v2204 = vadd.f32 %v1811, %v2031
      %v2205 = vadd.f32 %v1812, %v2033
      %v2206 = vadd.f32 %v1813, %v2143
      %v2207 = vadd.f32 %v1814, %v2037
      %v2208 = vadd.f32 %v1815, %v2039
      %v2209 = vadd.f32 %v1816, %v2148
      %v2210 = vadd.f32 %v1817, %v2041
      %v2211 = vadd.f32 %v1818, %v2043
      %v2212 = vadd.f32 %v1819, %v2151
      %v2213 = vadd.f32 %v1820, %v2047
      %v2214 = vadd.f32 %v1821, %v2049
      %v2215 = vadd.f32 %v1822, %v2156
      %v2216 = vadd.f32 %v1823, %v2051
      %v2217 = vadd.f32 %v1824, %v2053
      %v2218 = vadd.f32 %v1825, %v2159
      %v2219 = vadd.f32 %v1826, %v2057
      %v2220 = vadd.f32 %v1827, %v2059
      %v2221 = vadd.f32 %v1828, %v2164
      %v2222 = vadd.f32 %v1829, %v2061
      %v2223 = vadd.f32 %v1830, %v2063
      %v2224 = vadd.f32 %v1831, %v2167
      %v2225 = vadd.f32 %v1832, %v2067
      %v2226 = vadd.f32 %v1833, %v2069
      %v2227 = vadd.f32 %v1834, %v2172
      %s2228 = scalar_lea.vmem %s4, 272
      %v2229 = vld [vmem:[%s2228] sm:$0xf]
      %v2230 = vld [vmem:[%s2228 + $0x4] sm:$0xf]
      %v2231 = vld [vmem:[%s2228 + $0x8] sm:$0xf]
      %v2232 = vld [vmem:[%s2228 + $0xc] sm:$0xf]
      %v2233 = vld [vmem:[%s2228 + $0x10] sm:$0xf]
      %v2234 = vld [vmem:[%s2228 + $0x14] sm:$0xf]
      %v2235 = vld [vmem:[%s2228 + $0x18] sm:$0xf]
      %v2236 = vld [vmem:[%s2228 + $0x1c] sm:$0xf]
      %v2237 = vld [vmem:[%s2228 + $0x20] sm:$0xf]
      %v2238 = vld [vmem:[%s2228 + $0x24] sm:$0xf]
      %v2239 = vld [vmem:[%s2228 + $0x28] sm:$0xf]
      %v2240 = vld [vmem:[%s2228 + $0x2c] sm:$0xf]
      %v2241 = vld [vmem:[%s2228 + $0x30] sm:$0xf]
      %v2242 = vld [vmem:[%s2228 + $0x34] sm:$0xf]
      %v2243 = vld [vmem:[%s2228 + $0x38] sm:$0xf]
      %v2244 = vld [vmem:[%s2228 + $0x3c] sm:$0xf]
      %v2245 = vld [vmem:[%s2228 + $0x40] sm:$0xf]
      %v2263 = vunpack.c.l.b16 %v2229
      %v2264 = vunpack.c.l.b16 %v2230
      %v2265 = vunpack.c.l.b16 %v2231
      %v2266 = vunpack.c.l.b16 %v2232
      %v2267 = vunpack.c.l.b16 %v2233
      %v2268 = vunpack.c.l.b16 %v2234
      %v2269 = vunpack.c.l.b16 %v2235
      %v2270 = vunpack.c.l.b16 %v2236
      %v2271 = vunpack.c.l.b16 %v2237
      %v2272 = vunpack.c.l.b16 %v2238
      %v2273 = vunpack.c.l.b16 %v2239
      %v2274 = vunpack.c.l.b16 %v2240
      %v2275 = vunpack.c.l.b16 %v2241
      %v2276 = vunpack.c.l.b16 %v2242
      %v2277 = vunpack.c.l.b16 %v2243
      %v2278 = vunpack.c.l.b16 %v2244
      %v2279 = vunpack.c.l.b16 %v2245
      %v2280 = vpack.c.b16 %v2264, %v2263
      %v2281 = vpack.c.b16 %v2266, %v2265
      %v2282 = vpack.c.b16 %v2268, %v2267
      %v2283 = vpack.c.b16 %v2270, %v2269
      %v2284 = vpack.c.b16 %v2272, %v2271
      %v2285 = vpack.c.b16 %v2274, %v2273
      %v2286 = vpack.c.b16 %v2276, %v2275
      %v2287 = vpack.c.b16 %v2278, %v2277
      %v2288 = vpack.c.b16 %v2279, %v2279
      %2289 = vrot.lane.b32.xlu0 %v768, 109
      %v2290 = vpop.permute.xlu0 %2289
      %2291 = vrot.lane.b32.xlu0 %v769, 109
      %v2292 = vpop.permute.xlu0 %2291
      %2293 = vrot.lane.b32.xlu0 %v770, 109
      %v2294 = vpop.permute.xlu0 %2293
      %2295 = vrot.lane.b32.xlu0 %v771, 109
      %v2296 = vpop.permute.xlu0 %2295
      %2297 = vrot.lane.b32.xlu0 %v772, 109
      %v2298 = vpop.permute.xlu0 %2297
      %2299 = vrot.lane.b32.xlu0 %v773, 109
      %v2300 = vpop.permute.xlu0 %2299
      %2301 = vrot.lane.b32.xlu0 %v774, 109
      %v2302 = vpop.permute.xlu0 %2301
      %2303 = vrot.lane.b32.xlu0 %v775, 109
      %v2304 = vpop.permute.xlu0 %2303
      %vm2305 = vcmask 891904
      %v2306 = vsel %vm2305, %v2290, %v2292
      %v2307 = vsel %vm2305, %v2292, %v2294
      %v2308 = vsel %vm2305, %v2294, %v2296
      %v2309 = vsel %vm2305, %v2298, %v2300
      %v2310 = vsel %vm2305, %v2300, %v2302
      %v2311 = vsel %vm2305, %v2302, %v2304
      %v2319 = vsel %vm894, %v2280, 0
      %v2322 = vsel %vm894, %v2281, 0
      %v2325 = vsel %vm894, %v2282, 0
      %v2328 = vsel %vm894, %v2283, 0
      %v2331 = vsel %vm894, %v2284, 0
      %v2334 = vsel %vm894, %v2285, 0
      %v2337 = vsel %vm894, %v2286, 0
      %v2340 = vsel %vm894, %v2287, 0
      %v2343 = vsel %vm894, %v2288, 0
      %2345 = vmatprep.subr.bf16.mxu0 0
      %2346 = vmatpush1.bf16.msra.mxu0 0
      %2347 = vmatprep.subr.bf16.mxu0 0
      %2348 = vmatpush1.bf16.msra.mxu0 0
      %2349 = vmatprep.subr.bf16.mxu0 0
      %2350 = vmatpush1.bf16.msra.mxu0 0
      %2351 = vmatprep.subr.bf16.mxu0 0
      %2352 = vmatpush1.bf16.msra.mxu0 0
      %2353 = vmatprep.subr.bf16.mxu0 0
      %2354 = vmatpush1.bf16.msra.mxu0 0
      %2355 = vmatprep.subr.bf16.mxu0 0
      %2356 = vmatpush1.bf16.msra.mxu0 0
      %2357 = vmatprep.subr.bf16.mxu0 %v2310
      %2358 = vmatpush1.bf16.msra.mxu0 %v2309
      %2359 = vmatprep.subr.bf16.mxu0 %v2307
      %2360 = vmatpush1.bf16.msra.mxu0 %v2306
      %2361 = vmatprep.subr.bf16.mxu0 0
      %2362 = vmatpush2.bf16.msra.mxu0 0
      %2363 = vmatprep.subr.bf16.mxu0 0
      %2364 = vmatpush2.bf16.msra.mxu0 0
      %2365 = vmatprep.subr.bf16.mxu0 0
      %2366 = vmatpush2.bf16.msra.mxu0 0
      %2367 = vmatprep.subr.bf16.mxu0 0
      %2368 = vmatpush2.bf16.msra.mxu0 0
      %2369 = vmatprep.subr.bf16.mxu0 0
      %2370 = vmatpush2.bf16.msra.mxu0 0
      %2371 = vmatprep.subr.bf16.mxu0 0
      %2372 = vmatpush2.bf16.msra.mxu0 0
      %2373 = vmatprep.subr.bf16.mxu0 0
      %2374 = vmatpush2.bf16.msra.mxu0 0
      %2375 = vmatprep.subr.bf16.mxu0 0
      %2376 = vmatpush2.bf16.msra.mxu0 0
      %2377 = vmatprep.mubr.bf16.mxu0 0
      %2378 = vmatmul.mubr.bf16.gmra.mxu0 %v2319
      %v2379 = vpop.f32.mrf.mxu0
      %v2380 = vadd.f32 0.0, %v2379
      %v2381 = vpop.f32.mrf.mxu0
      %v2382 = vadd.f32 0.0, %v2381
      %v2383 = vpop.f32.mrf.mxu0
      %v2384 = vadd.f32 0.0, %v2383
      %v2385 = vpop.f32.mrf.mxu0
      %v2386 = vadd.f32 0.0, %v2385
      %2387 = vmatprep.mubr.bf16.mxu0 0
      %2388 = vmatmul.mubr.bf16.gmra.mxu0 %v2322
      %v2389 = vpop.f32.mrf.mxu0
      %v2390 = vadd.f32 0.0, %v2389
      %v2391 = vpop.f32.mrf.mxu0
      %v2392 = vadd.f32 0.0, %v2391
      %v2393 = vpop.f32.mrf.mxu0
      %v2394 = vadd.f32 0.0, %v2393
      %v2395 = vpop.f32.mrf.mxu0
      %v2396 = vadd.f32 0.0, %v2395
      %2397 = vmatprep.mubr.bf16.mxu0 0
      %2398 = vmatmul.mubr.bf16.gmra.mxu0 %v2325
      %v2399 = vpop.f32.mrf.mxu0
      %v2400 = vadd.f32 0.0, %v2399
      %v2401 = vpop.f32.mrf.mxu0
      %v2402 = vadd.f32 0.0, %v2401
      %v2403 = vpop.f32.mrf.mxu0
      %v2404 = vadd.f32 0.0, %v2403
      %v2405 = vpop.f32.mrf.mxu0
      %v2406 = vadd.f32 0.0, %v2405
      %2407 = vmatprep.mubr.bf16.mxu0 0
      %2408 = vmatmul.mubr.bf16.gmra.mxu0 %v2328
      %v2409 = vpop.f32.mrf.mxu0
      %v2410 = vadd.f32 0.0, %v2409
      %v2411 = vpop.f32.mrf.mxu0
      %v2412 = vadd.f32 0.0, %v2411
      %v2413 = vpop.f32.mrf.mxu0
      %v2414 = vadd.f32 0.0, %v2413
      %v2415 = vpop.f32.mrf.mxu0
      %v2416 = vadd.f32 0.0, %v2415
      %2417 = vmatprep.mubr.bf16.mxu0 0
      %2418 = vmatmul.mubr.bf16.gmra.mxu0 %v2331
      %v2419 = vpop.f32.mrf.mxu0
      %v2420 = vadd.f32 0.0, %v2419
      %v2421 = vpop.f32.mrf.mxu0
      %v2422 = vadd.f32 0.0, %v2421
      %v2423 = vpop.f32.mrf.mxu0
      %v2424 = vadd.f32 0.0, %v2423
      %v2425 = vpop.f32.mrf.mxu0
      %v2426 = vadd.f32 0.0, %v2425
      %2427 = vmatprep.mubr.bf16.mxu0 0
      %2428 = vmatmul.mubr.bf16.gmra.mxu0 %v2334
      %v2429 = vpop.f32.mrf.mxu0
      %v2430 = vadd.f32 0.0, %v2429
      %v2431 = vpop.f32.mrf.mxu0
      %v2432 = vadd.f32 0.0, %v2431
      %v2433 = vpop.f32.mrf.mxu0
      %v2434 = vadd.f32 0.0, %v2433
      %v2435 = vpop.f32.mrf.mxu0
      %v2436 = vadd.f32 0.0, %v2435
      %2437 = vmatprep.mubr.bf16.mxu0 0
      %2438 = vmatmul.mubr.bf16.gmra.mxu0 %v2337
      %v2439 = vpop.f32.mrf.mxu0
      %v2440 = vadd.f32 0.0, %v2439
      %v2441 = vpop.f32.mrf.mxu0
      %v2442 = vadd.f32 0.0, %v2441
      %v2443 = vpop.f32.mrf.mxu0
      %v2444 = vadd.f32 0.0, %v2443
      %v2445 = vpop.f32.mrf.mxu0
      %v2446 = vadd.f32 0.0, %v2445
      %2447 = vmatprep.mubr.bf16.mxu0 0
      %2448 = vmatmul.mubr.bf16.gmra.mxu0 %v2340
      %v2449 = vpop.f32.mrf.mxu0
      %v2450 = vadd.f32 0.0, %v2449
      %v2451 = vpop.f32.mrf.mxu0
      %v2452 = vadd.f32 0.0, %v2451
      %v2453 = vpop.f32.mrf.mxu0
      %v2454 = vadd.f32 0.0, %v2453
      %v2455 = vpop.f32.mrf.mxu0
      %v2456 = vadd.f32 0.0, %v2455
      %2457 = vmatprep.mubr.bf16.mxu0 0
      %2458 = vmatmul.mubr.bf16.gmra.mxu0 %v2343
      %v2459 = vpop.f32.mrf.mxu0
      %v2460 = vadd.f32 0.0, %v2459
      %v2461 = vpop.f32.mrf.mxu0
      %v2462 = vadd.f32 0.0, %v2461
      %v2463 = vpop.f32.mrf.mxu0
      %v2464 = vpop.f32.mrf.mxu0
      %2465 = vdwg.mxu0
      %2466 = vmatprep.subr.bf16.mxu0 0
      %2467 = vmatpush1.bf16.msra.mxu0 0
      %2468 = vmatprep.subr.bf16.mxu0 0
      %2469 = vmatpush1.bf16.msra.mxu0 0
      %2470 = vmatprep.subr.bf16.mxu0 0
      %2471 = vmatpush1.bf16.msra.mxu0 0
      %2472 = vmatprep.subr.bf16.mxu0 0
      %2473 = vmatpush1.bf16.msra.mxu0 0
      %2474 = vmatprep.subr.bf16.mxu0 0
      %2475 = vmatpush1.bf16.msra.mxu0 0
      %2476 = vmatprep.subr.bf16.mxu0 0
      %2477 = vmatpush1.bf16.msra.mxu0 0
      %2478 = vmatprep.subr.bf16.mxu0 0
      %2479 = vmatpush1.bf16.msra.mxu0 %v2311
      %2480 = vmatprep.subr.bf16.mxu0 0
      %2481 = vmatpush1.bf16.msra.mxu0 %v2308
      %2482 = vmatprep.subr.bf16.mxu0 0
      %2483 = vmatpush2.bf16.msra.mxu0 0
      %2484 = vmatprep.subr.bf16.mxu0 0
      %2485 = vmatpush2.bf16.msra.mxu0 0
      %2486 = vmatprep.subr.bf16.mxu0 0
      %2487 = vmatpush2.bf16.msra.mxu0 0
      %2488 = vmatprep.subr.bf16.mxu0 0
      %2489 = vmatpush2.bf16.msra.mxu0 0
      %2490 = vmatprep.subr.bf16.mxu0 0
      %2491 = vmatpush2.bf16.msra.mxu0 0
      %2492 = vmatprep.subr.bf16.mxu0 0
      %2493 = vmatpush2.bf16.msra.mxu0 0
      %2494 = vmatprep.subr.bf16.mxu0 0
      %2495 = vmatpush2.bf16.msra.mxu0 0
      %2496 = vmatprep.subr.bf16.mxu0 0
      %2497 = vmatpush2.bf16.msra.mxu0 0
      %2498 = vmatprep.mubr.bf16.mxu0 0
      %2499 = vmatmul.mubr.bf16.gmra.mxu0 %v2319
      %v2500 = vpop.f32.mrf.mxu0
      %v2501 = vadd.f32 0.0, %v2500
      %v2502 = vpop.f32.mrf.mxu0
      %v2503 = vpop.f32.mrf.mxu0
      %v2504 = vadd.f32 0.0, %v2503
      %v2505 = vpop.f32.mrf.mxu0
      %2506 = vmatprep.mubr.bf16.mxu0 0
      %2507 = vmatmul.mubr.bf16.gmra.mxu0 %v2322
      %v2508 = vpop.f32.mrf.mxu0
      %v2509 = vadd.f32 0.0, %v2508
      %v2510 = vpop.f32.mrf.mxu0
      %v2511 = vpop.f32.mrf.mxu0
      %v2512 = vadd.f32 0.0, %v2511
      %v2513 = vpop.f32.mrf.mxu0
      %2514 = vmatprep.mubr.bf16.mxu0 0
      %2515 = vmatmul.mubr.bf16.gmra.mxu0 %v2325
      %v2516 = vpop.f32.mrf.mxu0
      %v2517 = vadd.f32 0.0, %v2516
      %v2518 = vpop.f32.mrf.mxu0
      %v2519 = vpop.f32.mrf.mxu0
      %v2520 = vadd.f32 0.0, %v2519
      %v2521 = vpop.f32.mrf.mxu0
      %2522 = vmatprep.mubr.bf16.mxu0 0
      %2523 = vmatmul.mubr.bf16.gmra.mxu0 %v2328
      %v2524 = vpop.f32.mrf.mxu0
      %v2525 = vadd.f32 0.0, %v2524
      %v2526 = vpop.f32.mrf.mxu0
      %v2527 = vpop.f32.mrf.mxu0
      %v2528 = vadd.f32 0.0, %v2527
      %v2529 = vpop.f32.mrf.mxu0
      %2530 = vmatprep.mubr.bf16.mxu0 0
      %2531 = vmatmul.mubr.bf16.gmra.mxu0 %v2331
      %v2532 = vpop.f32.mrf.mxu0
      %v2533 = vadd.f32 0.0, %v2532
      %v2534 = vpop.f32.mrf.mxu0
      %v2535 = vpop.f32.mrf.mxu0
      %v2536 = vadd.f32 0.0, %v2535
      %v2537 = vpop.f32.mrf.mxu0
      %2538 = vmatprep.mubr.bf16.mxu0 0
      %2539 = vmatmul.mubr.bf16.gmra.mxu0 %v2334
      %v2540 = vpop.f32.mrf.mxu0
      %v2541 = vadd.f32 0.0, %v2540
      %v2542 = vpop.f32.mrf.mxu0
      %v2543 = vpop.f32.mrf.mxu0
      %v2544 = vadd.f32 0.0, %v2543
      %v2545 = vpop.f32.mrf.mxu0
      %2546 = vmatprep.mubr.bf16.mxu0 0
      %2547 = vmatmul.mubr.bf16.gmra.mxu0 %v2337
      %v2548 = vpop.f32.mrf.mxu0
      %v2549 = vadd.f32 0.0, %v2548
      %v2550 = vpop.f32.mrf.mxu0
      %v2551 = vpop.f32.mrf.mxu0
      %v2552 = vadd.f32 0.0, %v2551
      %v2553 = vpop.f32.mrf.mxu0
      %2554 = vmatprep.mubr.bf16.mxu0 0
      %2555 = vmatmul.mubr.bf16.gmra.mxu0 %v2340
      %v2556 = vpop.f32.mrf.mxu0
      %v2557 = vadd.f32 0.0, %v2556
      %v2558 = vpop.f32.mrf.mxu0
      %v2559 = vpop.f32.mrf.mxu0
      %v2560 = vadd.f32 0.0, %v2559
      %v2561 = vpop.f32.mrf.mxu0
      %2562 = vmatprep.mubr.bf16.mxu0 0
      %2563 = vmatmul.mubr.bf16.gmra.mxu0 %v2343
      %v2564 = vpop.f32.mrf.mxu0
      %v2565 = vadd.f32 0.0, %v2564
      %v2566 = vpop.f32.mrf.mxu0
      %v2567 = vpop.f32.mrf.mxu0
      %v2568 = vpop.f32.mrf.mxu0
      %2569 = vdwg.mxu0
      %v2570 = vadd.f32 %v2177, %v2380
      %v2571 = vadd.f32 %v2178, %v2382
      %v2572 = vadd.f32 %v2179, %v2501
      %v2573 = vadd.f32 %v2180, %v2384
      %v2574 = vadd.f32 %v2181, %v2386
      %v2575 = vadd.f32 %v2182, %v2504
      %v2576 = vadd.f32 %v2183, %v2390
      %v2577 = vadd.f32 %v2184, %v2392
      %v2578 = vadd.f32 %v2185, %v2509
      %v2579 = vadd.f32 %v2186, %v2394
      %v2580 = vadd.f32 %v2187, %v2396
      %v2581 = vadd.f32 %v2188, %v2512
      %v2582 = vadd.f32 %v2189, %v2400
      %v2583 = vadd.f32 %v2190, %v2402
      %v2584 = vadd.f32 %v2191, %v2517
      %v2585 = vadd.f32 %v2192, %v2404
      %v2586 = vadd.f32 %v2193, %v2406
      %v2587 = vadd.f32 %v2194, %v2520
      %v2588 = vadd.f32 %v2195, %v2410
      %v2589 = vadd.f32 %v2196, %v2412
      %v2590 = vadd.f32 %v2197, %v2525
      %v2591 = vadd.f32 %v2198, %v2414
      %v2592 = vadd.f32 %v2199, %v2416
      %v2593 = vadd.f32 %v2200, %v2528
      %v2594 = vadd.f32 %v2201, %v2420
      %v2595 = vadd.f32 %v2202, %v2422
      %v2596 = vadd.f32 %v2203, %v2533
      %v2597 = vadd.f32 %v2204, %v2424
      %v2598 = vadd.f32 %v2205, %v2426
      %v2599 = vadd.f32 %v2206, %v2536
      %v2600 = vadd.f32 %v2207, %v2430
      %v2601 = vadd.f32 %v2208, %v2432
      %v2602 = vadd.f32 %v2209, %v2541
      %v2603 = vadd.f32 %v2210, %v2434
      %v2604 = vadd.f32 %v2211, %v2436
      %v2605 = vadd.f32 %v2212, %v2544
      %v2606 = vadd.f32 %v2213, %v2440
      %v2607 = vadd.f32 %v2214, %v2442
      %v2608 = vadd.f32 %v2215, %v2549
      %v2609 = vadd.f32 %v2216, %v2444
      %v2610 = vadd.f32 %v2217, %v2446
      %v2611 = vadd.f32 %v2218, %v2552
      %v2612 = vadd.f32 %v2219, %v2450
      %v2613 = vadd.f32 %v2220, %v2452
      %v2614 = vadd.f32 %v2221, %v2557
      %v2615 = vadd.f32 %v2222, %v2454
      %v2616 = vadd.f32 %v2223, %v2456
      %v2617 = vadd.f32 %v2224, %v2560
      %v2618 = vadd.f32 %v2225, %v2460
      %v2619 = vadd.f32 %v2226, %v2462
      %v2620 = vadd.f32 %v2227, %v2565
      %s2621 = scalar_lea.vmem %s4, 340
      %v2622 = vld [vmem:[%s2621] sm:$0xf]
      %v2623 = vld [vmem:[%s2621 + $0x4] sm:$0xf]
      %v2624 = vld [vmem:[%s2621 + $0x8] sm:$0xf]
      %v2625 = vld [vmem:[%s2621 + $0xc] sm:$0xf]
      %v2626 = vld [vmem:[%s2621 + $0x10] sm:$0xf]
      %v2627 = vld [vmem:[%s2621 + $0x14] sm:$0xf]
      %v2628 = vld [vmem:[%s2621 + $0x18] sm:$0xf]
      %v2629 = vld [vmem:[%s2621 + $0x1c] sm:$0xf]
      %v2630 = vld [vmem:[%s2621 + $0x20] sm:$0xf]
      %v2631 = vld [vmem:[%s2621 + $0x24] sm:$0xf]
      %v2632 = vld [vmem:[%s2621 + $0x28] sm:$0xf]
      %v2633 = vld [vmem:[%s2621 + $0x2c] sm:$0xf]
      %v2634 = vld [vmem:[%s2621 + $0x30] sm:$0xf]
      %v2635 = vld [vmem:[%s2621 + $0x34] sm:$0xf]
      %v2636 = vld [vmem:[%s2621 + $0x38] sm:$0xf]
      %v2637 = vld [vmem:[%s2621 + $0x3c] sm:$0xf]
      %v2638 = vld [vmem:[%s2621 + $0x40] sm:$0xf]
      %v2656 = vunpack.c.l.b16 %v2622
      %v2657 = vunpack.c.l.b16 %v2623
      %v2658 = vunpack.c.l.b16 %v2624
      %v2659 = vunpack.c.l.b16 %v2625
      %v2660 = vunpack.c.l.b16 %v2626
      %v2661 = vunpack.c.l.b16 %v2627
      %v2662 = vunpack.c.l.b16 %v2628
      %v2663 = vunpack.c.l.b16 %v2629
      %v2664 = vunpack.c.l.b16 %v2630
      %v2665 = vunpack.c.l.b16 %v2631
      %v2666 = vunpack.c.l.b16 %v2632
      %v2667 = vunpack.c.l.b16 %v2633
      %v2668 = vunpack.c.l.b16 %v2634
      %v2669 = vunpack.c.l.b16 %v2635
      %v2670 = vunpack.c.l.b16 %v2636
      %v2671 = vunpack.c.l.b16 %v2637
      %v2672 = vunpack.c.l.b16 %v2638
      %v2673 = vpack.c.b16 %v2657, %v2656
      %v2674 = vpack.c.b16 %v2659, %v2658
      %v2675 = vpack.c.b16 %v2661, %v2660
      %v2676 = vpack.c.b16 %v2663, %v2662
      %v2677 = vpack.c.b16 %v2665, %v2664
      %v2678 = vpack.c.b16 %v2667, %v2666
      %v2679 = vpack.c.b16 %v2669, %v2668
      %v2680 = vpack.c.b16 %v2671, %v2670
      %v2681 = vpack.c.b16 %v2672, %v2672
      %2682 = vrot.lane.b32.xlu0 %v768, 108
      %v2683 = vpop.permute.xlu0 %2682
      %2684 = vrot.lane.b32.xlu0 %v769, 108
      %v2685 = vpop.permute.xlu0 %2684
      %2686 = vrot.lane.b32.xlu0 %v770, 108
      %v2687 = vpop.permute.xlu0 %2686
      %2688 = vrot.lane.b32.xlu0 %v771, 108
      %v2689 = vpop.permute.xlu0 %2688
      %2690 = vrot.lane.b32.xlu0 %v772, 108
      %v2691 = vpop.permute.xlu0 %2690
      %2692 = vrot.lane.b32.xlu0 %v773, 108
      %v2693 = vpop.permute.xlu0 %2692
      %2694 = vrot.lane.b32.xlu0 %v774, 108
      %v2695 = vpop.permute.xlu0 %2694
      %2696 = vrot.lane.b32.xlu0 %v775, 108
      %v2697 = vpop.permute.xlu0 %2696
      %vm2698 = vcmask 883712
      %v2699 = vsel %vm2698, %v2683, %v2685
      %v2700 = vsel %vm2698, %v2685, %v2687
      %v2701 = vsel %vm2698, %v2687, %v2689
      %v2702 = vsel %vm2698, %v2691, %v2693
      %v2703 = vsel %vm2698, %v2693, %v2695
      %v2704 = vsel %vm2698, %v2695, %v2697
      %v2712 = vsel %vm894, %v2673, 0
      %v2715 = vsel %vm894, %v2674, 0
      %v2718 = vsel %vm894, %v2675, 0
      %v2721 = vsel %vm894, %v2676, 0
      %v2724 = vsel %vm894, %v2677, 0
      %v2727 = vsel %vm894, %v2678, 0
      %v2730 = vsel %vm894, %v2679, 0
      %v2733 = vsel %vm894, %v2680, 0
      %v2736 = vsel %vm894, %v2681, 0
      %2738 = vmatprep.subr.bf16.mxu0 0
      %2739 = vmatpush1.bf16.msra.mxu0 0
      %2740 = vmatprep.subr.bf16.mxu0 0
      %2741 = vmatpush1.bf16.msra.mxu0 0
      %2742 = vmatprep.subr.bf16.mxu0 0
      %2743 = vmatpush1.bf16.msra.mxu0 0
      %2744 = vmatprep.subr.bf16.mxu0 0
      %2745 = vmatpush1.bf16.msra.mxu0 0
      %2746 = vmatprep.subr.bf16.mxu0 0
      %2747 = vmatpush1.bf16.msra.mxu0 0
      %2748 = vmatprep.subr.bf16.mxu0 0
      %2749 = vmatpush1.bf16.msra.mxu0 0
      %2750 = vmatprep.subr.bf16.mxu0 %v2703
      %2751 = vmatpush1.bf16.msra.mxu0 %v2702
      %2752 = vmatprep.subr.bf16.mxu0 %v2700
      %2753 = vmatpush1.bf16.msra.mxu0 %v2699
      %2754 = vmatprep.subr.bf16.mxu0 0
      %2755 = vmatpush2.bf16.msra.mxu0 0
      %2756 = vmatprep.subr.bf16.mxu0 0
      %2757 = vmatpush2.bf16.msra.mxu0 0
      %2758 = vmatprep.subr.bf16.mxu0 0
      %2759 = vmatpush2.bf16.msra.mxu0 0
      %2760 = vmatprep.subr.bf16.mxu0 0
      %2761 = vmatpush2.bf16.msra.mxu0 0
      %2762 = vmatprep.subr.bf16.mxu0 0
      %2763 = vmatpush2.bf16.msra.mxu0 0
      %2764 = vmatprep.subr.bf16.mxu0 0
      %2765 = vmatpush2.bf16.msra.mxu0 0
      %2766 = vmatprep.subr.bf16.mxu0 0
      %2767 = vmatpush2.bf16.msra.mxu0 0
      %2768 = vmatprep.subr.bf16.mxu0 0
      %2769 = vmatpush2.bf16.msra.mxu0 0
      %2770 = vmatprep.mubr.bf16.mxu0 0
      %2771 = vmatmul.mubr.bf16.gmra.mxu0 %v2712
      %v2772 = vpop.f32.mrf.mxu0
      %v2773 = vadd.f32 0.0, %v2772
      %v2774 = vpop.f32.mrf.mxu0
      %v2775 = vadd.f32 0.0, %v2774
      %v2776 = vpop.f32.mrf.mxu0
      %v2777 = vadd.f32 0.0, %v2776
      %v2778 = vpop.f32.mrf.mxu0
      %v2779 = vadd.f32 0.0, %v2778
      %2780 = vmatprep.mubr.bf16.mxu0 0
      %2781 = vmatmul.mubr.bf16.gmra.mxu0 %v2715
      %v2782 = vpop.f32.mrf.mxu0
      %v2783 = vadd.f32 0.0, %v2782
      %v2784 = vpop.f32.mrf.mxu0
      %v2785 = vadd.f32 0.0, %v2784
      %v2786 = vpop.f32.mrf.mxu0
      %v2787 = vadd.f32 0.0, %v2786
      %v2788 = vpop.f32.mrf.mxu0
      %v2789 = vadd.f32 0.0, %v2788
      %2790 = vmatprep.mubr.bf16.mxu0 0
      %2791 = vmatmul.mubr.bf16.gmra.mxu0 %v2718
      %v2792 = vpop.f32.mrf.mxu0
      %v2793 = vadd.f32 0.0, %v2792
      %v2794 = vpop.f32.mrf.mxu0
      %v2795 = vadd.f32 0.0, %v2794
      %v2796 = vpop.f32.mrf.mxu0
      %v2797 = vadd.f32 0.0, %v2796
      %v2798 = vpop.f32.mrf.mxu0
      %v2799 = vadd.f32 0.0, %v2798
      %2800 = vmatprep.mubr.bf16.mxu0 0
      %2801 = vmatmul.mubr.bf16.gmra.mxu0 %v2721
      %v2802 = vpop.f32.mrf.mxu0
      %v2803 = vadd.f32 0.0, %v2802
      %v2804 = vpop.f32.mrf.mxu0
      %v2805 = vadd.f32 0.0, %v2804
      %v2806 = vpop.f32.mrf.mxu0
      %v2807 = vadd.f32 0.0, %v2806
      %v2808 = vpop.f32.mrf.mxu0
      %v2809 = vadd.f32 0.0, %v2808
      %2810 = vmatprep.mubr.bf16.mxu0 0
      %2811 = vmatmul.mubr.bf16.gmra.mxu0 %v2724
      %v2812 = vpop.f32.mrf.mxu0
      %v2813 = vadd.f32 0.0, %v2812
      %v2814 = vpop.f32.mrf.mxu0
      %v2815 = vadd.f32 0.0, %v2814
      %v2816 = vpop.f32.mrf.mxu0
      %v2817 = vadd.f32 0.0, %v2816
      %v2818 = vpop.f32.mrf.mxu0
      %v2819 = vadd.f32 0.0, %v2818
      %2820 = vmatprep.mubr.bf16.mxu0 0
      %2821 = vmatmul.mubr.bf16.gmra.mxu0 %v2727
      %v2822 = vpop.f32.mrf.mxu0
      %v2823 = vadd.f32 0.0, %v2822
      %v2824 = vpop.f32.mrf.mxu0
      %v2825 = vadd.f32 0.0, %v2824
      %v2826 = vpop.f32.mrf.mxu0
      %v2827 = vadd.f32 0.0, %v2826
      %v2828 = vpop.f32.mrf.mxu0
      %v2829 = vadd.f32 0.0, %v2828
      %2830 = vmatprep.mubr.bf16.mxu0 0
      %2831 = vmatmul.mubr.bf16.gmra.mxu0 %v2730
      %v2832 = vpop.f32.mrf.mxu0
      %v2833 = vadd.f32 0.0, %v2832
      %v2834 = vpop.f32.mrf.mxu0
      %v2835 = vadd.f32 0.0, %v2834
      %v2836 = vpop.f32.mrf.mxu0
      %v2837 = vadd.f32 0.0, %v2836
      %v2838 = vpop.f32.mrf.mxu0
      %v2839 = vadd.f32 0.0, %v2838
      %2840 = vmatprep.mubr.bf16.mxu0 0
      %2841 = vmatmul.mubr.bf16.gmra.mxu0 %v2733
      %v2842 = vpop.f32.mrf.mxu0
      %v2843 = vadd.f32 0.0, %v2842
      %v2844 = vpop.f32.mrf.mxu0
      %v2845 = vadd.f32 0.0, %v2844
      %v2846 = vpop.f32.mrf.mxu0
      %v2847 = vadd.f32 0.0, %v2846
      %v2848 = vpop.f32.mrf.mxu0
      %v2849 = vadd.f32 0.0, %v2848
      %2850 = vmatprep.mubr.bf16.mxu0 0
      %2851 = vmatmul.mubr.bf16.gmra.mxu0 %v2736
      %v2852 = vpop.f32.mrf.mxu0
      %v2853 = vadd.f32 0.0, %v2852
      %v2854 = vpop.f32.mrf.mxu0
      %v2855 = vadd.f32 0.0, %v2854
      %v2856 = vpop.f32.mrf.mxu0
      %v2857 = vpop.f32.mrf.mxu0
      %2858 = vdwg.mxu0
      %2859 = vmatprep.subr.bf16.mxu0 0
      %2860 = vmatpush1.bf16.msra.mxu0 0
      %2861 = vmatprep.subr.bf16.mxu0 0
      %2862 = vmatpush1.bf16.msra.mxu0 0
      %2863 = vmatprep.subr.bf16.mxu0 0
      %2864 = vmatpush1.bf16.msra.mxu0 0
      %2865 = vmatprep.subr.bf16.mxu0 0
      %2866 = vmatpush1.bf16.msra.mxu0 0
      %2867 = vmatprep.subr.bf16.mxu0 0
      %2868 = vmatpush1.bf16.msra.mxu0 0
      %2869 = vmatprep.subr.bf16.mxu0 0
      %2870 = vmatpush1.bf16.msra.mxu0 0
      %2871 = vmatprep.subr.bf16.mxu0 0
      %2872 = vmatpush1.bf16.msra.mxu0 %v2704
      %2873 = vmatprep.subr.bf16.mxu0 0
      %2874 = vmatpush1.bf16.msra.mxu0 %v2701
      %2875 = vmatprep.subr.bf16.mxu0 0
      %2876 = vmatpush2.bf16.msra.mxu0 0
      %2877 = vmatprep.subr.bf16.mxu0 0
      %2878 = vmatpush2.bf16.msra.mxu0 0
      %2879 = vmatprep.subr.bf16.mxu0 0
      %2880 = vmatpush2.bf16.msra.mxu0 0
      %2881 = vmatprep.subr.bf16.mxu0 0
      %2882 = vmatpush2.bf16.msra.mxu0 0
      %2883 = vmatprep.subr.bf16.mxu0 0
      %2884 = vmatpush2.bf16.msra.mxu0 0
      %2885 = vmatprep.subr.bf16.mxu0 0
      %2886 = vmatpush2.bf16.msra.mxu0 0
      %2887 = vmatprep.subr.bf16.mxu0 0
      %2888 = vmatpush2.bf16.msra.mxu0 0
      %2889 = vmatprep.subr.bf16.mxu0 0
      %2890 = vmatpush2.bf16.msra.mxu0 0
      %2891 = vmatprep.mubr.bf16.mxu0 0
      %2892 = vmatmul.mubr.bf16.gmra.mxu0 %v2712
      %v2893 = vpop.f32.mrf.mxu0
      %v2894 = vadd.f32 0.0, %v2893
      %v2895 = vpop.f32.mrf.mxu0
      %v2896 = vpop.f32.mrf.mxu0
      %v2897 = vadd.f32 0.0, %v2896
      %v2898 = vpop.f32.mrf.mxu0
      %2899 = vmatprep.mubr.bf16.mxu0 0
      %2900 = vmatmul.mubr.bf16.gmra.mxu0 %v2715
      %v2901 = vpop.f32.mrf.mxu0
      %v2902 = vadd.f32 0.0, %v2901
      %v2903 = vpop.f32.mrf.mxu0
      %v2904 = vpop.f32.mrf.mxu0
      %v2905 = vadd.f32 0.0, %v2904
      %v2906 = vpop.f32.mrf.mxu0
      %2907 = vmatprep.mubr.bf16.mxu0 0
      %2908 = vmatmul.mubr.bf16.gmra.mxu0 %v2718
      %v2909 = vpop.f32.mrf.mxu0
      %v2910 = vadd.f32 0.0, %v2909
      %v2911 = vpop.f32.mrf.mxu0
      %v2912 = vpop.f32.mrf.mxu0
      %v2913 = vadd.f32 0.0, %v2912
      %v2914 = vpop.f32.mrf.mxu0
      %2915 = vmatprep.mubr.bf16.mxu0 0
      %2916 = vmatmul.mubr.bf16.gmra.mxu0 %v2721
      %v2917 = vpop.f32.mrf.mxu0
      %v2918 = vadd.f32 0.0, %v2917
      %v2919 = vpop.f32.mrf.mxu0
      %v2920 = vpop.f32.mrf.mxu0
      %v2921 = vadd.f32 0.0, %v2920
      %v2922 = vpop.f32.mrf.mxu0
      %2923 = vmatprep.mubr.bf16.mxu0 0
      %2924 = vmatmul.mubr.bf16.gmra.mxu0 %v2724
      %v2925 = vpop.f32.mrf.mxu0
      %v2926 = vadd.f32 0.0, %v2925
      %v2927 = vpop.f32.mrf.mxu0
      %v2928 = vpop.f32.mrf.mxu0
      %v2929 = vadd.f32 0.0, %v2928
      %v2930 = vpop.f32.mrf.mxu0
      %2931 = vmatprep.mubr.bf16.mxu0 0
      %2932 = vmatmul.mubr.bf16.gmra.mxu0 %v2727
      %v2933 = vpop.f32.mrf.mxu0
      %v2934 = vadd.f32 0.0, %v2933
      %v2935 = vpop.f32.mrf.mxu0
      %v2936 = vpop.f32.mrf.mxu0
      %v2937 = vadd.f32 0.0, %v2936
      %v2938 = vpop.f32.mrf.mxu0
      %2939 = vmatprep.mubr.bf16.mxu0 0
      %2940 = vmatmul.mubr.bf16.gmra.mxu0 %v2730
      %v2941 = vpop.f32.mrf.mxu0
      %v2942 = vadd.f32 0.0, %v2941
      %v2943 = vpop.f32.mrf.mxu0
      %v2944 = vpop.f32.mrf.mxu0
      %v2945 = vadd.f32 0.0, %v2944
      %v2946 = vpop.f32.mrf.mxu0
      %2947 = vmatprep.mubr.bf16.mxu0 0
      %2948 = vmatmul.mubr.bf16.gmra.mxu0 %v2733
      %v2949 = vpop.f32.mrf.mxu0
      %v2950 = vadd.f32 0.0, %v2949
      %v2951 = vpop.f32.mrf.mxu0
      %v2952 = vpop.f32.mrf.mxu0
      %v2953 = vadd.f32 0.0, %v2952
      %v2954 = vpop.f32.mrf.mxu0
      %2955 = vmatprep.mubr.bf16.mxu0 0
      %2956 = vmatmul.mubr.bf16.gmra.mxu0 %v2736
      %v2957 = vpop.f32.mrf.mxu0
      %v2958 = vadd.f32 0.0, %v2957
      %v2959 = vpop.f32.mrf.mxu0
      %v2960 = vpop.f32.mrf.mxu0
      %v2961 = vpop.f32.mrf.mxu0
      %2962 = vdwg.mxu0
      %v2963 = vadd.f32 %v2570, %v2773
      %v2964 = vadd.f32 %v2571, %v2775
      %v2965 = vadd.f32 %v2572, %v2894
      %v2966 = vadd.f32 %v2573, %v2777
      %v2967 = vadd.f32 %v2574, %v2779
      %v2968 = vadd.f32 %v2575, %v2897
      %v2969 = vadd.f32 %v2576, %v2783
      %v2970 = vadd.f32 %v2577, %v2785
      %v2971 = vadd.f32 %v2578, %v2902
      %v2972 = vadd.f32 %v2579, %v2787
      %v2973 = vadd.f32 %v2580, %v2789
      %v2974 = vadd.f32 %v2581, %v2905
      %v2975 = vadd.f32 %v2582, %v2793
      %v2976 = vadd.f32 %v2583, %v2795
      %v2977 = vadd.f32 %v2584, %v2910
      %v2978 = vadd.f32 %v2585, %v2797
      %v2979 = vadd.f32 %v2586, %v2799
      %v2980 = vadd.f32 %v2587, %v2913
      %v2981 = vadd.f32 %v2588, %v2803
      %v2982 = vadd.f32 %v2589, %v2805
      %v2983 = vadd.f32 %v2590, %v2918
      %v2984 = vadd.f32 %v2591, %v2807
      %v2985 = vadd.f32 %v2592, %v2809
      %v2986 = vadd.f32 %v2593, %v2921
      %v2987 = vadd.f32 %v2594, %v2813
      %v2988 = vadd.f32 %v2595, %v2815
      %v2989 = vadd.f32 %v2596, %v2926
      %v2990 = vadd.f32 %v2597, %v2817
      %v2991 = vadd.f32 %v2598, %v2819
      %v2992 = vadd.f32 %v2599, %v2929
      %v2993 = vadd.f32 %v2600, %v2823
      %v2994 = vadd.f32 %v2601, %v2825
      %v2995 = vadd.f32 %v2602, %v2934
      %v2996 = vadd.f32 %v2603, %v2827
      %v2997 = vadd.f32 %v2604, %v2829
      %v2998 = vadd.f32 %v2605, %v2937
      %v2999 = vadd.f32 %v2606, %v2833
      %v3000 = vadd.f32 %v2607, %v2835
      %v3001 = vadd.f32 %v2608, %v2942
      %v3002 = vadd.f32 %v2609, %v2837
      %v3003 = vadd.f32 %v2610, %v2839
      %v3004 = vadd.f32 %v2611, %v2945
      %v3005 = vadd.f32 %v2612, %v2843
      %v3006 = vadd.f32 %v2613, %v2845
      %v3007 = vadd.f32 %v2614, %v2950
      %v3008 = vadd.f32 %v2615, %v2847
      %v3009 = vadd.f32 %v2616, %v2849
      %v3010 = vadd.f32 %v2617, %v2953
      %v3011 = vadd.f32 %v2618, %v2853
      %v3012 = vadd.f32 %v2619, %v2855
      %v3013 = vadd.f32 %v2620, %v2958
      %s3014 = scalar_lea.vmem %s4, 408
      %v3015 = vld [vmem:[%s3014] sm:$0xf]
      %v3016 = vld [vmem:[%s3014 + $0x4] sm:$0xf]
      %v3017 = vld [vmem:[%s3014 + $0x8] sm:$0xf]
      %v3018 = vld [vmem:[%s3014 + $0xc] sm:$0xf]
      %v3019 = vld [vmem:[%s3014 + $0x10] sm:$0xf]
      %v3020 = vld [vmem:[%s3014 + $0x14] sm:$0xf]
      %v3021 = vld [vmem:[%s3014 + $0x18] sm:$0xf]
      %v3022 = vld [vmem:[%s3014 + $0x1c] sm:$0xf]
      %v3023 = vld [vmem:[%s3014 + $0x20] sm:$0xf]
      %v3024 = vld [vmem:[%s3014 + $0x24] sm:$0xf]
      %v3025 = vld [vmem:[%s3014 + $0x28] sm:$0xf]
      %v3026 = vld [vmem:[%s3014 + $0x2c] sm:$0xf]
      %v3027 = vld [vmem:[%s3014 + $0x30] sm:$0xf]
      %v3028 = vld [vmem:[%s3014 + $0x34] sm:$0xf]
      %v3029 = vld [vmem:[%s3014 + $0x38] sm:$0xf]
      %v3030 = vld [vmem:[%s3014 + $0x3c] sm:$0xf]
      %v3031 = vld [vmem:[%s3014 + $0x40] sm:$0xf]
      %v3049 = vunpack.c.l.b16 %v3015
      %v3050 = vunpack.c.l.b16 %v3016
      %v3051 = vunpack.c.l.b16 %v3017
      %v3052 = vunpack.c.l.b16 %v3018
      %v3053 = vunpack.c.l.b16 %v3019
      %v3054 = vunpack.c.l.b16 %v3020
      %v3055 = vunpack.c.l.b16 %v3021
      %v3056 = vunpack.c.l.b16 %v3022
      %v3057 = vunpack.c.l.b16 %v3023
      %v3058 = vunpack.c.l.b16 %v3024
      %v3059 = vunpack.c.l.b16 %v3025
      %v3060 = vunpack.c.l.b16 %v3026
      %v3061 = vunpack.c.l.b16 %v3027
      %v3062 = vunpack.c.l.b16 %v3028
      %v3063 = vunpack.c.l.b16 %v3029
      %v3064 = vunpack.c.l.b16 %v3030
      %v3065 = vunpack.c.l.b16 %v3031
      %v3066 = vpack.c.b16 %v3050, %v3049
      %v3067 = vpack.c.b16 %v3052, %v3051
      %v3068 = vpack.c.b16 %v3054, %v3053
      %v3069 = vpack.c.b16 %v3056, %v3055
      %v3070 = vpack.c.b16 %v3058, %v3057
      %v3071 = vpack.c.b16 %v3060, %v3059
      %v3072 = vpack.c.b16 %v3062, %v3061
      %v3073 = vpack.c.b16 %v3064, %v3063
      %v3074 = vpack.c.b16 %v3065, %v3065
      %3075 = vrot.lane.b32.xlu0 %v768, 92
      %v3076 = vpop.permute.xlu0 %3075
      %3077 = vrot.lane.b32.xlu0 %v769, 92
      %v3078 = vpop.permute.xlu0 %3077
      %3079 = vrot.lane.b32.xlu0 %v770, 92
      %v3080 = vpop.permute.xlu0 %3079
      %3081 = vrot.lane.b32.xlu0 %v771, 92
      %v3082 = vpop.permute.xlu0 %3081
      %3083 = vrot.lane.b32.xlu0 %v772, 92
      %v3084 = vpop.permute.xlu0 %3083
      %3085 = vrot.lane.b32.xlu0 %v773, 92
      %v3086 = vpop.permute.xlu0 %3085
      %3087 = vrot.lane.b32.xlu0 %v774, 92
      %v3088 = vpop.permute.xlu0 %3087
      %3089 = vrot.lane.b32.xlu0 %v775, 92
      %v3090 = vpop.permute.xlu0 %3089
      %vm3091 = vcmask 752640
      %v3092 = vsel %vm3091, %v3076, %v3078
      %v3093 = vsel %vm3091, %v3078, %v3080
      %v3094 = vsel %vm3091, %v3080, %v3082
      %v3095 = vsel %vm3091, %v3084, %v3086
      %v3096 = vsel %vm3091, %v3086, %v3088
      %v3097 = vsel %vm3091, %v3088, %v3090
      %v3105 = vsel %vm894, %v3066, 0
      %v3108 = vsel %vm894, %v3067, 0
      %v3111 = vsel %vm894, %v3068, 0
      %v3114 = vsel %vm894, %v3069, 0
      %v3117 = vsel %vm894, %v3070, 0
      %v3120 = vsel %vm894, %v3071, 0
      %v3123 = vsel %vm894, %v3072, 0
      %v3126 = vsel %vm894, %v3073, 0
      %v3129 = vsel %vm894, %v3074, 0
      %3131 = vmatprep.subr.bf16.mxu0 0
      %3132 = vmatpush1.bf16.msra.mxu0 0
      %3133 = vmatprep.subr.bf16.mxu0 0
      %3134 = vmatpush1.bf16.msra.mxu0 0
      %3135 = vmatprep.subr.bf16.mxu0 0
      %3136 = vmatpush1.bf16.msra.mxu0 0
      %3137 = vmatprep.subr.bf16.mxu0 0
      %3138 = vmatpush1.bf16.msra.mxu0 0
      %3139 = vmatprep.subr.bf16.mxu0 0
      %3140 = vmatpush1.bf16.msra.mxu0 0
      %3141 = vmatprep.subr.bf16.mxu0 0
      %3142 = vmatpush1.bf16.msra.mxu0 0
      %3143 = vmatprep.subr.bf16.mxu0 %v3096
      %3144 = vmatpush1.bf16.msra.mxu0 %v3095
      %3145 = vmatprep.subr.bf16.mxu0 %v3093
      %3146 = vmatpush1.bf16.msra.mxu0 %v3092
      %3147 = vmatprep.subr.bf16.mxu0 0
      %3148 = vmatpush2.bf16.msra.mxu0 0
      %3149 = vmatprep.subr.bf16.mxu0 0
      %3150 = vmatpush2.bf16.msra.mxu0 0
      %3151 = vmatprep.subr.bf16.mxu0 0
      %3152 = vmatpush2.bf16.msra.mxu0 0
      %3153 = vmatprep.subr.bf16.mxu0 0
      %3154 = vmatpush2.bf16.msra.mxu0 0
      %3155 = vmatprep.subr.bf16.mxu0 0
      %3156 = vmatpush2.bf16.msra.mxu0 0
      %3157 = vmatprep.subr.bf16.mxu0 0
      %3158 = vmatpush2.bf16.msra.mxu0 0
      %3159 = vmatprep.subr.bf16.mxu0 0
      %3160 = vmatpush2.bf16.msra.mxu0 0
      %3161 = vmatprep.subr.bf16.mxu0 0
      %3162 = vmatpush2.bf16.msra.mxu0 0
      %3163 = vmatprep.mubr.bf16.mxu0 0
      %3164 = vmatmul.mubr.bf16.gmra.mxu0 %v3105
      %v3165 = vpop.f32.mrf.mxu0
      %v3166 = vadd.f32 0.0, %v3165
      %v3167 = vpop.f32.mrf.mxu0
      %v3168 = vadd.f32 0.0, %v3167
      %v3169 = vpop.f32.mrf.mxu0
      %v3170 = vadd.f32 0.0, %v3169
      %v3171 = vpop.f32.mrf.mxu0
      %v3172 = vadd.f32 0.0, %v3171
      %3173 = vmatprep.mubr.bf16.mxu0 0
      %3174 = vmatmul.mubr.bf16.gmra.mxu0 %v3108
      %v3175 = vpop.f32.mrf.mxu0
      %v3176 = vadd.f32 0.0, %v3175
      %v3177 = vpop.f32.mrf.mxu0
      %v3178 = vadd.f32 0.0, %v3177
      %v3179 = vpop.f32.mrf.mxu0
      %v3180 = vadd.f32 0.0, %v3179
      %v3181 = vpop.f32.mrf.mxu0
      %v3182 = vadd.f32 0.0, %v3181
      %3183 = vmatprep.mubr.bf16.mxu0 0
      %3184 = vmatmul.mubr.bf16.gmra.mxu0 %v3111
      %v3185 = vpop.f32.mrf.mxu0
      %v3186 = vadd.f32 0.0, %v3185
      %v3187 = vpop.f32.mrf.mxu0
      %v3188 = vadd.f32 0.0, %v3187
      %v3189 = vpop.f32.mrf.mxu0
      %v3190 = vadd.f32 0.0, %v3189
      %v3191 = vpop.f32.mrf.mxu0
      %v3192 = vadd.f32 0.0, %v3191
      %3193 = vmatprep.mubr.bf16.mxu0 0
      %3194 = vmatmul.mubr.bf16.gmra.mxu0 %v3114
      %v3195 = vpop.f32.mrf.mxu0
      %v3196 = vadd.f32 0.0, %v3195
      %v3197 = vpop.f32.mrf.mxu0
      %v3198 = vadd.f32 0.0, %v3197
      %v3199 = vpop.f32.mrf.mxu0
      %v3200 = vadd.f32 0.0, %v3199
      %v3201 = vpop.f32.mrf.mxu0
      %v3202 = vadd.f32 0.0, %v3201
      %3203 = vmatprep.mubr.bf16.mxu0 0
      %3204 = vmatmul.mubr.bf16.gmra.mxu0 %v3117
      %v3205 = vpop.f32.mrf.mxu0
      %v3206 = vadd.f32 0.0, %v3205
      %v3207 = vpop.f32.mrf.mxu0
      %v3208 = vadd.f32 0.0, %v3207
      %v3209 = vpop.f32.mrf.mxu0
      %v3210 = vadd.f32 0.0, %v3209
      %v3211 = vpop.f32.mrf.mxu0
      %v3212 = vadd.f32 0.0, %v3211
      %3213 = vmatprep.mubr.bf16.mxu0 0
      %3214 = vmatmul.mubr.bf16.gmra.mxu0 %v3120
      %v3215 = vpop.f32.mrf.mxu0
      %v3216 = vadd.f32 0.0, %v3215
      %v3217 = vpop.f32.mrf.mxu0
      %v3218 = vadd.f32 0.0, %v3217
      %v3219 = vpop.f32.mrf.mxu0
      %v3220 = vadd.f32 0.0, %v3219
      %v3221 = vpop.f32.mrf.mxu0
      %v3222 = vadd.f32 0.0, %v3221
      %3223 = vmatprep.mubr.bf16.mxu0 0
      %3224 = vmatmul.mubr.bf16.gmra.mxu0 %v3123
      %v3225 = vpop.f32.mrf.mxu0
      %v3226 = vadd.f32 0.0, %v3225
      %v3227 = vpop.f32.mrf.mxu0
      %v3228 = vadd.f32 0.0, %v3227
      %v3229 = vpop.f32.mrf.mxu0
      %v3230 = vadd.f32 0.0, %v3229
      %v3231 = vpop.f32.mrf.mxu0
      %v3232 = vadd.f32 0.0, %v3231
      %3233 = vmatprep.mubr.bf16.mxu0 0
      %3234 = vmatmul.mubr.bf16.gmra.mxu0 %v3126
      %v3235 = vpop.f32.mrf.mxu0
      %v3236 = vadd.f32 0.0, %v3235
      %v3237 = vpop.f32.mrf.mxu0
      %v3238 = vadd.f32 0.0, %v3237
      %v3239 = vpop.f32.mrf.mxu0
      %v3240 = vadd.f32 0.0, %v3239
      %v3241 = vpop.f32.mrf.mxu0
      %v3242 = vadd.f32 0.0, %v3241
      %3243 = vmatprep.mubr.bf16.mxu0 0
      %3244 = vmatmul.mubr.bf16.gmra.mxu0 %v3129
      %v3245 = vpop.f32.mrf.mxu0
      %v3246 = vadd.f32 0.0, %v3245
      %v3247 = vpop.f32.mrf.mxu0
      %v3248 = vadd.f32 0.0, %v3247
      %v3249 = vpop.f32.mrf.mxu0
      %v3250 = vpop.f32.mrf.mxu0
      %3251 = vdwg.mxu0
      %3252 = vmatprep.subr.bf16.mxu0 0
      %3253 = vmatpush1.bf16.msra.mxu0 0
      %3254 = vmatprep.subr.bf16.mxu0 0
      %3255 = vmatpush1.bf16.msra.mxu0 0
      %3256 = vmatprep.subr.bf16.mxu0 0
      %3257 = vmatpush1.bf16.msra.mxu0 0
      %3258 = vmatprep.subr.bf16.mxu0 0
      %3259 = vmatpush1.bf16.msra.mxu0 0
      %3260 = vmatprep.subr.bf16.mxu0 0
      %3261 = vmatpush1.bf16.msra.mxu0 0
      %3262 = vmatprep.subr.bf16.mxu0 0
      %3263 = vmatpush1.bf16.msra.mxu0 0
      %3264 = vmatprep.subr.bf16.mxu0 0
      %3265 = vmatpush1.bf16.msra.mxu0 %v3097
      %3266 = vmatprep.subr.bf16.mxu0 0
      %3267 = vmatpush1.bf16.msra.mxu0 %v3094
      %3268 = vmatprep.subr.bf16.mxu0 0
      %3269 = vmatpush2.bf16.msra.mxu0 0
      %3270 = vmatprep.subr.bf16.mxu0 0
      %3271 = vmatpush2.bf16.msra.mxu0 0
      %3272 = vmatprep.subr.bf16.mxu0 0
      %3273 = vmatpush2.bf16.msra.mxu0 0
      %3274 = vmatprep.subr.bf16.mxu0 0
      %3275 = vmatpush2.bf16.msra.mxu0 0
      %3276 = vmatprep.subr.bf16.mxu0 0
      %3277 = vmatpush2.bf16.msra.mxu0 0
      %3278 = vmatprep.subr.bf16.mxu0 0
      %3279 = vmatpush2.bf16.msra.mxu0 0
      %3280 = vmatprep.subr.bf16.mxu0 0
      %3281 = vmatpush2.bf16.msra.mxu0 0
      %3282 = vmatprep.subr.bf16.mxu0 0
      %3283 = vmatpush2.bf16.msra.mxu0 0
      %3284 = vmatprep.mubr.bf16.mxu0 0
      %3285 = vmatmul.mubr.bf16.gmra.mxu0 %v3105
      %v3286 = vpop.f32.mrf.mxu0
      %v3287 = vadd.f32 0.0, %v3286
      %v3288 = vpop.f32.mrf.mxu0
      %v3289 = vpop.f32.mrf.mxu0
      %v3290 = vadd.f32 0.0, %v3289
      %v3291 = vpop.f32.mrf.mxu0
      %3292 = vmatprep.mubr.bf16.mxu0 0
      %3293 = vmatmul.mubr.bf16.gmra.mxu0 %v3108
      %v3294 = vpop.f32.mrf.mxu0
      %v3295 = vadd.f32 0.0, %v3294
      %v3296 = vpop.f32.mrf.mxu0
      %v3297 = vpop.f32.mrf.mxu0
      %v3298 = vadd.f32 0.0, %v3297
      %v3299 = vpop.f32.mrf.mxu0
      %3300 = vmatprep.mubr.bf16.mxu0 0
      %3301 = vmatmul.mubr.bf16.gmra.mxu0 %v3111
      %v3302 = vpop.f32.mrf.mxu0
      %v3303 = vadd.f32 0.0, %v3302
      %v3304 = vpop.f32.mrf.mxu0
      %v3305 = vpop.f32.mrf.mxu0
      %v3306 = vadd.f32 0.0, %v3305
      %v3307 = vpop.f32.mrf.mxu0
      %3308 = vmatprep.mubr.bf16.mxu0 0
      %3309 = vmatmul.mubr.bf16.gmra.mxu0 %v3114
      %v3310 = vpop.f32.mrf.mxu0
      %v3311 = vadd.f32 0.0, %v3310
      %v3312 = vpop.f32.mrf.mxu0
      %v3313 = vpop.f32.mrf.mxu0
      %v3314 = vadd.f32 0.0, %v3313
      %v3315 = vpop.f32.mrf.mxu0
      %3316 = vmatprep.mubr.bf16.mxu0 0
      %3317 = vmatmul.mubr.bf16.gmra.mxu0 %v3117
      %v3318 = vpop.f32.mrf.mxu0
      %v3319 = vadd.f32 0.0, %v3318
      %v3320 = vpop.f32.mrf.mxu0
      %v3321 = vpop.f32.mrf.mxu0
      %v3322 = vadd.f32 0.0, %v3321
      %v3323 = vpop.f32.mrf.mxu0
      %3324 = vmatprep.mubr.bf16.mxu0 0
      %3325 = vmatmul.mubr.bf16.gmra.mxu0 %v3120
      %v3326 = vpop.f32.mrf.mxu0
      %v3327 = vadd.f32 0.0, %v3326
      %v3328 = vpop.f32.mrf.mxu0
      %v3329 = vpop.f32.mrf.mxu0
      %v3330 = vadd.f32 0.0, %v3329
      %v3331 = vpop.f32.mrf.mxu0
      %3332 = vmatprep.mubr.bf16.mxu0 0
      %3333 = vmatmul.mubr.bf16.gmra.mxu0 %v3123
      %v3334 = vpop.f32.mrf.mxu0
      %v3335 = vadd.f32 0.0, %v3334
      %v3336 = vpop.f32.mrf.mxu0
      %v3337 = vpop.f32.mrf.mxu0
      %v3338 = vadd.f32 0.0, %v3337
      %v3339 = vpop.f32.mrf.mxu0
      %3340 = vmatprep.mubr.bf16.mxu0 0
      %3341 = vmatmul.mubr.bf16.gmra.mxu0 %v3126
      %v3342 = vpop.f32.mrf.mxu0
      %v3343 = vadd.f32 0.0, %v3342
      %v3344 = vpop.f32.mrf.mxu0
      %v3345 = vpop.f32.mrf.mxu0
      %v3346 = vadd.f32 0.0, %v3345
      %v3347 = vpop.f32.mrf.mxu0
      %3348 = vmatprep.mubr.bf16.mxu0 0
      %3349 = vmatmul.mubr.bf16.gmra.mxu0 %v3129
      %v3350 = vpop.f32.mrf.mxu0
      %v3351 = vadd.f32 0.0, %v3350
      %v3352 = vpop.f32.mrf.mxu0
      %v3353 = vpop.f32.mrf.mxu0
      %v3354 = vpop.f32.mrf.mxu0
      %3355 = vdwg.mxu0
      %v3356 = vadd.f32 %v2963, %v3166
      %v3357 = vadd.f32 %v2964, %v3168
      %v3358 = vadd.f32 %v2965, %v3287
      %v3359 = vadd.f32 %v2966, %v3170
      %v3360 = vadd.f32 %v2967, %v3172
      %v3361 = vadd.f32 %v2968, %v3290
      %v3362 = vadd.f32 %v2969, %v3176
      %v3363 = vadd.f32 %v2970, %v3178
      %v3364 = vadd.f32 %v2971, %v3295
      %v3365 = vadd.f32 %v2972, %v3180
      %v3366 = vadd.f32 %v2973, %v3182
      %v3367 = vadd.f32 %v2974, %v3298
      %v3368 = vadd.f32 %v2975, %v3186
      %v3369 = vadd.f32 %v2976, %v3188
      %v3370 = vadd.f32 %v2977, %v3303
      %v3371 = vadd.f32 %v2978, %v3190
      %v3372 = vadd.f32 %v2979, %v3192
      %v3373 = vadd.f32 %v2980, %v3306
      %v3374 = vadd.f32 %v2981, %v3196
      %v3375 = vadd.f32 %v2982, %v3198
      %v3376 = vadd.f32 %v2983, %v3311
      %v3377 = vadd.f32 %v2984, %v3200
      %v3378 = vadd.f32 %v2985, %v3202
      %v3379 = vadd.f32 %v2986, %v3314
      %v3380 = vadd.f32 %v2987, %v3206
      %v3381 = vadd.f32 %v2988, %v3208
      %v3382 = vadd.f32 %v2989, %v3319
      %v3383 = vadd.f32 %v2990, %v3210
      %v3384 = vadd.f32 %v2991, %v3212
      %v3385 = vadd.f32 %v2992, %v3322
      %v3386 = vadd.f32 %v2993, %v3216
      %v3387 = vadd.f32 %v2994, %v3218
      %v3388 = vadd.f32 %v2995, %v3327
      %v3389 = vadd.f32 %v2996, %v3220
      %v3390 = vadd.f32 %v2997, %v3222
      %v3391 = vadd.f32 %v2998, %v3330
      %v3392 = vadd.f32 %v2999, %v3226
      %v3393 = vadd.f32 %v3000, %v3228
      %v3394 = vadd.f32 %v3001, %v3335
      %v3395 = vadd.f32 %v3002, %v3230
      %v3396 = vadd.f32 %v3003, %v3232
      %v3397 = vadd.f32 %v3004, %v3338
      %v3398 = vadd.f32 %v3005, %v3236
      %v3399 = vadd.f32 %v3006, %v3238
      %v3400 = vadd.f32 %v3007, %v3343
      %v3401 = vadd.f32 %v3008, %v3240
      %v3402 = vadd.f32 %v3009, %v3242
      %v3403 = vadd.f32 %v3010, %v3346
      %v3404 = vadd.f32 %v3011, %v3246
      %v3405 = vadd.f32 %v3012, %v3248
      %v3406 = vadd.f32 %v3013, %v3351
      %s3407 = scalar_lea.vmem %s4, 476
      %v3408 = vld [vmem:[%s3407] sm:$0xf]
      %v3409 = vld [vmem:[%s3407 + $0x4] sm:$0xf]
      %v3410 = vld [vmem:[%s3407 + $0x8] sm:$0xf]
      %v3411 = vld [vmem:[%s3407 + $0xc] sm:$0xf]
      %v3412 = vld [vmem:[%s3407 + $0x10] sm:$0xf]
      %v3413 = vld [vmem:[%s3407 + $0x14] sm:$0xf]
      %v3414 = vld [vmem:[%s3407 + $0x18] sm:$0xf]
      %v3415 = vld [vmem:[%s3407 + $0x1c] sm:$0xf]
      %v3416 = vld [vmem:[%s3407 + $0x20] sm:$0xf]
      %v3417 = vld [vmem:[%s3407 + $0x24] sm:$0xf]
      %v3418 = vld [vmem:[%s3407 + $0x28] sm:$0xf]
      %v3419 = vld [vmem:[%s3407 + $0x2c] sm:$0xf]
      %v3420 = vld [vmem:[%s3407 + $0x30] sm:$0xf]
      %v3421 = vld [vmem:[%s3407 + $0x34] sm:$0xf]
      %v3422 = vld [vmem:[%s3407 + $0x38] sm:$0xf]
      %v3423 = vld [vmem:[%s3407 + $0x3c] sm:$0xf]
      %v3424 = vld [vmem:[%s3407 + $0x40] sm:$0xf]
      %v3442 = vunpack.c.l.b16 %v3408
      %v3443 = vunpack.c.l.b16 %v3409
      %v3444 = vunpack.c.l.b16 %v3410
      %v3445 = vunpack.c.l.b16 %v3411
      %v3446 = vunpack.c.l.b16 %v3412
      %v3447 = vunpack.c.l.b16 %v3413
      %v3448 = vunpack.c.l.b16 %v3414
      %v3449 = vunpack.c.l.b16 %v3415
      %v3450 = vunpack.c.l.b16 %v3416
      %v3451 = vunpack.c.l.b16 %v3417
      %v3452 = vunpack.c.l.b16 %v3418
      %v3453 = vunpack.c.l.b16 %v3419
      %v3454 = vunpack.c.l.b16 %v3420
      %v3455 = vunpack.c.l.b16 %v3421
      %v3456 = vunpack.c.l.b16 %v3422
      %v3457 = vunpack.c.l.b16 %v3423
      %v3458 = vunpack.c.l.b16 %v3424
      %v3459 = vpack.c.b16 %v3443, %v3442
      %v3460 = vpack.c.b16 %v3445, %v3444
      %v3461 = vpack.c.b16 %v3447, %v3446
      %v3462 = vpack.c.b16 %v3449, %v3448
      %v3463 = vpack.c.b16 %v3451, %v3450
      %v3464 = vpack.c.b16 %v3453, %v3452
      %v3465 = vpack.c.b16 %v3455, %v3454
      %v3466 = vpack.c.b16 %v3457, %v3456
      %v3467 = vpack.c.b16 %v3458, %v3458
      %3468 = vrot.lane.b32.xlu0 %v768, 91
      %v3469 = vpop.permute.xlu0 %3468
      %3470 = vrot.lane.b32.xlu0 %v769, 91
      %v3471 = vpop.permute.xlu0 %3470
      %3472 = vrot.lane.b32.xlu0 %v770, 91
      %v3473 = vpop.permute.xlu0 %3472
      %3474 = vrot.lane.b32.xlu0 %v771, 91
      %v3475 = vpop.permute.xlu0 %3474
      %3476 = vrot.lane.b32.xlu0 %v772, 91
      %v3477 = vpop.permute.xlu0 %3476
      %3478 = vrot.lane.b32.xlu0 %v773, 91
      %v3479 = vpop.permute.xlu0 %3478
      %3480 = vrot.lane.b32.xlu0 %v774, 91
      %v3481 = vpop.permute.xlu0 %3480
      %3482 = vrot.lane.b32.xlu0 %v775, 91
      %v3483 = vpop.permute.xlu0 %3482
      %vm3484 = vcmask 744448
      %v3485 = vsel %vm3484, %v3469, %v3471
      %v3486 = vsel %vm3484, %v3471, %v3473
      %v3487 = vsel %vm3484, %v3473, %v3475
      %v3488 = vsel %vm3484, %v3477, %v3479
      %v3489 = vsel %vm3484, %v3479, %v3481
      %v3490 = vsel %vm3484, %v3481, %v3483
      %v3498 = vsel %vm894, %v3459, 0
      %v3501 = vsel %vm894, %v3460, 0
      %v3504 = vsel %vm894, %v3461, 0
      %v3507 = vsel %vm894, %v3462, 0
      %v3510 = vsel %vm894, %v3463, 0
      %v3513 = vsel %vm894, %v3464, 0
      %v3516 = vsel %vm894, %v3465, 0
      %v3519 = vsel %vm894, %v3466, 0
      %v3522 = vsel %vm894, %v3467, 0
      %3524 = vmatprep.subr.bf16.mxu0 0
      %3525 = vmatpush1.bf16.msra.mxu0 0
      %3526 = vmatprep.subr.bf16.mxu0 0
      %3527 = vmatpush1.bf16.msra.mxu0 0
      %3528 = vmatprep.subr.bf16.mxu0 0
      %3529 = vmatpush1.bf16.msra.mxu0 0
      %3530 = vmatprep.subr.bf16.mxu0 0
      %3531 = vmatpush1.bf16.msra.mxu0 0
      %3532 = vmatprep.subr.bf16.mxu0 0
      %3533 = vmatpush1.bf16.msra.mxu0 0
      %3534 = vmatprep.subr.bf16.mxu0 0
      %3535 = vmatpush1.bf16.msra.mxu0 0
      %3536 = vmatprep.subr.bf16.mxu0 %v3489
      %3537 = vmatpush1.bf16.msra.mxu0 %v3488
      %3538 = vmatprep.subr.bf16.mxu0 %v3486
      %3539 = vmatpush1.bf16.msra.mxu0 %v3485
      %3540 = vmatprep.subr.bf16.mxu0 0
      %3541 = vmatpush2.bf16.msra.mxu0 0
      %3542 = vmatprep.subr.bf16.mxu0 0
      %3543 = vmatpush2.bf16.msra.mxu0 0
      %3544 = vmatprep.subr.bf16.mxu0 0
      %3545 = vmatpush2.bf16.msra.mxu0 0
      %3546 = vmatprep.subr.bf16.mxu0 0
      %3547 = vmatpush2.bf16.msra.mxu0 0
      %3548 = vmatprep.subr.bf16.mxu0 0
      %3549 = vmatpush2.bf16.msra.mxu0 0
      %3550 = vmatprep.subr.bf16.mxu0 0
      %3551 = vmatpush2.bf16.msra.mxu0 0
      %3552 = vmatprep.subr.bf16.mxu0 0
      %3553 = vmatpush2.bf16.msra.mxu0 0
      %3554 = vmatprep.subr.bf16.mxu0 0
      %3555 = vmatpush2.bf16.msra.mxu0 0
      %3556 = vmatprep.mubr.bf16.mxu0 0
      %3557 = vmatmul.mubr.bf16.gmra.mxu0 %v3498
      %v3558 = vpop.f32.mrf.mxu0
      %v3559 = vadd.f32 0.0, %v3558
      %v3560 = vpop.f32.mrf.mxu0
      %v3561 = vadd.f32 0.0, %v3560
      %v3562 = vpop.f32.mrf.mxu0
      %v3563 = vadd.f32 0.0, %v3562
      %v3564 = vpop.f32.mrf.mxu0
      %v3565 = vadd.f32 0.0, %v3564
      %3566 = vmatprep.mubr.bf16.mxu0 0
      %3567 = vmatmul.mubr.bf16.gmra.mxu0 %v3501
      %v3568 = vpop.f32.mrf.mxu0
      %v3569 = vadd.f32 0.0, %v3568
      %v3570 = vpop.f32.mrf.mxu0
      %v3571 = vadd.f32 0.0, %v3570
      %v3572 = vpop.f32.mrf.mxu0
      %v3573 = vadd.f32 0.0, %v3572
      %v3574 = vpop.f32.mrf.mxu0
      %v3575 = vadd.f32 0.0, %v3574
      %3576 = vmatprep.mubr.bf16.mxu0 0
      %3577 = vmatmul.mubr.bf16.gmra.mxu0 %v3504
      %v3578 = vpop.f32.mrf.mxu0
      %v3579 = vadd.f32 0.0, %v3578
      %v3580 = vpop.f32.mrf.mxu0
      %v3581 = vadd.f32 0.0, %v3580
      %v3582 = vpop.f32.mrf.mxu0
      %v3583 = vadd.f32 0.0, %v3582
      %v3584 = vpop.f32.mrf.mxu0
      %v3585 = vadd.f32 0.0, %v3584
      %3586 = vmatprep.mubr.bf16.mxu0 0
      %3587 = vmatmul.mubr.bf16.gmra.mxu0 %v3507
      %v3588 = vpop.f32.mrf.mxu0
      %v3589 = vadd.f32 0.0, %v3588
      %v3590 = vpop.f32.mrf.mxu0
      %v3591 = vadd.f32 0.0, %v3590
      %v3592 = vpop.f32.mrf.mxu0
      %v3593 = vadd.f32 0.0, %v3592
      %v3594 = vpop.f32.mrf.mxu0
      %v3595 = vadd.f32 0.0, %v3594
      %3596 = vmatprep.mubr.bf16.mxu0 0
      %3597 = vmatmul.mubr.bf16.gmra.mxu0 %v3510
      %v3598 = vpop.f32.mrf.mxu0
      %v3599 = vadd.f32 0.0, %v3598
      %v3600 = vpop.f32.mrf.mxu0
      %v3601 = vadd.f32 0.0, %v3600
      %v3602 = vpop.f32.mrf.mxu0
      %v3603 = vadd.f32 0.0, %v3602
      %v3604 = vpop.f32.mrf.mxu0
      %v3605 = vadd.f32 0.0, %v3604
      %3606 = vmatprep.mubr.bf16.mxu0 0
      %3607 = vmatmul.mubr.bf16.gmra.mxu0 %v3513
      %v3608 = vpop.f32.mrf.mxu0
      %v3609 = vadd.f32 0.0, %v3608
      %v3610 = vpop.f32.mrf.mxu0
      %v3611 = vadd.f32 0.0, %v3610
      %v3612 = vpop.f32.mrf.mxu0
      %v3613 = vadd.f32 0.0, %v3612
      %v3614 = vpop.f32.mrf.mxu0
      %v3615 = vadd.f32 0.0, %v3614
      %3616 = vmatprep.mubr.bf16.mxu0 0
      %3617 = vmatmul.mubr.bf16.gmra.mxu0 %v3516
      %v3618 = vpop.f32.mrf.mxu0
      %v3619 = vadd.f32 0.0, %v3618
      %v3620 = vpop.f32.mrf.mxu0
      %v3621 = vadd.f32 0.0, %v3620
      %v3622 = vpop.f32.mrf.mxu0
      %v3623 = vadd.f32 0.0, %v3622
      %v3624 = vpop.f32.mrf.mxu0
      %v3625 = vadd.f32 0.0, %v3624
      %3626 = vmatprep.mubr.bf16.mxu0 0
      %3627 = vmatmul.mubr.bf16.gmra.mxu0 %v3519
      %v3628 = vpop.f32.mrf.mxu0
      %v3629 = vadd.f32 0.0, %v3628
      %v3630 = vpop.f32.mrf.mxu0
      %v3631 = vadd.f32 0.0, %v3630
      %v3632 = vpop.f32.mrf.mxu0
      %v3633 = vadd.f32 0.0, %v3632
      %v3634 = vpop.f32.mrf.mxu0
      %v3635 = vadd.f32 0.0, %v3634
      %3636 = vmatprep.mubr.bf16.mxu0 0
      %3637 = vmatmul.mubr.bf16.gmra.mxu0 %v3522
      %v3638 = vpop.f32.mrf.mxu0
      %v3639 = vadd.f32 0.0, %v3638
      %v3640 = vpop.f32.mrf.mxu0
      %v3641 = vadd.f32 0.0, %v3640
      %v3642 = vpop.f32.mrf.mxu0
      %v3643 = vpop.f32.mrf.mxu0
      %3644 = vdwg.mxu0
      %3645 = vmatprep.subr.bf16.mxu0 0
      %3646 = vmatpush1.bf16.msra.mxu0 0
      %3647 = vmatprep.subr.bf16.mxu0 0
      %3648 = vmatpush1.bf16.msra.mxu0 0
      %3649 = vmatprep.subr.bf16.mxu0 0
      %3650 = vmatpush1.bf16.msra.mxu0 0
      %3651 = vmatprep.subr.bf16.mxu0 0
      %3652 = vmatpush1.bf16.msra.mxu0 0
      %3653 = vmatprep.subr.bf16.mxu0 0
      %3654 = vmatpush1.bf16.msra.mxu0 0
      %3655 = vmatprep.subr.bf16.mxu0 0
      %3656 = vmatpush1.bf16.msra.mxu0 0
      %3657 = vmatprep.subr.bf16.mxu0 0
      %3658 = vmatpush1.bf16.msra.mxu0 %v3490
      %3659 = vmatprep.subr.bf16.mxu0 0
      %3660 = vmatpush1.bf16.msra.mxu0 %v3487
      %3661 = vmatprep.subr.bf16.mxu0 0
      %3662 = vmatpush2.bf16.msra.mxu0 0
      %3663 = vmatprep.subr.bf16.mxu0 0
      %3664 = vmatpush2.bf16.msra.mxu0 0
      %3665 = vmatprep.subr.bf16.mxu0 0
      %3666 = vmatpush2.bf16.msra.mxu0 0
      %3667 = vmatprep.subr.bf16.mxu0 0
      %3668 = vmatpush2.bf16.msra.mxu0 0
      %3669 = vmatprep.subr.bf16.mxu0 0
      %3670 = vmatpush2.bf16.msra.mxu0 0
      %3671 = vmatprep.subr.bf16.mxu0 0
      %3672 = vmatpush2.bf16.msra.mxu0 0
      %3673 = vmatprep.subr.bf16.mxu0 0
      %3674 = vmatpush2.bf16.msra.mxu0 0
      %3675 = vmatprep.subr.bf16.mxu0 0
      %3676 = vmatpush2.bf16.msra.mxu0 0
      %3677 = vmatprep.mubr.bf16.mxu0 0
      %3678 = vmatmul.mubr.bf16.gmra.mxu0 %v3498
      %v3679 = vpop.f32.mrf.mxu0
      %v3680 = vadd.f32 0.0, %v3679
      %v3681 = vpop.f32.mrf.mxu0
      %v3682 = vpop.f32.mrf.mxu0
      %v3683 = vadd.f32 0.0, %v3682
      %v3684 = vpop.f32.mrf.mxu0
      %3685 = vmatprep.mubr.bf16.mxu0 0
      %3686 = vmatmul.mubr.bf16.gmra.mxu0 %v3501
      %v3687 = vpop.f32.mrf.mxu0
      %v3688 = vadd.f32 0.0, %v3687
      %v3689 = vpop.f32.mrf.mxu0
      %v3690 = vpop.f32.mrf.mxu0
      %v3691 = vadd.f32 0.0, %v3690
      %v3692 = vpop.f32.mrf.mxu0
      %3693 = vmatprep.mubr.bf16.mxu0 0
      %3694 = vmatmul.mubr.bf16.gmra.mxu0 %v3504
      %v3695 = vpop.f32.mrf.mxu0
      %v3696 = vadd.f32 0.0, %v3695
      %v3697 = vpop.f32.mrf.mxu0
      %v3698 = vpop.f32.mrf.mxu0
      %v3699 = vadd.f32 0.0, %v3698
      %v3700 = vpop.f32.mrf.mxu0
      %3701 = vmatprep.mubr.bf16.mxu0 0
      %3702 = vmatmul.mubr.bf16.gmra.mxu0 %v3507
      %v3703 = vpop.f32.mrf.mxu0
      %v3704 = vadd.f32 0.0, %v3703
      %v3705 = vpop.f32.mrf.mxu0
      %v3706 = vpop.f32.mrf.mxu0
      %v3707 = vadd.f32 0.0, %v3706
      %v3708 = vpop.f32.mrf.mxu0
      %3709 = vmatprep.mubr.bf16.mxu0 0
      %3710 = vmatmul.mubr.bf16.gmra.mxu0 %v3510
      %v3711 = vpop.f32.mrf.mxu0
      %v3712 = vadd.f32 0.0, %v3711
      %v3713 = vpop.f32.mrf.mxu0
      %v3714 = vpop.f32.mrf.mxu0
      %v3715 = vadd.f32 0.0, %v3714
      %v3716 = vpop.f32.mrf.mxu0
      %3717 = vmatprep.mubr.bf16.mxu0 0
      %3718 = vmatmul.mubr.bf16.gmra.mxu0 %v3513
      %v3719 = vpop.f32.mrf.mxu0
      %v3720 = vadd.f32 0.0, %v3719
      %v3721 = vpop.f32.mrf.mxu0
      %v3722 = vpop.f32.mrf.mxu0
      %v3723 = vadd.f32 0.0, %v3722
      %v3724 = vpop.f32.mrf.mxu0
      %3725 = vmatprep.mubr.bf16.mxu0 0
      %3726 = vmatmul.mubr.bf16.gmra.mxu0 %v3516
      %v3727 = vpop.f32.mrf.mxu0
      %v3728 = vadd.f32 0.0, %v3727
      %v3729 = vpop.f32.mrf.mxu0
      %v3730 = vpop.f32.mrf.mxu0
      %v3731 = vadd.f32 0.0, %v3730
      %v3732 = vpop.f32.mrf.mxu0
      %3733 = vmatprep.mubr.bf16.mxu0 0
      %3734 = vmatmul.mubr.bf16.gmra.mxu0 %v3519
      %v3735 = vpop.f32.mrf.mxu0
      %v3736 = vadd.f32 0.0, %v3735
      %v3737 = vpop.f32.mrf.mxu0
      %v3738 = vpop.f32.mrf.mxu0
      %v3739 = vadd.f32 0.0, %v3738
      %v3740 = vpop.f32.mrf.mxu0
      %3741 = vmatprep.mubr.bf16.mxu0 0
      %3742 = vmatmul.mubr.bf16.gmra.mxu0 %v3522
      %v3743 = vpop.f32.mrf.mxu0
      %v3744 = vadd.f32 0.0, %v3743
      %v3745 = vpop.f32.mrf.mxu0
      %v3746 = vpop.f32.mrf.mxu0
      %v3747 = vpop.f32.mrf.mxu0
      %3748 = vdwg.mxu0
      %v3749 = vadd.f32 %v3356, %v3559
      %v3750 = vadd.f32 %v3357, %v3561
      %v3751 = vadd.f32 %v3358, %v3680
      %v3752 = vadd.f32 %v3359, %v3563
      %v3753 = vadd.f32 %v3360, %v3565
      %v3754 = vadd.f32 %v3361, %v3683
      %v3755 = vadd.f32 %v3362, %v3569
      %v3756 = vadd.f32 %v3363, %v3571
      %v3757 = vadd.f32 %v3364, %v3688
      %v3758 = vadd.f32 %v3365, %v3573
      %v3759 = vadd.f32 %v3366, %v3575
      %v3760 = vadd.f32 %v3367, %v3691
      %v3761 = vadd.f32 %v3368, %v3579
      %v3762 = vadd.f32 %v3369, %v3581
      %v3763 = vadd.f32 %v3370, %v3696
      %v3764 = vadd.f32 %v3371, %v3583
      %v3765 = vadd.f32 %v3372, %v3585
      %v3766 = vadd.f32 %v3373, %v3699
      %v3767 = vadd.f32 %v3374, %v3589
      %v3768 = vadd.f32 %v3375, %v3591
      %v3769 = vadd.f32 %v3376, %v3704
      %v3770 = vadd.f32 %v3377, %v3593
      %v3771 = vadd.f32 %v3378, %v3595
      %v3772 = vadd.f32 %v3379, %v3707
      %v3773 = vadd.f32 %v3380, %v3599
      %v3774 = vadd.f32 %v3381, %v3601
      %v3775 = vadd.f32 %v3382, %v3712
      %v3776 = vadd.f32 %v3383, %v3603
      %v3777 = vadd.f32 %v3384, %v3605
      %v3778 = vadd.f32 %v3385, %v3715
      %v3779 = vadd.f32 %v3386, %v3609
      %v3780 = vadd.f32 %v3387, %v3611
      %v3781 = vadd.f32 %v3388, %v3720
      %v3782 = vadd.f32 %v3389, %v3613
      %v3783 = vadd.f32 %v3390, %v3615
      %v3784 = vadd.f32 %v3391, %v3723
      %v3785 = vadd.f32 %v3392, %v3619
      %v3786 = vadd.f32 %v3393, %v3621
      %v3787 = vadd.f32 %v3394, %v3728
      %v3788 = vadd.f32 %v3395, %v3623
      %v3789 = vadd.f32 %v3396, %v3625
      %v3790 = vadd.f32 %v3397, %v3731
      %v3791 = vadd.f32 %v3398, %v3629
      %v3792 = vadd.f32 %v3399, %v3631
      %v3793 = vadd.f32 %v3400, %v3736
      %v3794 = vadd.f32 %v3401, %v3633
      %v3795 = vadd.f32 %v3402, %v3635
      %v3796 = vadd.f32 %v3403, %v3739
      %v3797 = vadd.f32 %v3404, %v3639
      %v3798 = vadd.f32 %v3405, %v3641
      %v3799 = vadd.f32 %v3406, %v3744
      %s3800 = scalar_lea.vmem %s4, 544
      %v3801 = vld [vmem:[%s3800] sm:$0xf]
      %v3802 = vld [vmem:[%s3800 + $0x4] sm:$0xf]
      %v3803 = vld [vmem:[%s3800 + $0x8] sm:$0xf]
      %v3804 = vld [vmem:[%s3800 + $0xc] sm:$0xf]
      %v3805 = vld [vmem:[%s3800 + $0x10] sm:$0xf]
      %v3806 = vld [vmem:[%s3800 + $0x14] sm:$0xf]
      %v3807 = vld [vmem:[%s3800 + $0x18] sm:$0xf]
      %v3808 = vld [vmem:[%s3800 + $0x1c] sm:$0xf]
      %v3809 = vld [vmem:[%s3800 + $0x20] sm:$0xf]
      %v3810 = vld [vmem:[%s3800 + $0x24] sm:$0xf]
      %v3811 = vld [vmem:[%s3800 + $0x28] sm:$0xf]
      %v3812 = vld [vmem:[%s3800 + $0x2c] sm:$0xf]
      %v3813 = vld [vmem:[%s3800 + $0x30] sm:$0xf]
      %v3814 = vld [vmem:[%s3800 + $0x34] sm:$0xf]
      %v3815 = vld [vmem:[%s3800 + $0x38] sm:$0xf]
      %v3816 = vld [vmem:[%s3800 + $0x3c] sm:$0xf]
      %v3817 = vld [vmem:[%s3800 + $0x40] sm:$0xf]
      %v3835 = vunpack.c.l.b16 %v3801
      %v3836 = vunpack.c.l.b16 %v3802
      %v3837 = vunpack.c.l.b16 %v3803
      %v3838 = vunpack.c.l.b16 %v3804
      %v3839 = vunpack.c.l.b16 %v3805
      %v3840 = vunpack.c.l.b16 %v3806
      %v3841 = vunpack.c.l.b16 %v3807
      %v3842 = vunpack.c.l.b16 %v3808
      %v3843 = vunpack.c.l.b16 %v3809
      %v3844 = vunpack.c.l.b16 %v3810
      %v3845 = vunpack.c.l.b16 %v3811
      %v3846 = vunpack.c.l.b16 %v3812
      %v3847 = vunpack.c.l.b16 %v3813
      %v3848 = vunpack.c.l.b16 %v3814
      %v3849 = vunpack.c.l.b16 %v3815
      %v3850 = vunpack.c.l.b16 %v3816
      %v3851 = vunpack.c.l.b16 %v3817
      %v3852 = vpack.c.b16 %v3836, %v3835
      %v3853 = vpack.c.b16 %v3838, %v3837
      %v3854 = vpack.c.b16 %v3840, %v3839
      %v3855 = vpack.c.b16 %v3842, %v3841
      %v3856 = vpack.c.b16 %v3844, %v3843
      %v3857 = vpack.c.b16 %v3846, %v3845
      %v3858 = vpack.c.b16 %v3848, %v3847
      %v3859 = vpack.c.b16 %v3850, %v3849
      %v3860 = vpack.c.b16 %v3851, %v3851
      %3861 = vrot.lane.b32.xlu0 %v768, 90
      %v3862 = vpop.permute.xlu0 %3861
      %3863 = vrot.lane.b32.xlu0 %v769, 90
      %v3864 = vpop.permute.xlu0 %3863
      %3865 = vrot.lane.b32.xlu0 %v770, 90
      %v3866 = vpop.permute.xlu0 %3865
      %3867 = vrot.lane.b32.xlu0 %v771, 90
      %v3868 = vpop.permute.xlu0 %3867
      %3869 = vrot.lane.b32.xlu0 %v772, 90
      %v3870 = vpop.permute.xlu0 %3869
      %3871 = vrot.lane.b32.xlu0 %v773, 90
      %v3872 = vpop.permute.xlu0 %3871
      %3873 = vrot.lane.b32.xlu0 %v774, 90
      %v3874 = vpop.permute.xlu0 %3873
      %3875 = vrot.lane.b32.xlu0 %v775, 90
      %v3876 = vpop.permute.xlu0 %3875
      %vm3877 = vcmask 736256
      %v3878 = vsel %vm3877, %v3862, %v3864
      %v3879 = vsel %vm3877, %v3864, %v3866
      %v3880 = vsel %vm3877, %v3866, %v3868
      %v3881 = vsel %vm3877, %v3870, %v3872
      %v3882 = vsel %vm3877, %v3872, %v3874
      %v3883 = vsel %vm3877, %v3874, %v3876
      %v3891 = vsel %vm894, %v3852, 0
      %v3894 = vsel %vm894, %v3853, 0
      %v3897 = vsel %vm894, %v3854, 0
      %v3900 = vsel %vm894, %v3855, 0
      %v3903 = vsel %vm894, %v3856, 0
      %v3906 = vsel %vm894, %v3857, 0
      %v3909 = vsel %vm894, %v3858, 0
      %v3912 = vsel %vm894, %v3859, 0
      %v3915 = vsel %vm894, %v3860, 0
      %3917 = vmatprep.subr.bf16.mxu0 0
      %3918 = vmatpush1.bf16.msra.mxu0 0
      %3919 = vmatprep.subr.bf16.mxu0 0
      %3920 = vmatpush1.bf16.msra.mxu0 0
      %3921 = vmatprep.subr.bf16.mxu0 0
      %3922 = vmatpush1.bf16.msra.mxu0 0
      %3923 = vmatprep.subr.bf16.mxu0 0
      %3924 = vmatpush1.bf16.msra.mxu0 0
      %3925 = vmatprep.subr.bf16.mxu0 0
      %3926 = vmatpush1.bf16.msra.mxu0 0
      %3927 = vmatprep.subr.bf16.mxu0 0
      %3928 = vmatpush1.bf16.msra.mxu0 0
      %3929 = vmatprep.subr.bf16.mxu0 %v3882
      %3930 = vmatpush1.bf16.msra.mxu0 %v3881
      %3931 = vmatprep.subr.bf16.mxu0 %v3879
      %3932 = vmatpush1.bf16.msra.mxu0 %v3878
      %3933 = vmatprep.subr.bf16.mxu0 0
      %3934 = vmatpush2.bf16.msra.mxu0 0
      %3935 = vmatprep.subr.bf16.mxu0 0
      %3936 = vmatpush2.bf16.msra.mxu0 0
      %3937 = vmatprep.subr.bf16.mxu0 0
      %3938 = vmatpush2.bf16.msra.mxu0 0
      %3939 = vmatprep.subr.bf16.mxu0 0
      %3940 = vmatpush2.bf16.msra.mxu0 0
      %3941 = vmatprep.subr.bf16.mxu0 0
      %3942 = vmatpush2.bf16.msra.mxu0 0
      %3943 = vmatprep.subr.bf16.mxu0 0
      %3944 = vmatpush2.bf16.msra.mxu0 0
      %3945 = vmatprep.subr.bf16.mxu0 0
      %3946 = vmatpush2.bf16.msra.mxu0 0
      %3947 = vmatprep.subr.bf16.mxu0 0
      %3948 = vmatpush2.bf16.msra.mxu0 0
      %3949 = vmatprep.mubr.bf16.mxu0 0
      %3950 = vmatmul.mubr.bf16.gmra.mxu0 %v3891
      %v3951 = vpop.f32.mrf.mxu0
      %v3952 = vadd.f32 0.0, %v3951
      %v3953 = vpop.f32.mrf.mxu0
      %v3954 = vadd.f32 0.0, %v3953
      %v3955 = vpop.f32.mrf.mxu0
      %v3956 = vadd.f32 0.0, %v3955
      %v3957 = vpop.f32.mrf.mxu0
      %v3958 = vadd.f32 0.0, %v3957
      %3959 = vmatprep.mubr.bf16.mxu0 0
      %3960 = vmatmul.mubr.bf16.gmra.mxu0 %v3894
      %v3961 = vpop.f32.mrf.mxu0
      %v3962 = vadd.f32 0.0, %v3961
      %v3963 = vpop.f32.mrf.mxu0
      %v3964 = vadd.f32 0.0, %v3963
      %v3965 = vpop.f32.mrf.mxu0
      %v3966 = vadd.f32 0.0, %v3965
      %v3967 = vpop.f32.mrf.mxu0
      %v3968 = vadd.f32 0.0, %v3967
      %3969 = vmatprep.mubr.bf16.mxu0 0
      %3970 = vmatmul.mubr.bf16.gmra.mxu0 %v3897
      %v3971 = vpop.f32.mrf.mxu0
      %v3972 = vadd.f32 0.0, %v3971
      %v3973 = vpop.f32.mrf.mxu0
      %v3974 = vadd.f32 0.0, %v3973
      %v3975 = vpop.f32.mrf.mxu0
      %v3976 = vadd.f32 0.0, %v3975
      %v3977 = vpop.f32.mrf.mxu0
      %v3978 = vadd.f32 0.0, %v3977
      %3979 = vmatprep.mubr.bf16.mxu0 0
      %3980 = vmatmul.mubr.bf16.gmra.mxu0 %v3900
      %v3981 = vpop.f32.mrf.mxu0
      %v3982 = vadd.f32 0.0, %v3981
      %v3983 = vpop.f32.mrf.mxu0
      %v3984 = vadd.f32 0.0, %v3983
      %v3985 = vpop.f32.mrf.mxu0
      %v3986 = vadd.f32 0.0, %v3985
      %v3987 = vpop.f32.mrf.mxu0
      %v3988 = vadd.f32 0.0, %v3987
      %3989 = vmatprep.mubr.bf16.mxu0 0
      %3990 = vmatmul.mubr.bf16.gmra.mxu0 %v3903
      %v3991 = vpop.f32.mrf.mxu0
      %v3992 = vadd.f32 0.0, %v3991
      %v3993 = vpop.f32.mrf.mxu0
      %v3994 = vadd.f32 0.0, %v3993
      %v3995 = vpop.f32.mrf.mxu0
      %v3996 = vadd.f32 0.0, %v3995
      %v3997 = vpop.f32.mrf.mxu0
      %v3998 = vadd.f32 0.0, %v3997
      %3999 = vmatprep.mubr.bf16.mxu0 0
      %4000 = vmatmul.mubr.bf16.gmra.mxu0 %v3906
      %v4001 = vpop.f32.mrf.mxu0
      %v4002 = vadd.f32 0.0, %v4001
      %v4003 = vpop.f32.mrf.mxu0
      %v4004 = vadd.f32 0.0, %v4003
      %v4005 = vpop.f32.mrf.mxu0
      %v4006 = vadd.f32 0.0, %v4005
      %v4007 = vpop.f32.mrf.mxu0
      %v4008 = vadd.f32 0.0, %v4007
      %4009 = vmatprep.mubr.bf16.mxu0 0
      %4010 = vmatmul.mubr.bf16.gmra.mxu0 %v3909
      %v4011 = vpop.f32.mrf.mxu0
      %v4012 = vadd.f32 0.0, %v4011
      %v4013 = vpop.f32.mrf.mxu0
      %v4014 = vadd.f32 0.0, %v4013
      %v4015 = vpop.f32.mrf.mxu0
      %v4016 = vadd.f32 0.0, %v4015
      %v4017 = vpop.f32.mrf.mxu0
      %v4018 = vadd.f32 0.0, %v4017
      %4019 = vmatprep.mubr.bf16.mxu0 0
      %4020 = vmatmul.mubr.bf16.gmra.mxu0 %v3912
      %v4021 = vpop.f32.mrf.mxu0
      %v4022 = vadd.f32 0.0, %v4021
      %v4023 = vpop.f32.mrf.mxu0
      %v4024 = vadd.f32 0.0, %v4023
      %v4025 = vpop.f32.mrf.mxu0
      %v4026 = vadd.f32 0.0, %v4025
      %v4027 = vpop.f32.mrf.mxu0
      %v4028 = vadd.f32 0.0, %v4027
      %4029 = vmatprep.mubr.bf16.mxu0 0
      %4030 = vmatmul.mubr.bf16.gmra.mxu0 %v3915
      %v4031 = vpop.f32.mrf.mxu0
      %v4032 = vadd.f32 0.0, %v4031
      %v4033 = vpop.f32.mrf.mxu0
      %v4034 = vadd.f32 0.0, %v4033
      %v4035 = vpop.f32.mrf.mxu0
      %v4036 = vpop.f32.mrf.mxu0
      %4037 = vdwg.mxu0
      %4038 = vmatprep.subr.bf16.mxu0 0
      %4039 = vmatpush1.bf16.msra.mxu0 0
      %4040 = vmatprep.subr.bf16.mxu0 0
      %4041 = vmatpush1.bf16.msra.mxu0 0
      %4042 = vmatprep.subr.bf16.mxu0 0
      %4043 = vmatpush1.bf16.msra.mxu0 0
      %4044 = vmatprep.subr.bf16.mxu0 0
      %4045 = vmatpush1.bf16.msra.mxu0 0
      %4046 = vmatprep.subr.bf16.mxu0 0
      %4047 = vmatpush1.bf16.msra.mxu0 0
      %4048 = vmatprep.subr.bf16.mxu0 0
      %4049 = vmatpush1.bf16.msra.mxu0 0
      %4050 = vmatprep.subr.bf16.mxu0 0
      %4051 = vmatpush1.bf16.msra.mxu0 %v3883
      %4052 = vmatprep.subr.bf16.mxu0 0
      %4053 = vmatpush1.bf16.msra.mxu0 %v3880
      %4054 = vmatprep.subr.bf16.mxu0 0
      %4055 = vmatpush2.bf16.msra.mxu0 0
      %4056 = vmatprep.subr.bf16.mxu0 0
      %4057 = vmatpush2.bf16.msra.mxu0 0
      %4058 = vmatprep.subr.bf16.mxu0 0
      %4059 = vmatpush2.bf16.msra.mxu0 0
      %4060 = vmatprep.subr.bf16.mxu0 0
      %4061 = vmatpush2.bf16.msra.mxu0 0
      %4062 = vmatprep.subr.bf16.mxu0 0
      %4063 = vmatpush2.bf16.msra.mxu0 0
      %4064 = vmatprep.subr.bf16.mxu0 0
      %4065 = vmatpush2.bf16.msra.mxu0 0
      %4066 = vmatprep.subr.bf16.mxu0 0
      %4067 = vmatpush2.bf16.msra.mxu0 0
      %4068 = vmatprep.subr.bf16.mxu0 0
      %4069 = vmatpush2.bf16.msra.mxu0 0
      %4070 = vmatprep.mubr.bf16.mxu0 0
      %4071 = vmatmul.mubr.bf16.gmra.mxu0 %v3891
      %v4072 = vpop.f32.mrf.mxu0
      %v4073 = vadd.f32 0.0, %v4072
      %v4074 = vpop.f32.mrf.mxu0
      %v4075 = vpop.f32.mrf.mxu0
      %v4076 = vadd.f32 0.0, %v4075
      %v4077 = vpop.f32.mrf.mxu0
      %4078 = vmatprep.mubr.bf16.mxu0 0
      %4079 = vmatmul.mubr.bf16.gmra.mxu0 %v3894
      %v4080 = vpop.f32.mrf.mxu0
      %v4081 = vadd.f32 0.0, %v4080
      %v4082 = vpop.f32.mrf.mxu0
      %v4083 = vpop.f32.mrf.mxu0
      %v4084 = vadd.f32 0.0, %v4083
      %v4085 = vpop.f32.mrf.mxu0
      %4086 = vmatprep.mubr.bf16.mxu0 0
      %4087 = vmatmul.mubr.bf16.gmra.mxu0 %v3897
      %v4088 = vpop.f32.mrf.mxu0
      %v4089 = vadd.f32 0.0, %v4088
      %v4090 = vpop.f32.mrf.mxu0
      %v4091 = vpop.f32.mrf.mxu0
      %v4092 = vadd.f32 0.0, %v4091
      %v4093 = vpop.f32.mrf.mxu0
      %4094 = vmatprep.mubr.bf16.mxu0 0
      %4095 = vmatmul.mubr.bf16.gmra.mxu0 %v3900
      %v4096 = vpop.f32.mrf.mxu0
      %v4097 = vadd.f32 0.0, %v4096
      %v4098 = vpop.f32.mrf.mxu0
      %v4099 = vpop.f32.mrf.mxu0
      %v4100 = vadd.f32 0.0, %v4099
      %v4101 = vpop.f32.mrf.mxu0
      %4102 = vmatprep.mubr.bf16.mxu0 0
      %4103 = vmatmul.mubr.bf16.gmra.mxu0 %v3903
      %v4104 = vpop.f32.mrf.mxu0
      %v4105 = vadd.f32 0.0, %v4104
      %v4106 = vpop.f32.mrf.mxu0
      %v4107 = vpop.f32.mrf.mxu0
      %v4108 = vadd.f32 0.0, %v4107
      %v4109 = vpop.f32.mrf.mxu0
      %4110 = vmatprep.mubr.bf16.mxu0 0
      %4111 = vmatmul.mubr.bf16.gmra.mxu0 %v3906
      %v4112 = vpop.f32.mrf.mxu0
      %v4113 = vadd.f32 0.0, %v4112
      %v4114 = vpop.f32.mrf.mxu0
      %v4115 = vpop.f32.mrf.mxu0
      %v4116 = vadd.f32 0.0, %v4115
      %v4117 = vpop.f32.mrf.mxu0
      %4118 = vmatprep.mubr.bf16.mxu0 0
      %4119 = vmatmul.mubr.bf16.gmra.mxu0 %v3909
      %v4120 = vpop.f32.mrf.mxu0
      %v4121 = vadd.f32 0.0, %v4120
      %v4122 = vpop.f32.mrf.mxu0
      %v4123 = vpop.f32.mrf.mxu0
      %v4124 = vadd.f32 0.0, %v4123
      %v4125 = vpop.f32.mrf.mxu0
      %4126 = vmatprep.mubr.bf16.mxu0 0
      %4127 = vmatmul.mubr.bf16.gmra.mxu0 %v3912
      %v4128 = vpop.f32.mrf.mxu0
      %v4129 = vadd.f32 0.0, %v4128
      %v4130 = vpop.f32.mrf.mxu0
      %v4131 = vpop.f32.mrf.mxu0
      %v4132 = vadd.f32 0.0, %v4131
      %v4133 = vpop.f32.mrf.mxu0
      %4134 = vmatprep.mubr.bf16.mxu0 0
      %4135 = vmatmul.mubr.bf16.gmra.mxu0 %v3915
      %v4136 = vpop.f32.mrf.mxu0
      %v4137 = vadd.f32 0.0, %v4136
      %v4138 = vpop.f32.mrf.mxu0
      %v4139 = vpop.f32.mrf.mxu0
      %v4140 = vpop.f32.mrf.mxu0
      %4141 = vdwg.mxu0
      %v4142 = vadd.f32 %v3749, %v3952
      %v4143 = vadd.f32 %v3750, %v3954
      %v4144 = vadd.f32 %v3751, %v4073
      %v4145 = vadd.f32 %v3752, %v3956
      %v4146 = vadd.f32 %v3753, %v3958
      %v4147 = vadd.f32 %v3754, %v4076
      %v4148 = vadd.f32 %v3755, %v3962
      %v4149 = vadd.f32 %v3756, %v3964
      %v4150 = vadd.f32 %v3757, %v4081
      %v4151 = vadd.f32 %v3758, %v3966
      %v4152 = vadd.f32 %v3759, %v3968
      %v4153 = vadd.f32 %v3760, %v4084
      %v4154 = vadd.f32 %v3761, %v3972
      %v4155 = vadd.f32 %v3762, %v3974
      %v4156 = vadd.f32 %v3763, %v4089
      %v4157 = vadd.f32 %v3764, %v3976
      %v4158 = vadd.f32 %v3765, %v3978
      %v4159 = vadd.f32 %v3766, %v4092
      %v4160 = vadd.f32 %v3767, %v3982
      %v4161 = vadd.f32 %v3768, %v3984
      %v4162 = vadd.f32 %v3769, %v4097
      %v4163 = vadd.f32 %v3770, %v3986
      %v4164 = vadd.f32 %v3771, %v3988
      %v4165 = vadd.f32 %v3772, %v4100
      %v4166 = vadd.f32 %v3773, %v3992
      %v4167 = vadd.f32 %v3774, %v3994
      %v4168 = vadd.f32 %v3775, %v4105
      %v4169 = vadd.f32 %v3776, %v3996
      %v4170 = vadd.f32 %v3777, %v3998
      %v4171 = vadd.f32 %v3778, %v4108
      %v4172 = vadd.f32 %v3779, %v4002
      %v4173 = vadd.f32 %v3780, %v4004
      %v4174 = vadd.f32 %v3781, %v4113
      %v4175 = vadd.f32 %v3782, %v4006
      %v4176 = vadd.f32 %v3783, %v4008
      %v4177 = vadd.f32 %v3784, %v4116
      %v4178 = vadd.f32 %v3785, %v4012
      %v4179 = vadd.f32 %v3786, %v4014
      %v4180 = vadd.f32 %v3787, %v4121
      %v4181 = vadd.f32 %v3788, %v4016
      %v4182 = vadd.f32 %v3789, %v4018
      %v4183 = vadd.f32 %v3790, %v4124
      %v4184 = vadd.f32 %v3791, %v4022
      %v4185 = vadd.f32 %v3792, %v4024
      %v4186 = vadd.f32 %v3793, %v4129
      %v4187 = vadd.f32 %v3794, %v4026
      %v4188 = vadd.f32 %v3795, %v4028
      %v4189 = vadd.f32 %v3796, %v4132
      %v4190 = vadd.f32 %v3797, %v4032
      %v4191 = vadd.f32 %v3798, %v4034
      %v4192 = vadd.f32 %v3799, %v4137
      %v4193 = vld [vmem:[%s5] sm:$0xff]
      %v4194 = vld [vmem:[%s5 + $0x8] sm:$0xff]
      %v4195 = vld [vmem:[%s5 + $0x10] sm:$0xff]
      %v4196 = vld [vmem:[%s5 + $0x18] sm:$0xff]
      %v4197 = vld [vmem:[%s5 + $0x20] sm:$0xff]
      %v4198 = vld [vmem:[%s5 + $0x28] sm:$0xff]
      %v4199 = vld [vmem:[%s5 + $0x30] sm:$0xff]
      %v4200 = vld [vmem:[%s5 + $0x38] sm:$0xff]
      %v4201 = vld [vmem:[%s5 + $0x40] sm:$0xff]
      %v4202 = vld [vmem:[%s5 + $0x48] sm:$0xff]
      %v4203 = vld [vmem:[%s5 + $0x50] sm:$0xff]
      %v4204 = vld [vmem:[%s5 + $0x58] sm:$0xff]
      %v4205 = vld [vmem:[%s5 + $0x60] sm:$0xff]
      %v4206 = vld [vmem:[%s5 + $0x68] sm:$0xff]
      %v4207 = vld [vmem:[%s5 + $0x70] sm:$0xff]
      %v4208 = vld [vmem:[%s5 + $0x78] sm:$0xff]
      %v4209 = vld [vmem:[%s5 + $0x80] sm:$0xff]
      %4211 = vset.pattern.permute.xlu0 0
      %4212 = vperm.xlu0 %4211, %v4193
      %v4213 = vpop.permute.xlu0 %4212
      %4216 = vset.pattern.permute.xlu0 0
      %4217 = vperm.xlu0 %4216, %v4194
      %v4218 = vpop.permute.xlu0 %4217
      %4221 = vset.pattern.permute.xlu0 0
      %4222 = vperm.xlu0 %4221, %v4195
      %v4223 = vpop.permute.xlu0 %4222
      %4226 = vset.pattern.permute.xlu0 0
      %4227 = vperm.xlu0 %4226, %v4196
      %v4228 = vpop.permute.xlu0 %4227
      %4231 = vset.pattern.permute.xlu0 0
      %4232 = vperm.xlu0 %4231, %v4197
      %v4233 = vpop.permute.xlu0 %4232
      %4236 = vset.pattern.permute.xlu0 0
      %4237 = vperm.xlu0 %4236, %v4198
      %v4238 = vpop.permute.xlu0 %4237
      %4241 = vset.pattern.permute.xlu0 0
      %4242 = vperm.xlu0 %4241, %v4199
      %v4243 = vpop.permute.xlu0 %4242
      %4246 = vset.pattern.permute.xlu0 0
      %4247 = vperm.xlu0 %4246, %v4200
      %v4248 = vpop.permute.xlu0 %4247
      %4251 = vset.pattern.permute.xlu0 0
      %4252 = vperm.xlu0 %4251, %v4201
      %v4253 = vpop.permute.xlu0 %4252
      %4256 = vset.pattern.permute.xlu0 0
      %4257 = vperm.xlu0 %4256, %v4202
      %v4258 = vpop.permute.xlu0 %4257
      %4261 = vset.pattern.permute.xlu0 0
      %4262 = vperm.xlu0 %4261, %v4203
      %v4263 = vpop.permute.xlu0 %4262
      %4266 = vset.pattern.permute.xlu0 0
      %4267 = vperm.xlu0 %4266, %v4204
      %v4268 = vpop.permute.xlu0 %4267
      %4271 = vset.pattern.permute.xlu0 0
      %4272 = vperm.xlu0 %4271, %v4205
      %v4273 = vpop.permute.xlu0 %4272
      %4276 = vset.pattern.permute.xlu0 0
      %4277 = vperm.xlu0 %4276, %v4206
      %v4278 = vpop.permute.xlu0 %4277
      %4281 = vset.pattern.permute.xlu0 0
      %4282 = vperm.xlu0 %4281, %v4207
      %v4283 = vpop.permute.xlu0 %4282
      %4286 = vset.pattern.permute.xlu0 0
      %4287 = vperm.xlu0 %4286, %v4208
      %v4288 = vpop.permute.xlu0 %4287
      %4291 = vset.pattern.permute.xlu0 0
      %4292 = vperm.xlu0 %4291, %v4209
      %v4293 = vpop.permute.xlu0 %4292
      %v4295 = vadd.f32 %v4142, %v4213
      %v4296 = vadd.f32 %v4143, %v4213
      %v4297 = vadd.f32 %v4144, %v4213
      %v4298 = vadd.f32 %v4145, %v4218
      %v4299 = vadd.f32 %v4146, %v4218
      %v4300 = vadd.f32 %v4147, %v4218
      %v4301 = vadd.f32 %v4148, %v4223
      %v4302 = vadd.f32 %v4149, %v4223
      %v4303 = vadd.f32 %v4150, %v4223
      %v4304 = vadd.f32 %v4151, %v4228
      %v4305 = vadd.f32 %v4152, %v4228
      %v4306 = vadd.f32 %v4153, %v4228
      %v4307 = vadd.f32 %v4154, %v4233
      %v4308 = vadd.f32 %v4155, %v4233
      %v4309 = vadd.f32 %v4156, %v4233
      %v4310 = vadd.f32 %v4157, %v4238
      %v4311 = vadd.f32 %v4158, %v4238
      %v4312 = vadd.f32 %v4159, %v4238
      %v4313 = vadd.f32 %v4160, %v4243
      %v4314 = vadd.f32 %v4161, %v4243
      %v4315 = vadd.f32 %v4162, %v4243
      %v4316 = vadd.f32 %v4163, %v4248
      %v4317 = vadd.f32 %v4164, %v4248
      %v4318 = vadd.f32 %v4165, %v4248
      %v4319 = vadd.f32 %v4166, %v4253
      %v4320 = vadd.f32 %v4167, %v4253
      %v4321 = vadd.f32 %v4168, %v4253
      %v4322 = vadd.f32 %v4169, %v4258
      %v4323 = vadd.f32 %v4170, %v4258
      %v4324 = vadd.f32 %v4171, %v4258
      %v4325 = vadd.f32 %v4172, %v4263
      %v4326 = vadd.f32 %v4173, %v4263
      %v4327 = vadd.f32 %v4174, %v4263
      %v4328 = vadd.f32 %v4175, %v4268
      %v4329 = vadd.f32 %v4176, %v4268
      %v4330 = vadd.f32 %v4177, %v4268
      %v4331 = vadd.f32 %v4178, %v4273
      %v4332 = vadd.f32 %v4179, %v4273
      %v4333 = vadd.f32 %v4180, %v4273
      %v4334 = vadd.f32 %v4181, %v4278
      %v4335 = vadd.f32 %v4182, %v4278
      %v4336 = vadd.f32 %v4183, %v4278
      %v4337 = vadd.f32 %v4184, %v4283
      %v4338 = vadd.f32 %v4185, %v4283
      %v4339 = vadd.f32 %v4186, %v4283
      %v4340 = vadd.f32 %v4187, %v4288
      %v4341 = vadd.f32 %v4188, %v4288
      %v4342 = vadd.f32 %v4189, %v4288
      %v4343 = vadd.f32 %v4190, %v4293
      %v4344 = vadd.f32 %v4191, %v4293
      %v4345 = vadd.f32 %v4192, %v4293
      %4346 = vmatprep.subr.mxu0 0.0
      %4347 = vmatpush1.msra.mxu0 %v719
      %4348 = vmatprep.subr.mxu0 0.0
      %4349 = vmatpush1.msra.mxu0 %v718
      %4350 = vmatprep.subr.mxu0 0.0
      %4351 = vmatpush1.msra.mxu0 %v717
      %4352 = vmatprep.subr.mxu0 0.0
      %4353 = vmatpush1.msra.mxu0 %v716
      %4354 = vmatprep.subr.mxu0 0.0
      %4355 = vmatpush1.msra.mxu0 %v715
      %4356 = vmatprep.subr.mxu0 0.0
      %4357 = vmatpush1.msra.mxu0 %v714
      %4358 = vmatprep.subr.mxu0 0.0
      %4359 = vmatpush1.msra.mxu0 %v713
      %4360 = vmatprep.subr.mxu0 0.0
      %4361 = vmatpush1.msra.mxu0 %v712
      %4362 = vmatprep.subr.mxu0 0.0
      %4363 = vmatpush1.msra.mxu0 %v711
      %4364 = vmatprep.subr.mxu0 0.0
      %4365 = vmatpush1.msra.mxu0 %v710
      %4366 = vmatprep.subr.mxu0 0.0
      %4367 = vmatpush1.msra.mxu0 %v709
      %4368 = vmatprep.subr.mxu0 0.0
      %4369 = vmatpush1.msra.mxu0 %v708
      %4370 = vmatprep.subr.mxu0 0.0
      %4371 = vmatpush1.msra.mxu0 %v707
      %4372 = vmatprep.subr.mxu0 0.0
      %4373 = vmatpush1.msra.mxu0 %v706
      %4374 = vmatprep.subr.mxu0 0.0
      %4375 = vmatpush1.msra.mxu0 %v705
      %4376 = vmatprep.subr.mxu0 0.0
      %4377 = vmatpush1.msra.mxu0 %v704
      %4378 = vmatprep.subr.mxu0 0.0
      %4379 = vmatpush2.msra.mxu0 %v735
      %4380 = vmatprep.subr.mxu0 0.0
      %4381 = vmatpush2.msra.mxu0 %v734
      %4382 = vmatprep.subr.mxu0 0.0
      %4383 = vmatpush2.msra.mxu0 %v733
      %4384 = vmatprep.subr.mxu0 0.0
      %4385 = vmatpush2.msra.mxu0 %v732
      %4386 = vmatprep.subr.mxu0 0.0
      %4387 = vmatpush2.msra.mxu0 %v731
      %4388 = vmatprep.subr.mxu0 0.0
      %4389 = vmatpush2.msra.mxu0 %v730
      %4390 = vmatprep.subr.mxu0 0.0
      %4391 = vmatpush2.msra.mxu0 %v729
      %4392 = vmatprep.subr.mxu0 0.0
      %4393 = vmatpush2.msra.mxu0 %v728
      %4394 = vmatprep.subr.mxu0 0.0
      %4395 = vmatpush2.msra.mxu0 %v727
      %4396 = vmatprep.subr.mxu0 0.0
      %4397 = vmatpush2.msra.mxu0 %v726
      %4398 = vmatprep.subr.mxu0 0.0
      %4399 = vmatpush2.msra.mxu0 %v725
      %4400 = vmatprep.subr.mxu0 0.0
      %4401 = vmatpush2.msra.mxu0 %v724
      %4402 = vmatprep.subr.mxu0 0.0
      %4403 = vmatpush2.msra.mxu0 %v723
      %4404 = vmatprep.subr.mxu0 0.0
      %4405 = vmatpush2.msra.mxu0 %v722
      %4406 = vmatprep.subr.mxu0 0.0
      %4407 = vmatpush2.msra.mxu0 %v721
      %4408 = vmatprep.subr.mxu0 0.0
      %4409 = vmatpush2.msra.mxu0 %v720
      %4410 = vmatprep.mubr.f32.mxu0 %v4296
      %4411 = vmatmul.mubr.f32.gmra.mxu0 %v4295
      %v4412 = vpop.f32.mrf.mxu0
      %v4413 = vadd.f32 0.0, %v4412
      %v4414 = vpop.f32.mrf.mxu0
      %4415 = vmatprep.mubr.f32.mxu0 %v4299
      %4416 = vmatmul.mubr.f32.gmra.mxu0 %v4298
      %v4417 = vpop.f32.mrf.mxu0
      %v4418 = vadd.f32 0.0, %v4417
      %v4419 = vpop.f32.mrf.mxu0
      %4420 = vmatprep.mubr.f32.mxu0 %v4302
      %4421 = vmatmul.mubr.f32.gmra.mxu0 %v4301
      %v4422 = vpop.f32.mrf.mxu0
      %v4423 = vadd.f32 0.0, %v4422
      %v4424 = vpop.f32.mrf.mxu0
      %4425 = vmatprep.mubr.f32.mxu0 %v4305
      %4426 = vmatmul.mubr.f32.gmra.mxu0 %v4304
      %v4427 = vpop.f32.mrf.mxu0
      %v4428 = vadd.f32 0.0, %v4427
      %v4429 = vpop.f32.mrf.mxu0
      %4430 = vmatprep.mubr.f32.mxu0 %v4308
      %4431 = vmatmul.mubr.f32.gmra.mxu0 %v4307
      %v4432 = vpop.f32.mrf.mxu0
      %v4433 = vadd.f32 0.0, %v4432
      %v4434 = vpop.f32.mrf.mxu0
      %4435 = vmatprep.mubr.f32.mxu0 %v4311
      %4436 = vmatmul.mubr.f32.gmra.mxu0 %v4310
      %v4437 = vpop.f32.mrf.mxu0
      %v4438 = vadd.f32 0.0, %v4437
      %v4439 = vpop.f32.mrf.mxu0
      %4440 = vmatprep.mubr.f32.mxu0 %v4314
      %4441 = vmatmul.mubr.f32.gmra.mxu0 %v4313
      %v4442 = vpop.f32.mrf.mxu0
      %v4443 = vadd.f32 0.0, %v4442
      %v4444 = vpop.f32.mrf.mxu0
      %4445 = vmatprep.mubr.f32.mxu0 %v4317
      %4446 = vmatmul.mubr.f32.gmra.mxu0 %v4316
      %v4447 = vpop.f32.mrf.mxu0
      %v4448 = vadd.f32 0.0, %v4447
      %v4449 = vpop.f32.mrf.mxu0
      %4450 = vmatprep.mubr.f32.mxu0 %v4320
      %4451 = vmatmul.mubr.f32.gmra.mxu0 %v4319
      %v4452 = vpop.f32.mrf.mxu0
      %v4453 = vadd.f32 0.0, %v4452
      %v4454 = vpop.f32.mrf.mxu0
      %4455 = vmatprep.mubr.f32.mxu0 %v4323
      %4456 = vmatmul.mubr.f32.gmra.mxu0 %v4322
      %v4457 = vpop.f32.mrf.mxu0
      %v4458 = vadd.f32 0.0, %v4457
      %v4459 = vpop.f32.mrf.mxu0
      %4460 = vmatprep.mubr.f32.mxu0 %v4326
      %4461 = vmatmul.mubr.f32.gmra.mxu0 %v4325
      %v4462 = vpop.f32.mrf.mxu0
      %v4463 = vadd.f32 0.0, %v4462
      %v4464 = vpop.f32.mrf.mxu0
      %4465 = vmatprep.mubr.f32.mxu0 %v4329
      %4466 = vmatmul.mubr.f32.gmra.mxu0 %v4328
      %v4467 = vpop.f32.mrf.mxu0
      %v4468 = vadd.f32 0.0, %v4467
      %v4469 = vpop.f32.mrf.mxu0
      %4470 = vmatprep.mubr.f32.mxu0 %v4332
      %4471 = vmatmul.mubr.f32.gmra.mxu0 %v4331
      %v4472 = vpop.f32.mrf.mxu0
      %v4473 = vadd.f32 0.0, %v4472
      %v4474 = vpop.f32.mrf.mxu0
      %4475 = vmatprep.mubr.f32.mxu0 %v4335
      %4476 = vmatmul.mubr.f32.gmra.mxu0 %v4334
      %v4477 = vpop.f32.mrf.mxu0
      %v4478 = vadd.f32 0.0, %v4477
      %v4479 = vpop.f32.mrf.mxu0
      %4480 = vmatprep.mubr.f32.mxu0 %v4338
      %4481 = vmatmul.mubr.f32.gmra.mxu0 %v4337
      %v4482 = vpop.f32.mrf.mxu0
      %v4483 = vadd.f32 0.0, %v4482
      %v4484 = vpop.f32.mrf.mxu0
      %4485 = vmatprep.mubr.f32.mxu0 %v4341
      %4486 = vmatmul.mubr.f32.gmra.mxu0 %v4340
      %v4487 = vpop.f32.mrf.mxu0
      %v4488 = vadd.f32 0.0, %v4487
      %v4489 = vpop.f32.mrf.mxu0
      %4490 = vmatprep.mubr.f32.mxu0 %v4344
      %4491 = vmatmul.mubr.f32.gmra.mxu0 %v4343
      %v4492 = vpop.f32.mrf.mxu0
      %v4493 = vadd.f32 0.0, %v4492
      %v4494 = vpop.f32.mrf.mxu0
      %4495 = vdwg.mxu0
      %4496 = vmatprep.subr.mxu0 0.0
      %4497 = vmatpush1.msra.mxu0 %v751
      %4498 = vmatprep.subr.mxu0 0.0
      %4499 = vmatpush1.msra.mxu0 %v750
      %4500 = vmatprep.subr.mxu0 0.0
      %4501 = vmatpush1.msra.mxu0 %v749
      %4502 = vmatprep.subr.mxu0 0.0
      %4503 = vmatpush1.msra.mxu0 %v748
      %4504 = vmatprep.subr.mxu0 0.0
      %4505 = vmatpush1.msra.mxu0 %v747
      %4506 = vmatprep.subr.mxu0 0.0
      %4507 = vmatpush1.msra.mxu0 %v746
      %4508 = vmatprep.subr.mxu0 0.0
      %4509 = vmatpush1.msra.mxu0 %v745
      %4510 = vmatprep.subr.mxu0 0.0
      %4511 = vmatpush1.msra.mxu0 %v744
      %4512 = vmatprep.subr.mxu0 0.0
      %4513 = vmatpush1.msra.mxu0 %v743
      %4514 = vmatprep.subr.mxu0 0.0
      %4515 = vmatpush1.msra.mxu0 %v742
      %4516 = vmatprep.subr.mxu0 0.0
      %4517 = vmatpush1.msra.mxu0 %v741
      %4518 = vmatprep.subr.mxu0 0.0
      %4519 = vmatpush1.msra.mxu0 %v740
      %4520 = vmatprep.subr.mxu0 0.0
      %4521 = vmatpush1.msra.mxu0 %v739
      %4522 = vmatprep.subr.mxu0 0.0
      %4523 = vmatpush1.msra.mxu0 %v738
      %4524 = vmatprep.subr.mxu0 0.0
      %4525 = vmatpush1.msra.mxu0 %v737
      %4526 = vmatprep.subr.mxu0 0.0
      %4527 = vmatpush1.msra.mxu0 %v736
      %4528 = vmatprep.subr.mxu0 0.0
      %4529 = vmatpush2.msra.mxu0 0.0
      %4530 = vmatprep.subr.mxu0 0.0
      %4531 = vmatpush2.msra.mxu0 0.0
      %4532 = vmatprep.subr.mxu0 0.0
      %4533 = vmatpush2.msra.mxu0 0.0
      %4534 = vmatprep.subr.mxu0 0.0
      %4535 = vmatpush2.msra.mxu0 0.0
      %4536 = vmatprep.subr.mxu0 0.0
      %4537 = vmatpush2.msra.mxu0 0.0
      %4538 = vmatprep.subr.mxu0 0.0
      %4539 = vmatpush2.msra.mxu0 0.0
      %4540 = vmatprep.subr.mxu0 0.0
      %4541 = vmatpush2.msra.mxu0 0.0
      %4542 = vmatprep.subr.mxu0 0.0
      %4543 = vmatpush2.msra.mxu0 0.0
      %4544 = vmatprep.subr.mxu0 0.0
      %4545 = vmatpush2.msra.mxu0 0.0
      %4546 = vmatprep.subr.mxu0 0.0
      %4547 = vmatpush2.msra.mxu0 0.0
      %4548 = vmatprep.subr.mxu0 0.0
      %4549 = vmatpush2.msra.mxu0 0.0
      %4550 = vmatprep.subr.mxu0 0.0
      %4551 = vmatpush2.msra.mxu0 0.0
      %4552 = vmatprep.subr.mxu0 0.0
      %4553 = vmatpush2.msra.mxu0 0.0
      %4554 = vmatprep.subr.mxu0 0.0
      %4555 = vmatpush2.msra.mxu0 0.0
      %4556 = vmatprep.subr.mxu0 0.0
      %4557 = vmatpush2.msra.mxu0 0.0
      %4558 = vmatprep.subr.mxu0 0.0
      %4559 = vmatpush2.msra.mxu0 0.0
      %4560 = vmatprep.mubr.f32.mxu0 0.0
      %4561 = vmatmul.mubr.f32.gmra.mxu0 %v4297
      %v4562 = vpop.f32.mrf.mxu0
      %v4563 = vadd.f32 %v4413, %v4562
      %v4564 = vpop.f32.mrf.mxu0
      %4565 = vmatprep.mubr.f32.mxu0 0.0
      %4566 = vmatmul.mubr.f32.gmra.mxu0 %v4300
      %v4567 = vpop.f32.mrf.mxu0
      %v4568 = vadd.f32 %v4418, %v4567
      %v4569 = vpop.f32.mrf.mxu0
      %4570 = vmatprep.mubr.f32.mxu0 0.0
      %4571 = vmatmul.mubr.f32.gmra.mxu0 %v4303
      %v4572 = vpop.f32.mrf.mxu0
      %v4573 = vadd.f32 %v4423, %v4572
      %v4574 = vpop.f32.mrf.mxu0
      %4575 = vmatprep.mubr.f32.mxu0 0.0
      %4576 = vmatmul.mubr.f32.gmra.mxu0 %v4306
      %v4577 = vpop.f32.mrf.mxu0
      %v4578 = vadd.f32 %v4428, %v4577
      %v4579 = vpop.f32.mrf.mxu0
      %4580 = vmatprep.mubr.f32.mxu0 0.0
      %4581 = vmatmul.mubr.f32.gmra.mxu0 %v4309
      %v4582 = vpop.f32.mrf.mxu0
      %v4583 = vadd.f32 %v4433, %v4582
      %v4584 = vpop.f32.mrf.mxu0
      %4585 = vmatprep.mubr.f32.mxu0 0.0
      %4586 = vmatmul.mubr.f32.gmra.mxu0 %v4312
      %v4587 = vpop.f32.mrf.mxu0
      %v4588 = vadd.f32 %v4438, %v4587
      %v4589 = vpop.f32.mrf.mxu0
      %4590 = vmatprep.mubr.f32.mxu0 0.0
      %4591 = vmatmul.mubr.f32.gmra.mxu0 %v4315
      %v4592 = vpop.f32.mrf.mxu0
      %v4593 = vadd.f32 %v4443, %v4592
      %v4594 = vpop.f32.mrf.mxu0
      %4595 = vmatprep.mubr.f32.mxu0 0.0
      %4596 = vmatmul.mubr.f32.gmra.mxu0 %v4318
      %v4597 = vpop.f32.mrf.mxu0
      %v4598 = vadd.f32 %v4448, %v4597
      %v4599 = vpop.f32.mrf.mxu0
      %4600 = vmatprep.mubr.f32.mxu0 0.0
      %4601 = vmatmul.mubr.f32.gmra.mxu0 %v4321
      %v4602 = vpop.f32.mrf.mxu0
      %v4603 = vadd.f32 %v4453, %v4602
      %v4604 = vpop.f32.mrf.mxu0
      %4605 = vmatprep.mubr.f32.mxu0 0.0
      %4606 = vmatmul.mubr.f32.gmra.mxu0 %v4324
      %v4607 = vpop.f32.mrf.mxu0
      %v4608 = vadd.f32 %v4458, %v4607
      %v4609 = vpop.f32.mrf.mxu0
      %4610 = vmatprep.mubr.f32.mxu0 0.0
      %4611 = vmatmul.mubr.f32.gmra.mxu0 %v4327
      %v4612 = vpop.f32.mrf.mxu0
      %v4613 = vadd.f32 %v4463, %v4612
      %v4614 = vpop.f32.mrf.mxu0
      %4615 = vmatprep.mubr.f32.mxu0 0.0
      %4616 = vmatmul.mubr.f32.gmra.mxu0 %v4330
      %v4617 = vpop.f32.mrf.mxu0
      %v4618 = vadd.f32 %v4468, %v4617
      %v4619 = vpop.f32.mrf.mxu0
      %4620 = vmatprep.mubr.f32.mxu0 0.0
      %4621 = vmatmul.mubr.f32.gmra.mxu0 %v4333
      %v4622 = vpop.f32.mrf.mxu0
      %v4623 = vadd.f32 %v4473, %v4622
      %v4624 = vpop.f32.mrf.mxu0
      %4625 = vmatprep.mubr.f32.mxu0 0.0
      %4626 = vmatmul.mubr.f32.gmra.mxu0 %v4336
      %v4627 = vpop.f32.mrf.mxu0
      %v4628 = vadd.f32 %v4478, %v4627
      %v4629 = vpop.f32.mrf.mxu0
      %4630 = vmatprep.mubr.f32.mxu0 0.0
      %4631 = vmatmul.mubr.f32.gmra.mxu0 %v4339
      %v4632 = vpop.f32.mrf.mxu0
      %v4633 = vadd.f32 %v4483, %v4632
      %v4634 = vpop.f32.mrf.mxu0
      %4635 = vmatprep.mubr.f32.mxu0 0.0
      %4636 = vmatmul.mubr.f32.gmra.mxu0 %v4342
      %v4637 = vpop.f32.mrf.mxu0
      %v4638 = vadd.f32 %v4488, %v4637
      %v4639 = vpop.f32.mrf.mxu0
      %4640 = vmatprep.mubr.f32.mxu0 0.0
      %4641 = vmatmul.mubr.f32.gmra.mxu0 %v4345
      %v4642 = vpop.f32.mrf.mxu0
      %v4643 = vadd.f32 %v4493, %v4642
      %v4644 = vpop.f32.mrf.mxu0
      %4645 = vdwg.mxu0
      %v4646 = vld [vmem:[%s8] sm:$0xff]
      %v4647 = vld [vmem:[%s8 + $0x8] sm:$0xff]
      %v4648 = vld [vmem:[%s8 + $0x10] sm:$0xff]
      %v4649 = vld [vmem:[%s8 + $0x18] sm:$0xff]
      %v4650 = vld [vmem:[%s8 + $0x20] sm:$0xff]
      %v4651 = vld [vmem:[%s8 + $0x28] sm:$0xff]
      %v4652 = vld [vmem:[%s8 + $0x30] sm:$0xff]
      %v4653 = vld [vmem:[%s8 + $0x38] sm:$0xff]
      %v4654 = vld [vmem:[%s8 + $0x40] sm:$0xff]
      %v4655 = vld [vmem:[%s8 + $0x48] sm:$0xff]
      %v4656 = vld [vmem:[%s8 + $0x50] sm:$0xff]
      %v4657 = vld [vmem:[%s8 + $0x58] sm:$0xff]
      %v4658 = vld [vmem:[%s8 + $0x60] sm:$0xff]
      %v4659 = vld [vmem:[%s8 + $0x68] sm:$0xff]
      %v4660 = vld [vmem:[%s8 + $0x70] sm:$0xff]
      %v4661 = vld [vmem:[%s8 + $0x78] sm:$0xff]
      %v4662 = vld [vmem:[%s8 + $0x80] sm:$0xff]
      %v4663 = vld [vmem:[%s8 + $0x88] sm:$0xff]
      %v4664 = vld [vmem:[%s8 + $0x90] sm:$0xff]
      %v4665 = vld [vmem:[%s8 + $0x98] sm:$0xff]
      %v4666 = vld [vmem:[%s8 + $0xa0] sm:$0xff]
      %v4667 = vld [vmem:[%s8 + $0xa8] sm:$0xff]
      %v4668 = vld [vmem:[%s8 + $0xb0] sm:$0xff]
      %v4669 = vld [vmem:[%s8 + $0xb8] sm:$0xff]
      %v4670 = vld [vmem:[%s8 + $0xc0] sm:$0xff]
      %v4671 = vld [vmem:[%s8 + $0xc8] sm:$0xff]
      %v4672 = vld [vmem:[%s8 + $0xd0] sm:$0xff]
      %v4673 = vld [vmem:[%s8 + $0xd8] sm:$0xff]
      %v4674 = vld [vmem:[%s8 + $0xe0] sm:$0xff]
      %v4675 = vld [vmem:[%s8 + $0xe8] sm:$0xff]
      %v4676 = vld [vmem:[%s8 + $0xf0] sm:$0xff]
      %v4677 = vld [vmem:[%s8 + $0xf8] sm:$0xff]
      %v4678 = vld [vmem:[%s8 + $0x100] sm:$0xff]
      %v4679 = vld [vmem:[%s8 + $0x108] sm:$0xff]
      %vm4680 = vcmask 64512
      %v4682 = vsel %vm4680, %v4647, 0
      %v4685 = vsel %vm4680, %v4649, 0
      %v4688 = vsel %vm4680, %v4651, 0
      %v4691 = vsel %vm4680, %v4653, 0
      %v4694 = vsel %vm4680, %v4655, 0
      %v4697 = vsel %vm4680, %v4657, 0
      %v4700 = vsel %vm4680, %v4659, 0
      %v4703 = vsel %vm4680, %v4661, 0
      %v4706 = vsel %vm4680, %v4663, 0
      %v4709 = vsel %vm4680, %v4665, 0
      %v4712 = vsel %vm4680, %v4667, 0
      %v4715 = vsel %vm4680, %v4669, 0
      %v4718 = vsel %vm4680, %v4671, 0
      %v4721 = vsel %vm4680, %v4673, 0
      %v4724 = vsel %vm4680, %v4675, 0
      %v4727 = vsel %vm4680, %v4677, 0
      %v4730 = vsel %vm4680, %v4679, 0
      %4732 = vmatprep.subr.mxu0 0.0
      %4733 = vmatpush1.msra.mxu0 %v4638
      %4734 = vmatprep.subr.mxu0 0.0
      %4735 = vmatpush1.msra.mxu0 %v4633
      %4736 = vmatprep.subr.mxu0 0.0
      %4737 = vmatpush1.msra.mxu0 %v4628
      %4738 = vmatprep.subr.mxu0 0.0
      %4739 = vmatpush1.msra.mxu0 %v4623
      %4740 = vmatprep.subr.mxu0 0.0
      %4741 = vmatpush1.msra.mxu0 %v4618
      %4742 = vmatprep.subr.mxu0 0.0
      %4743 = vmatpush1.msra.mxu0 %v4613
      %4744 = vmatprep.subr.mxu0 0.0
      %4745 = vmatpush1.msra.mxu0 %v4608
      %4746 = vmatprep.subr.mxu0 0.0
      %4747 = vmatpush1.msra.mxu0 %v4603
      %4748 = vmatprep.subr.mxu0 0.0
      %4749 = vmatpush1.msra.mxu0 %v4598
      %4750 = vmatprep.subr.mxu0 0.0
      %4751 = vmatpush1.msra.mxu0 %v4593
      %4752 = vmatprep.subr.mxu0 0.0
      %4753 = vmatpush1.msra.mxu0 %v4588
      %4754 = vmatprep.subr.mxu0 0.0
      %4755 = vmatpush1.msra.mxu0 %v4583
      %4756 = vmatprep.subr.mxu0 0.0
      %4757 = vmatpush1.msra.mxu0 %v4578
      %4758 = vmatprep.subr.mxu0 0.0
      %4759 = vmatpush1.msra.mxu0 %v4573
      %4760 = vmatprep.subr.mxu0 0.0
      %4761 = vmatpush1.msra.mxu0 %v4568
      %4762 = vmatprep.subr.mxu0 0.0
      %4763 = vmatpush1.msra.mxu0 %v4563
      %4764 = vmatprep.subr.mxu0 0.0
      %4765 = vmatpush2.msra.mxu0 0.0
      %4766 = vmatprep.subr.mxu0 0.0
      %4767 = vmatpush2.msra.mxu0 0.0
      %4768 = vmatprep.subr.mxu0 0.0
      %4769 = vmatpush2.msra.mxu0 0.0
      %4770 = vmatprep.subr.mxu0 0.0
      %4771 = vmatpush2.msra.mxu0 0.0
      %4772 = vmatprep.subr.mxu0 0.0
      %4773 = vmatpush2.msra.mxu0 0.0
      %4774 = vmatprep.subr.mxu0 0.0
      %4775 = vmatpush2.msra.mxu0 0.0
      %4776 = vmatprep.subr.mxu0 0.0
      %4777 = vmatpush2.msra.mxu0 0.0
      %4778 = vmatprep.subr.mxu0 0.0
      %4779 = vmatpush2.msra.mxu0 0.0
      %4780 = vmatprep.subr.mxu0 0.0
      %4781 = vmatpush2.msra.mxu0 0.0
      %4782 = vmatprep.subr.mxu0 0.0
      %4783 = vmatpush2.msra.mxu0 0.0
      %4784 = vmatprep.subr.mxu0 0.0
      %4785 = vmatpush2.msra.mxu0 0.0
      %4786 = vmatprep.subr.mxu0 0.0
      %4787 = vmatpush2.msra.mxu0 0.0
      %4788 = vmatprep.subr.mxu0 0.0
      %4789 = vmatpush2.msra.mxu0 0.0
      %4790 = vmatprep.subr.mxu0 0.0
      %4791 = vmatpush2.msra.mxu0 0.0
      %4792 = vmatprep.subr.mxu0 0.0
      %4793 = vmatpush2.msra.mxu0 0.0
      %4794 = vmatprep.subr.mxu0 0.0
      %4795 = vmatpush2.msra.mxu0 %v4643
      %4796 = vmatprep.mubr.f32.mxu0 %v4682
      %4797 = vmatmul.mubr.f32.gmra.mxu0 %v4646
      %v4798 = vpop.f32.mrf.mxu0
      %v4799 = vadd.f32 0.0, %v4798
      %v4800 = vpop.f32.mrf.mxu0
      %4801 = vmatprep.mubr.f32.mxu0 %v4685
      %4802 = vmatmul.mubr.f32.gmra.mxu0 %v4648
      %v4803 = vpop.f32.mrf.mxu0
      %v4804 = vadd.f32 0.0, %v4803
      %v4805 = vpop.f32.mrf.mxu0
      %4806 = vmatprep.mubr.f32.mxu0 %v4688
      %4807 = vmatmul.mubr.f32.gmra.mxu0 %v4650
      %v4808 = vpop.f32.mrf.mxu0
      %v4809 = vadd.f32 0.0, %v4808
      %v4810 = vpop.f32.mrf.mxu0
      %4811 = vmatprep.mubr.f32.mxu0 %v4691
      %4812 = vmatmul.mubr.f32.gmra.mxu0 %v4652
      %v4813 = vpop.f32.mrf.mxu0
      %v4814 = vadd.f32 0.0, %v4813
      %v4815 = vpop.f32.mrf.mxu0
      %4816 = vmatprep.mubr.f32.mxu0 %v4694
      %4817 = vmatmul.mubr.f32.gmra.mxu0 %v4654
      %v4818 = vpop.f32.mrf.mxu0
      %v4819 = vadd.f32 0.0, %v4818
      %v4820 = vpop.f32.mrf.mxu0
      %4821 = vmatprep.mubr.f32.mxu0 %v4697
      %4822 = vmatmul.mubr.f32.gmra.mxu0 %v4656
      %v4823 = vpop.f32.mrf.mxu0
      %v4824 = vadd.f32 0.0, %v4823
      %v4825 = vpop.f32.mrf.mxu0
      %4826 = vmatprep.mubr.f32.mxu0 %v4700
      %4827 = vmatmul.mubr.f32.gmra.mxu0 %v4658
      %v4828 = vpop.f32.mrf.mxu0
      %v4829 = vadd.f32 0.0, %v4828
      %v4830 = vpop.f32.mrf.mxu0
      %4831 = vmatprep.mubr.f32.mxu0 %v4703
      %4832 = vmatmul.mubr.f32.gmra.mxu0 %v4660
      %v4833 = vpop.f32.mrf.mxu0
      %v4834 = vadd.f32 0.0, %v4833
      %v4835 = vpop.f32.mrf.mxu0
      %4836 = vmatprep.mubr.f32.mxu0 %v4706
      %4837 = vmatmul.mubr.f32.gmra.mxu0 %v4662
      %v4838 = vpop.f32.mrf.mxu0
      %v4839 = vadd.f32 0.0, %v4838
      %v4840 = vpop.f32.mrf.mxu0
      %4841 = vmatprep.mubr.f32.mxu0 %v4709
      %4842 = vmatmul.mubr.f32.gmra.mxu0 %v4664
      %v4843 = vpop.f32.mrf.mxu0
      %v4844 = vadd.f32 0.0, %v4843
      %v4845 = vpop.f32.mrf.mxu0
      %4846 = vmatprep.mubr.f32.mxu0 %v4712
      %4847 = vmatmul.mubr.f32.gmra.mxu0 %v4666
      %v4848 = vpop.f32.mrf.mxu0
      %v4849 = vadd.f32 0.0, %v4848
      %v4850 = vpop.f32.mrf.mxu0
      %4851 = vmatprep.mubr.f32.mxu0 %v4715
      %4852 = vmatmul.mubr.f32.gmra.mxu0 %v4668
      %v4853 = vpop.f32.mrf.mxu0
      %v4854 = vadd.f32 0.0, %v4853
      %v4855 = vpop.f32.mrf.mxu0
      %4856 = vmatprep.mubr.f32.mxu0 %v4718
      %4857 = vmatmul.mubr.f32.gmra.mxu0 %v4670
      %v4858 = vpop.f32.mrf.mxu0
      %v4859 = vadd.f32 0.0, %v4858
      %v4860 = vpop.f32.mrf.mxu0
      %4861 = vmatprep.mubr.f32.mxu0 %v4721
      %4862 = vmatmul.mubr.f32.gmra.mxu0 %v4672
      %v4863 = vpop.f32.mrf.mxu0
      %v4864 = vadd.f32 0.0, %v4863
      %v4865 = vpop.f32.mrf.mxu0
      %4866 = vmatprep.mubr.f32.mxu0 %v4724
      %4867 = vmatmul.mubr.f32.gmra.mxu0 %v4674
      %v4868 = vpop.f32.mrf.mxu0
      %v4869 = vadd.f32 0.0, %v4868
      %v4870 = vpop.f32.mrf.mxu0
      %4871 = vmatprep.mubr.f32.mxu0 %v4727
      %4872 = vmatmul.mubr.f32.gmra.mxu0 %v4676
      %v4873 = vpop.f32.mrf.mxu0
      %v4874 = vadd.f32 0.0, %v4873
      %v4875 = vpop.f32.mrf.mxu0
      %4876 = vmatprep.mubr.f32.mxu0 %v4730
      %4877 = vmatmul.mubr.f32.gmra.mxu0 %v4678
      %v4878 = vpop.f32.mrf.mxu0
      %v4879 = vadd.f32 0.0, %v4878
      %v4880 = vpop.f32.mrf.mxu0
      %4881 = vdwg.mxu0
      %4883 = vset.pattern.permute.xlu0 0
      %4884 = vperm.xlu0 %4883, %v4799
      %v4885 = vpop.permute.xlu0 %4884
      %4888 = vset.pattern.permute.xlu0 0
      %4889 = vperm.xlu0 %4888, %v4804
      %v4890 = vpop.permute.xlu0 %4889
      %4893 = vset.pattern.permute.xlu0 0
      %4894 = vperm.xlu0 %4893, %v4809
      %v4895 = vpop.permute.xlu0 %4894
      %4898 = vset.pattern.permute.xlu0 0
      %4899 = vperm.xlu0 %4898, %v4814
      %v4900 = vpop.permute.xlu0 %4899
      %4903 = vset.pattern.permute.xlu0 0
      %4904 = vperm.xlu0 %4903, %v4819
      %v4905 = vpop.permute.xlu0 %4904
      %4908 = vset.pattern.permute.xlu0 0
      %4909 = vperm.xlu0 %4908, %v4824
      %v4910 = vpop.permute.xlu0 %4909
      %4913 = vset.pattern.permute.xlu0 0
      %4914 = vperm.xlu0 %4913, %v4829
      %v4915 = vpop.permute.xlu0 %4914
      %4918 = vset.pattern.permute.xlu0 0
      %4919 = vperm.xlu0 %4918, %v4834
      %v4920 = vpop.permute.xlu0 %4919
      %4923 = vset.pattern.permute.xlu0 0
      %4924 = vperm.xlu0 %4923, %v4839
      %v4925 = vpop.permute.xlu0 %4924
      %4928 = vset.pattern.permute.xlu0 0
      %4929 = vperm.xlu0 %4928, %v4844
      %v4930 = vpop.permute.xlu0 %4929
      %4933 = vset.pattern.permute.xlu0 0
      %4934 = vperm.xlu0 %4933, %v4849
      %v4935 = vpop.permute.xlu0 %4934
      %4938 = vset.pattern.permute.xlu0 0
      %4939 = vperm.xlu0 %4938, %v4854
      %v4940 = vpop.permute.xlu0 %4939
      %4943 = vset.pattern.permute.xlu0 0
      %4944 = vperm.xlu0 %4943, %v4859
      %v4945 = vpop.permute.xlu0 %4944
      %4948 = vset.pattern.permute.xlu0 0
      %4949 = vperm.xlu0 %4948, %v4864
      %v4950 = vpop.permute.xlu0 %4949
      %4953 = vset.pattern.permute.xlu0 0
      %4954 = vperm.xlu0 %4953, %v4869
      %v4955 = vpop.permute.xlu0 %4954
      %4958 = vset.pattern.permute.xlu0 0
      %4959 = vperm.xlu0 %4958, %v4874
      %v4960 = vpop.permute.xlu0 %4959
      %4963 = vset.pattern.permute.xlu0 0
      %4964 = vperm.xlu0 %4963, %v4879
      %v4965 = vpop.permute.xlu0 %4964
      %v4967 = vsub.f32 %v4295, %v4885
      %v4968 = vsub.f32 %v4296, %v4885
      %v4969 = vsub.f32 %v4297, %v4885
      %v4970 = vsub.f32 %v4298, %v4890
      %v4971 = vsub.f32 %v4299, %v4890
      %v4972 = vsub.f32 %v4300, %v4890
      %v4973 = vsub.f32 %v4301, %v4895
      %v4974 = vsub.f32 %v4302, %v4895
      %v4975 = vsub.f32 %v4303, %v4895
      %v4976 = vsub.f32 %v4304, %v4900
      %v4977 = vsub.f32 %v4305, %v4900
      %v4978 = vsub.f32 %v4306, %v4900
      %v4979 = vsub.f32 %v4307, %v4905
      %v4980 = vsub.f32 %v4308, %v4905
      %v4981 = vsub.f32 %v4309, %v4905
      %v4982 = vsub.f32 %v4310, %v4910
      %v4983 = vsub.f32 %v4311, %v4910
      %v4984 = vsub.f32 %v4312, %v4910
      %v4985 = vsub.f32 %v4313, %v4915
      %v4986 = vsub.f32 %v4314, %v4915
      %v4987 = vsub.f32 %v4315, %v4915
      %v4988 = vsub.f32 %v4316, %v4920
      %v4989 = vsub.f32 %v4317, %v4920
      %v4990 = vsub.f32 %v4318, %v4920
      %v4991 = vsub.f32 %v4319, %v4925
      %v4992 = vsub.f32 %v4320, %v4925
      %v4993 = vsub.f32 %v4321, %v4925
      %v4994 = vsub.f32 %v4322, %v4930
      %v4995 = vsub.f32 %v4323, %v4930
      %v4996 = vsub.f32 %v4324, %v4930
      %v4997 = vsub.f32 %v4325, %v4935
      %v4998 = vsub.f32 %v4326, %v4935
      %v4999 = vsub.f32 %v4327, %v4935
      %v5000 = vsub.f32 %v4328, %v4940
      %v5001 = vsub.f32 %v4329, %v4940
      %v5002 = vsub.f32 %v4330, %v4940
      %v5003 = vsub.f32 %v4331, %v4945
      %v5004 = vsub.f32 %v4332, %v4945
      %v5005 = vsub.f32 %v4333, %v4945
      %v5006 = vsub.f32 %v4334, %v4950
      %v5007 = vsub.f32 %v4335, %v4950
      %v5008 = vsub.f32 %v4336, %v4950
      %v5009 = vsub.f32 %v4337, %v4955
      %v5010 = vsub.f32 %v4338, %v4955
      %v5011 = vsub.f32 %v4339, %v4955
      %v5012 = vsub.f32 %v4340, %v4960
      %v5013 = vsub.f32 %v4341, %v4960
      %v5014 = vsub.f32 %v4342, %v4960
      %v5015 = vsub.f32 %v4343, %v4965
      %v5016 = vsub.f32 %v4344, %v4965
      %v5017 = vsub.f32 %v4345, %v4965
      %v5018 = vmul.f32 %v4967, %v4967
      %v5019 = vmul.f32 %v4968, %v4968
      %v5020 = vmul.f32 %v4969, %v4969
      %v5021 = vmul.f32 %v4970, %v4970
      %v5022 = vmul.f32 %v4971, %v4971
      %v5023 = vmul.f32 %v4972, %v4972
      %v5024 = vmul.f32 %v4973, %v4973
      %v5025 = vmul.f32 %v4974, %v4974
      %v5026 = vmul.f32 %v4975, %v4975
      %v5027 = vmul.f32 %v4976, %v4976
      %v5028 = vmul.f32 %v4977, %v4977
      %v5029 = vmul.f32 %v4978, %v4978
      %v5030 = vmul.f32 %v4979, %v4979
      %v5031 = vmul.f32 %v4980, %v4980
      %v5032 = vmul.f32 %v4981, %v4981
      %v5033 = vmul.f32 %v4982, %v4982
      %v5034 = vmul.f32 %v4983, %v4983
      %v5035 = vmul.f32 %v4984, %v4984
      %v5036 = vmul.f32 %v4985, %v4985
      %v5037 = vmul.f32 %v4986, %v4986
      %v5038 = vmul.f32 %v4987, %v4987
      %v5039 = vmul.f32 %v4988, %v4988
      %v5040 = vmul.f32 %v4989, %v4989
      %v5041 = vmul.f32 %v4990, %v4990
      %v5042 = vmul.f32 %v4991, %v4991
      %v5043 = vmul.f32 %v4992, %v4992
      %v5044 = vmul.f32 %v4993, %v4993
      %v5045 = vmul.f32 %v4994, %v4994
      %v5046 = vmul.f32 %v4995, %v4995
      %v5047 = vmul.f32 %v4996, %v4996
      %v5048 = vmul.f32 %v4997, %v4997
      %v5049 = vmul.f32 %v4998, %v4998
      %v5050 = vmul.f32 %v4999, %v4999
      %v5051 = vmul.f32 %v5000, %v5000
      %v5052 = vmul.f32 %v5001, %v5001
      %v5053 = vmul.f32 %v5002, %v5002
      %v5054 = vmul.f32 %v5003, %v5003
      %v5055 = vmul.f32 %v5004, %v5004
      %v5056 = vmul.f32 %v5005, %v5005
      %v5057 = vmul.f32 %v5006, %v5006
      %v5058 = vmul.f32 %v5007, %v5007
      %v5059 = vmul.f32 %v5008, %v5008
      %v5060 = vmul.f32 %v5009, %v5009
      %v5061 = vmul.f32 %v5010, %v5010
      %v5062 = vmul.f32 %v5011, %v5011
      %v5063 = vmul.f32 %v5012, %v5012
      %v5064 = vmul.f32 %v5013, %v5013
      %v5065 = vmul.f32 %v5014, %v5014
      %v5066 = vmul.f32 %v5015, %v5015
      %v5067 = vmul.f32 %v5016, %v5016
      %v5068 = vmul.f32 %v5017, %v5017
      %5069 = vmatprep.subr.mxu0 0.0
      %5070 = vmatpush1.msra.mxu0 %v719
      %5071 = vmatprep.subr.mxu0 0.0
      %5072 = vmatpush1.msra.mxu0 %v718
      %5073 = vmatprep.subr.mxu0 0.0
      %5074 = vmatpush1.msra.mxu0 %v717
      %5075 = vmatprep.subr.mxu0 0.0
      %5076 = vmatpush1.msra.mxu0 %v716
      %5077 = vmatprep.subr.mxu0 0.0
      %5078 = vmatpush1.msra.mxu0 %v715
      %5079 = vmatprep.subr.mxu0 0.0
      %5080 = vmatpush1.msra.mxu0 %v714
      %5081 = vmatprep.subr.mxu0 0.0
      %5082 = vmatpush1.msra.mxu0 %v713
      %5083 = vmatprep.subr.mxu0 0.0
      %5084 = vmatpush1.msra.mxu0 %v712
      %5085 = vmatprep.subr.mxu0 0.0
      %5086 = vmatpush1.msra.mxu0 %v711
      %5087 = vmatprep.subr.mxu0 0.0
      %5088 = vmatpush1.msra.mxu0 %v710
      %5089 = vmatprep.subr.mxu0 0.0
      %5090 = vmatpush1.msra.mxu0 %v709
      %5091 = vmatprep.subr.mxu0 0.0
      %5092 = vmatpush1.msra.mxu0 %v708
      %5093 = vmatprep.subr.mxu0 0.0
      %5094 = vmatpush1.msra.mxu0 %v707
      %5095 = vmatprep.subr.mxu0 0.0
      %5096 = vmatpush1.msra.mxu0 %v706
      %5097 = vmatprep.subr.mxu0 0.0
      %5098 = vmatpush1.msra.mxu0 %v705
      %5099 = vmatprep.subr.mxu0 0.0
      %5100 = vmatpush1.msra.mxu0 %v704
      %5101 = vmatprep.subr.mxu0 0.0
      %5102 = vmatpush2.msra.mxu0 %v735
      %5103 = vmatprep.subr.mxu0 0.0
      %5104 = vmatpush2.msra.mxu0 %v734
      %5105 = vmatprep.subr.mxu0 0.0
      %5106 = vmatpush2.msra.mxu0 %v733
      %5107 = vmatprep.subr.mxu0 0.0
      %5108 = vmatpush2.msra.mxu0 %v732
      %5109 = vmatprep.subr.mxu0 0.0
      %5110 = vmatpush2.msra.mxu0 %v731
      %5111 = vmatprep.subr.mxu0 0.0
      %5112 = vmatpush2.msra.mxu0 %v730
      %5113 = vmatprep.subr.mxu0 0.0
      %5114 = vmatpush2.msra.mxu0 %v729
      %5115 = vmatprep.subr.mxu0 0.0
      %5116 = vmatpush2.msra.mxu0 %v728
      %5117 = vmatprep.subr.mxu0 0.0
      %5118 = vmatpush2.msra.mxu0 %v727
      %5119 = vmatprep.subr.mxu0 0.0
      %5120 = vmatpush2.msra.mxu0 %v726
      %5121 = vmatprep.subr.mxu0 0.0
      %5122 = vmatpush2.msra.mxu0 %v725
      %5123 = vmatprep.subr.mxu0 0.0
      %5124 = vmatpush2.msra.mxu0 %v724
      %5125 = vmatprep.subr.mxu0 0.0
      %5126 = vmatpush2.msra.mxu0 %v723
      %5127 = vmatprep.subr.mxu0 0.0
      %5128 = vmatpush2.msra.mxu0 %v722
      %5129 = vmatprep.subr.mxu0 0.0
      %5130 = vmatpush2.msra.mxu0 %v721
      %5131 = vmatprep.subr.mxu0 0.0
      %5132 = vmatpush2.msra.mxu0 %v720
      %5133 = vmatprep.mubr.f32.mxu0 %v5019
      %5134 = vmatmul.mubr.f32.gmra.mxu0 %v5018
      %v5135 = vpop.f32.mrf.mxu0
      %v5136 = vadd.f32 0.0, %v5135
      %v5137 = vpop.f32.mrf.mxu0
      %5138 = vmatprep.mubr.f32.mxu0 %v5022
      %5139 = vmatmul.mubr.f32.gmra.mxu0 %v5021
      %v5140 = vpop.f32.mrf.mxu0
      %v5141 = vadd.f32 0.0, %v5140
      %v5142 = vpop.f32.mrf.mxu0
      %5143 = vmatprep.mubr.f32.mxu0 %v5025
      %5144 = vmatmul.mubr.f32.gmra.mxu0 %v5024
      %v5145 = vpop.f32.mrf.mxu0
      %v5146 = vadd.f32 0.0, %v5145
      %v5147 = vpop.f32.mrf.mxu0
      %5148 = vmatprep.mubr.f32.mxu0 %v5028
      %5149 = vmatmul.mubr.f32.gmra.mxu0 %v5027
      %v5150 = vpop.f32.mrf.mxu0
      %v5151 = vadd.f32 0.0, %v5150
      %v5152 = vpop.f32.mrf.mxu0
      %5153 = vmatprep.mubr.f32.mxu0 %v5031
      %5154 = vmatmul.mubr.f32.gmra.mxu0 %v5030
      %v5155 = vpop.f32.mrf.mxu0
      %v5156 = vadd.f32 0.0, %v5155
      %v5157 = vpop.f32.mrf.mxu0
      %5158 = vmatprep.mubr.f32.mxu0 %v5034
      %5159 = vmatmul.mubr.f32.gmra.mxu0 %v5033
      %v5160 = vpop.f32.mrf.mxu0
      %v5161 = vadd.f32 0.0, %v5160
      %v5162 = vpop.f32.mrf.mxu0
      %5163 = vmatprep.mubr.f32.mxu0 %v5037
      %5164 = vmatmul.mubr.f32.gmra.mxu0 %v5036
      %v5165 = vpop.f32.mrf.mxu0
      %v5166 = vadd.f32 0.0, %v5165
      %v5167 = vpop.f32.mrf.mxu0
      %5168 = vmatprep.mubr.f32.mxu0 %v5040
      %5169 = vmatmul.mubr.f32.gmra.mxu0 %v5039
      %v5170 = vpop.f32.mrf.mxu0
      %v5171 = vadd.f32 0.0, %v5170
      %v5172 = vpop.f32.mrf.mxu0
      %5173 = vmatprep.mubr.f32.mxu0 %v5043
      %5174 = vmatmul.mubr.f32.gmra.mxu0 %v5042
      %v5175 = vpop.f32.mrf.mxu0
      %v5176 = vadd.f32 0.0, %v5175
      %v5177 = vpop.f32.mrf.mxu0
      %5178 = vmatprep.mubr.f32.mxu0 %v5046
      %5179 = vmatmul.mubr.f32.gmra.mxu0 %v5045
      %v5180 = vpop.f32.mrf.mxu0
      %v5181 = vadd.f32 0.0, %v5180
      %v5182 = vpop.f32.mrf.mxu0
      %5183 = vmatprep.mubr.f32.mxu0 %v5049
      %5184 = vmatmul.mubr.f32.gmra.mxu0 %v5048
      %v5185 = vpop.f32.mrf.mxu0
      %v5186 = vadd.f32 0.0, %v5185
      %v5187 = vpop.f32.mrf.mxu0
      %5188 = vmatprep.mubr.f32.mxu0 %v5052
      %5189 = vmatmul.mubr.f32.gmra.mxu0 %v5051
      %v5190 = vpop.f32.mrf.mxu0
      %v5191 = vadd.f32 0.0, %v5190
      %v5192 = vpop.f32.mrf.mxu0
      %5193 = vmatprep.mubr.f32.mxu0 %v5055
      %5194 = vmatmul.mubr.f32.gmra.mxu0 %v5054
      %v5195 = vpop.f32.mrf.mxu0
      %v5196 = vadd.f32 0.0, %v5195
      %v5197 = vpop.f32.mrf.mxu0
      %5198 = vmatprep.mubr.f32.mxu0 %v5058
      %5199 = vmatmul.mubr.f32.gmra.mxu0 %v5057
      %v5200 = vpop.f32.mrf.mxu0
      %v5201 = vadd.f32 0.0, %v5200
      %v5202 = vpop.f32.mrf.mxu0
      %5203 = vmatprep.mubr.f32.mxu0 %v5061
      %5204 = vmatmul.mubr.f32.gmra.mxu0 %v5060
      %v5205 = vpop.f32.mrf.mxu0
      %v5206 = vadd.f32 0.0, %v5205
      %v5207 = vpop.f32.mrf.mxu0
      %5208 = vmatprep.mubr.f32.mxu0 %v5064
      %5209 = vmatmul.mubr.f32.gmra.mxu0 %v5063
      %v5210 = vpop.f32.mrf.mxu0
      %v5211 = vadd.f32 0.0, %v5210
      %v5212 = vpop.f32.mrf.mxu0
      %5213 = vmatprep.mubr.f32.mxu0 %v5067
      %5214 = vmatmul.mubr.f32.gmra.mxu0 %v5066
      %v5215 = vpop.f32.mrf.mxu0
      %v5216 = vadd.f32 0.0, %v5215
      %v5217 = vpop.f32.mrf.mxu0
      %5218 = vdwg.mxu0
      %5219 = vmatprep.subr.mxu0 0.0
      %5220 = vmatpush1.msra.mxu0 %v751
      %5221 = vmatprep.subr.mxu0 0.0
      %5222 = vmatpush1.msra.mxu0 %v750
      %5223 = vmatprep.subr.mxu0 0.0
      %5224 = vmatpush1.msra.mxu0 %v749
      %5225 = vmatprep.subr.mxu0 0.0
      %5226 = vmatpush1.msra.mxu0 %v748
      %5227 = vmatprep.subr.mxu0 0.0
      %5228 = vmatpush1.msra.mxu0 %v747
      %5229 = vmatprep.subr.mxu0 0.0
      %5230 = vmatpush1.msra.mxu0 %v746
      %5231 = vmatprep.subr.mxu0 0.0
      %5232 = vmatpush1.msra.mxu0 %v745
      %5233 = vmatprep.subr.mxu0 0.0
      %5234 = vmatpush1.msra.mxu0 %v744
      %5235 = vmatprep.subr.mxu0 0.0
      %5236 = vmatpush1.msra.mxu0 %v743
      %5237 = vmatprep.subr.mxu0 0.0
      %5238 = vmatpush1.msra.mxu0 %v742
      %5239 = vmatprep.subr.mxu0 0.0
      %5240 = vmatpush1.msra.mxu0 %v741
      %5241 = vmatprep.subr.mxu0 0.0
      %5242 = vmatpush1.msra.mxu0 %v740
      %5243 = vmatprep.subr.mxu0 0.0
      %5244 = vmatpush1.msra.mxu0 %v739
      %5245 = vmatprep.subr.mxu0 0.0
      %5246 = vmatpush1.msra.mxu0 %v738
      %5247 = vmatprep.subr.mxu0 0.0
      %5248 = vmatpush1.msra.mxu0 %v737
      %5249 = vmatprep.subr.mxu0 0.0
      %5250 = vmatpush1.msra.mxu0 %v736
      %5251 = vmatprep.subr.mxu0 0.0
      %5252 = vmatpush2.msra.mxu0 0.0
      %5253 = vmatprep.subr.mxu0 0.0
      %5254 = vmatpush2.msra.mxu0 0.0
      %5255 = vmatprep.subr.mxu0 0.0
      %5256 = vmatpush2.msra.mxu0 0.0
      %5257 = vmatprep.subr.mxu0 0.0
      %5258 = vmatpush2.msra.mxu0 0.0
      %5259 = vmatprep.subr.mxu0 0.0
      %5260 = vmatpush2.msra.mxu0 0.0
      %5261 = vmatprep.subr.mxu0 0.0
      %5262 = vmatpush2.msra.mxu0 0.0
      %5263 = vmatprep.subr.mxu0 0.0
      %5264 = vmatpush2.msra.mxu0 0.0
      %5265 = vmatprep.subr.mxu0 0.0
      %5266 = vmatpush2.msra.mxu0 0.0
      %5267 = vmatprep.subr.mxu0 0.0
      %5268 = vmatpush2.msra.mxu0 0.0
      %5269 = vmatprep.subr.mxu0 0.0
      %5270 = vmatpush2.msra.mxu0 0.0
      %5271 = vmatprep.subr.mxu0 0.0
      %5272 = vmatpush2.msra.mxu0 0.0
      %5273 = vmatprep.subr.mxu0 0.0
      %5274 = vmatpush2.msra.mxu0 0.0
      %5275 = vmatprep.subr.mxu0 0.0
      %5276 = vmatpush2.msra.mxu0 0.0
      %5277 = vmatprep.subr.mxu0 0.0
      %5278 = vmatpush2.msra.mxu0 0.0
      %5279 = vmatprep.subr.mxu0 0.0
      %5280 = vmatpush2.msra.mxu0 0.0
      %5281 = vmatprep.subr.mxu0 0.0
      %5282 = vmatpush2.msra.mxu0 0.0
      %5283 = vmatprep.mubr.f32.mxu0 0.0
      %5284 = vmatmul.mubr.f32.gmra.mxu0 %v5020
      %v5285 = vpop.f32.mrf.mxu0
      %v5286 = vadd.f32 %v5136, %v5285
      %v5287 = vpop.f32.mrf.mxu0
      %5288 = vmatprep.mubr.f32.mxu0 0.0
      %5289 = vmatmul.mubr.f32.gmra.mxu0 %v5023
      %v5290 = vpop.f32.mrf.mxu0
      %v5291 = vadd.f32 %v5141, %v5290
      %v5292 = vpop.f32.mrf.mxu0
      %5293 = vmatprep.mubr.f32.mxu0 0.0
      %5294 = vmatmul.mubr.f32.gmra.mxu0 %v5026
      %v5295 = vpop.f32.mrf.mxu0
      %v5296 = vadd.f32 %v5146, %v5295
      %v5297 = vpop.f32.mrf.mxu0
      %5298 = vmatprep.mubr.f32.mxu0 0.0
      %5299 = vmatmul.mubr.f32.gmra.mxu0 %v5029
      %v5300 = vpop.f32.mrf.mxu0
      %v5301 = vadd.f32 %v5151, %v5300
      %v5302 = vpop.f32.mrf.mxu0
      %5303 = vmatprep.mubr.f32.mxu0 0.0
      %5304 = vmatmul.mubr.f32.gmra.mxu0 %v5032
      %v5305 = vpop.f32.mrf.mxu0
      %v5306 = vadd.f32 %v5156, %v5305
      %v5307 = vpop.f32.mrf.mxu0
      %5308 = vmatprep.mubr.f32.mxu0 0.0
      %5309 = vmatmul.mubr.f32.gmra.mxu0 %v5035
      %v5310 = vpop.f32.mrf.mxu0
      %v5311 = vadd.f32 %v5161, %v5310
      %v5312 = vpop.f32.mrf.mxu0
      %5313 = vmatprep.mubr.f32.mxu0 0.0
      %5314 = vmatmul.mubr.f32.gmra.mxu0 %v5038
      %v5315 = vpop.f32.mrf.mxu0
      %v5316 = vadd.f32 %v5166, %v5315
      %v5317 = vpop.f32.mrf.mxu0
      %5318 = vmatprep.mubr.f32.mxu0 0.0
      %5319 = vmatmul.mubr.f32.gmra.mxu0 %v5041
      %v5320 = vpop.f32.mrf.mxu0
      %v5321 = vadd.f32 %v5171, %v5320
      %v5322 = vpop.f32.mrf.mxu0
      %5323 = vmatprep.mubr.f32.mxu0 0.0
      %5324 = vmatmul.mubr.f32.gmra.mxu0 %v5044
      %v5325 = vpop.f32.mrf.mxu0
      %v5326 = vadd.f32 %v5176, %v5325
      %v5327 = vpop.f32.mrf.mxu0
      %5328 = vmatprep.mubr.f32.mxu0 0.0
      %5329 = vmatmul.mubr.f32.gmra.mxu0 %v5047
      %v5330 = vpop.f32.mrf.mxu0
      %v5331 = vadd.f32 %v5181, %v5330
      %v5332 = vpop.f32.mrf.mxu0
      %5333 = vmatprep.mubr.f32.mxu0 0.0
      %5334 = vmatmul.mubr.f32.gmra.mxu0 %v5050
      %v5335 = vpop.f32.mrf.mxu0
      %v5336 = vadd.f32 %v5186, %v5335
      %v5337 = vpop.f32.mrf.mxu0
      %5338 = vmatprep.mubr.f32.mxu0 0.0
      %5339 = vmatmul.mubr.f32.gmra.mxu0 %v5053
      %v5340 = vpop.f32.mrf.mxu0
      %v5341 = vadd.f32 %v5191, %v5340
      %v5342 = vpop.f32.mrf.mxu0
      %5343 = vmatprep.mubr.f32.mxu0 0.0
      %5344 = vmatmul.mubr.f32.gmra.mxu0 %v5056
      %v5345 = vpop.f32.mrf.mxu0
      %v5346 = vadd.f32 %v5196, %v5345
      %v5347 = vpop.f32.mrf.mxu0
      %5348 = vmatprep.mubr.f32.mxu0 0.0
      %5349 = vmatmul.mubr.f32.gmra.mxu0 %v5059
      %v5350 = vpop.f32.mrf.mxu0
      %v5351 = vadd.f32 %v5201, %v5350
      %v5352 = vpop.f32.mrf.mxu0
      %5353 = vmatprep.mubr.f32.mxu0 0.0
      %5354 = vmatmul.mubr.f32.gmra.mxu0 %v5062
      %v5355 = vpop.f32.mrf.mxu0
      %v5356 = vadd.f32 %v5206, %v5355
      %v5357 = vpop.f32.mrf.mxu0
      %5358 = vmatprep.mubr.f32.mxu0 0.0
      %5359 = vmatmul.mubr.f32.gmra.mxu0 %v5065
      %v5360 = vpop.f32.mrf.mxu0
      %v5361 = vadd.f32 %v5211, %v5360
      %v5362 = vpop.f32.mrf.mxu0
      %5363 = vmatprep.mubr.f32.mxu0 0.0
      %5364 = vmatmul.mubr.f32.gmra.mxu0 %v5068
      %v5365 = vpop.f32.mrf.mxu0
      %v5366 = vadd.f32 %v5216, %v5365
      %v5367 = vpop.f32.mrf.mxu0
      %5368 = vdwg.mxu0
      %5369 = vmatprep.subr.mxu0 0.0
      %5370 = vmatpush1.msra.mxu0 %v5361
      %5371 = vmatprep.subr.mxu0 0.0
      %5372 = vmatpush1.msra.mxu0 %v5356
      %5373 = vmatprep.subr.mxu0 0.0
      %5374 = vmatpush1.msra.mxu0 %v5351
      %5375 = vmatprep.subr.mxu0 0.0
      %5376 = vmatpush1.msra.mxu0 %v5346
      %5377 = vmatprep.subr.mxu0 0.0
      %5378 = vmatpush1.msra.mxu0 %v5341
      %5379 = vmatprep.subr.mxu0 0.0
      %5380 = vmatpush1.msra.mxu0 %v5336
      %5381 = vmatprep.subr.mxu0 0.0
      %5382 = vmatpush1.msra.mxu0 %v5331
      %5383 = vmatprep.subr.mxu0 0.0
      %5384 = vmatpush1.msra.mxu0 %v5326
      %5385 = vmatprep.subr.mxu0 0.0
      %5386 = vmatpush1.msra.mxu0 %v5321
      %5387 = vmatprep.subr.mxu0 0.0
      %5388 = vmatpush1.msra.mxu0 %v5316
      %5389 = vmatprep.subr.mxu0 0.0
      %5390 = vmatpush1.msra.mxu0 %v5311
      %5391 = vmatprep.subr.mxu0 0.0
      %5392 = vmatpush1.msra.mxu0 %v5306
      %5393 = vmatprep.subr.mxu0 0.0
      %5394 = vmatpush1.msra.mxu0 %v5301
      %5395 = vmatprep.subr.mxu0 0.0
      %5396 = vmatpush1.msra.mxu0 %v5296
      %5397 = vmatprep.subr.mxu0 0.0
      %5398 = vmatpush1.msra.mxu0 %v5291
      %5399 = vmatprep.subr.mxu0 0.0
      %5400 = vmatpush1.msra.mxu0 %v5286
      %5401 = vmatprep.subr.mxu0 0.0
      %5402 = vmatpush2.msra.mxu0 0.0
      %5403 = vmatprep.subr.mxu0 0.0
      %5404 = vmatpush2.msra.mxu0 0.0
      %5405 = vmatprep.subr.mxu0 0.0
      %5406 = vmatpush2.msra.mxu0 0.0
      %5407 = vmatprep.subr.mxu0 0.0
      %5408 = vmatpush2.msra.mxu0 0.0
      %5409 = vmatprep.subr.mxu0 0.0
      %5410 = vmatpush2.msra.mxu0 0.0
      %5411 = vmatprep.subr.mxu0 0.0
      %5412 = vmatpush2.msra.mxu0 0.0
      %5413 = vmatprep.subr.mxu0 0.0
      %5414 = vmatpush2.msra.mxu0 0.0
      %5415 = vmatprep.subr.mxu0 0.0
      %5416 = vmatpush2.msra.mxu0 0.0
      %5417 = vmatprep.subr.mxu0 0.0
      %5418 = vmatpush2.msra.mxu0 0.0
      %5419 = vmatprep.subr.mxu0 0.0
      %5420 = vmatpush2.msra.mxu0 0.0
      %5421 = vmatprep.subr.mxu0 0.0
      %5422 = vmatpush2.msra.mxu0 0.0
      %5423 = vmatprep.subr.mxu0 0.0
      %5424 = vmatpush2.msra.mxu0 0.0
      %5425 = vmatprep.subr.mxu0 0.0
      %5426 = vmatpush2.msra.mxu0 0.0
      %5427 = vmatprep.subr.mxu0 0.0
      %5428 = vmatpush2.msra.mxu0 0.0
      %5429 = vmatprep.subr.mxu0 0.0
      %5430 = vmatpush2.msra.mxu0 0.0
      %5431 = vmatprep.subr.mxu0 0.0
      %5432 = vmatpush2.msra.mxu0 %v5366
      %5433 = vmatprep.mubr.f32.mxu0 %v4682
      %5434 = vmatmul.mubr.f32.gmra.mxu0 %v4646
      %v5435 = vpop.f32.mrf.mxu0
      %v5436 = vadd.f32 0.0, %v5435
      %v5437 = vpop.f32.mrf.mxu0
      %5438 = vmatprep.mubr.f32.mxu0 %v4685
      %5439 = vmatmul.mubr.f32.gmra.mxu0 %v4648
      %v5440 = vpop.f32.mrf.mxu0
      %v5441 = vadd.f32 0.0, %v5440
      %v5442 = vpop.f32.mrf.mxu0
      %5443 = vmatprep.mubr.f32.mxu0 %v4688
      %5444 = vmatmul.mubr.f32.gmra.mxu0 %v4650
      %v5445 = vpop.f32.mrf.mxu0
      %v5446 = vadd.f32 0.0, %v5445
      %v5447 = vpop.f32.mrf.mxu0
      %5448 = vmatprep.mubr.f32.mxu0 %v4691
      %5449 = vmatmul.mubr.f32.gmra.mxu0 %v4652
      %v5450 = vpop.f32.mrf.mxu0
      %v5451 = vadd.f32 0.0, %v5450
      %v5452 = vpop.f32.mrf.mxu0
      %5453 = vmatprep.mubr.f32.mxu0 %v4694
      %5454 = vmatmul.mubr.f32.gmra.mxu0 %v4654
      %v5455 = vpop.f32.mrf.mxu0
      %v5456 = vadd.f32 0.0, %v5455
      %v5457 = vpop.f32.mrf.mxu0
      %5458 = vmatprep.mubr.f32.mxu0 %v4697
      %5459 = vmatmul.mubr.f32.gmra.mxu0 %v4656
      %v5460 = vpop.f32.mrf.mxu0
      %v5461 = vadd.f32 0.0, %v5460
      %v5462 = vpop.f32.mrf.mxu0
      %5463 = vmatprep.mubr.f32.mxu0 %v4700
      %5464 = vmatmul.mubr.f32.gmra.mxu0 %v4658
      %v5465 = vpop.f32.mrf.mxu0
      %v5466 = vadd.f32 0.0, %v5465
      %v5467 = vpop.f32.mrf.mxu0
      %5468 = vmatprep.mubr.f32.mxu0 %v4703
      %5469 = vmatmul.mubr.f32.gmra.mxu0 %v4660
      %v5470 = vpop.f32.mrf.mxu0
      %v5471 = vadd.f32 0.0, %v5470
      %v5472 = vpop.f32.mrf.mxu0
      %5473 = vmatprep.mubr.f32.mxu0 %v4706
      %5474 = vmatmul.mubr.f32.gmra.mxu0 %v4662
      %v5475 = vpop.f32.mrf.mxu0
      %v5476 = vadd.f32 0.0, %v5475
      %v5477 = vpop.f32.mrf.mxu0
      %5478 = vmatprep.mubr.f32.mxu0 %v4709
      %5479 = vmatmul.mubr.f32.gmra.mxu0 %v4664
      %v5480 = vpop.f32.mrf.mxu0
      %v5481 = vadd.f32 0.0, %v5480
      %v5482 = vpop.f32.mrf.mxu0
      %5483 = vmatprep.mubr.f32.mxu0 %v4712
      %5484 = vmatmul.mubr.f32.gmra.mxu0 %v4666
      %v5485 = vpop.f32.mrf.mxu0
      %v5486 = vadd.f32 0.0, %v5485
      %v5487 = vpop.f32.mrf.mxu0
      %5488 = vmatprep.mubr.f32.mxu0 %v4715
      %5489 = vmatmul.mubr.f32.gmra.mxu0 %v4668
      %v5490 = vpop.f32.mrf.mxu0
      %v5491 = vadd.f32 0.0, %v5490
      %v5492 = vpop.f32.mrf.mxu0
      %5493 = vmatprep.mubr.f32.mxu0 %v4718
      %5494 = vmatmul.mubr.f32.gmra.mxu0 %v4670
      %v5495 = vpop.f32.mrf.mxu0
      %v5496 = vadd.f32 0.0, %v5495
      %v5497 = vpop.f32.mrf.mxu0
      %5498 = vmatprep.mubr.f32.mxu0 %v4721
      %5499 = vmatmul.mubr.f32.gmra.mxu0 %v4672
      %v5500 = vpop.f32.mrf.mxu0
      %v5501 = vadd.f32 0.0, %v5500
      %v5502 = vpop.f32.mrf.mxu0
      %5503 = vmatprep.mubr.f32.mxu0 %v4724
      %5504 = vmatmul.mubr.f32.gmra.mxu0 %v4674
      %v5505 = vpop.f32.mrf.mxu0
      %v5506 = vadd.f32 0.0, %v5505
      %v5507 = vpop.f32.mrf.mxu0
      %5508 = vmatprep.mubr.f32.mxu0 %v4727
      %5509 = vmatmul.mubr.f32.gmra.mxu0 %v4676
      %v5510 = vpop.f32.mrf.mxu0
      %v5511 = vadd.f32 0.0, %v5510
      %v5512 = vpop.f32.mrf.mxu0
      %5513 = vmatprep.mubr.f32.mxu0 %v4730
      %5514 = vmatmul.mubr.f32.gmra.mxu0 %v4678
      %v5515 = vpop.f32.mrf.mxu0
      %v5516 = vadd.f32 0.0, %v5515
      %v5517 = vpop.f32.mrf.mxu0
      %5518 = vdwg.mxu0
      %v5519 = vadd.f32 %v5436, 1e-05
      %v5520 = vadd.f32 %v5441, 1e-05
      %v5521 = vadd.f32 %v5446, 1e-05
      %v5522 = vadd.f32 %v5451, 1e-05
      %v5523 = vadd.f32 %v5456, 1e-05
      %v5524 = vadd.f32 %v5461, 1e-05
      %v5525 = vadd.f32 %v5466, 1e-05
      %v5526 = vadd.f32 %v5471, 1e-05
      %v5527 = vadd.f32 %v5476, 1e-05
      %v5528 = vadd.f32 %v5481, 1e-05
      %v5529 = vadd.f32 %v5486, 1e-05
      %v5530 = vadd.f32 %v5491, 1e-05
      %v5531 = vadd.f32 %v5496, 1e-05
      %v5532 = vadd.f32 %v5501, 1e-05
      %v5533 = vadd.f32 %v5506, 1e-05
      %v5534 = vadd.f32 %v5511, 1e-05
      %v5535 = vadd.f32 %v5516, 1e-05
      %v5536 = vrsqrt.pop %v5519
      %v5537 = vrsqrt.pop %v5520
      %v5538 = vrsqrt.pop %v5521
      %v5539 = vrsqrt.pop %v5522
      %v5540 = vrsqrt.pop %v5523
      %v5541 = vrsqrt.pop %v5524
      %v5542 = vrsqrt.pop %v5525
      %v5543 = vrsqrt.pop %v5526
      %v5544 = vrsqrt.pop %v5527
      %v5545 = vrsqrt.pop %v5528
      %v5546 = vrsqrt.pop %v5529
      %v5547 = vrsqrt.pop %v5530
      %v5548 = vrsqrt.pop %v5531
      %v5549 = vrsqrt.pop %v5532
      %v5550 = vrsqrt.pop %v5533
      %v5551 = vrsqrt.pop %v5534
      %v5552 = vrsqrt.pop %v5535
      %v5553 = vld [vmem:[%s6] sm:$0xff]
      %v5554 = vld [vmem:[%s6 + $0x8] sm:$0xff]
      %v5555 = vld [vmem:[%s6 + $0x10] sm:$0xff]
      %v5556 = vld [vmem:[%s6 + $0x18] sm:$0xff]
      %v5557 = vld [vmem:[%s6 + $0x20] sm:$0xff]
      %v5558 = vld [vmem:[%s6 + $0x28] sm:$0xff]
      %v5559 = vld [vmem:[%s6 + $0x30] sm:$0xff]
      %v5560 = vld [vmem:[%s6 + $0x38] sm:$0xff]
      %v5561 = vld [vmem:[%s6 + $0x40] sm:$0xff]
      %v5562 = vld [vmem:[%s6 + $0x48] sm:$0xff]
      %v5563 = vld [vmem:[%s6 + $0x50] sm:$0xff]
      %v5564 = vld [vmem:[%s6 + $0x58] sm:$0xff]
      %v5565 = vld [vmem:[%s6 + $0x60] sm:$0xff]
      %v5566 = vld [vmem:[%s6 + $0x68] sm:$0xff]
      %v5567 = vld [vmem:[%s6 + $0x70] sm:$0xff]
      %v5568 = vld [vmem:[%s6 + $0x78] sm:$0xff]
      %v5569 = vld [vmem:[%s6 + $0x80] sm:$0xff]
      %v5570 = vmul.f32 %v5536, %v5553
      %v5571 = vmul.f32 %v5537, %v5554
      %v5572 = vmul.f32 %v5538, %v5555
      %v5573 = vmul.f32 %v5539, %v5556
      %v5574 = vmul.f32 %v5540, %v5557
      %v5575 = vmul.f32 %v5541, %v5558
      %v5576 = vmul.f32 %v5542, %v5559
      %v5577 = vmul.f32 %v5543, %v5560
      %v5578 = vmul.f32 %v5544, %v5561
      %v5579 = vmul.f32 %v5545, %v5562
      %v5580 = vmul.f32 %v5546, %v5563
      %v5581 = vmul.f32 %v5547, %v5564
      %v5582 = vmul.f32 %v5548, %v5565
      %v5583 = vmul.f32 %v5549, %v5566
      %v5584 = vmul.f32 %v5550, %v5567
      %v5585 = vmul.f32 %v5551, %v5568
      %v5586 = vmul.f32 %v5552, %v5569
      %5588 = vset.pattern.permute.xlu0 0
      %5589 = vperm.xlu0 %5588, %v5570
      %v5590 = vpop.permute.xlu0 %5589
      %5593 = vset.pattern.permute.xlu0 0
      %5594 = vperm.xlu0 %5593, %v5571
      %v5595 = vpop.permute.xlu0 %5594
      %5598 = vset.pattern.permute.xlu0 0
      %5599 = vperm.xlu0 %5598, %v5572
      %v5600 = vpop.permute.xlu0 %5599
      %5603 = vset.pattern.permute.xlu0 0
      %5604 = vperm.xlu0 %5603, %v5573
      %v5605 = vpop.permute.xlu0 %5604
      %5608 = vset.pattern.permute.xlu0 0
      %5609 = vperm.xlu0 %5608, %v5574
      %v5610 = vpop.permute.xlu0 %5609
      %5613 = vset.pattern.permute.xlu0 0
      %5614 = vperm.xlu0 %5613, %v5575
      %v5615 = vpop.permute.xlu0 %5614
      %5618 = vset.pattern.permute.xlu0 0
      %5619 = vperm.xlu0 %5618, %v5576
      %v5620 = vpop.permute.xlu0 %5619
      %5623 = vset.pattern.permute.xlu0 0
      %5624 = vperm.xlu0 %5623, %v5577
      %v5625 = vpop.permute.xlu0 %5624
      %5628 = vset.pattern.permute.xlu0 0
      %5629 = vperm.xlu0 %5628, %v5578
      %v5630 = vpop.permute.xlu0 %5629
      %5633 = vset.pattern.permute.xlu0 0
      %5634 = vperm.xlu0 %5633, %v5579
      %v5635 = vpop.permute.xlu0 %5634
      %5638 = vset.pattern.permute.xlu0 0
      %5639 = vperm.xlu0 %5638, %v5580
      %v5640 = vpop.permute.xlu0 %5639
      %5643 = vset.pattern.permute.xlu0 0
      %5644 = vperm.xlu0 %5643, %v5581
      %v5645 = vpop.permute.xlu0 %5644
      %5648 = vset.pattern.permute.xlu0 0
      %5649 = vperm.xlu0 %5648, %v5582
      %v5650 = vpop.permute.xlu0 %5649
      %5653 = vset.pattern.permute.xlu0 0
      %5654 = vperm.xlu0 %5653, %v5583
      %v5655 = vpop.permute.xlu0 %5654
      %5658 = vset.pattern.permute.xlu0 0
      %5659 = vperm.xlu0 %5658, %v5584
      %v5660 = vpop.permute.xlu0 %5659
      %5663 = vset.pattern.permute.xlu0 0
      %5664 = vperm.xlu0 %5663, %v5585
      %v5665 = vpop.permute.xlu0 %5664
      %5668 = vset.pattern.permute.xlu0 0
      %5669 = vperm.xlu0 %5668, %v5586
      %v5670 = vpop.permute.xlu0 %5669
      %v5672 = vmul.f32 %v4967, %v5590
      %v5673 = vmul.f32 %v4968, %v5590
      %v5674 = vmul.f32 %v4969, %v5590
      %v5675 = vmul.f32 %v4970, %v5595
      %v5676 = vmul.f32 %v4971, %v5595
      %v5677 = vmul.f32 %v4972, %v5595
      %v5678 = vmul.f32 %v4973, %v5600
      %v5679 = vmul.f32 %v4974, %v5600
      %v5680 = vmul.f32 %v4975, %v5600
      %v5681 = vmul.f32 %v4976, %v5605
      %v5682 = vmul.f32 %v4977, %v5605
      %v5683 = vmul.f32 %v4978, %v5605
      %v5684 = vmul.f32 %v4979, %v5610
      %v5685 = vmul.f32 %v4980, %v5610
      %v5686 = vmul.f32 %v4981, %v5610
      %v5687 = vmul.f32 %v4982, %v5615
      %v5688 = vmul.f32 %v4983, %v5615
      %v5689 = vmul.f32 %v4984, %v5615
      %v5690 = vmul.f32 %v4985, %v5620
      %v5691 = vmul.f32 %v4986, %v5620
      %v5692 = vmul.f32 %v4987, %v5620
      %v5693 = vmul.f32 %v4988, %v5625
      %v5694 = vmul.f32 %v4989, %v5625
      %v5695 = vmul.f32 %v4990, %v5625
      %v5696 = vmul.f32 %v4991, %v5630
      %v5697 = vmul.f32 %v4992, %v5630
      %v5698 = vmul.f32 %v4993, %v5630
      %v5699 = vmul.f32 %v4994, %v5635
      %v5700 = vmul.f32 %v4995, %v5635
      %v5701 = vmul.f32 %v4996, %v5635
      %v5702 = vmul.f32 %v4997, %v5640
      %v5703 = vmul.f32 %v4998, %v5640
      %v5704 = vmul.f32 %v4999, %v5640
      %v5705 = vmul.f32 %v5000, %v5645
      %v5706 = vmul.f32 %v5001, %v5645
      %v5707 = vmul.f32 %v5002, %v5645
      %v5708 = vmul.f32 %v5003, %v5650
      %v5709 = vmul.f32 %v5004, %v5650
      %v5710 = vmul.f32 %v5005, %v5650
      %v5711 = vmul.f32 %v5006, %v5655
      %v5712 = vmul.f32 %v5007, %v5655
      %v5713 = vmul.f32 %v5008, %v5655
      %v5714 = vmul.f32 %v5009, %v5660
      %v5715 = vmul.f32 %v5010, %v5660
      %v5716 = vmul.f32 %v5011, %v5660
      %v5717 = vmul.f32 %v5012, %v5665
      %v5718 = vmul.f32 %v5013, %v5665
      %v5719 = vmul.f32 %v5014, %v5665
      %v5720 = vmul.f32 %v5015, %v5670
      %v5721 = vmul.f32 %v5016, %v5670
      %v5722 = vmul.f32 %v5017, %v5670
      %v5723 = vld [vmem:[%s7] sm:$0xff]
      %v5724 = vld [vmem:[%s7 + $0x8] sm:$0xff]
      %v5725 = vld [vmem:[%s7 + $0x10] sm:$0xff]
      %v5726 = vld [vmem:[%s7 + $0x18] sm:$0xff]
      %v5727 = vld [vmem:[%s7 + $0x20] sm:$0xff]
      %v5728 = vld [vmem:[%s7 + $0x28] sm:$0xff]
      %v5729 = vld [vmem:[%s7 + $0x30] sm:$0xff]
      %v5730 = vld [vmem:[%s7 + $0x38] sm:$0xff]
      %v5731 = vld [vmem:[%s7 + $0x40] sm:$0xff]
      %v5732 = vld [vmem:[%s7 + $0x48] sm:$0xff]
      %v5733 = vld [vmem:[%s7 + $0x50] sm:$0xff]
      %v5734 = vld [vmem:[%s7 + $0x58] sm:$0xff]
      %v5735 = vld [vmem:[%s7 + $0x60] sm:$0xff]
      %v5736 = vld [vmem:[%s7 + $0x68] sm:$0xff]
      %v5737 = vld [vmem:[%s7 + $0x70] sm:$0xff]
      %v5738 = vld [vmem:[%s7 + $0x78] sm:$0xff]
      %v5739 = vld [vmem:[%s7 + $0x80] sm:$0xff]
      %5741 = vset.pattern.permute.xlu0 0
      %5742 = vperm.xlu0 %5741, %v5723
      %v5743 = vpop.permute.xlu0 %5742
      %5746 = vset.pattern.permute.xlu0 0
      %5747 = vperm.xlu0 %5746, %v5724
      %v5748 = vpop.permute.xlu0 %5747
      %5751 = vset.pattern.permute.xlu0 0
      %5752 = vperm.xlu0 %5751, %v5725
      %v5753 = vpop.permute.xlu0 %5752
      %5756 = vset.pattern.permute.xlu0 0
      %5757 = vperm.xlu0 %5756, %v5726
      %v5758 = vpop.permute.xlu0 %5757
      %5761 = vset.pattern.permute.xlu0 0
      %5762 = vperm.xlu0 %5761, %v5727
      %v5763 = vpop.permute.xlu0 %5762
      %5766 = vset.pattern.permute.xlu0 0
      %5767 = vperm.xlu0 %5766, %v5728
      %v5768 = vpop.permute.xlu0 %5767
      %5771 = vset.pattern.permute.xlu0 0
      %5772 = vperm.xlu0 %5771, %v5729
      %v5773 = vpop.permute.xlu0 %5772
      %5776 = vset.pattern.permute.xlu0 0
      %5777 = vperm.xlu0 %5776, %v5730
      %v5778 = vpop.permute.xlu0 %5777
      %5781 = vset.pattern.permute.xlu0 0
      %5782 = vperm.xlu0 %5781, %v5731
      %v5783 = vpop.permute.xlu0 %5782
      %5786 = vset.pattern.permute.xlu0 0
      %5787 = vperm.xlu0 %5786, %v5732
      %v5788 = vpop.permute.xlu0 %5787
      %5791 = vset.pattern.permute.xlu0 0
      %5792 = vperm.xlu0 %5791, %v5733
      %v5793 = vpop.permute.xlu0 %5792
      %5796 = vset.pattern.permute.xlu0 0
      %5797 = vperm.xlu0 %5796, %v5734
      %v5798 = vpop.permute.xlu0 %5797
      %5801 = vset.pattern.permute.xlu0 0
      %5802 = vperm.xlu0 %5801, %v5735
      %v5803 = vpop.permute.xlu0 %5802
      %5806 = vset.pattern.permute.xlu0 0
      %5807 = vperm.xlu0 %5806, %v5736
      %v5808 = vpop.permute.xlu0 %5807
      %5811 = vset.pattern.permute.xlu0 0
      %5812 = vperm.xlu0 %5811, %v5737
      %v5813 = vpop.permute.xlu0 %5812
      %5816 = vset.pattern.permute.xlu0 0
      %5817 = vperm.xlu0 %5816, %v5738
      %v5818 = vpop.permute.xlu0 %5817
      %5821 = vset.pattern.permute.xlu0 0
      %5822 = vperm.xlu0 %5821, %v5739
      %v5823 = vpop.permute.xlu0 %5822
      %v5825 = vadd.f32 %v5672, %v5743
      %v5826 = vadd.f32 %v5673, %v5743
      %v5827 = vadd.f32 %v5674, %v5743
      %v5828 = vadd.f32 %v5675, %v5748
      %v5829 = vadd.f32 %v5676, %v5748
      %v5830 = vadd.f32 %v5677, %v5748
      %v5831 = vadd.f32 %v5678, %v5753
      %v5832 = vadd.f32 %v5679, %v5753
      %v5833 = vadd.f32 %v5680, %v5753
      %v5834 = vadd.f32 %v5681, %v5758
      %v5835 = vadd.f32 %v5682, %v5758
      %v5836 = vadd.f32 %v5683, %v5758
      %v5837 = vadd.f32 %v5684, %v5763
      %v5838 = vadd.f32 %v5685, %v5763
      %v5839 = vadd.f32 %v5686, %v5763
      %v5840 = vadd.f32 %v5687, %v5768
      %v5841 = vadd.f32 %v5688, %v5768
      %v5842 = vadd.f32 %v5689, %v5768
      %v5843 = vadd.f32 %v5690, %v5773
      %v5844 = vadd.f32 %v5691, %v5773
      %v5845 = vadd.f32 %v5692, %v5773
      %v5846 = vadd.f32 %v5693, %v5778
      %v5847 = vadd.f32 %v5694, %v5778
      %v5848 = vadd.f32 %v5695, %v5778
      %v5849 = vadd.f32 %v5696, %v5783
      %v5850 = vadd.f32 %v5697, %v5783
      %v5851 = vadd.f32 %v5698, %v5783
      %v5852 = vadd.f32 %v5699, %v5788
      %v5853 = vadd.f32 %v5700, %v5788
      %v5854 = vadd.f32 %v5701, %v5788
      %v5855 = vadd.f32 %v5702, %v5793
      %v5856 = vadd.f32 %v5703, %v5793
      %v5857 = vadd.f32 %v5704, %v5793
      %v5858 = vadd.f32 %v5705, %v5798
      %v5859 = vadd.f32 %v5706, %v5798
      %v5860 = vadd.f32 %v5707, %v5798
      %v5861 = vadd.f32 %v5708, %v5803
      %v5862 = vadd.f32 %v5709, %v5803
      %v5863 = vadd.f32 %v5710, %v5803
      %v5864 = vadd.f32 %v5711, %v5808
      %v5865 = vadd.f32 %v5712, %v5808
      %v5866 = vadd.f32 %v5713, %v5808
      %v5867 = vadd.f32 %v5714, %v5813
      %v5868 = vadd.f32 %v5715, %v5813
      %v5869 = vadd.f32 %v5716, %v5813
      %v5870 = vadd.f32 %v5717, %v5818
      %v5871 = vadd.f32 %v5718, %v5818
      %v5872 = vadd.f32 %v5719, %v5818
      %v5873 = vadd.f32 %v5720, %v5823
      %v5874 = vadd.f32 %v5721, %v5823
      %v5875 = vadd.f32 %v5722, %v5823
      %v5876 = vadd.f32 %v5825, %v5846
      %v5877 = vadd.f32 %v5826, %v5847
      %v5878 = vadd.f32 %v5827, %v5848
      %v5879 = vadd.f32 %v5828, %v5849
      %v5880 = vadd.f32 %v5829, %v5850
      %v5881 = vadd.f32 %v5830, %v5851
      %v5882 = vadd.f32 %v5831, %v5852
      %v5883 = vadd.f32 %v5832, %v5853
      %v5884 = vadd.f32 %v5833, %v5854
      %v5885 = vadd.f32 %v5876, %v5858
      %v5886 = vadd.f32 %v5877, %v5859
      %v5887 = vadd.f32 %v5878, %v5860
      %v5888 = vadd.f32 %v5879, %v5861
      %v5889 = vadd.f32 %v5880, %v5862
      %v5890 = vadd.f32 %v5881, %v5863
      %v5891 = vadd.f32 %v5882, %v5864
      %v5892 = vadd.f32 %v5883, %v5865
      %v5893 = vadd.f32 %v5884, %v5866
      %v5894 = vxor.u32 %v5885, 2147483648
      %v5895 = vxor.u32 %v5886, 2147483648
      %v5896 = vxor.u32 %v5887, 2147483648
      %v5897 = vmul.f32 %v5894, 1.442695
      %v5898 = vpow.pop %v5897
      %v5899 = vmul.f32 %v5895, 1.442695
      %v5900 = vpow.pop %v5899
      %v5901 = vmul.f32 %v5896, 1.442695
      %v5902 = vpow.pop %v5901
      %v5903 = vadd.f32 %v5898, 1.0
      %v5904 = vadd.f32 %v5900, 1.0
      %v5905 = vadd.f32 %v5902, 1.0
      %v5906 = vrcp.pop %v5903
      %v5907 = vmul.f32 1.0, %v5906
      %v5908 = vrcp.pop %v5904
      %v5909 = vmul.f32 1.0, %v5908
      %v5910 = vrcp.pop %v5905
      %v5911 = vmul.f32 1.0, %v5910
      %v5912 = vtanh.pop %v5888
      %v5913 = vtanh.pop %v5889
      %v5914 = vtanh.pop %v5890
      %v5915 = vadd.f32 %v5891, 1.0
      %v5916 = vadd.f32 %v5892, 1.0
      %v5917 = vadd.f32 %v5893, 1.0
      %v5918 = vxor.u32 %v5915, 2147483648
      %v5919 = vxor.u32 %v5916, 2147483648
      %v5920 = vxor.u32 %v5917, 2147483648
      %v5921 = vmul.f32 %v5918, 1.442695
      %v5922 = vpow.pop %v5921
      %v5923 = vmul.f32 %v5919, 1.442695
      %v5924 = vpow.pop %v5923
      %v5925 = vmul.f32 %v5920, 1.442695
      %v5926 = vpow.pop %v5925
      %v5927 = vadd.f32 %v5922, 1.0
      %v5928 = vadd.f32 %v5924, 1.0
      %v5929 = vadd.f32 %v5926, 1.0
      %v5930 = vrcp.pop %v5927
      %v5931 = vmul.f32 1.0, %v5930
      %v5932 = vrcp.pop %v5928
      %v5933 = vmul.f32 1.0, %v5932
      %v5934 = vrcp.pop %v5929
      %v5935 = vmul.f32 1.0, %v5934
      %v5936 = vmul.f32 %v5931, %v776
      %v5937 = vmul.f32 %v5933, %v777
      %v5938 = vmul.f32 %v5935, %v778
      %v5939 = vmul.f32 %v5907, %v5912
      %v5940 = vmul.f32 %v5909, %v5913
      %v5941 = vmul.f32 %v5911, %v5914
      %v5942 = vadd.f32 %v5936, %v5939
      %v5943 = vadd.f32 %v5937, %v5940
      %v5944 = vadd.f32 %v5938, %v5941
      %v5946 = vlaneseq
      %v5947 = vshrl.u32 %v5946, 7
      %v5948 = vsub.s32 0, %v5947
      %v5949 = vrot.slane %v703, %v5948
      %v5950 = vlaneseq
      %v5951 = vshrl.u32 %v5950, 7
      %v5952 = vsub.s32 1, %v5951
      %v5953 = vrot.slane %v703, %v5952
      %v5954 = vlaneseq
      %v5955 = vshrl.u32 %v5954, 7
      %v5956 = vsub.s32 2, %v5955
      %v5957 = vrot.slane %v703, %v5956
      %v5961 = vmul.f32 %v5942, %v5949
      %v5962 = vmul.f32 %v5943, %v5953
      %v5963 = vmul.f32 %v5944, %v5957
      %v5964 = vpack.c.bf16 %v5961, %v5961
      %v5965 = vpack.c.bf16 %v5962, %v5962
      %v5966 = vpack.c.bf16 %v5963, %v5963
      %5970 = vrot.lane.b32.xlu0 %v5964, 19
      %v5971 = vpop.permute.xlu0 %5970
      %5972 = vrot.lane.b32.xlu0 %v5965, 19
      %v5973 = vpop.permute.xlu0 %5972
      %5974 = vrot.lane.b32.xlu0 %v5966, 19
      %v5975 = vpop.permute.xlu0 %5974
      %vm5976 = vcmask 154624
      %v5977 = vsel %vm5976, %v5971, %v5973
      %v5978 = vsel %vm5976, %v5973, %v5975
      %vm5979 = vcmask 154624
      %v5982 = vsel %vm5979, 0, %v5971
      %v5984 = vsel %vm5979, %v5975, 0
      %v5985 = vld [vmem:[%s9] sm:$0xf]
      %v5986 = vld [vmem:[%s9 + $0x4] sm:$0xf]
      %v5987 = vld [vmem:[%s9 + $0x8] sm:$0xf]
      %v5988 = vld [vmem:[%s9 + $0xc] sm:$0xf]
      %s5989 = scalar_lea.vmem %s9, 16
      %v5990 = vld [vmem:[%s5989] sm:$0xf]
      %v5991 = vld [vmem:[%s5989 + $0x4] sm:$0xf]
      %v5992 = vld [vmem:[%s5989 + $0x8] sm:$0xf]
      %v5993 = vld [vmem:[%s5989 + $0xc] sm:$0xf]
      %v5998 = vunpack.c.l.b16 %v5990
      %v5999 = vunpack.c.l.b16 %v5991
      %v6000 = vunpack.c.l.b16 %v5992
      %v6001 = vunpack.c.l.b16 %v5993
      %v6002 = vpack.c.b16 %v5999, %v5998
      %v6003 = vpack.c.b16 %v6001, %v6000
      %6006 = vrot.lane.b32.xlu0 %v5982, 127
      %v6007 = vpop.permute.xlu0 %6006
      %6008 = vrot.lane.b32.xlu0 %v5977, 127
      %v6009 = vpop.permute.xlu0 %6008
      %6010 = vrot.lane.b32.xlu0 %v5978, 127
      %v6011 = vpop.permute.xlu0 %6010
      %6012 = vrot.lane.b32.xlu0 %v5984, 127
      %v6013 = vpop.permute.xlu0 %6012
      %v6014 = vsel %vm881, %v6007, %v6009
      %v6015 = vsel %vm881, %v6009, %v6011
      %v6016 = vsel %vm881, %v6011, %v6013
      %v6018 = vsel %vm4680, %v6002, 0
      %v6021 = vsel %vm4680, %v6003, 0
      %vm6023 = vcmask 1043456
      %v6025 = vsel %vm6023, %v6014, 0
      %v6028 = vsel %vm6023, %v6015, 0
      %v6031 = vsel %vm6023, %v6016, 0
      %6033 = vmatprep.subr.bf16.mxu0 0
      %6034 = vmatpush1.bf16.msra.mxu0 0
      %6035 = vmatprep.subr.bf16.mxu0 0
      %6036 = vmatpush1.bf16.msra.mxu0 0
      %6037 = vmatprep.subr.bf16.mxu0 0
      %6038 = vmatpush1.bf16.msra.mxu0 0
      %6039 = vmatprep.subr.bf16.mxu0 0
      %6040 = vmatpush1.bf16.msra.mxu0 0
      %6041 = vmatprep.subr.bf16.mxu0 0
      %6042 = vmatpush1.bf16.msra.mxu0 0
      %6043 = vmatprep.subr.bf16.mxu0 0
      %6044 = vmatpush1.bf16.msra.mxu0 0
      %6045 = vmatprep.subr.bf16.mxu0 0
      %6046 = vmatpush1.bf16.msra.mxu0 0
      %6047 = vmatprep.subr.bf16.mxu0 %v6028
      %6048 = vmatpush1.bf16.msra.mxu0 %v6025
      %6049 = vmatprep.subr.bf16.mxu0 0
      %6050 = vmatpush2.bf16.msra.mxu0 0
      %6051 = vmatprep.subr.bf16.mxu0 0
      %6052 = vmatpush2.bf16.msra.mxu0 0
      %6053 = vmatprep.subr.bf16.mxu0 0
      %6054 = vmatpush2.bf16.msra.mxu0 0
      %6055 = vmatprep.subr.bf16.mxu0 0
      %6056 = vmatpush2.bf16.msra.mxu0 0
      %6057 = vmatprep.subr.bf16.mxu0 0
      %6058 = vmatpush2.bf16.msra.mxu0 0
      %6059 = vmatprep.subr.bf16.mxu0 0
      %6060 = vmatpush2.bf16.msra.mxu0 0
      %6061 = vmatprep.subr.bf16.mxu0 0
      %6062 = vmatpush2.bf16.msra.mxu0 0
      %6063 = vmatprep.subr.bf16.mxu0 0
      %6064 = vmatpush2.bf16.msra.mxu0 0
      %6065 = vmatprep.mubr.bf16.mxu0 0
      %6066 = vmatmul.mubr.bf16.gmra.mxu0 %v6018
      %v6067 = vpop.f32.mrf.mxu0
      %v6068 = vadd.f32 0.0, %v6067
      %v6069 = vpop.f32.mrf.mxu0
      %v6070 = vadd.f32 0.0, %v6069
      %v6071 = vpop.f32.mrf.mxu0
      %v6072 = vadd.f32 0.0, %v6071
      %v6073 = vpop.f32.mrf.mxu0
      %v6074 = vadd.f32 0.0, %v6073
      %6075 = vmatprep.mubr.bf16.mxu0 0
      %6076 = vmatmul.mubr.bf16.gmra.mxu0 %v6021
      %v6077 = vpop.f32.mrf.mxu0
      %v6078 = vadd.f32 0.0, %v6077
      %v6079 = vpop.f32.mrf.mxu0
      %v6080 = vadd.f32 0.0, %v6079
      %v6081 = vpop.f32.mrf.mxu0
      %v6082 = vadd.f32 0.0, %v6081
      %v6083 = vpop.f32.mrf.mxu0
      %v6084 = vadd.f32 0.0, %v6083
      %6085 = vdwg.mxu0
      %6086 = vmatprep.subr.bf16.mxu0 0
      %6087 = vmatpush1.bf16.msra.mxu0 0
      %6088 = vmatprep.subr.bf16.mxu0 0
      %6089 = vmatpush1.bf16.msra.mxu0 0
      %6090 = vmatprep.subr.bf16.mxu0 0
      %6091 = vmatpush1.bf16.msra.mxu0 0
      %6092 = vmatprep.subr.bf16.mxu0 0
      %6093 = vmatpush1.bf16.msra.mxu0 0
      %6094 = vmatprep.subr.bf16.mxu0 0
      %6095 = vmatpush1.bf16.msra.mxu0 0
      %6096 = vmatprep.subr.bf16.mxu0 0
      %6097 = vmatpush1.bf16.msra.mxu0 0
      %6098 = vmatprep.subr.bf16.mxu0 0
      %6099 = vmatpush1.bf16.msra.mxu0 0
      %6100 = vmatprep.subr.bf16.mxu0 0
      %6101 = vmatpush1.bf16.msra.mxu0 %v6031
      %6102 = vmatprep.subr.bf16.mxu0 0
      %6103 = vmatpush2.bf16.msra.mxu0 0
      %6104 = vmatprep.subr.bf16.mxu0 0
      %6105 = vmatpush2.bf16.msra.mxu0 0
      %6106 = vmatprep.subr.bf16.mxu0 0
      %6107 = vmatpush2.bf16.msra.mxu0 0
      %6108 = vmatprep.subr.bf16.mxu0 0
      %6109 = vmatpush2.bf16.msra.mxu0 0
      %6110 = vmatprep.subr.bf16.mxu0 0
      %6111 = vmatpush2.bf16.msra.mxu0 0
      %6112 = vmatprep.subr.bf16.mxu0 0
      %6113 = vmatpush2.bf16.msra.mxu0 0
      %6114 = vmatprep.subr.bf16.mxu0 0
      %6115 = vmatpush2.bf16.msra.mxu0 0
      %6116 = vmatprep.subr.bf16.mxu0 0
      %6117 = vmatpush2.bf16.msra.mxu0 0
      %6118 = vmatprep.mubr.bf16.mxu0 0
      %6119 = vmatmul.mubr.bf16.gmra.mxu0 %v6018
      %v6120 = vpop.f32.mrf.mxu0
      %v6121 = vadd.f32 0.0, %v6120
      %v6122 = vpop.f32.mrf.mxu0
      %v6123 = vpop.f32.mrf.mxu0
      %v6124 = vadd.f32 0.0, %v6123
      %v6125 = vpop.f32.mrf.mxu0
      %6126 = vmatprep.mubr.bf16.mxu0 0
      %6127 = vmatmul.mubr.bf16.gmra.mxu0 %v6021
      %v6128 = vpop.f32.mrf.mxu0
      %v6129 = vadd.f32 0.0, %v6128
      %v6130 = vpop.f32.mrf.mxu0
      %v6131 = vpop.f32.mrf.mxu0
      %v6132 = vadd.f32 0.0, %v6131
      %v6133 = vpop.f32.mrf.mxu0
      %6134 = vdwg.mxu0
      %v6139 = vunpack.c.l.b16 %v5985
      %v6140 = vunpack.c.l.b16 %v5986
      %v6141 = vunpack.c.l.b16 %v5987
      %v6142 = vunpack.c.l.b16 %v5988
      %v6143 = vpack.c.b16 %v6140, %v6139
      %v6144 = vpack.c.b16 %v6142, %v6141
      %v6146 = vsel %vm4680, %v6143, 0
      %v6149 = vsel %vm4680, %v6144, 0
      %v6151 = vsel %vm6023, %v5982, 0
      %v6154 = vsel %vm6023, %v5977, 0
      %v6157 = vsel %vm6023, %v5978, 0
      %6159 = vmatprep.subr.bf16.mxu0 0
      %6160 = vmatpush1.bf16.msra.mxu0 0
      %6161 = vmatprep.subr.bf16.mxu0 0
      %6162 = vmatpush1.bf16.msra.mxu0 0
      %6163 = vmatprep.subr.bf16.mxu0 0
      %6164 = vmatpush1.bf16.msra.mxu0 0
      %6165 = vmatprep.subr.bf16.mxu0 0
      %6166 = vmatpush1.bf16.msra.mxu0 0
      %6167 = vmatprep.subr.bf16.mxu0 0
      %6168 = vmatpush1.bf16.msra.mxu0 0
      %6169 = vmatprep.subr.bf16.mxu0 0
      %6170 = vmatpush1.bf16.msra.mxu0 0
      %6171 = vmatprep.subr.bf16.mxu0 0
      %6172 = vmatpush1.bf16.msra.mxu0 0
      %6173 = vmatprep.subr.bf16.mxu0 %v6154
      %6174 = vmatpush1.bf16.msra.mxu0 %v6151
      %6175 = vmatprep.subr.bf16.mxu0 0
      %6176 = vmatpush2.bf16.msra.mxu0 0
      %6177 = vmatprep.subr.bf16.mxu0 0
      %6178 = vmatpush2.bf16.msra.mxu0 0
      %6179 = vmatprep.subr.bf16.mxu0 0
      %6180 = vmatpush2.bf16.msra.mxu0 0
      %6181 = vmatprep.subr.bf16.mxu0 0
      %6182 = vmatpush2.bf16.msra.mxu0 0
      %6183 = vmatprep.subr.bf16.mxu0 0
      %6184 = vmatpush2.bf16.msra.mxu0 0
      %6185 = vmatprep.subr.bf16.mxu0 0
      %6186 = vmatpush2.bf16.msra.mxu0 0
      %6187 = vmatprep.subr.bf16.mxu0 0
      %6188 = vmatpush2.bf16.msra.mxu0 0
      %6189 = vmatprep.subr.bf16.mxu0 0
      %6190 = vmatpush2.bf16.msra.mxu0 0
      %6191 = vmatprep.mubr.bf16.mxu0 0
      %6192 = vmatmul.mubr.bf16.gmra.mxu0 %v6146
      %v6193 = vpop.f32.mrf.mxu0
      %v6194 = vadd.f32 %v6068, %v6193
      %v6195 = vpop.f32.mrf.mxu0
      %v6196 = vadd.f32 %v6070, %v6195
      %v6197 = vpop.f32.mrf.mxu0
      %v6198 = vadd.f32 %v6072, %v6197
      %v6199 = vpop.f32.mrf.mxu0
      %v6200 = vadd.f32 %v6074, %v6199
      %6201 = vmatprep.mubr.bf16.mxu0 0
      %6202 = vmatmul.mubr.bf16.gmra.mxu0 %v6149
      %v6203 = vpop.f32.mrf.mxu0
      %v6204 = vadd.f32 %v6078, %v6203
      %v6205 = vpop.f32.mrf.mxu0
      %v6206 = vadd.f32 %v6080, %v6205
      %v6207 = vpop.f32.mrf.mxu0
      %v6208 = vadd.f32 %v6082, %v6207
      %v6209 = vpop.f32.mrf.mxu0
      %v6210 = vadd.f32 %v6084, %v6209
      %6211 = vdwg.mxu0
      %6212 = vmatprep.subr.bf16.mxu0 0
      %6213 = vmatpush1.bf16.msra.mxu0 0
      %6214 = vmatprep.subr.bf16.mxu0 0
      %6215 = vmatpush1.bf16.msra.mxu0 0
      %6216 = vmatprep.subr.bf16.mxu0 0
      %6217 = vmatpush1.bf16.msra.mxu0 0
      %6218 = vmatprep.subr.bf16.mxu0 0
      %6219 = vmatpush1.bf16.msra.mxu0 0
      %6220 = vmatprep.subr.bf16.mxu0 0
      %6221 = vmatpush1.bf16.msra.mxu0 0
      %6222 = vmatprep.subr.bf16.mxu0 0
      %6223 = vmatpush1.bf16.msra.mxu0 0
      %6224 = vmatprep.subr.bf16.mxu0 0
      %6225 = vmatpush1.bf16.msra.mxu0 0
      %6226 = vmatprep.subr.bf16.mxu0 0
      %6227 = vmatpush1.bf16.msra.mxu0 %v6157
      %6228 = vmatprep.subr.bf16.mxu0 0
      %6229 = vmatpush2.bf16.msra.mxu0 0
      %6230 = vmatprep.subr.bf16.mxu0 0
      %6231 = vmatpush2.bf16.msra.mxu0 0
      %6232 = vmatprep.subr.bf16.mxu0 0
      %6233 = vmatpush2.bf16.msra.mxu0 0
      %6234 = vmatprep.subr.bf16.mxu0 0
      %6235 = vmatpush2.bf16.msra.mxu0 0
      %6236 = vmatprep.subr.bf16.mxu0 0
      %6237 = vmatpush2.bf16.msra.mxu0 0
      %6238 = vmatprep.subr.bf16.mxu0 0
      %6239 = vmatpush2.bf16.msra.mxu0 0
      %6240 = vmatprep.subr.bf16.mxu0 0
      %6241 = vmatpush2.bf16.msra.mxu0 0
      %6242 = vmatprep.subr.bf16.mxu0 0
      %6243 = vmatpush2.bf16.msra.mxu0 0
      %6244 = vmatprep.mubr.bf16.mxu0 0
      %6245 = vmatmul.mubr.bf16.gmra.mxu0 %v6146
      %v6246 = vpop.f32.mrf.mxu0
      %v6247 = vadd.f32 %v6121, %v6246
      %v6248 = vpop.f32.mrf.mxu0
      %v6249 = vpop.f32.mrf.mxu0
      %v6250 = vadd.f32 %v6124, %v6249
      %v6251 = vpop.f32.mrf.mxu0
      %6252 = vmatprep.mubr.bf16.mxu0 0
      %6253 = vmatmul.mubr.bf16.gmra.mxu0 %v6149
      %v6254 = vpop.f32.mrf.mxu0
      %v6255 = vadd.f32 %v6129, %v6254
      %v6256 = vpop.f32.mrf.mxu0
      %v6257 = vpop.f32.mrf.mxu0
      %v6258 = vadd.f32 %v6132, %v6257
      %v6259 = vpop.f32.mrf.mxu0
      %6260 = vdwg.mxu0
      %s6261 = scalar_lea.vmem %s9, 32
      %v6262 = vld [vmem:[%s6261] sm:$0xf]
      %v6263 = vld [vmem:[%s6261 + $0x4] sm:$0xf]
      %v6264 = vld [vmem:[%s6261 + $0x8] sm:$0xf]
      %v6265 = vld [vmem:[%s6261 + $0xc] sm:$0xf]
      %v6270 = vunpack.c.l.b16 %v6262
      %v6271 = vunpack.c.l.b16 %v6263
      %v6272 = vunpack.c.l.b16 %v6264
      %v6273 = vunpack.c.l.b16 %v6265
      %v6274 = vpack.c.b16 %v6271, %v6270
      %v6275 = vpack.c.b16 %v6273, %v6272
      %6276 = vrot.lane.b32.xlu0 %v5982, 126
      %v6277 = vpop.permute.xlu0 %6276
      %6278 = vrot.lane.b32.xlu0 %v5977, 126
      %v6279 = vpop.permute.xlu0 %6278
      %6280 = vrot.lane.b32.xlu0 %v5978, 126
      %v6281 = vpop.permute.xlu0 %6280
      %6282 = vrot.lane.b32.xlu0 %v5984, 126
      %v6283 = vpop.permute.xlu0 %6282
      %v6284 = vsel %vm1519, %v6277, %v6279
      %v6285 = vsel %vm1519, %v6279, %v6281
      %v6286 = vsel %vm1519, %v6281, %v6283
      %v6288 = vsel %vm4680, %v6274, 0
      %v6291 = vsel %vm4680, %v6275, 0
      %v6294 = vsel %vm6023, %v6284, 0
      %v6297 = vsel %vm6023, %v6285, 0
      %v6300 = vsel %vm6023, %v6286, 0
      %6302 = vmatprep.subr.bf16.mxu0 0
      %6303 = vmatpush1.bf16.msra.mxu0 0
      %6304 = vmatprep.subr.bf16.mxu0 0
      %6305 = vmatpush1.bf16.msra.mxu0 0
      %6306 = vmatprep.subr.bf16.mxu0 0
      %6307 = vmatpush1.bf16.msra.mxu0 0
      %6308 = vmatprep.subr.bf16.mxu0 0
      %6309 = vmatpush1.bf16.msra.mxu0 0
      %6310 = vmatprep.subr.bf16.mxu0 0
      %6311 = vmatpush1.bf16.msra.mxu0 0
      %6312 = vmatprep.subr.bf16.mxu0 0
      %6313 = vmatpush1.bf16.msra.mxu0 0
      %6314 = vmatprep.subr.bf16.mxu0 0
      %6315 = vmatpush1.bf16.msra.mxu0 0
      %6316 = vmatprep.subr.bf16.mxu0 %v6297
      %6317 = vmatpush1.bf16.msra.mxu0 %v6294
      %6318 = vmatprep.subr.bf16.mxu0 0
      %6319 = vmatpush2.bf16.msra.mxu0 0
      %6320 = vmatprep.subr.bf16.mxu0 0
      %6321 = vmatpush2.bf16.msra.mxu0 0
      %6322 = vmatprep.subr.bf16.mxu0 0
      %6323 = vmatpush2.bf16.msra.mxu0 0
      %6324 = vmatprep.subr.bf16.mxu0 0
      %6325 = vmatpush2.bf16.msra.mxu0 0
      %6326 = vmatprep.subr.bf16.mxu0 0
      %6327 = vmatpush2.bf16.msra.mxu0 0
      %6328 = vmatprep.subr.bf16.mxu0 0
      %6329 = vmatpush2.bf16.msra.mxu0 0
      %6330 = vmatprep.subr.bf16.mxu0 0
      %6331 = vmatpush2.bf16.msra.mxu0 0
      %6332 = vmatprep.subr.bf16.mxu0 0
      %6333 = vmatpush2.bf16.msra.mxu0 0
      %6334 = vmatprep.mubr.bf16.mxu0 0
      %6335 = vmatmul.mubr.bf16.gmra.mxu0 %v6288
      %v6336 = vpop.f32.mrf.mxu0
      %v6337 = vadd.f32 0.0, %v6336
      %v6338 = vpop.f32.mrf.mxu0
      %v6339 = vadd.f32 0.0, %v6338
      %v6340 = vpop.f32.mrf.mxu0
      %v6341 = vadd.f32 0.0, %v6340
      %v6342 = vpop.f32.mrf.mxu0
      %v6343 = vadd.f32 0.0, %v6342
      %6344 = vmatprep.mubr.bf16.mxu0 0
      %6345 = vmatmul.mubr.bf16.gmra.mxu0 %v6291
      %v6346 = vpop.f32.mrf.mxu0
      %v6347 = vadd.f32 0.0, %v6346
      %v6348 = vpop.f32.mrf.mxu0
      %v6349 = vadd.f32 0.0, %v6348
      %v6350 = vpop.f32.mrf.mxu0
      %v6351 = vadd.f32 0.0, %v6350
      %v6352 = vpop.f32.mrf.mxu0
      %v6353 = vadd.f32 0.0, %v6352
      %6354 = vdwg.mxu0
      %6355 = vmatprep.subr.bf16.mxu0 0
      %6356 = vmatpush1.bf16.msra.mxu0 0
      %6357 = vmatprep.subr.bf16.mxu0 0
      %6358 = vmatpush1.bf16.msra.mxu0 0
      %6359 = vmatprep.subr.bf16.mxu0 0
      %6360 = vmatpush1.bf16.msra.mxu0 0
      %6361 = vmatprep.subr.bf16.mxu0 0
      %6362 = vmatpush1.bf16.msra.mxu0 0
      %6363 = vmatprep.subr.bf16.mxu0 0
      %6364 = vmatpush1.bf16.msra.mxu0 0
      %6365 = vmatprep.subr.bf16.mxu0 0
      %6366 = vmatpush1.bf16.msra.mxu0 0
      %6367 = vmatprep.subr.bf16.mxu0 0
      %6368 = vmatpush1.bf16.msra.mxu0 0
      %6369 = vmatprep.subr.bf16.mxu0 0
      %6370 = vmatpush1.bf16.msra.mxu0 %v6300
      %6371 = vmatprep.subr.bf16.mxu0 0
      %6372 = vmatpush2.bf16.msra.mxu0 0
      %6373 = vmatprep.subr.bf16.mxu0 0
      %6374 = vmatpush2.bf16.msra.mxu0 0
      %6375 = vmatprep.subr.bf16.mxu0 0
      %6376 = vmatpush2.bf16.msra.mxu0 0
      %6377 = vmatprep.subr.bf16.mxu0 0
      %6378 = vmatpush2.bf16.msra.mxu0 0
      %6379 = vmatprep.subr.bf16.mxu0 0
      %6380 = vmatpush2.bf16.msra.mxu0 0
      %6381 = vmatprep.subr.bf16.mxu0 0
      %6382 = vmatpush2.bf16.msra.mxu0 0
      %6383 = vmatprep.subr.bf16.mxu0 0
      %6384 = vmatpush2.bf16.msra.mxu0 0
      %6385 = vmatprep.subr.bf16.mxu0 0
      %6386 = vmatpush2.bf16.msra.mxu0 0
      %6387 = vmatprep.mubr.bf16.mxu0 0
      %6388 = vmatmul.mubr.bf16.gmra.mxu0 %v6288
      %v6389 = vpop.f32.mrf.mxu0
      %v6390 = vadd.f32 0.0, %v6389
      %v6391 = vpop.f32.mrf.mxu0
      %v6392 = vpop.f32.mrf.mxu0
      %v6393 = vadd.f32 0.0, %v6392
      %v6394 = vpop.f32.mrf.mxu0
      %6395 = vmatprep.mubr.bf16.mxu0 0
      %6396 = vmatmul.mubr.bf16.gmra.mxu0 %v6291
      %v6397 = vpop.f32.mrf.mxu0
      %v6398 = vadd.f32 0.0, %v6397
      %v6399 = vpop.f32.mrf.mxu0
      %v6400 = vpop.f32.mrf.mxu0
      %v6401 = vadd.f32 0.0, %v6400
      %v6402 = vpop.f32.mrf.mxu0
      %6403 = vdwg.mxu0
      %v6404 = vadd.f32 %v6194, %v6337
      %v6405 = vadd.f32 %v6196, %v6339
      %v6406 = vadd.f32 %v6247, %v6390
      %v6407 = vadd.f32 %v6198, %v6341
      %v6408 = vadd.f32 %v6200, %v6343
      %v6409 = vadd.f32 %v6250, %v6393
      %v6410 = vadd.f32 %v6204, %v6347
      %v6411 = vadd.f32 %v6206, %v6349
      %v6412 = vadd.f32 %v6255, %v6398
      %v6413 = vadd.f32 %v6208, %v6351
      %v6414 = vadd.f32 %v6210, %v6353
      %v6415 = vadd.f32 %v6258, %v6401
      %s6416 = scalar_lea.vmem %s9, 48
      %v6417 = vld [vmem:[%s6416] sm:$0xf]
      %v6418 = vld [vmem:[%s6416 + $0x4] sm:$0xf]
      %v6419 = vld [vmem:[%s6416 + $0x8] sm:$0xf]
      %v6420 = vld [vmem:[%s6416 + $0xc] sm:$0xf]
      %v6425 = vunpack.c.l.b16 %v6417
      %v6426 = vunpack.c.l.b16 %v6418
      %v6427 = vunpack.c.l.b16 %v6419
      %v6428 = vunpack.c.l.b16 %v6420
      %v6429 = vpack.c.b16 %v6426, %v6425
      %v6430 = vpack.c.b16 %v6428, %v6427
      %6431 = vrot.lane.b32.xlu0 %v5982, 110
      %v6432 = vpop.permute.xlu0 %6431
      %6433 = vrot.lane.b32.xlu0 %v5977, 110
      %v6434 = vpop.permute.xlu0 %6433
      %6435 = vrot.lane.b32.xlu0 %v5978, 110
      %v6436 = vpop.permute.xlu0 %6435
      %6437 = vrot.lane.b32.xlu0 %v5984, 110
      %v6438 = vpop.permute.xlu0 %6437
      %v6439 = vsel %vm1912, %v6432, %v6434
      %v6440 = vsel %vm1912, %v6434, %v6436
      %v6441 = vsel %vm1912, %v6436, %v6438
      %v6443 = vsel %vm4680, %v6429, 0
      %v6446 = vsel %vm4680, %v6430, 0
      %v6449 = vsel %vm6023, %v6439, 0
      %v6452 = vsel %vm6023, %v6440, 0
      %v6455 = vsel %vm6023, %v6441, 0
      %6457 = vmatprep.subr.bf16.mxu0 0
      %6458 = vmatpush1.bf16.msra.mxu0 0
      %6459 = vmatprep.subr.bf16.mxu0 0
      %6460 = vmatpush1.bf16.msra.mxu0 0
      %6461 = vmatprep.subr.bf16.mxu0 0
      %6462 = vmatpush1.bf16.msra.mxu0 0
      %6463 = vmatprep.subr.bf16.mxu0 0
      %6464 = vmatpush1.bf16.msra.mxu0 0
      %6465 = vmatprep.subr.bf16.mxu0 0
      %6466 = vmatpush1.bf16.msra.mxu0 0
      %6467 = vmatprep.subr.bf16.mxu0 0
      %6468 = vmatpush1.bf16.msra.mxu0 0
      %6469 = vmatprep.subr.bf16.mxu0 0
      %6470 = vmatpush1.bf16.msra.mxu0 0
      %6471 = vmatprep.subr.bf16.mxu0 %v6452
      %6472 = vmatpush1.bf16.msra.mxu0 %v6449
      %6473 = vmatprep.subr.bf16.mxu0 0
      %6474 = vmatpush2.bf16.msra.mxu0 0
      %6475 = vmatprep.subr.bf16.mxu0 0
      %6476 = vmatpush2.bf16.msra.mxu0 0
      %6477 = vmatprep.subr.bf16.mxu0 0
      %6478 = vmatpush2.bf16.msra.mxu0 0
      %6479 = vmatprep.subr.bf16.mxu0 0
      %6480 = vmatpush2.bf16.msra.mxu0 0
      %6481 = vmatprep.subr.bf16.mxu0 0
      %6482 = vmatpush2.bf16.msra.mxu0 0
      %6483 = vmatprep.subr.bf16.mxu0 0
      %6484 = vmatpush2.bf16.msra.mxu0 0
      %6485 = vmatprep.subr.bf16.mxu0 0
      %6486 = vmatpush2.bf16.msra.mxu0 0
      %6487 = vmatprep.subr.bf16.mxu0 0
      %6488 = vmatpush2.bf16.msra.mxu0 0
      %6489 = vmatprep.mubr.bf16.mxu0 0
      %6490 = vmatmul.mubr.bf16.gmra.mxu0 %v6443
      %v6491 = vpop.f32.mrf.mxu0
      %v6492 = vadd.f32 0.0, %v6491
      %v6493 = vpop.f32.mrf.mxu0
      %v6494 = vadd.f32 0.0, %v6493
      %v6495 = vpop.f32.mrf.mxu0
      %v6496 = vadd.f32 0.0, %v6495
      %v6497 = vpop.f32.mrf.mxu0
      %v6498 = vadd.f32 0.0, %v6497
      %6499 = vmatprep.mubr.bf16.mxu0 0
      %6500 = vmatmul.mubr.bf16.gmra.mxu0 %v6446
      %v6501 = vpop.f32.mrf.mxu0
      %v6502 = vadd.f32 0.0, %v6501
      %v6503 = vpop.f32.mrf.mxu0
      %v6504 = vadd.f32 0.0, %v6503
      %v6505 = vpop.f32.mrf.mxu0
      %v6506 = vadd.f32 0.0, %v6505
      %v6507 = vpop.f32.mrf.mxu0
      %v6508 = vadd.f32 0.0, %v6507
      %6509 = vdwg.mxu0
      %6510 = vmatprep.subr.bf16.mxu0 0
      %6511 = vmatpush1.bf16.msra.mxu0 0
      %6512 = vmatprep.subr.bf16.mxu0 0
      %6513 = vmatpush1.bf16.msra.mxu0 0
      %6514 = vmatprep.subr.bf16.mxu0 0
      %6515 = vmatpush1.bf16.msra.mxu0 0
      %6516 = vmatprep.subr.bf16.mxu0 0
      %6517 = vmatpush1.bf16.msra.mxu0 0
      %6518 = vmatprep.subr.bf16.mxu0 0
      %6519 = vmatpush1.bf16.msra.mxu0 0
      %6520 = vmatprep.subr.bf16.mxu0 0
      %6521 = vmatpush1.bf16.msra.mxu0 0
      %6522 = vmatprep.subr.bf16.mxu0 0
      %6523 = vmatpush1.bf16.msra.mxu0 0
      %6524 = vmatprep.subr.bf16.mxu0 0
      %6525 = vmatpush1.bf16.msra.mxu0 %v6455
      %6526 = vmatprep.subr.bf16.mxu0 0
      %6527 = vmatpush2.bf16.msra.mxu0 0
      %6528 = vmatprep.subr.bf16.mxu0 0
      %6529 = vmatpush2.bf16.msra.mxu0 0
      %6530 = vmatprep.subr.bf16.mxu0 0
      %6531 = vmatpush2.bf16.msra.mxu0 0
      %6532 = vmatprep.subr.bf16.mxu0 0
      %6533 = vmatpush2.bf16.msra.mxu0 0
      %6534 = vmatprep.subr.bf16.mxu0 0
      %6535 = vmatpush2.bf16.msra.mxu0 0
      %6536 = vmatprep.subr.bf16.mxu0 0
      %6537 = vmatpush2.bf16.msra.mxu0 0
      %6538 = vmatprep.subr.bf16.mxu0 0
      %6539 = vmatpush2.bf16.msra.mxu0 0
      %6540 = vmatprep.subr.bf16.mxu0 0
      %6541 = vmatpush2.bf16.msra.mxu0 0
      %6542 = vmatprep.mubr.bf16.mxu0 0
      %6543 = vmatmul.mubr.bf16.gmra.mxu0 %v6443
      %v6544 = vpop.f32.mrf.mxu0
      %v6545 = vadd.f32 0.0, %v6544
      %v6546 = vpop.f32.mrf.mxu0
      %v6547 = vpop.f32.mrf.mxu0
      %v6548 = vadd.f32 0.0, %v6547
      %v6549 = vpop.f32.mrf.mxu0
      %6550 = vmatprep.mubr.bf16.mxu0 0
      %6551 = vmatmul.mubr.bf16.gmra.mxu0 %v6446
      %v6552 = vpop.f32.mrf.mxu0
      %v6553 = vadd.f32 0.0, %v6552
      %v6554 = vpop.f32.mrf.mxu0
      %v6555 = vpop.f32.mrf.mxu0
      %v6556 = vadd.f32 0.0, %v6555
      %v6557 = vpop.f32.mrf.mxu0
      %6558 = vdwg.mxu0
      %v6559 = vadd.f32 %v6404, %v6492
      %v6560 = vadd.f32 %v6405, %v6494
      %v6561 = vadd.f32 %v6406, %v6545
      %v6562 = vadd.f32 %v6407, %v6496
      %v6563 = vadd.f32 %v6408, %v6498
      %v6564 = vadd.f32 %v6409, %v6548
      %v6565 = vadd.f32 %v6410, %v6502
      %v6566 = vadd.f32 %v6411, %v6504
      %v6567 = vadd.f32 %v6412, %v6553
      %v6568 = vadd.f32 %v6413, %v6506
      %v6569 = vadd.f32 %v6414, %v6508
      %v6570 = vadd.f32 %v6415, %v6556
      %s6571 = scalar_lea.vmem %s9, 64
      %v6572 = vld [vmem:[%s6571] sm:$0xf]
      %v6573 = vld [vmem:[%s6571 + $0x4] sm:$0xf]
      %v6574 = vld [vmem:[%s6571 + $0x8] sm:$0xf]
      %v6575 = vld [vmem:[%s6571 + $0xc] sm:$0xf]
      %v6580 = vunpack.c.l.b16 %v6572
      %v6581 = vunpack.c.l.b16 %v6573
      %v6582 = vunpack.c.l.b16 %v6574
      %v6583 = vunpack.c.l.b16 %v6575
      %v6584 = vpack.c.b16 %v6581, %v6580
      %v6585 = vpack.c.b16 %v6583, %v6582
      %6586 = vrot.lane.b32.xlu0 %v5982, 109
      %v6587 = vpop.permute.xlu0 %6586
      %6588 = vrot.lane.b32.xlu0 %v5977, 109
      %v6589 = vpop.permute.xlu0 %6588
      %6590 = vrot.lane.b32.xlu0 %v5978, 109
      %v6591 = vpop.permute.xlu0 %6590
      %6592 = vrot.lane.b32.xlu0 %v5984, 109
      %v6593 = vpop.permute.xlu0 %6592
      %v6594 = vsel %vm2305, %v6587, %v6589
      %v6595 = vsel %vm2305, %v6589, %v6591
      %v6596 = vsel %vm2305, %v6591, %v6593
      %v6598 = vsel %vm4680, %v6584, 0
      %v6601 = vsel %vm4680, %v6585, 0
      %v6604 = vsel %vm6023, %v6594, 0
      %v6607 = vsel %vm6023, %v6595, 0
      %v6610 = vsel %vm6023, %v6596, 0
      %6612 = vmatprep.subr.bf16.mxu0 0
      %6613 = vmatpush1.bf16.msra.mxu0 0
      %6614 = vmatprep.subr.bf16.mxu0 0
      %6615 = vmatpush1.bf16.msra.mxu0 0
      %6616 = vmatprep.subr.bf16.mxu0 0
      %6617 = vmatpush1.bf16.msra.mxu0 0
      %6618 = vmatprep.subr.bf16.mxu0 0
      %6619 = vmatpush1.bf16.msra.mxu0 0
      %6620 = vmatprep.subr.bf16.mxu0 0
      %6621 = vmatpush1.bf16.msra.mxu0 0
      %6622 = vmatprep.subr.bf16.mxu0 0
      %6623 = vmatpush1.bf16.msra.mxu0 0
      %6624 = vmatprep.subr.bf16.mxu0 0
      %6625 = vmatpush1.bf16.msra.mxu0 0
      %6626 = vmatprep.subr.bf16.mxu0 %v6607
      %6627 = vmatpush1.bf16.msra.mxu0 %v6604
      %6628 = vmatprep.subr.bf16.mxu0 0
      %6629 = vmatpush2.bf16.msra.mxu0 0
      %6630 = vmatprep.subr.bf16.mxu0 0
      %6631 = vmatpush2.bf16.msra.mxu0 0
      %6632 = vmatprep.subr.bf16.mxu0 0
      %6633 = vmatpush2.bf16.msra.mxu0 0
      %6634 = vmatprep.subr.bf16.mxu0 0
      %6635 = vmatpush2.bf16.msra.mxu0 0
      %6636 = vmatprep.subr.bf16.mxu0 0
      %6637 = vmatpush2.bf16.msra.mxu0 0
      %6638 = vmatprep.subr.bf16.mxu0 0
      %6639 = vmatpush2.bf16.msra.mxu0 0
      %6640 = vmatprep.subr.bf16.mxu0 0
      %6641 = vmatpush2.bf16.msra.mxu0 0
      %6642 = vmatprep.subr.bf16.mxu0 0
      %6643 = vmatpush2.bf16.msra.mxu0 0
      %6644 = vmatprep.mubr.bf16.mxu0 0
      %6645 = vmatmul.mubr.bf16.gmra.mxu0 %v6598
      %v6646 = vpop.f32.mrf.mxu0
      %v6647 = vadd.f32 0.0, %v6646
      %v6648 = vpop.f32.mrf.mxu0
      %v6649 = vadd.f32 0.0, %v6648
      %v6650 = vpop.f32.mrf.mxu0
      %v6651 = vadd.f32 0.0, %v6650
      %v6652 = vpop.f32.mrf.mxu0
      %v6653 = vadd.f32 0.0, %v6652
      %6654 = vmatprep.mubr.bf16.mxu0 0
      %6655 = vmatmul.mubr.bf16.gmra.mxu0 %v6601
      %v6656 = vpop.f32.mrf.mxu0
      %v6657 = vadd.f32 0.0, %v6656
      %v6658 = vpop.f32.mrf.mxu0
      %v6659 = vadd.f32 0.0, %v6658
      %v6660 = vpop.f32.mrf.mxu0
      %v6661 = vadd.f32 0.0, %v6660
      %v6662 = vpop.f32.mrf.mxu0
      %v6663 = vadd.f32 0.0, %v6662
      %6664 = vdwg.mxu0
      %6665 = vmatprep.subr.bf16.mxu0 0
      %6666 = vmatpush1.bf16.msra.mxu0 0
      %6667 = vmatprep.subr.bf16.mxu0 0
      %6668 = vmatpush1.bf16.msra.mxu0 0
      %6669 = vmatprep.subr.bf16.mxu0 0
      %6670 = vmatpush1.bf16.msra.mxu0 0
      %6671 = vmatprep.subr.bf16.mxu0 0
      %6672 = vmatpush1.bf16.msra.mxu0 0
      %6673 = vmatprep.subr.bf16.mxu0 0
      %6674 = vmatpush1.bf16.msra.mxu0 0
      %6675 = vmatprep.subr.bf16.mxu0 0
      %6676 = vmatpush1.bf16.msra.mxu0 0
      %6677 = vmatprep.subr.bf16.mxu0 0
      %6678 = vmatpush1.bf16.msra.mxu0 0
      %6679 = vmatprep.subr.bf16.mxu0 0
      %6680 = vmatpush1.bf16.msra.mxu0 %v6610
      %6681 = vmatprep.subr.bf16.mxu0 0
      %6682 = vmatpush2.bf16.msra.mxu0 0
      %6683 = vmatprep.subr.bf16.mxu0 0
      %6684 = vmatpush2.bf16.msra.mxu0 0
      %6685 = vmatprep.subr.bf16.mxu0 0
      %6686 = vmatpush2.bf16.msra.mxu0 0
      %6687 = vmatprep.subr.bf16.mxu0 0
      %6688 = vmatpush2.bf16.msra.mxu0 0
      %6689 = vmatprep.subr.bf16.mxu0 0
      %6690 = vmatpush2.bf16.msra.mxu0 0
      %6691 = vmatprep.subr.bf16.mxu0 0
      %6692 = vmatpush2.bf16.msra.mxu0 0
      %6693 = vmatprep.subr.bf16.mxu0 0
      %6694 = vmatpush2.bf16.msra.mxu0 0
      %6695 = vmatprep.subr.bf16.mxu0 0
      %6696 = vmatpush2.bf16.msra.mxu0 0
      %6697 = vmatprep.mubr.bf16.mxu0 0
      %6698 = vmatmul.mubr.bf16.gmra.mxu0 %v6598
      %v6699 = vpop.f32.mrf.mxu0
      %v6700 = vadd.f32 0.0, %v6699
      %v6701 = vpop.f32.mrf.mxu0
      %v6702 = vpop.f32.mrf.mxu0
      %v6703 = vadd.f32 0.0, %v6702
      %v6704 = vpop.f32.mrf.mxu0
      %6705 = vmatprep.mubr.bf16.mxu0 0
      %6706 = vmatmul.mubr.bf16.gmra.mxu0 %v6601
      %v6707 = vpop.f32.mrf.mxu0
      %v6708 = vadd.f32 0.0, %v6707
      %v6709 = vpop.f32.mrf.mxu0
      %v6710 = vpop.f32.mrf.mxu0
      %v6711 = vadd.f32 0.0, %v6710
      %v6712 = vpop.f32.mrf.mxu0
      %6713 = vdwg.mxu0
      %v6714 = vadd.f32 %v6559, %v6647
      %v6715 = vadd.f32 %v6560, %v6649
      %v6716 = vadd.f32 %v6561, %v6700
      %v6717 = vadd.f32 %v6562, %v6651
      %v6718 = vadd.f32 %v6563, %v6653
      %v6719 = vadd.f32 %v6564, %v6703
      %v6720 = vadd.f32 %v6565, %v6657
      %v6721 = vadd.f32 %v6566, %v6659
      %v6722 = vadd.f32 %v6567, %v6708
      %v6723 = vadd.f32 %v6568, %v6661
      %v6724 = vadd.f32 %v6569, %v6663
      %v6725 = vadd.f32 %v6570, %v6711
      %s6726 = scalar_lea.vmem %s9, 80
      %v6727 = vld [vmem:[%s6726] sm:$0xf]
      %v6728 = vld [vmem:[%s6726 + $0x4] sm:$0xf]
      %v6729 = vld [vmem:[%s6726 + $0x8] sm:$0xf]
      %v6730 = vld [vmem:[%s6726 + $0xc] sm:$0xf]
      %v6735 = vunpack.c.l.b16 %v6727
      %v6736 = vunpack.c.l.b16 %v6728
      %v6737 = vunpack.c.l.b16 %v6729
      %v6738 = vunpack.c.l.b16 %v6730
      %v6739 = vpack.c.b16 %v6736, %v6735
      %v6740 = vpack.c.b16 %v6738, %v6737
      %6741 = vrot.lane.b32.xlu0 %v5982, 108
      %v6742 = vpop.permute.xlu0 %6741
      %6743 = vrot.lane.b32.xlu0 %v5977, 108
      %v6744 = vpop.permute.xlu0 %6743
      %6745 = vrot.lane.b32.xlu0 %v5978, 108
      %v6746 = vpop.permute.xlu0 %6745
      %6747 = vrot.lane.b32.xlu0 %v5984, 108
      %v6748 = vpop.permute.xlu0 %6747
      %v6749 = vsel %vm2698, %v6742, %v6744
      %v6750 = vsel %vm2698, %v6744, %v6746
      %v6751 = vsel %vm2698, %v6746, %v6748
      %v6753 = vsel %vm4680, %v6739, 0
      %v6756 = vsel %vm4680, %v6740, 0
      %v6759 = vsel %vm6023, %v6749, 0
      %v6762 = vsel %vm6023, %v6750, 0
      %v6765 = vsel %vm6023, %v6751, 0
      %6767 = vmatprep.subr.bf16.mxu0 0
      %6768 = vmatpush1.bf16.msra.mxu0 0
      %6769 = vmatprep.subr.bf16.mxu0 0
      %6770 = vmatpush1.bf16.msra.mxu0 0
      %6771 = vmatprep.subr.bf16.mxu0 0
      %6772 = vmatpush1.bf16.msra.mxu0 0
      %6773 = vmatprep.subr.bf16.mxu0 0
      %6774 = vmatpush1.bf16.msra.mxu0 0
      %6775 = vmatprep.subr.bf16.mxu0 0
      %6776 = vmatpush1.bf16.msra.mxu0 0
      %6777 = vmatprep.subr.bf16.mxu0 0
      %6778 = vmatpush1.bf16.msra.mxu0 0
      %6779 = vmatprep.subr.bf16.mxu0 0
      %6780 = vmatpush1.bf16.msra.mxu0 0
      %6781 = vmatprep.subr.bf16.mxu0 %v6762
      %6782 = vmatpush1.bf16.msra.mxu0 %v6759
      %6783 = vmatprep.subr.bf16.mxu0 0
      %6784 = vmatpush2.bf16.msra.mxu0 0
      %6785 = vmatprep.subr.bf16.mxu0 0
      %6786 = vmatpush2.bf16.msra.mxu0 0
      %6787 = vmatprep.subr.bf16.mxu0 0
      %6788 = vmatpush2.bf16.msra.mxu0 0
      %6789 = vmatprep.subr.bf16.mxu0 0
      %6790 = vmatpush2.bf16.msra.mxu0 0
      %6791 = vmatprep.subr.bf16.mxu0 0
      %6792 = vmatpush2.bf16.msra.mxu0 0
      %6793 = vmatprep.subr.bf16.mxu0 0
      %6794 = vmatpush2.bf16.msra.mxu0 0
      %6795 = vmatprep.subr.bf16.mxu0 0
      %6796 = vmatpush2.bf16.msra.mxu0 0
      %6797 = vmatprep.subr.bf16.mxu0 0
      %6798 = vmatpush2.bf16.msra.mxu0 0
      %6799 = vmatprep.mubr.bf16.mxu0 0
      %6800 = vmatmul.mubr.bf16.gmra.mxu0 %v6753
      %v6801 = vpop.f32.mrf.mxu0
      %v6802 = vadd.f32 0.0, %v6801
      %v6803 = vpop.f32.mrf.mxu0
      %v6804 = vadd.f32 0.0, %v6803
      %v6805 = vpop.f32.mrf.mxu0
      %v6806 = vadd.f32 0.0, %v6805
      %v6807 = vpop.f32.mrf.mxu0
      %v6808 = vadd.f32 0.0, %v6807
      %6809 = vmatprep.mubr.bf16.mxu0 0
      %6810 = vmatmul.mubr.bf16.gmra.mxu0 %v6756
      %v6811 = vpop.f32.mrf.mxu0
      %v6812 = vadd.f32 0.0, %v6811
      %v6813 = vpop.f32.mrf.mxu0
      %v6814 = vadd.f32 0.0, %v6813
      %v6815 = vpop.f32.mrf.mxu0
      %v6816 = vadd.f32 0.0, %v6815
      %v6817 = vpop.f32.mrf.mxu0
      %v6818 = vadd.f32 0.0, %v6817
      %6819 = vdwg.mxu0
      %6820 = vmatprep.subr.bf16.mxu0 0
      %6821 = vmatpush1.bf16.msra.mxu0 0
      %6822 = vmatprep.subr.bf16.mxu0 0
      %6823 = vmatpush1.bf16.msra.mxu0 0
      %6824 = vmatprep.subr.bf16.mxu0 0
      %6825 = vmatpush1.bf16.msra.mxu0 0
      %6826 = vmatprep.subr.bf16.mxu0 0
      %6827 = vmatpush1.bf16.msra.mxu0 0
      %6828 = vmatprep.subr.bf16.mxu0 0
      %6829 = vmatpush1.bf16.msra.mxu0 0
      %6830 = vmatprep.subr.bf16.mxu0 0
      %6831 = vmatpush1.bf16.msra.mxu0 0
      %6832 = vmatprep.subr.bf16.mxu0 0
      %6833 = vmatpush1.bf16.msra.mxu0 0
      %6834 = vmatprep.subr.bf16.mxu0 0
      %6835 = vmatpush1.bf16.msra.mxu0 %v6765
      %6836 = vmatprep.subr.bf16.mxu0 0
      %6837 = vmatpush2.bf16.msra.mxu0 0
      %6838 = vmatprep.subr.bf16.mxu0 0
      %6839 = vmatpush2.bf16.msra.mxu0 0
      %6840 = vmatprep.subr.bf16.mxu0 0
      %6841 = vmatpush2.bf16.msra.mxu0 0
      %6842 = vmatprep.subr.bf16.mxu0 0
      %6843 = vmatpush2.bf16.msra.mxu0 0
      %6844 = vmatprep.subr.bf16.mxu0 0
      %6845 = vmatpush2.bf16.msra.mxu0 0
      %6846 = vmatprep.subr.bf16.mxu0 0
      %6847 = vmatpush2.bf16.msra.mxu0 0
      %6848 = vmatprep.subr.bf16.mxu0 0
      %6849 = vmatpush2.bf16.msra.mxu0 0
      %6850 = vmatprep.subr.bf16.mxu0 0
      %6851 = vmatpush2.bf16.msra.mxu0 0
      %6852 = vmatprep.mubr.bf16.mxu0 0
      %6853 = vmatmul.mubr.bf16.gmra.mxu0 %v6753
      %v6854 = vpop.f32.mrf.mxu0
      %v6855 = vadd.f32 0.0, %v6854
      %v6856 = vpop.f32.mrf.mxu0
      %v6857 = vpop.f32.mrf.mxu0
      %v6858 = vadd.f32 0.0, %v6857
      %v6859 = vpop.f32.mrf.mxu0
      %6860 = vmatprep.mubr.bf16.mxu0 0
      %6861 = vmatmul.mubr.bf16.gmra.mxu0 %v6756
      %v6862 = vpop.f32.mrf.mxu0
      %v6863 = vadd.f32 0.0, %v6862
      %v6864 = vpop.f32.mrf.mxu0
      %v6865 = vpop.f32.mrf.mxu0
      %v6866 = vadd.f32 0.0, %v6865
      %v6867 = vpop.f32.mrf.mxu0
      %6868 = vdwg.mxu0
      %v6869 = vadd.f32 %v6714, %v6802
      %v6870 = vadd.f32 %v6715, %v6804
      %v6871 = vadd.f32 %v6716, %v6855
      %v6872 = vadd.f32 %v6717, %v6806
      %v6873 = vadd.f32 %v6718, %v6808
      %v6874 = vadd.f32 %v6719, %v6858
      %v6875 = vadd.f32 %v6720, %v6812
      %v6876 = vadd.f32 %v6721, %v6814
      %v6877 = vadd.f32 %v6722, %v6863
      %v6878 = vadd.f32 %v6723, %v6816
      %v6879 = vadd.f32 %v6724, %v6818
      %v6880 = vadd.f32 %v6725, %v6866
      %s6881 = scalar_lea.vmem %s9, 96
      %v6882 = vld [vmem:[%s6881] sm:$0xf]
      %v6883 = vld [vmem:[%s6881 + $0x4] sm:$0xf]
      %v6884 = vld [vmem:[%s6881 + $0x8] sm:$0xf]
      %v6885 = vld [vmem:[%s6881 + $0xc] sm:$0xf]
      %v6890 = vunpack.c.l.b16 %v6882
      %v6891 = vunpack.c.l.b16 %v6883
      %v6892 = vunpack.c.l.b16 %v6884
      %v6893 = vunpack.c.l.b16 %v6885
      %v6894 = vpack.c.b16 %v6891, %v6890
      %v6895 = vpack.c.b16 %v6893, %v6892
      %6896 = vrot.lane.b32.xlu0 %v5982, 92
      %v6897 = vpop.permute.xlu0 %6896
      %6898 = vrot.lane.b32.xlu0 %v5977, 92
      %v6899 = vpop.permute.xlu0 %6898
      %6900 = vrot.lane.b32.xlu0 %v5978, 92
      %v6901 = vpop.permute.xlu0 %6900
      %6902 = vrot.lane.b32.xlu0 %v5984, 92
      %v6903 = vpop.permute.xlu0 %6902
      %v6904 = vsel %vm3091, %v6897, %v6899
      %v6905 = vsel %vm3091, %v6899, %v6901
      %v6906 = vsel %vm3091, %v6901, %v6903
      %v6908 = vsel %vm4680, %v6894, 0
      %v6911 = vsel %vm4680, %v6895, 0
      %v6914 = vsel %vm6023, %v6904, 0
      %v6917 = vsel %vm6023, %v6905, 0
      %v6920 = vsel %vm6023, %v6906, 0
      %6922 = vmatprep.subr.bf16.mxu0 0
      %6923 = vmatpush1.bf16.msra.mxu0 0
      %6924 = vmatprep.subr.bf16.mxu0 0
      %6925 = vmatpush1.bf16.msra.mxu0 0
      %6926 = vmatprep.subr.bf16.mxu0 0
      %6927 = vmatpush1.bf16.msra.mxu0 0
      %6928 = vmatprep.subr.bf16.mxu0 0
      %6929 = vmatpush1.bf16.msra.mxu0 0
      %6930 = vmatprep.subr.bf16.mxu0 0
      %6931 = vmatpush1.bf16.msra.mxu0 0
      %6932 = vmatprep.subr.bf16.mxu0 0
      %6933 = vmatpush1.bf16.msra.mxu0 0
      %6934 = vmatprep.subr.bf16.mxu0 0
      %6935 = vmatpush1.bf16.msra.mxu0 0
      %6936 = vmatprep.subr.bf16.mxu0 %v6917
      %6937 = vmatpush1.bf16.msra.mxu0 %v6914
      %6938 = vmatprep.subr.bf16.mxu0 0
      %6939 = vmatpush2.bf16.msra.mxu0 0
      %6940 = vmatprep.subr.bf16.mxu0 0
      %6941 = vmatpush2.bf16.msra.mxu0 0
      %6942 = vmatprep.subr.bf16.mxu0 0
      %6943 = vmatpush2.bf16.msra.mxu0 0
      %6944 = vmatprep.subr.bf16.mxu0 0
      %6945 = vmatpush2.bf16.msra.mxu0 0
      %6946 = vmatprep.subr.bf16.mxu0 0
      %6947 = vmatpush2.bf16.msra.mxu0 0
      %6948 = vmatprep.subr.bf16.mxu0 0
      %6949 = vmatpush2.bf16.msra.mxu0 0
      %6950 = vmatprep.subr.bf16.mxu0 0
      %6951 = vmatpush2.bf16.msra.mxu0 0
      %6952 = vmatprep.subr.bf16.mxu0 0
      %6953 = vmatpush2.bf16.msra.mxu0 0
      %6954 = vmatprep.mubr.bf16.mxu0 0
      %6955 = vmatmul.mubr.bf16.gmra.mxu0 %v6908
      %v6956 = vpop.f32.mrf.mxu0
      %v6957 = vadd.f32 0.0, %v6956
      %v6958 = vpop.f32.mrf.mxu0
      %v6959 = vadd.f32 0.0, %v6958
      %v6960 = vpop.f32.mrf.mxu0
      %v6961 = vadd.f32 0.0, %v6960
      %v6962 = vpop.f32.mrf.mxu0
      %v6963 = vadd.f32 0.0, %v6962
      %6964 = vmatprep.mubr.bf16.mxu0 0
      %6965 = vmatmul.mubr.bf16.gmra.mxu0 %v6911
      %v6966 = vpop.f32.mrf.mxu0
      %v6967 = vadd.f32 0.0, %v6966
      %v6968 = vpop.f32.mrf.mxu0
      %v6969 = vadd.f32 0.0, %v6968
      %v6970 = vpop.f32.mrf.mxu0
      %v6971 = vadd.f32 0.0, %v6970
      %v6972 = vpop.f32.mrf.mxu0
      %v6973 = vadd.f32 0.0, %v6972
      %6974 = vdwg.mxu0
      %6975 = vmatprep.subr.bf16.mxu0 0
      %6976 = vmatpush1.bf16.msra.mxu0 0
      %6977 = vmatprep.subr.bf16.mxu0 0
      %6978 = vmatpush1.bf16.msra.mxu0 0
      %6979 = vmatprep.subr.bf16.mxu0 0
      %6980 = vmatpush1.bf16.msra.mxu0 0
      %6981 = vmatprep.subr.bf16.mxu0 0
      %6982 = vmatpush1.bf16.msra.mxu0 0
      %6983 = vmatprep.subr.bf16.mxu0 0
      %6984 = vmatpush1.bf16.msra.mxu0 0
      %6985 = vmatprep.subr.bf16.mxu0 0
      %6986 = vmatpush1.bf16.msra.mxu0 0
      %6987 = vmatprep.subr.bf16.mxu0 0
      %6988 = vmatpush1.bf16.msra.mxu0 0
      %6989 = vmatprep.subr.bf16.mxu0 0
      %6990 = vmatpush1.bf16.msra.mxu0 %v6920
      %6991 = vmatprep.subr.bf16.mxu0 0
      %6992 = vmatpush2.bf16.msra.mxu0 0
      %6993 = vmatprep.subr.bf16.mxu0 0
      %6994 = vmatpush2.bf16.msra.mxu0 0
      %6995 = vmatprep.subr.bf16.mxu0 0
      %6996 = vmatpush2.bf16.msra.mxu0 0
      %6997 = vmatprep.subr.bf16.mxu0 0
      %6998 = vmatpush2.bf16.msra.mxu0 0
      %6999 = vmatprep.subr.bf16.mxu0 0
      %7000 = vmatpush2.bf16.msra.mxu0 0
      %7001 = vmatprep.subr.bf16.mxu0 0
      %7002 = vmatpush2.bf16.msra.mxu0 0
      %7003 = vmatprep.subr.bf16.mxu0 0
      %7004 = vmatpush2.bf16.msra.mxu0 0
      %7005 = vmatprep.subr.bf16.mxu0 0
      %7006 = vmatpush2.bf16.msra.mxu0 0
      %7007 = vmatprep.mubr.bf16.mxu0 0
      %7008 = vmatmul.mubr.bf16.gmra.mxu0 %v6908
      %v7009 = vpop.f32.mrf.mxu0
      %v7010 = vadd.f32 0.0, %v7009
      %v7011 = vpop.f32.mrf.mxu0
      %v7012 = vpop.f32.mrf.mxu0
      %v7013 = vadd.f32 0.0, %v7012
      %v7014 = vpop.f32.mrf.mxu0
      %7015 = vmatprep.mubr.bf16.mxu0 0
      %7016 = vmatmul.mubr.bf16.gmra.mxu0 %v6911
      %v7017 = vpop.f32.mrf.mxu0
      %v7018 = vadd.f32 0.0, %v7017
      %v7019 = vpop.f32.mrf.mxu0
      %v7020 = vpop.f32.mrf.mxu0
      %v7021 = vadd.f32 0.0, %v7020
      %v7022 = vpop.f32.mrf.mxu0
      %7023 = vdwg.mxu0
      %v7024 = vadd.f32 %v6869, %v6957
      %v7025 = vadd.f32 %v6870, %v6959
      %v7026 = vadd.f32 %v6871, %v7010
      %v7027 = vadd.f32 %v6872, %v6961
      %v7028 = vadd.f32 %v6873, %v6963
      %v7029 = vadd.f32 %v6874, %v7013
      %v7030 = vadd.f32 %v6875, %v6967
      %v7031 = vadd.f32 %v6876, %v6969
      %v7032 = vadd.f32 %v6877, %v7018
      %v7033 = vadd.f32 %v6878, %v6971
      %v7034 = vadd.f32 %v6879, %v6973
      %v7035 = vadd.f32 %v6880, %v7021
      %s7036 = scalar_lea.vmem %s9, 112
      %v7037 = vld [vmem:[%s7036] sm:$0xf]
      %v7038 = vld [vmem:[%s7036 + $0x4] sm:$0xf]
      %v7039 = vld [vmem:[%s7036 + $0x8] sm:$0xf]
      %v7040 = vld [vmem:[%s7036 + $0xc] sm:$0xf]
      %v7045 = vunpack.c.l.b16 %v7037
      %v7046 = vunpack.c.l.b16 %v7038
      %v7047 = vunpack.c.l.b16 %v7039
      %v7048 = vunpack.c.l.b16 %v7040
      %v7049 = vpack.c.b16 %v7046, %v7045
      %v7050 = vpack.c.b16 %v7048, %v7047
      %7051 = vrot.lane.b32.xlu0 %v5982, 91
      %v7052 = vpop.permute.xlu0 %7051
      %7053 = vrot.lane.b32.xlu0 %v5977, 91
      %v7054 = vpop.permute.xlu0 %7053
      %7055 = vrot.lane.b32.xlu0 %v5978, 91
      %v7056 = vpop.permute.xlu0 %7055
      %7057 = vrot.lane.b32.xlu0 %v5984, 91
      %v7058 = vpop.permute.xlu0 %7057
      %v7059 = vsel %vm3484, %v7052, %v7054
      %v7060 = vsel %vm3484, %v7054, %v7056
      %v7061 = vsel %vm3484, %v7056, %v7058
      %v7063 = vsel %vm4680, %v7049, 0
      %v7066 = vsel %vm4680, %v7050, 0
      %v7069 = vsel %vm6023, %v7059, 0
      %v7072 = vsel %vm6023, %v7060, 0
      %v7075 = vsel %vm6023, %v7061, 0
      %7077 = vmatprep.subr.bf16.mxu0 0
      %7078 = vmatpush1.bf16.msra.mxu0 0
      %7079 = vmatprep.subr.bf16.mxu0 0
      %7080 = vmatpush1.bf16.msra.mxu0 0
      %7081 = vmatprep.subr.bf16.mxu0 0
      %7082 = vmatpush1.bf16.msra.mxu0 0
      %7083 = vmatprep.subr.bf16.mxu0 0
      %7084 = vmatpush1.bf16.msra.mxu0 0
      %7085 = vmatprep.subr.bf16.mxu0 0
      %7086 = vmatpush1.bf16.msra.mxu0 0
      %7087 = vmatprep.subr.bf16.mxu0 0
      %7088 = vmatpush1.bf16.msra.mxu0 0
      %7089 = vmatprep.subr.bf16.mxu0 0
      %7090 = vmatpush1.bf16.msra.mxu0 0
      %7091 = vmatprep.subr.bf16.mxu0 %v7072
      %7092 = vmatpush1.bf16.msra.mxu0 %v7069
      %7093 = vmatprep.subr.bf16.mxu0 0
      %7094 = vmatpush2.bf16.msra.mxu0 0
      %7095 = vmatprep.subr.bf16.mxu0 0
      %7096 = vmatpush2.bf16.msra.mxu0 0
      %7097 = vmatprep.subr.bf16.mxu0 0
      %7098 = vmatpush2.bf16.msra.mxu0 0
      %7099 = vmatprep.subr.bf16.mxu0 0
      %7100 = vmatpush2.bf16.msra.mxu0 0
      %7101 = vmatprep.subr.bf16.mxu0 0
      %7102 = vmatpush2.bf16.msra.mxu0 0
      %7103 = vmatprep.subr.bf16.mxu0 0
      %7104 = vmatpush2.bf16.msra.mxu0 0
      %7105 = vmatprep.subr.bf16.mxu0 0
      %7106 = vmatpush2.bf16.msra.mxu0 0
      %7107 = vmatprep.subr.bf16.mxu0 0
      %7108 = vmatpush2.bf16.msra.mxu0 0
      %7109 = vmatprep.mubr.bf16.mxu0 0
      %7110 = vmatmul.mubr.bf16.gmra.mxu0 %v7063
      %v7111 = vpop.f32.mrf.mxu0
      %v7112 = vadd.f32 0.0, %v7111
      %v7113 = vpop.f32.mrf.mxu0
      %v7114 = vadd.f32 0.0, %v7113
      %v7115 = vpop.f32.mrf.mxu0
      %v7116 = vadd.f32 0.0, %v7115
      %v7117 = vpop.f32.mrf.mxu0
      %v7118 = vadd.f32 0.0, %v7117
      %7119 = vmatprep.mubr.bf16.mxu0 0
      %7120 = vmatmul.mubr.bf16.gmra.mxu0 %v7066
      %v7121 = vpop.f32.mrf.mxu0
      %v7122 = vadd.f32 0.0, %v7121
      %v7123 = vpop.f32.mrf.mxu0
      %v7124 = vadd.f32 0.0, %v7123
      %v7125 = vpop.f32.mrf.mxu0
      %v7126 = vadd.f32 0.0, %v7125
      %v7127 = vpop.f32.mrf.mxu0
      %v7128 = vadd.f32 0.0, %v7127
      %7129 = vdwg.mxu0
      %7130 = vmatprep.subr.bf16.mxu0 0
      %7131 = vmatpush1.bf16.msra.mxu0 0
      %7132 = vmatprep.subr.bf16.mxu0 0
      %7133 = vmatpush1.bf16.msra.mxu0 0
      %7134 = vmatprep.subr.bf16.mxu0 0
      %7135 = vmatpush1.bf16.msra.mxu0 0
      %7136 = vmatprep.subr.bf16.mxu0 0
      %7137 = vmatpush1.bf16.msra.mxu0 0
      %7138 = vmatprep.subr.bf16.mxu0 0
      %7139 = vmatpush1.bf16.msra.mxu0 0
      %7140 = vmatprep.subr.bf16.mxu0 0
      %7141 = vmatpush1.bf16.msra.mxu0 0
      %7142 = vmatprep.subr.bf16.mxu0 0
      %7143 = vmatpush1.bf16.msra.mxu0 0
      %7144 = vmatprep.subr.bf16.mxu0 0
      %7145 = vmatpush1.bf16.msra.mxu0 %v7075
      %7146 = vmatprep.subr.bf16.mxu0 0
      %7147 = vmatpush2.bf16.msra.mxu0 0
      %7148 = vmatprep.subr.bf16.mxu0 0
      %7149 = vmatpush2.bf16.msra.mxu0 0
      %7150 = vmatprep.subr.bf16.mxu0 0
      %7151 = vmatpush2.bf16.msra.mxu0 0
      %7152 = vmatprep.subr.bf16.mxu0 0
      %7153 = vmatpush2.bf16.msra.mxu0 0
      %7154 = vmatprep.subr.bf16.mxu0 0
      %7155 = vmatpush2.bf16.msra.mxu0 0
      %7156 = vmatprep.subr.bf16.mxu0 0
      %7157 = vmatpush2.bf16.msra.mxu0 0
      %7158 = vmatprep.subr.bf16.mxu0 0
      %7159 = vmatpush2.bf16.msra.mxu0 0
      %7160 = vmatprep.subr.bf16.mxu0 0
      %7161 = vmatpush2.bf16.msra.mxu0 0
      %7162 = vmatprep.mubr.bf16.mxu0 0
      %7163 = vmatmul.mubr.bf16.gmra.mxu0 %v7063
      %v7164 = vpop.f32.mrf.mxu0
      %v7165 = vadd.f32 0.0, %v7164
      %v7166 = vpop.f32.mrf.mxu0
      %v7167 = vpop.f32.mrf.mxu0
      %v7168 = vadd.f32 0.0, %v7167
      %v7169 = vpop.f32.mrf.mxu0
      %7170 = vmatprep.mubr.bf16.mxu0 0
      %7171 = vmatmul.mubr.bf16.gmra.mxu0 %v7066
      %v7172 = vpop.f32.mrf.mxu0
      %v7173 = vadd.f32 0.0, %v7172
      %v7174 = vpop.f32.mrf.mxu0
      %v7175 = vpop.f32.mrf.mxu0
      %v7176 = vadd.f32 0.0, %v7175
      %v7177 = vpop.f32.mrf.mxu0
      %7178 = vdwg.mxu0
      %v7179 = vadd.f32 %v7024, %v7112
      %v7180 = vadd.f32 %v7025, %v7114
      %v7181 = vadd.f32 %v7026, %v7165
      %v7182 = vadd.f32 %v7027, %v7116
      %v7183 = vadd.f32 %v7028, %v7118
      %v7184 = vadd.f32 %v7029, %v7168
      %v7185 = vadd.f32 %v7030, %v7122
      %v7186 = vadd.f32 %v7031, %v7124
      %v7187 = vadd.f32 %v7032, %v7173
      %v7188 = vadd.f32 %v7033, %v7126
      %v7189 = vadd.f32 %v7034, %v7128
      %v7190 = vadd.f32 %v7035, %v7176
      %s7191 = scalar_lea.vmem %s9, 128
      %v7192 = vld [vmem:[%s7191] sm:$0xf]
      %v7193 = vld [vmem:[%s7191 + $0x4] sm:$0xf]
      %v7194 = vld [vmem:[%s7191 + $0x8] sm:$0xf]
      %v7195 = vld [vmem:[%s7191 + $0xc] sm:$0xf]
      %v7200 = vunpack.c.l.b16 %v7192
      %v7201 = vunpack.c.l.b16 %v7193
      %v7202 = vunpack.c.l.b16 %v7194
      %v7203 = vunpack.c.l.b16 %v7195
      %v7204 = vpack.c.b16 %v7201, %v7200
      %v7205 = vpack.c.b16 %v7203, %v7202
      %7206 = vrot.lane.b32.xlu0 %v5982, 90
      %v7207 = vpop.permute.xlu0 %7206
      %7208 = vrot.lane.b32.xlu0 %v5977, 90
      %v7209 = vpop.permute.xlu0 %7208
      %7210 = vrot.lane.b32.xlu0 %v5978, 90
      %v7211 = vpop.permute.xlu0 %7210
      %7212 = vrot.lane.b32.xlu0 %v5984, 90
      %v7213 = vpop.permute.xlu0 %7212
      %v7214 = vsel %vm3877, %v7207, %v7209
      %v7215 = vsel %vm3877, %v7209, %v7211
      %v7216 = vsel %vm3877, %v7211, %v7213
      %v7218 = vsel %vm4680, %v7204, 0
      %v7221 = vsel %vm4680, %v7205, 0
      %v7224 = vsel %vm6023, %v7214, 0
      %v7227 = vsel %vm6023, %v7215, 0
      %v7230 = vsel %vm6023, %v7216, 0
      %7232 = vmatprep.subr.bf16.mxu0 0
      %7233 = vmatpush1.bf16.msra.mxu0 0
      %7234 = vmatprep.subr.bf16.mxu0 0
      %7235 = vmatpush1.bf16.msra.mxu0 0
      %7236 = vmatprep.subr.bf16.mxu0 0
      %7237 = vmatpush1.bf16.msra.mxu0 0
      %7238 = vmatprep.subr.bf16.mxu0 0
      %7239 = vmatpush1.bf16.msra.mxu0 0
      %7240 = vmatprep.subr.bf16.mxu0 0
      %7241 = vmatpush1.bf16.msra.mxu0 0
      %7242 = vmatprep.subr.bf16.mxu0 0
      %7243 = vmatpush1.bf16.msra.mxu0 0
      %7244 = vmatprep.subr.bf16.mxu0 0
      %7245 = vmatpush1.bf16.msra.mxu0 0
      %7246 = vmatprep.subr.bf16.mxu0 %v7227
      %7247 = vmatpush1.bf16.msra.mxu0 %v7224
      %7248 = vmatprep.subr.bf16.mxu0 0
      %7249 = vmatpush2.bf16.msra.mxu0 0
      %7250 = vmatprep.subr.bf16.mxu0 0
      %7251 = vmatpush2.bf16.msra.mxu0 0
      %7252 = vmatprep.subr.bf16.mxu0 0
      %7253 = vmatpush2.bf16.msra.mxu0 0
      %7254 = vmatprep.subr.bf16.mxu0 0
      %7255 = vmatpush2.bf16.msra.mxu0 0
      %7256 = vmatprep.subr.bf16.mxu0 0
      %7257 = vmatpush2.bf16.msra.mxu0 0
      %7258 = vmatprep.subr.bf16.mxu0 0
      %7259 = vmatpush2.bf16.msra.mxu0 0
      %7260 = vmatprep.subr.bf16.mxu0 0
      %7261 = vmatpush2.bf16.msra.mxu0 0
      %7262 = vmatprep.subr.bf16.mxu0 0
      %7263 = vmatpush2.bf16.msra.mxu0 0
      %7264 = vmatprep.mubr.bf16.mxu0 0
      %7265 = vmatmul.mubr.bf16.gmra.mxu0 %v7218
      %v7266 = vpop.f32.mrf.mxu0
      %v7267 = vadd.f32 0.0, %v7266
      %v7268 = vpop.f32.mrf.mxu0
      %v7269 = vadd.f32 0.0, %v7268
      %v7270 = vpop.f32.mrf.mxu0
      %v7271 = vadd.f32 0.0, %v7270
      %v7272 = vpop.f32.mrf.mxu0
      %v7273 = vadd.f32 0.0, %v7272
      %7274 = vmatprep.mubr.bf16.mxu0 0
      %7275 = vmatmul.mubr.bf16.gmra.mxu0 %v7221
      %v7276 = vpop.f32.mrf.mxu0
      %v7277 = vadd.f32 0.0, %v7276
      %v7278 = vpop.f32.mrf.mxu0
      %v7279 = vadd.f32 0.0, %v7278
      %v7280 = vpop.f32.mrf.mxu0
      %v7281 = vadd.f32 0.0, %v7280
      %v7282 = vpop.f32.mrf.mxu0
      %v7283 = vadd.f32 0.0, %v7282
      %7284 = vdwg.mxu0
      %7285 = vmatprep.subr.bf16.mxu0 0
      %7286 = vmatpush1.bf16.msra.mxu0 0
      %7287 = vmatprep.subr.bf16.mxu0 0
      %7288 = vmatpush1.bf16.msra.mxu0 0
      %7289 = vmatprep.subr.bf16.mxu0 0
      %7290 = vmatpush1.bf16.msra.mxu0 0
      %7291 = vmatprep.subr.bf16.mxu0 0
      %7292 = vmatpush1.bf16.msra.mxu0 0
      %7293 = vmatprep.subr.bf16.mxu0 0
      %7294 = vmatpush1.bf16.msra.mxu0 0
      %7295 = vmatprep.subr.bf16.mxu0 0
      %7296 = vmatpush1.bf16.msra.mxu0 0
      %7297 = vmatprep.subr.bf16.mxu0 0
      %7298 = vmatpush1.bf16.msra.mxu0 0
      %7299 = vmatprep.subr.bf16.mxu0 0
      %7300 = vmatpush1.bf16.msra.mxu0 %v7230
      %7301 = vmatprep.subr.bf16.mxu0 0
      %7302 = vmatpush2.bf16.msra.mxu0 0
      %7303 = vmatprep.subr.bf16.mxu0 0
      %7304 = vmatpush2.bf16.msra.mxu0 0
      %7305 = vmatprep.subr.bf16.mxu0 0
      %7306 = vmatpush2.bf16.msra.mxu0 0
      %7307 = vmatprep.subr.bf16.mxu0 0
      %7308 = vmatpush2.bf16.msra.mxu0 0
      %7309 = vmatprep.subr.bf16.mxu0 0
      %7310 = vmatpush2.bf16.msra.mxu0 0
      %7311 = vmatprep.subr.bf16.mxu0 0
      %7312 = vmatpush2.bf16.msra.mxu0 0
      %7313 = vmatprep.subr.bf16.mxu0 0
      %7314 = vmatpush2.bf16.msra.mxu0 0
      %7315 = vmatprep.subr.bf16.mxu0 0
      %7316 = vmatpush2.bf16.msra.mxu0 0
      %7317 = vmatprep.mubr.bf16.mxu0 0
      %7318 = vmatmul.mubr.bf16.gmra.mxu0 %v7218
      %v7319 = vpop.f32.mrf.mxu0
      %v7320 = vadd.f32 0.0, %v7319
      %v7321 = vpop.f32.mrf.mxu0
      %v7322 = vpop.f32.mrf.mxu0
      %v7323 = vadd.f32 0.0, %v7322
      %v7324 = vpop.f32.mrf.mxu0
      %7325 = vmatprep.mubr.bf16.mxu0 0
      %7326 = vmatmul.mubr.bf16.gmra.mxu0 %v7221
      %v7327 = vpop.f32.mrf.mxu0
      %v7328 = vadd.f32 0.0, %v7327
      %v7329 = vpop.f32.mrf.mxu0
      %v7330 = vpop.f32.mrf.mxu0
      %v7331 = vadd.f32 0.0, %v7330
      %v7332 = vpop.f32.mrf.mxu0
      %7333 = vdwg.mxu0
      %v7334 = vadd.f32 %v7179, %v7267
      %v7335 = vadd.f32 %v7180, %v7269
      %v7336 = vadd.f32 %v7181, %v7320
      %v7337 = vadd.f32 %v7182, %v7271
      %v7338 = vadd.f32 %v7183, %v7273
      %v7339 = vadd.f32 %v7184, %v7323
      %v7340 = vadd.f32 %v7185, %v7277
      %v7341 = vadd.f32 %v7186, %v7279
      %v7342 = vadd.f32 %v7187, %v7328
      %v7343 = vadd.f32 %v7188, %v7281
      %v7344 = vadd.f32 %v7189, %v7283
      %v7345 = vadd.f32 %v7190, %v7331
      %v7346 = vld [vmem:[%s10] sm:$0xff]
      %v7347 = vld [vmem:[%s10 + $0x8] sm:$0xff]
      %v7348 = vld [vmem:[%s10 + $0x10] sm:$0xff]
      %v7349 = vld [vmem:[%s10 + $0x18] sm:$0xff]
      %7351 = vset.pattern.permute.xlu0 0
      %7352 = vperm.xlu0 %7351, %v7346
      %v7353 = vpop.permute.xlu0 %7352
      %7356 = vset.pattern.permute.xlu0 0
      %7357 = vperm.xlu0 %7356, %v7347
      %v7358 = vpop.permute.xlu0 %7357
      %7361 = vset.pattern.permute.xlu0 0
      %7362 = vperm.xlu0 %7361, %v7348
      %v7363 = vpop.permute.xlu0 %7362
      %7366 = vset.pattern.permute.xlu0 0
      %7367 = vperm.xlu0 %7366, %v7349
      %v7368 = vpop.permute.xlu0 %7367
      %v7370 = vadd.f32 %v7334, %v7353
      %v7371 = vadd.f32 %v7335, %v7353
      %v7372 = vadd.f32 %v7336, %v7353
      %v7373 = vadd.f32 %v7337, %v7358
      %v7374 = vadd.f32 %v7338, %v7358
      %v7375 = vadd.f32 %v7339, %v7358
      %v7376 = vadd.f32 %v7340, %v7363
      %v7377 = vadd.f32 %v7341, %v7363
      %v7378 = vadd.f32 %v7342, %v7363
      %v7379 = vadd.f32 %v7343, %v7368
      %v7380 = vadd.f32 %v7344, %v7368
      %v7381 = vadd.f32 %v7345, %v7368
      %7382 = vmatprep.subr.mxu0 0.0
      %7383 = vmatpush1.msra.mxu0 %v719
      %7384 = vmatprep.subr.mxu0 0.0
      %7385 = vmatpush1.msra.mxu0 %v718
      %7386 = vmatprep.subr.mxu0 0.0
      %7387 = vmatpush1.msra.mxu0 %v717
      %7388 = vmatprep.subr.mxu0 0.0
      %7389 = vmatpush1.msra.mxu0 %v716
      %7390 = vmatprep.subr.mxu0 0.0
      %7391 = vmatpush1.msra.mxu0 %v715
      %7392 = vmatprep.subr.mxu0 0.0
      %7393 = vmatpush1.msra.mxu0 %v714
      %7394 = vmatprep.subr.mxu0 0.0
      %7395 = vmatpush1.msra.mxu0 %v713
      %7396 = vmatprep.subr.mxu0 0.0
      %7397 = vmatpush1.msra.mxu0 %v712
      %7398 = vmatprep.subr.mxu0 0.0
      %7399 = vmatpush1.msra.mxu0 %v711
      %7400 = vmatprep.subr.mxu0 0.0
      %7401 = vmatpush1.msra.mxu0 %v710
      %7402 = vmatprep.subr.mxu0 0.0
      %7403 = vmatpush1.msra.mxu0 %v709
      %7404 = vmatprep.subr.mxu0 0.0
      %7405 = vmatpush1.msra.mxu0 %v708
      %7406 = vmatprep.subr.mxu0 0.0
      %7407 = vmatpush1.msra.mxu0 %v707
      %7408 = vmatprep.subr.mxu0 0.0
      %7409 = vmatpush1.msra.mxu0 %v706
      %7410 = vmatprep.subr.mxu0 0.0
      %7411 = vmatpush1.msra.mxu0 %v705
      %7412 = vmatprep.subr.mxu0 0.0
      %7413 = vmatpush1.msra.mxu0 %v704
      %7414 = vmatprep.subr.mxu0 0.0
      %7415 = vmatpush2.msra.mxu0 %v735
      %7416 = vmatprep.subr.mxu0 0.0
      %7417 = vmatpush2.msra.mxu0 %v734
      %7418 = vmatprep.subr.mxu0 0.0
      %7419 = vmatpush2.msra.mxu0 %v733
      %7420 = vmatprep.subr.mxu0 0.0
      %7421 = vmatpush2.msra.mxu0 %v732
      %7422 = vmatprep.subr.mxu0 0.0
      %7423 = vmatpush2.msra.mxu0 %v731
      %7424 = vmatprep.subr.mxu0 0.0
      %7425 = vmatpush2.msra.mxu0 %v730
      %7426 = vmatprep.subr.mxu0 0.0
      %7427 = vmatpush2.msra.mxu0 %v729
      %7428 = vmatprep.subr.mxu0 0.0
      %7429 = vmatpush2.msra.mxu0 %v728
      %7430 = vmatprep.subr.mxu0 0.0
      %7431 = vmatpush2.msra.mxu0 %v727
      %7432 = vmatprep.subr.mxu0 0.0
      %7433 = vmatpush2.msra.mxu0 %v726
      %7434 = vmatprep.subr.mxu0 0.0
      %7435 = vmatpush2.msra.mxu0 %v725
      %7436 = vmatprep.subr.mxu0 0.0
      %7437 = vmatpush2.msra.mxu0 %v724
      %7438 = vmatprep.subr.mxu0 0.0
      %7439 = vmatpush2.msra.mxu0 %v723
      %7440 = vmatprep.subr.mxu0 0.0
      %7441 = vmatpush2.msra.mxu0 %v722
      %7442 = vmatprep.subr.mxu0 0.0
      %7443 = vmatpush2.msra.mxu0 %v721
      %7444 = vmatprep.subr.mxu0 0.0
      %7445 = vmatpush2.msra.mxu0 %v720
      %7446 = vmatprep.mubr.f32.mxu0 %v7371
      %7447 = vmatmul.mubr.f32.gmra.mxu0 %v7370
      %v7448 = vpop.f32.mrf.mxu0
      %v7449 = vadd.f32 0.0, %v7448
      %v7450 = vpop.f32.mrf.mxu0
      %7451 = vmatprep.mubr.f32.mxu0 %v7374
      %7452 = vmatmul.mubr.f32.gmra.mxu0 %v7373
      %v7453 = vpop.f32.mrf.mxu0
      %v7454 = vadd.f32 0.0, %v7453
      %v7455 = vpop.f32.mrf.mxu0
      %7456 = vmatprep.mubr.f32.mxu0 %v7377
      %7457 = vmatmul.mubr.f32.gmra.mxu0 %v7376
      %v7458 = vpop.f32.mrf.mxu0
      %v7459 = vadd.f32 0.0, %v7458
      %v7460 = vpop.f32.mrf.mxu0
      %7461 = vmatprep.mubr.f32.mxu0 %v7380
      %7462 = vmatmul.mubr.f32.gmra.mxu0 %v7379
      %v7463 = vpop.f32.mrf.mxu0
      %v7464 = vadd.f32 0.0, %v7463
      %v7465 = vpop.f32.mrf.mxu0
      %7466 = vdwg.mxu0
      %7467 = vmatprep.subr.mxu0 0.0
      %7468 = vmatpush1.msra.mxu0 %v751
      %7469 = vmatprep.subr.mxu0 0.0
      %7470 = vmatpush1.msra.mxu0 %v750
      %7471 = vmatprep.subr.mxu0 0.0
      %7472 = vmatpush1.msra.mxu0 %v749
      %7473 = vmatprep.subr.mxu0 0.0
      %7474 = vmatpush1.msra.mxu0 %v748
      %7475 = vmatprep.subr.mxu0 0.0
      %7476 = vmatpush1.msra.mxu0 %v747
      %7477 = vmatprep.subr.mxu0 0.0
      %7478 = vmatpush1.msra.mxu0 %v746
      %7479 = vmatprep.subr.mxu0 0.0
      %7480 = vmatpush1.msra.mxu0 %v745
      %7481 = vmatprep.subr.mxu0 0.0
      %7482 = vmatpush1.msra.mxu0 %v744
      %7483 = vmatprep.subr.mxu0 0.0
      %7484 = vmatpush1.msra.mxu0 %v743
      %7485 = vmatprep.subr.mxu0 0.0
      %7486 = vmatpush1.msra.mxu0 %v742
      %7487 = vmatprep.subr.mxu0 0.0
      %7488 = vmatpush1.msra.mxu0 %v741
      %7489 = vmatprep.subr.mxu0 0.0
      %7490 = vmatpush1.msra.mxu0 %v740
      %7491 = vmatprep.subr.mxu0 0.0
      %7492 = vmatpush1.msra.mxu0 %v739
      %7493 = vmatprep.subr.mxu0 0.0
      %7494 = vmatpush1.msra.mxu0 %v738
      %7495 = vmatprep.subr.mxu0 0.0
      %7496 = vmatpush1.msra.mxu0 %v737
      %7497 = vmatprep.subr.mxu0 0.0
      %7498 = vmatpush1.msra.mxu0 %v736
      %7499 = vmatprep.subr.mxu0 0.0
      %7500 = vmatpush2.msra.mxu0 0.0
      %7501 = vmatprep.subr.mxu0 0.0
      %7502 = vmatpush2.msra.mxu0 0.0
      %7503 = vmatprep.subr.mxu0 0.0
      %7504 = vmatpush2.msra.mxu0 0.0
      %7505 = vmatprep.subr.mxu0 0.0
      %7506 = vmatpush2.msra.mxu0 0.0
      %7507 = vmatprep.subr.mxu0 0.0
      %7508 = vmatpush2.msra.mxu0 0.0
      %7509 = vmatprep.subr.mxu0 0.0
      %7510 = vmatpush2.msra.mxu0 0.0
      %7511 = vmatprep.subr.mxu0 0.0
      %7512 = vmatpush2.msra.mxu0 0.0
      %7513 = vmatprep.subr.mxu0 0.0
      %7514 = vmatpush2.msra.mxu0 0.0
      %7515 = vmatprep.subr.mxu0 0.0
      %7516 = vmatpush2.msra.mxu0 0.0
      %7517 = vmatprep.subr.mxu0 0.0
      %7518 = vmatpush2.msra.mxu0 0.0
      %7519 = vmatprep.subr.mxu0 0.0
      %7520 = vmatpush2.msra.mxu0 0.0
      %7521 = vmatprep.subr.mxu0 0.0
      %7522 = vmatpush2.msra.mxu0 0.0
      %7523 = vmatprep.subr.mxu0 0.0
      %7524 = vmatpush2.msra.mxu0 0.0
      %7525 = vmatprep.subr.mxu0 0.0
      %7526 = vmatpush2.msra.mxu0 0.0
      %7527 = vmatprep.subr.mxu0 0.0
      %7528 = vmatpush2.msra.mxu0 0.0
      %7529 = vmatprep.subr.mxu0 0.0
      %7530 = vmatpush2.msra.mxu0 0.0
      %7531 = vmatprep.mubr.f32.mxu0 0.0
      %7532 = vmatmul.mubr.f32.gmra.mxu0 %v7372
      %v7533 = vpop.f32.mrf.mxu0
      %v7534 = vadd.f32 %v7449, %v7533
      %v7535 = vpop.f32.mrf.mxu0
      %7536 = vmatprep.mubr.f32.mxu0 0.0
      %7537 = vmatmul.mubr.f32.gmra.mxu0 %v7375
      %v7538 = vpop.f32.mrf.mxu0
      %v7539 = vadd.f32 %v7454, %v7538
      %v7540 = vpop.f32.mrf.mxu0
      %7541 = vmatprep.mubr.f32.mxu0 0.0
      %7542 = vmatmul.mubr.f32.gmra.mxu0 %v7378
      %v7543 = vpop.f32.mrf.mxu0
      %v7544 = vadd.f32 %v7459, %v7543
      %v7545 = vpop.f32.mrf.mxu0
      %7546 = vmatprep.mubr.f32.mxu0 0.0
      %7547 = vmatmul.mubr.f32.gmra.mxu0 %v7381
      %v7548 = vpop.f32.mrf.mxu0
      %v7549 = vadd.f32 %v7464, %v7548
      %v7550 = vpop.f32.mrf.mxu0
      %7551 = vdwg.mxu0
      %v7552 = vld [vmem:[%s13] sm:$0xff]
      %v7553 = vld [vmem:[%s13 + $0x8] sm:$0xff]
      %v7554 = vld [vmem:[%s13 + $0x10] sm:$0xff]
      %v7555 = vld [vmem:[%s13 + $0x18] sm:$0xff]
      %v7557 = vsel %vm894, %v7552, 0
      %v7560 = vsel %vm894, %v7553, 0
      %v7563 = vsel %vm894, %v7554, 0
      %v7566 = vsel %vm894, %v7555, 0
      %7568 = vmatprep.subr.mxu0 0.0
      %7569 = vmatpush1.msra.mxu0 0.0
      %7570 = vmatprep.subr.mxu0 0.0
      %7571 = vmatpush1.msra.mxu0 0.0
      %7572 = vmatprep.subr.mxu0 0.0
      %7573 = vmatpush1.msra.mxu0 0.0
      %7574 = vmatprep.subr.mxu0 0.0
      %7575 = vmatpush1.msra.mxu0 0.0
      %7576 = vmatprep.subr.mxu0 0.0
      %7577 = vmatpush1.msra.mxu0 0.0
      %7578 = vmatprep.subr.mxu0 0.0
      %7579 = vmatpush1.msra.mxu0 0.0
      %7580 = vmatprep.subr.mxu0 0.0
      %7581 = vmatpush1.msra.mxu0 0.0
      %7582 = vmatprep.subr.mxu0 0.0
      %7583 = vmatpush1.msra.mxu0 0.0
      %7584 = vmatprep.subr.mxu0 0.0
      %7585 = vmatpush1.msra.mxu0 0.0
      %7586 = vmatprep.subr.mxu0 0.0
      %7587 = vmatpush1.msra.mxu0 0.0
      %7588 = vmatprep.subr.mxu0 0.0
      %7589 = vmatpush1.msra.mxu0 0.0
      %7590 = vmatprep.subr.mxu0 0.0
      %7591 = vmatpush1.msra.mxu0 0.0
      %7592 = vmatprep.subr.mxu0 0.0
      %7593 = vmatpush1.msra.mxu0 %v7549
      %7594 = vmatprep.subr.mxu0 0.0
      %7595 = vmatpush1.msra.mxu0 %v7544
      %7596 = vmatprep.subr.mxu0 0.0
      %7597 = vmatpush1.msra.mxu0 %v7539
      %7598 = vmatprep.subr.mxu0 0.0
      %7599 = vmatpush1.msra.mxu0 %v7534
      %7600 = vmatprep.subr.mxu0 0.0
      %7601 = vmatpush2.msra.mxu0 0.0
      %7602 = vmatprep.subr.mxu0 0.0
      %7603 = vmatpush2.msra.mxu0 0.0
      %7604 = vmatprep.subr.mxu0 0.0
      %7605 = vmatpush2.msra.mxu0 0.0
      %7606 = vmatprep.subr.mxu0 0.0
      %7607 = vmatpush2.msra.mxu0 0.0
      %7608 = vmatprep.subr.mxu0 0.0
      %7609 = vmatpush2.msra.mxu0 0.0
      %7610 = vmatprep.subr.mxu0 0.0
      %7611 = vmatpush2.msra.mxu0 0.0
      %7612 = vmatprep.subr.mxu0 0.0
      %7613 = vmatpush2.msra.mxu0 0.0
      %7614 = vmatprep.subr.mxu0 0.0
      %7615 = vmatpush2.msra.mxu0 0.0
      %7616 = vmatprep.subr.mxu0 0.0
      %7617 = vmatpush2.msra.mxu0 0.0
      %7618 = vmatprep.subr.mxu0 0.0
      %7619 = vmatpush2.msra.mxu0 0.0
      %7620 = vmatprep.subr.mxu0 0.0
      %7621 = vmatpush2.msra.mxu0 0.0
      %7622 = vmatprep.subr.mxu0 0.0
      %7623 = vmatpush2.msra.mxu0 0.0
      %7624 = vmatprep.subr.mxu0 0.0
      %7625 = vmatpush2.msra.mxu0 0.0
      %7626 = vmatprep.subr.mxu0 0.0
      %7627 = vmatpush2.msra.mxu0 0.0
      %7628 = vmatprep.subr.mxu0 0.0
      %7629 = vmatpush2.msra.mxu0 0.0
      %7630 = vmatprep.subr.mxu0 0.0
      %7631 = vmatpush2.msra.mxu0 0.0
      %7632 = vmatprep.mubr.f32.mxu0 0.0
      %7633 = vmatmul.mubr.f32.gmra.mxu0 %v7557
      %v7634 = vpop.f32.mrf.mxu0
      %v7635 = vadd.f32 0.0, %v7634
      %v7636 = vpop.f32.mrf.mxu0
      %7637 = vmatprep.mubr.f32.mxu0 0.0
      %7638 = vmatmul.mubr.f32.gmra.mxu0 %v7560
      %v7639 = vpop.f32.mrf.mxu0
      %v7640 = vadd.f32 0.0, %v7639
      %v7641 = vpop.f32.mrf.mxu0
      %7642 = vmatprep.mubr.f32.mxu0 0.0
      %7643 = vmatmul.mubr.f32.gmra.mxu0 %v7563
      %v7644 = vpop.f32.mrf.mxu0
      %v7645 = vadd.f32 0.0, %v7644
      %v7646 = vpop.f32.mrf.mxu0
      %7647 = vmatprep.mubr.f32.mxu0 0.0
      %7648 = vmatmul.mubr.f32.gmra.mxu0 %v7566
      %v7649 = vpop.f32.mrf.mxu0
      %v7650 = vadd.f32 0.0, %v7649
      %v7651 = vpop.f32.mrf.mxu0
      %7652 = vdwg.mxu0
      %7654 = vset.pattern.permute.xlu0 0
      %7655 = vperm.xlu0 %7654, %v7635
      %v7656 = vpop.permute.xlu0 %7655
      %7659 = vset.pattern.permute.xlu0 0
      %7660 = vperm.xlu0 %7659, %v7640
      %v7661 = vpop.permute.xlu0 %7660
      %7664 = vset.pattern.permute.xlu0 0
      %7665 = vperm.xlu0 %7664, %v7645
      %v7666 = vpop.permute.xlu0 %7665
      %7669 = vset.pattern.permute.xlu0 0
      %7670 = vperm.xlu0 %7669, %v7650
      %v7671 = vpop.permute.xlu0 %7670
      %v7673 = vsub.f32 %v7370, %v7656
      %v7674 = vsub.f32 %v7371, %v7656
      %v7675 = vsub.f32 %v7372, %v7656
      %v7676 = vsub.f32 %v7373, %v7661
      %v7677 = vsub.f32 %v7374, %v7661
      %v7678 = vsub.f32 %v7375, %v7661
      %v7679 = vsub.f32 %v7376, %v7666
      %v7680 = vsub.f32 %v7377, %v7666
      %v7681 = vsub.f32 %v7378, %v7666
      %v7682 = vsub.f32 %v7379, %v7671
      %v7683 = vsub.f32 %v7380, %v7671
      %v7684 = vsub.f32 %v7381, %v7671
      %v7685 = vmul.f32 %v7673, %v7673
      %v7686 = vmul.f32 %v7674, %v7674
      %v7687 = vmul.f32 %v7675, %v7675
      %v7688 = vmul.f32 %v7676, %v7676
      %v7689 = vmul.f32 %v7677, %v7677
      %v7690 = vmul.f32 %v7678, %v7678
      %v7691 = vmul.f32 %v7679, %v7679
      %v7692 = vmul.f32 %v7680, %v7680
      %v7693 = vmul.f32 %v7681, %v7681
      %v7694 = vmul.f32 %v7682, %v7682
      %v7695 = vmul.f32 %v7683, %v7683
      %v7696 = vmul.f32 %v7684, %v7684
      %7697 = vmatprep.subr.mxu0 0.0
      %7698 = vmatpush1.msra.mxu0 %v719
      %7699 = vmatprep.subr.mxu0 0.0
      %7700 = vmatpush1.msra.mxu0 %v718
      %7701 = vmatprep.subr.mxu0 0.0
      %7702 = vmatpush1.msra.mxu0 %v717
      %7703 = vmatprep.subr.mxu0 0.0
      %7704 = vmatpush1.msra.mxu0 %v716
      %7705 = vmatprep.subr.mxu0 0.0
      %7706 = vmatpush1.msra.mxu0 %v715
      %7707 = vmatprep.subr.mxu0 0.0
      %7708 = vmatpush1.msra.mxu0 %v714
      %7709 = vmatprep.subr.mxu0 0.0
      %7710 = vmatpush1.msra.mxu0 %v713
      %7711 = vmatprep.subr.mxu0 0.0
      %7712 = vmatpush1.msra.mxu0 %v712
      %7713 = vmatprep.subr.mxu0 0.0
      %7714 = vmatpush1.msra.mxu0 %v711
      %7715 = vmatprep.subr.mxu0 0.0
      %7716 = vmatpush1.msra.mxu0 %v710
      %7717 = vmatprep.subr.mxu0 0.0
      %7718 = vmatpush1.msra.mxu0 %v709
      %7719 = vmatprep.subr.mxu0 0.0
      %7720 = vmatpush1.msra.mxu0 %v708
      %7721 = vmatprep.subr.mxu0 0.0
      %7722 = vmatpush1.msra.mxu0 %v707
      %7723 = vmatprep.subr.mxu0 0.0
      %7724 = vmatpush1.msra.mxu0 %v706
      %7725 = vmatprep.subr.mxu0 0.0
      %7726 = vmatpush1.msra.mxu0 %v705
      %7727 = vmatprep.subr.mxu0 0.0
      %7728 = vmatpush1.msra.mxu0 %v704
      %7729 = vmatprep.subr.mxu0 0.0
      %7730 = vmatpush2.msra.mxu0 %v735
      %7731 = vmatprep.subr.mxu0 0.0
      %7732 = vmatpush2.msra.mxu0 %v734
      %7733 = vmatprep.subr.mxu0 0.0
      %7734 = vmatpush2.msra.mxu0 %v733
      %7735 = vmatprep.subr.mxu0 0.0
      %7736 = vmatpush2.msra.mxu0 %v732
      %7737 = vmatprep.subr.mxu0 0.0
      %7738 = vmatpush2.msra.mxu0 %v731
      %7739 = vmatprep.subr.mxu0 0.0
      %7740 = vmatpush2.msra.mxu0 %v730
      %7741 = vmatprep.subr.mxu0 0.0
      %7742 = vmatpush2.msra.mxu0 %v729
      %7743 = vmatprep.subr.mxu0 0.0
      %7744 = vmatpush2.msra.mxu0 %v728
      %7745 = vmatprep.subr.mxu0 0.0
      %7746 = vmatpush2.msra.mxu0 %v727
      %7747 = vmatprep.subr.mxu0 0.0
      %7748 = vmatpush2.msra.mxu0 %v726
      %7749 = vmatprep.subr.mxu0 0.0
      %7750 = vmatpush2.msra.mxu0 %v725
      %7751 = vmatprep.subr.mxu0 0.0
      %7752 = vmatpush2.msra.mxu0 %v724
      %7753 = vmatprep.subr.mxu0 0.0
      %7754 = vmatpush2.msra.mxu0 %v723
      %7755 = vmatprep.subr.mxu0 0.0
      %7756 = vmatpush2.msra.mxu0 %v722
      %7757 = vmatprep.subr.mxu0 0.0
      %7758 = vmatpush2.msra.mxu0 %v721
      %7759 = vmatprep.subr.mxu0 0.0
      %7760 = vmatpush2.msra.mxu0 %v720
      %7761 = vmatprep.mubr.f32.mxu0 %v7686
      %7762 = vmatmul.mubr.f32.gmra.mxu0 %v7685
      %v7763 = vpop.f32.mrf.mxu0
      %v7764 = vadd.f32 0.0, %v7763
      %v7765 = vpop.f32.mrf.mxu0
      %7766 = vmatprep.mubr.f32.mxu0 %v7689
      %7767 = vmatmul.mubr.f32.gmra.mxu0 %v7688
      %v7768 = vpop.f32.mrf.mxu0
      %v7769 = vadd.f32 0.0, %v7768
      %v7770 = vpop.f32.mrf.mxu0
      %7771 = vmatprep.mubr.f32.mxu0 %v7692
      %7772 = vmatmul.mubr.f32.gmra.mxu0 %v7691
      %v7773 = vpop.f32.mrf.mxu0
      %v7774 = vadd.f32 0.0, %v7773
      %v7775 = vpop.f32.mrf.mxu0
      %7776 = vmatprep.mubr.f32.mxu0 %v7695
      %7777 = vmatmul.mubr.f32.gmra.mxu0 %v7694
      %v7778 = vpop.f32.mrf.mxu0
      %v7779 = vadd.f32 0.0, %v7778
      %v7780 = vpop.f32.mrf.mxu0
      %7781 = vdwg.mxu0
      %7782 = vmatprep.subr.mxu0 0.0
      %7783 = vmatpush1.msra.mxu0 %v751
      %7784 = vmatprep.subr.mxu0 0.0
      %7785 = vmatpush1.msra.mxu0 %v750
      %7786 = vmatprep.subr.mxu0 0.0
      %7787 = vmatpush1.msra.mxu0 %v749
      %7788 = vmatprep.subr.mxu0 0.0
      %7789 = vmatpush1.msra.mxu0 %v748
      %7790 = vmatprep.subr.mxu0 0.0
      %7791 = vmatpush1.msra.mxu0 %v747
      %7792 = vmatprep.subr.mxu0 0.0
      %7793 = vmatpush1.msra.mxu0 %v746
      %7794 = vmatprep.subr.mxu0 0.0
      %7795 = vmatpush1.msra.mxu0 %v745
      %7796 = vmatprep.subr.mxu0 0.0
      %7797 = vmatpush1.msra.mxu0 %v744
      %7798 = vmatprep.subr.mxu0 0.0
      %7799 = vmatpush1.msra.mxu0 %v743
      %7800 = vmatprep.subr.mxu0 0.0
      %7801 = vmatpush1.msra.mxu0 %v742
      %7802 = vmatprep.subr.mxu0 0.0
      %7803 = vmatpush1.msra.mxu0 %v741
      %7804 = vmatprep.subr.mxu0 0.0
      %7805 = vmatpush1.msra.mxu0 %v740
      %7806 = vmatprep.subr.mxu0 0.0
      %7807 = vmatpush1.msra.mxu0 %v739
      %7808 = vmatprep.subr.mxu0 0.0
      %7809 = vmatpush1.msra.mxu0 %v738
      %7810 = vmatprep.subr.mxu0 0.0
      %7811 = vmatpush1.msra.mxu0 %v737
      %7812 = vmatprep.subr.mxu0 0.0
      %7813 = vmatpush1.msra.mxu0 %v736
      %7814 = vmatprep.subr.mxu0 0.0
      %7815 = vmatpush2.msra.mxu0 0.0
      %7816 = vmatprep.subr.mxu0 0.0
      %7817 = vmatpush2.msra.mxu0 0.0
      %7818 = vmatprep.subr.mxu0 0.0
      %7819 = vmatpush2.msra.mxu0 0.0
      %7820 = vmatprep.subr.mxu0 0.0
      %7821 = vmatpush2.msra.mxu0 0.0
      %7822 = vmatprep.subr.mxu0 0.0
      %7823 = vmatpush2.msra.mxu0 0.0
      %7824 = vmatprep.subr.mxu0 0.0
      %7825 = vmatpush2.msra.mxu0 0.0
      %7826 = vmatprep.subr.mxu0 0.0
      %7827 = vmatpush2.msra.mxu0 0.0
      %7828 = vmatprep.subr.mxu0 0.0
      %7829 = vmatpush2.msra.mxu0 0.0
      %7830 = vmatprep.subr.mxu0 0.0
      %7831 = vmatpush2.msra.mxu0 0.0
      %7832 = vmatprep.subr.mxu0 0.0
      %7833 = vmatpush2.msra.mxu0 0.0
      %7834 = vmatprep.subr.mxu0 0.0
      %7835 = vmatpush2.msra.mxu0 0.0
      %7836 = vmatprep.subr.mxu0 0.0
      %7837 = vmatpush2.msra.mxu0 0.0
      %7838 = vmatprep.subr.mxu0 0.0
      %7839 = vmatpush2.msra.mxu0 0.0
      %7840 = vmatprep.subr.mxu0 0.0
      %7841 = vmatpush2.msra.mxu0 0.0
      %7842 = vmatprep.subr.mxu0 0.0
      %7843 = vmatpush2.msra.mxu0 0.0
      %7844 = vmatprep.subr.mxu0 0.0
      %7845 = vmatpush2.msra.mxu0 0.0
      %7846 = vmatprep.mubr.f32.mxu0 0.0
      %7847 = vmatmul.mubr.f32.gmra.mxu0 %v7687
      %v7848 = vpop.f32.mrf.mxu0
      %v7849 = vadd.f32 %v7764, %v7848
      %v7850 = vpop.f32.mrf.mxu0
      %7851 = vmatprep.mubr.f32.mxu0 0.0
      %7852 = vmatmul.mubr.f32.gmra.mxu0 %v7690
      %v7853 = vpop.f32.mrf.mxu0
      %v7854 = vadd.f32 %v7769, %v7853
      %v7855 = vpop.f32.mrf.mxu0
      %7856 = vmatprep.mubr.f32.mxu0 0.0
      %7857 = vmatmul.mubr.f32.gmra.mxu0 %v7693
      %v7858 = vpop.f32.mrf.mxu0
      %v7859 = vadd.f32 %v7774, %v7858
      %v7860 = vpop.f32.mrf.mxu0
      %7861 = vmatprep.mubr.f32.mxu0 0.0
      %7862 = vmatmul.mubr.f32.gmra.mxu0 %v7696
      %v7863 = vpop.f32.mrf.mxu0
      %v7864 = vadd.f32 %v7779, %v7863
      %v7865 = vpop.f32.mrf.mxu0
      %7866 = vdwg.mxu0
      %7867 = vmatprep.subr.mxu0 0.0
      %7868 = vmatpush1.msra.mxu0 0.0
      %7869 = vmatprep.subr.mxu0 0.0
      %7870 = vmatpush1.msra.mxu0 0.0
      %7871 = vmatprep.subr.mxu0 0.0
      %7872 = vmatpush1.msra.mxu0 0.0
      %7873 = vmatprep.subr.mxu0 0.0
      %7874 = vmatpush1.msra.mxu0 0.0
      %7875 = vmatprep.subr.mxu0 0.0
      %7876 = vmatpush1.msra.mxu0 0.0
      %7877 = vmatprep.subr.mxu0 0.0
      %7878 = vmatpush1.msra.mxu0 0.0
      %7879 = vmatprep.subr.mxu0 0.0
      %7880 = vmatpush1.msra.mxu0 0.0
      %7881 = vmatprep.subr.mxu0 0.0
      %7882 = vmatpush1.msra.mxu0 0.0
      %7883 = vmatprep.subr.mxu0 0.0
      %7884 = vmatpush1.msra.mxu0 0.0
      %7885 = vmatprep.subr.mxu0 0.0
      %7886 = vmatpush1.msra.mxu0 0.0
      %7887 = vmatprep.subr.mxu0 0.0
      %7888 = vmatpush1.msra.mxu0 0.0
      %7889 = vmatprep.subr.mxu0 0.0
      %7890 = vmatpush1.msra.mxu0 0.0
      %7891 = vmatprep.subr.mxu0 0.0
      %7892 = vmatpush1.msra.mxu0 %v7864
      %7893 = vmatprep.subr.mxu0 0.0
      %7894 = vmatpush1.msra.mxu0 %v7859
      %7895 = vmatprep.subr.mxu0 0.0
      %7896 = vmatpush1.msra.mxu0 %v7854
      %7897 = vmatprep.subr.mxu0 0.0
      %7898 = vmatpush1.msra.mxu0 %v7849
      %7899 = vmatprep.subr.mxu0 0.0
      %7900 = vmatpush2.msra.mxu0 0.0
      %7901 = vmatprep.subr.mxu0 0.0
      %7902 = vmatpush2.msra.mxu0 0.0
      %7903 = vmatprep.subr.mxu0 0.0
      %7904 = vmatpush2.msra.mxu0 0.0
      %7905 = vmatprep.subr.mxu0 0.0
      %7906 = vmatpush2.msra.mxu0 0.0
      %7907 = vmatprep.subr.mxu0 0.0
      %7908 = vmatpush2.msra.mxu0 0.0
      %7909 = vmatprep.subr.mxu0 0.0
      %7910 = vmatpush2.msra.mxu0 0.0
      %7911 = vmatprep.subr.mxu0 0.0
      %7912 = vmatpush2.msra.mxu0 0.0
      %7913 = vmatprep.subr.mxu0 0.0
      %7914 = vmatpush2.msra.mxu0 0.0
      %7915 = vmatprep.subr.mxu0 0.0
      %7916 = vmatpush2.msra.mxu0 0.0
      %7917 = vmatprep.subr.mxu0 0.0
      %7918 = vmatpush2.msra.mxu0 0.0
      %7919 = vmatprep.subr.mxu0 0.0
      %7920 = vmatpush2.msra.mxu0 0.0
      %7921 = vmatprep.subr.mxu0 0.0
      %7922 = vmatpush2.msra.mxu0 0.0
      %7923 = vmatprep.subr.mxu0 0.0
      %7924 = vmatpush2.msra.mxu0 0.0
      %7925 = vmatprep.subr.mxu0 0.0
      %7926 = vmatpush2.msra.mxu0 0.0
      %7927 = vmatprep.subr.mxu0 0.0
      %7928 = vmatpush2.msra.mxu0 0.0
      %7929 = vmatprep.subr.mxu0 0.0
      %7930 = vmatpush2.msra.mxu0 0.0
      %7931 = vmatprep.mubr.f32.mxu0 0.0
      %7932 = vmatmul.mubr.f32.gmra.mxu0 %v7557
      %v7933 = vpop.f32.mrf.mxu0
      %v7934 = vadd.f32 0.0, %v7933
      %v7935 = vpop.f32.mrf.mxu0
      %7936 = vmatprep.mubr.f32.mxu0 0.0
      %7937 = vmatmul.mubr.f32.gmra.mxu0 %v7560
      %v7938 = vpop.f32.mrf.mxu0
      %v7939 = vadd.f32 0.0, %v7938
      %v7940 = vpop.f32.mrf.mxu0
      %7941 = vmatprep.mubr.f32.mxu0 0.0
      %7942 = vmatmul.mubr.f32.gmra.mxu0 %v7563
      %v7943 = vpop.f32.mrf.mxu0
      %v7944 = vadd.f32 0.0, %v7943
      %v7945 = vpop.f32.mrf.mxu0
      %7946 = vmatprep.mubr.f32.mxu0 0.0
      %7947 = vmatmul.mubr.f32.gmra.mxu0 %v7566
      %v7948 = vpop.f32.mrf.mxu0
      %v7949 = vadd.f32 0.0, %v7948
      %v7950 = vpop.f32.mrf.mxu0
      %7951 = vdwg.mxu0
      %v7952 = vadd.f32 %v7934, 1e-05
      %v7953 = vadd.f32 %v7939, 1e-05
      %v7954 = vadd.f32 %v7944, 1e-05
      %v7955 = vadd.f32 %v7949, 1e-05
      %v7956 = vrsqrt.pop %v7952
      %v7957 = vrsqrt.pop %v7953
      %v7958 = vrsqrt.pop %v7954
      %v7959 = vrsqrt.pop %v7955
      %v7960 = vld [vmem:[%s11] sm:$0xff]
      %v7961 = vld [vmem:[%s11 + $0x8] sm:$0xff]
      %v7962 = vld [vmem:[%s11 + $0x10] sm:$0xff]
      %v7963 = vld [vmem:[%s11 + $0x18] sm:$0xff]
      %v7964 = vmul.f32 %v7956, %v7960
      %v7965 = vmul.f32 %v7957, %v7961
      %v7966 = vmul.f32 %v7958, %v7962
      %v7967 = vmul.f32 %v7959, %v7963
      %7969 = vset.pattern.permute.xlu0 0
      %7970 = vperm.xlu0 %7969, %v7964
      %v7971 = vpop.permute.xlu0 %7970
      %7974 = vset.pattern.permute.xlu0 0
      %7975 = vperm.xlu0 %7974, %v7965
      %v7976 = vpop.permute.xlu0 %7975
      %7979 = vset.pattern.permute.xlu0 0
      %7980 = vperm.xlu0 %7979, %v7966
      %v7981 = vpop.permute.xlu0 %7980
      %7984 = vset.pattern.permute.xlu0 0
      %7985 = vperm.xlu0 %7984, %v7967
      %v7986 = vpop.permute.xlu0 %7985
      %v7988 = vmul.f32 %v7673, %v7971
      %v7989 = vmul.f32 %v7674, %v7971
      %v7990 = vmul.f32 %v7675, %v7971
      %v7991 = vmul.f32 %v7676, %v7976
      %v7992 = vmul.f32 %v7677, %v7976
      %v7993 = vmul.f32 %v7678, %v7976
      %v7994 = vmul.f32 %v7679, %v7981
      %v7995 = vmul.f32 %v7680, %v7981
      %v7996 = vmul.f32 %v7681, %v7981
      %v7997 = vmul.f32 %v7682, %v7986
      %v7998 = vmul.f32 %v7683, %v7986
      %v7999 = vmul.f32 %v7684, %v7986
      %v8000 = vld [vmem:[%s12] sm:$0xff]
      %v8001 = vld [vmem:[%s12 + $0x8] sm:$0xff]
      %v8002 = vld [vmem:[%s12 + $0x10] sm:$0xff]
      %v8003 = vld [vmem:[%s12 + $0x18] sm:$0xff]
      %8005 = vset.pattern.permute.xlu0 0
      %8006 = vperm.xlu0 %8005, %v8000
      %v8007 = vpop.permute.xlu0 %8006
      %8010 = vset.pattern.permute.xlu0 0
      %8011 = vperm.xlu0 %8010, %v8001
      %v8012 = vpop.permute.xlu0 %8011
      %8015 = vset.pattern.permute.xlu0 0
      %8016 = vperm.xlu0 %8015, %v8002
      %v8017 = vpop.permute.xlu0 %8016
      %8020 = vset.pattern.permute.xlu0 0
      %8021 = vperm.xlu0 %8020, %v8003
      %v8022 = vpop.permute.xlu0 %8021
      %v8024 = vadd.f32 %v7988, %v8007
      %v8025 = vadd.f32 %v7989, %v8007
      %v8026 = vadd.f32 %v7990, %v8007
      %v8027 = vadd.f32 %v7991, %v8012
      %v8028 = vadd.f32 %v7992, %v8012
      %v8029 = vadd.f32 %v7993, %v8012
      %v8030 = vadd.f32 %v7994, %v8017
      %v8031 = vadd.f32 %v7995, %v8017
      %v8032 = vadd.f32 %v7996, %v8017
      %v8033 = vadd.f32 %v7997, %v8022
      %v8034 = vadd.f32 %v7998, %v8022
      %v8035 = vadd.f32 %v7999, %v8022
      %v8036 = vadd.f32 %v8024, %v5837
      %v8037 = vadd.f32 %v8025, %v5838
      %v8038 = vadd.f32 %v8026, %v5839
      %v8039 = vadd.f32 %v8027, %v5840
      %v8040 = vadd.f32 %v8028, %v5841
      %v8041 = vadd.f32 %v8029, %v5842
      %v8042 = vadd.f32 %v8030, %v5843
      %v8043 = vadd.f32 %v8031, %v5844
      %v8044 = vadd.f32 %v8032, %v5845
      %v8045 = vadd.f32 %v8036, %v5867
      %v8046 = vadd.f32 %v8037, %v5868
      %v8047 = vadd.f32 %v8038, %v5869
      %v8048 = vxor.u32 %v8045, 2147483648
      %v8049 = vxor.u32 %v8046, 2147483648
      %v8050 = vxor.u32 %v8047, 2147483648
      %v8051 = vmul.f32 %v8048, 1.442695
      %v8052 = vpow.pop %v8051
      %v8053 = vmul.f32 %v8049, 1.442695
      %v8054 = vpow.pop %v8053
      %v8055 = vmul.f32 %v8050, 1.442695
      %v8056 = vpow.pop %v8055
      %v8057 = vadd.f32 %v8052, 1.0
      %v8058 = vadd.f32 %v8054, 1.0
      %v8059 = vadd.f32 %v8056, 1.0
      %v8060 = vrcp.pop %v8057
      %v8061 = vmul.f32 1.0, %v8060
      %v8062 = vrcp.pop %v8058
      %v8063 = vmul.f32 1.0, %v8062
      %v8064 = vrcp.pop %v8059
      %v8065 = vmul.f32 1.0, %v8064
      %v8066 = vtanh.pop %v8039
      %v8067 = vtanh.pop %v8040
      %v8068 = vtanh.pop %v8041
      %v8069 = vadd.f32 %v8042, %v5870
      %v8070 = vadd.f32 %v8043, %v5871
      %v8071 = vadd.f32 %v8044, %v5872
      %v8072 = vadd.f32 %v8069, 1.0
      %v8073 = vadd.f32 %v8070, 1.0
      %v8074 = vadd.f32 %v8071, 1.0
      %v8075 = vxor.u32 %v8072, 2147483648
      %v8076 = vxor.u32 %v8073, 2147483648
      %v8077 = vxor.u32 %v8074, 2147483648
      %v8078 = vmul.f32 %v8075, 1.442695
      %v8079 = vpow.pop %v8078
      %v8080 = vmul.f32 %v8076, 1.442695
      %v8081 = vpow.pop %v8080
      %v8082 = vmul.f32 %v8077, 1.442695
      %v8083 = vpow.pop %v8082
      %v8084 = vadd.f32 %v8079, 1.0
      %v8085 = vadd.f32 %v8081, 1.0
      %v8086 = vadd.f32 %v8083, 1.0
      %v8087 = vrcp.pop %v8084
      %v8088 = vmul.f32 1.0, %v8087
      %v8089 = vrcp.pop %v8085
      %v8090 = vmul.f32 1.0, %v8089
      %v8091 = vrcp.pop %v8086
      %v8092 = vmul.f32 1.0, %v8091
      %v8093 = vtanh.pop %v5873
      %v8094 = vtanh.pop %v5874
      %v8095 = vtanh.pop %v5875
      %v8096 = vmul.f32 %v8088, %v8093
      %v8097 = vmul.f32 %v8090, %v8094
      %v8098 = vmul.f32 %v8092, %v8095
      %v8099 = vmul.f32 %v8061, %v8066
      %v8100 = vmul.f32 %v8063, %v8067
      %v8101 = vmul.f32 %v8065, %v8068
      %v8102 = vadd.f32 %v8096, %v8099
      %v8103 = vadd.f32 %v8097, %v8100
      %v8104 = vadd.f32 %v8098, %v8101
      %v8105 = vmul.f32 %v8102, %v5949
      %v8106 = vmul.f32 %v8103, %v5953
      %v8107 = vmul.f32 %v8104, %v5957
      %v8108 = vpack.c.bf16 %v8105, %v5961
      %v8109 = vpack.c.bf16 %v8106, %v5962
      %v8110 = vpack.c.bf16 %v8107, %v5963
      %8114 = vrot.lane.b32.xlu0 %v8108, 19
      %v8115 = vpop.permute.xlu0 %8114
      %8116 = vrot.lane.b32.xlu0 %v8109, 19
      %v8117 = vpop.permute.xlu0 %8116
      %8118 = vrot.lane.b32.xlu0 %v8110, 19
      %v8119 = vpop.permute.xlu0 %8118
      %v8120 = vsel %vm5976, %v8115, %v8117
      %v8121 = vsel %vm5976, %v8117, %v8119
      %v8125 = vsel %vm5979, 0, %v8115
      %v8128 = vsel %vm5979, %v8119, 0
      %v8129 = vld [vmem:[%s14] sm:$0xf]
      %v8130 = vld [vmem:[%s14 + $0x4] sm:$0xf]
      %s8131 = scalar_lea.vmem %s14, 8
      %v8132 = vld [vmem:[%s8131] sm:$0xf]
      %v8133 = vld [vmem:[%s8131 + $0x4] sm:$0xf]
      %v8136 = vunpack.c.l.b16 %v8132
      %v8137 = vunpack.c.l.b16 %v8133
      %v8138 = vpack.c.b16 %v8137, %v8136
      %8141 = vrot.lane.b32.xlu0 %v8125, 127
      %v8142 = vpop.permute.xlu0 %8141
      %8143 = vrot.lane.b32.xlu0 %v8120, 127
      %v8144 = vpop.permute.xlu0 %8143
      %8145 = vrot.lane.b32.xlu0 %v8121, 127
      %v8146 = vpop.permute.xlu0 %8145
      %8147 = vrot.lane.b32.xlu0 %v8128, 127
      %v8148 = vpop.permute.xlu0 %8147
      %v8149 = vsel %vm881, %v8142, %v8144
      %v8150 = vsel %vm881, %v8144, %v8146
      %v8151 = vsel %vm881, %v8146, %v8148
      %vm8155 = vcmask 130048
      %v8157 = vsel %vm8155, %v8138, 0
      %8159 = vmatprep.subr.bf16.mxu0 0
      %8160 = vmatpush1.bf16.msra.mxu0 0
      %8161 = vmatprep.subr.bf16.mxu0 0
      %8162 = vmatpush1.bf16.msra.mxu0 0
      %8163 = vmatprep.subr.bf16.mxu0 0
      %8164 = vmatpush1.bf16.msra.mxu0 0
      %8165 = vmatprep.subr.bf16.mxu0 0
      %8166 = vmatpush1.bf16.msra.mxu0 0
      %8167 = vmatprep.subr.bf16.mxu0 0
      %8168 = vmatpush1.bf16.msra.mxu0 0
      %8169 = vmatprep.subr.bf16.mxu0 0
      %8170 = vmatpush1.bf16.msra.mxu0 0
      %8171 = vmatprep.subr.bf16.mxu0 0
      %8172 = vmatpush1.bf16.msra.mxu0 0
      %8173 = vmatprep.subr.bf16.mxu0 %v8150
      %8174 = vmatpush1.bf16.msra.mxu0 %v8149
      %8175 = vmatprep.subr.bf16.mxu0 0
      %8176 = vmatpush2.bf16.msra.mxu0 0
      %8177 = vmatprep.subr.bf16.mxu0 0
      %8178 = vmatpush2.bf16.msra.mxu0 0
      %8179 = vmatprep.subr.bf16.mxu0 0
      %8180 = vmatpush2.bf16.msra.mxu0 0
      %8181 = vmatprep.subr.bf16.mxu0 0
      %8182 = vmatpush2.bf16.msra.mxu0 0
      %8183 = vmatprep.subr.bf16.mxu0 0
      %8184 = vmatpush2.bf16.msra.mxu0 0
      %8185 = vmatprep.subr.bf16.mxu0 0
      %8186 = vmatpush2.bf16.msra.mxu0 0
      %8187 = vmatprep.subr.bf16.mxu0 0
      %8188 = vmatpush2.bf16.msra.mxu0 0
      %8189 = vmatprep.subr.bf16.mxu0 0
      %8190 = vmatpush2.bf16.msra.mxu0 0
      %8191 = vmatprep.mubr.bf16.mxu0 0
      %8192 = vmatmul.mubr.bf16.gmra.mxu0 %v8157
      %v8193 = vpop.f32.mrf.mxu0
      %v8194 = vadd.f32 0.0, %v8193
      %v8195 = vpop.f32.mrf.mxu0
      %v8196 = vadd.f32 0.0, %v8195
      %v8197 = vpop.f32.mrf.mxu0
      %v8198 = vadd.f32 0.0, %v8197
      %v8199 = vpop.f32.mrf.mxu0
      %v8200 = vadd.f32 0.0, %v8199
      %8201 = vdwg.mxu0
      %8202 = vmatprep.subr.bf16.mxu0 0
      %8203 = vmatpush1.bf16.msra.mxu0 0
      %8204 = vmatprep.subr.bf16.mxu0 0
      %8205 = vmatpush1.bf16.msra.mxu0 0
      %8206 = vmatprep.subr.bf16.mxu0 0
      %8207 = vmatpush1.bf16.msra.mxu0 0
      %8208 = vmatprep.subr.bf16.mxu0 0
      %8209 = vmatpush1.bf16.msra.mxu0 0
      %8210 = vmatprep.subr.bf16.mxu0 0
      %8211 = vmatpush1.bf16.msra.mxu0 0
      %8212 = vmatprep.subr.bf16.mxu0 0
      %8213 = vmatpush1.bf16.msra.mxu0 0
      %8214 = vmatprep.subr.bf16.mxu0 0
      %8215 = vmatpush1.bf16.msra.mxu0 0
      %8216 = vmatprep.subr.bf16.mxu0 0
      %8217 = vmatpush1.bf16.msra.mxu0 %v8151
      %8218 = vmatprep.subr.bf16.mxu0 0
      %8219 = vmatpush2.bf16.msra.mxu0 0
      %8220 = vmatprep.subr.bf16.mxu0 0
      %8221 = vmatpush2.bf16.msra.mxu0 0
      %8222 = vmatprep.subr.bf16.mxu0 0
      %8223 = vmatpush2.bf16.msra.mxu0 0
      %8224 = vmatprep.subr.bf16.mxu0 0
      %8225 = vmatpush2.bf16.msra.mxu0 0
      %8226 = vmatprep.subr.bf16.mxu0 0
      %8227 = vmatpush2.bf16.msra.mxu0 0
      %8228 = vmatprep.subr.bf16.mxu0 0
      %8229 = vmatpush2.bf16.msra.mxu0 0
      %8230 = vmatprep.subr.bf16.mxu0 0
      %8231 = vmatpush2.bf16.msra.mxu0 0
      %8232 = vmatprep.subr.bf16.mxu0 0
      %8233 = vmatpush2.bf16.msra.mxu0 0
      %8234 = vmatprep.mubr.bf16.mxu0 0
      %8235 = vmatmul.mubr.bf16.gmra.mxu0 %v8157
      %v8236 = vpop.f32.mrf.mxu0
      %v8237 = vadd.f32 0.0, %v8236
      %v8238 = vpop.f32.mrf.mxu0
      %v8239 = vpop.f32.mrf.mxu0
      %v8240 = vadd.f32 0.0, %v8239
      %v8241 = vpop.f32.mrf.mxu0
      %8242 = vdwg.mxu0
      %v8245 = vunpack.c.l.b16 %v8129
      %v8246 = vunpack.c.l.b16 %v8130
      %v8247 = vpack.c.b16 %v8246, %v8245
      %v8249 = vsel %vm8155, %v8247, 0
      %8251 = vmatprep.subr.bf16.mxu0 0
      %8252 = vmatpush1.bf16.msra.mxu0 0
      %8253 = vmatprep.subr.bf16.mxu0 0
      %8254 = vmatpush1.bf16.msra.mxu0 0
      %8255 = vmatprep.subr.bf16.mxu0 0
      %8256 = vmatpush1.bf16.msra.mxu0 0
      %8257 = vmatprep.subr.bf16.mxu0 0
      %8258 = vmatpush1.bf16.msra.mxu0 0
      %8259 = vmatprep.subr.bf16.mxu0 0
      %8260 = vmatpush1.bf16.msra.mxu0 0
      %8261 = vmatprep.subr.bf16.mxu0 0
      %8262 = vmatpush1.bf16.msra.mxu0 0
      %8263 = vmatprep.subr.bf16.mxu0 0
      %8264 = vmatpush1.bf16.msra.mxu0 0
      %8265 = vmatprep.subr.bf16.mxu0 %v8120
      %8266 = vmatpush1.bf16.msra.mxu0 %v8125
      %8267 = vmatprep.subr.bf16.mxu0 0
      %8268 = vmatpush2.bf16.msra.mxu0 0
      %8269 = vmatprep.subr.bf16.mxu0 0
      %8270 = vmatpush2.bf16.msra.mxu0 0
      %8271 = vmatprep.subr.bf16.mxu0 0
      %8272 = vmatpush2.bf16.msra.mxu0 0
      %8273 = vmatprep.subr.bf16.mxu0 0
      %8274 = vmatpush2.bf16.msra.mxu0 0
      %8275 = vmatprep.subr.bf16.mxu0 0
      %8276 = vmatpush2.bf16.msra.mxu0 0
      %8277 = vmatprep.subr.bf16.mxu0 0
      %8278 = vmatpush2.bf16.msra.mxu0 0
      %8279 = vmatprep.subr.bf16.mxu0 0
      %8280 = vmatpush2.bf16.msra.mxu0 0
      %8281 = vmatprep.subr.bf16.mxu0 0
      %8282 = vmatpush2.bf16.msra.mxu0 0
      %8283 = vmatprep.mubr.bf16.mxu0 0
      %8284 = vmatmul.mubr.bf16.gmra.mxu0 %v8249
      %v8285 = vpop.f32.mrf.mxu0
      %v8286 = vadd.f32 %v8194, %v8285
      %v8287 = vpop.f32.mrf.mxu0
      %v8288 = vadd.f32 %v8196, %v8287
      %v8289 = vpop.f32.mrf.mxu0
      %v8290 = vadd.f32 %v8198, %v8289
      %v8291 = vpop.f32.mrf.mxu0
      %v8292 = vadd.f32 %v8200, %v8291
      %8293 = vdwg.mxu0
      %8294 = vmatprep.subr.bf16.mxu0 0
      %8295 = vmatpush1.bf16.msra.mxu0 0
      %8296 = vmatprep.subr.bf16.mxu0 0
      %8297 = vmatpush1.bf16.msra.mxu0 0
      %8298 = vmatprep.subr.bf16.mxu0 0
      %8299 = vmatpush1.bf16.msra.mxu0 0
      %8300 = vmatprep.subr.bf16.mxu0 0
      %8301 = vmatpush1.bf16.msra.mxu0 0
      %8302 = vmatprep.subr.bf16.mxu0 0
      %8303 = vmatpush1.bf16.msra.mxu0 0
      %8304 = vmatprep.subr.bf16.mxu0 0
      %8305 = vmatpush1.bf16.msra.mxu0 0
      %8306 = vmatprep.subr.bf16.mxu0 0
      %8307 = vmatpush1.bf16.msra.mxu0 0
      %8308 = vmatprep.subr.bf16.mxu0 0
      %8309 = vmatpush1.bf16.msra.mxu0 %v8121
      %8310 = vmatprep.subr.bf16.mxu0 0
      %8311 = vmatpush2.bf16.msra.mxu0 0
      %8312 = vmatprep.subr.bf16.mxu0 0
      %8313 = vmatpush2.bf16.msra.mxu0 0
      %8314 = vmatprep.subr.bf16.mxu0 0
      %8315 = vmatpush2.bf16.msra.mxu0 0
      %8316 = vmatprep.subr.bf16.mxu0 0
      %8317 = vmatpush2.bf16.msra.mxu0 0
      %8318 = vmatprep.subr.bf16.mxu0 0
      %8319 = vmatpush2.bf16.msra.mxu0 0
      %8320 = vmatprep.subr.bf16.mxu0 0
      %8321 = vmatpush2.bf16.msra.mxu0 0
      %8322 = vmatprep.subr.bf16.mxu0 0
      %8323 = vmatpush2.bf16.msra.mxu0 0
      %8324 = vmatprep.subr.bf16.mxu0 0
      %8325 = vmatpush2.bf16.msra.mxu0 0
      %8326 = vmatprep.mubr.bf16.mxu0 0
      %8327 = vmatmul.mubr.bf16.gmra.mxu0 %v8249
      %v8328 = vpop.f32.mrf.mxu0
      %v8329 = vadd.f32 %v8237, %v8328
      %v8330 = vpop.f32.mrf.mxu0
      %v8331 = vpop.f32.mrf.mxu0
      %v8332 = vadd.f32 %v8240, %v8331
      %v8333 = vpop.f32.mrf.mxu0
      %8334 = vdwg.mxu0
      %s8335 = scalar_lea.vmem %s14, 16
      %v8336 = vld [vmem:[%s8335] sm:$0xf]
      %v8337 = vld [vmem:[%s8335 + $0x4] sm:$0xf]
      %v8340 = vunpack.c.l.b16 %v8336
      %v8341 = vunpack.c.l.b16 %v8337
      %v8342 = vpack.c.b16 %v8341, %v8340
      %8343 = vrot.lane.b32.xlu0 %v8125, 126
      %v8344 = vpop.permute.xlu0 %8343
      %8345 = vrot.lane.b32.xlu0 %v8120, 126
      %v8346 = vpop.permute.xlu0 %8345
      %8347 = vrot.lane.b32.xlu0 %v8121, 126
      %v8348 = vpop.permute.xlu0 %8347
      %8349 = vrot.lane.b32.xlu0 %v8128, 126
      %v8350 = vpop.permute.xlu0 %8349
      %v8351 = vsel %vm1519, %v8344, %v8346
      %v8352 = vsel %vm1519, %v8346, %v8348
      %v8353 = vsel %vm1519, %v8348, %v8350
      %v8358 = vsel %vm8155, %v8342, 0
      %8360 = vmatprep.subr.bf16.mxu0 0
      %8361 = vmatpush1.bf16.msra.mxu0 0
      %8362 = vmatprep.subr.bf16.mxu0 0
      %8363 = vmatpush1.bf16.msra.mxu0 0
      %8364 = vmatprep.subr.bf16.mxu0 0
      %8365 = vmatpush1.bf16.msra.mxu0 0
      %8366 = vmatprep.subr.bf16.mxu0 0
      %8367 = vmatpush1.bf16.msra.mxu0 0
      %8368 = vmatprep.subr.bf16.mxu0 0
      %8369 = vmatpush1.bf16.msra.mxu0 0
      %8370 = vmatprep.subr.bf16.mxu0 0
      %8371 = vmatpush1.bf16.msra.mxu0 0
      %8372 = vmatprep.subr.bf16.mxu0 0
      %8373 = vmatpush1.bf16.msra.mxu0 0
      %8374 = vmatprep.subr.bf16.mxu0 %v8352
      %8375 = vmatpush1.bf16.msra.mxu0 %v8351
      %8376 = vmatprep.subr.bf16.mxu0 0
      %8377 = vmatpush2.bf16.msra.mxu0 0
      %8378 = vmatprep.subr.bf16.mxu0 0
      %8379 = vmatpush2.bf16.msra.mxu0 0
      %8380 = vmatprep.subr.bf16.mxu0 0
      %8381 = vmatpush2.bf16.msra.mxu0 0
      %8382 = vmatprep.subr.bf16.mxu0 0
      %8383 = vmatpush2.bf16.msra.mxu0 0
      %8384 = vmatprep.subr.bf16.mxu0 0
      %8385 = vmatpush2.bf16.msra.mxu0 0
      %8386 = vmatprep.subr.bf16.mxu0 0
      %8387 = vmatpush2.bf16.msra.mxu0 0
      %8388 = vmatprep.subr.bf16.mxu0 0
      %8389 = vmatpush2.bf16.msra.mxu0 0
      %8390 = vmatprep.subr.bf16.mxu0 0
      %8391 = vmatpush2.bf16.msra.mxu0 0
      %8392 = vmatprep.mubr.bf16.mxu0 0
      %8393 = vmatmul.mubr.bf16.gmra.mxu0 %v8358
      %v8394 = vpop.f32.mrf.mxu0
      %v8395 = vadd.f32 0.0, %v8394
      %v8396 = vpop.f32.mrf.mxu0
      %v8397 = vadd.f32 0.0, %v8396
      %v8398 = vpop.f32.mrf.mxu0
      %v8399 = vadd.f32 0.0, %v8398
      %v8400 = vpop.f32.mrf.mxu0
      %v8401 = vadd.f32 0.0, %v8400
      %8402 = vdwg.mxu0
      %8403 = vmatprep.subr.bf16.mxu0 0
      %8404 = vmatpush1.bf16.msra.mxu0 0
      %8405 = vmatprep.subr.bf16.mxu0 0
      %8406 = vmatpush1.bf16.msra.mxu0 0
      %8407 = vmatprep.subr.bf16.mxu0 0
      %8408 = vmatpush1.bf16.msra.mxu0 0
      %8409 = vmatprep.subr.bf16.mxu0 0
      %8410 = vmatpush1.bf16.msra.mxu0 0
      %8411 = vmatprep.subr.bf16.mxu0 0
      %8412 = vmatpush1.bf16.msra.mxu0 0
      %8413 = vmatprep.subr.bf16.mxu0 0
      %8414 = vmatpush1.bf16.msra.mxu0 0
      %8415 = vmatprep.subr.bf16.mxu0 0
      %8416 = vmatpush1.bf16.msra.mxu0 0
      %8417 = vmatprep.subr.bf16.mxu0 0
      %8418 = vmatpush1.bf16.msra.mxu0 %v8353
      %8419 = vmatprep.subr.bf16.mxu0 0
      %8420 = vmatpush2.bf16.msra.mxu0 0
      %8421 = vmatprep.subr.bf16.mxu0 0
      %8422 = vmatpush2.bf16.msra.mxu0 0
      %8423 = vmatprep.subr.bf16.mxu0 0
      %8424 = vmatpush2.bf16.msra.mxu0 0
      %8425 = vmatprep.subr.bf16.mxu0 0
      %8426 = vmatpush2.bf16.msra.mxu0 0
      %8427 = vmatprep.subr.bf16.mxu0 0
      %8428 = vmatpush2.bf16.msra.mxu0 0
      %8429 = vmatprep.subr.bf16.mxu0 0
      %8430 = vmatpush2.bf16.msra.mxu0 0
      %8431 = vmatprep.subr.bf16.mxu0 0
      %8432 = vmatpush2.bf16.msra.mxu0 0
      %8433 = vmatprep.subr.bf16.mxu0 0
      %8434 = vmatpush2.bf16.msra.mxu0 0
      %8435 = vmatprep.mubr.bf16.mxu0 0
      %8436 = vmatmul.mubr.bf16.gmra.mxu0 %v8358
      %v8437 = vpop.f32.mrf.mxu0
      %v8438 = vadd.f32 0.0, %v8437
      %v8439 = vpop.f32.mrf.mxu0
      %v8440 = vpop.f32.mrf.mxu0
      %v8441 = vadd.f32 0.0, %v8440
      %v8442 = vpop.f32.mrf.mxu0
      %8443 = vdwg.mxu0
      %v8444 = vadd.f32 %v8286, %v8395
      %v8445 = vadd.f32 %v8288, %v8397
      %v8446 = vadd.f32 %v8329, %v8438
      %v8447 = vadd.f32 %v8290, %v8399
      %v8448 = vadd.f32 %v8292, %v8401
      %v8449 = vadd.f32 %v8332, %v8441
      %s8450 = scalar_lea.vmem %s14, 24
      %v8451 = vld [vmem:[%s8450] sm:$0xf]
      %v8452 = vld [vmem:[%s8450 + $0x4] sm:$0xf]
      %v8455 = vunpack.c.l.b16 %v8451
      %v8456 = vunpack.c.l.b16 %v8452
      %v8457 = vpack.c.b16 %v8456, %v8455
      %8458 = vrot.lane.b32.xlu0 %v8125, 110
      %v8459 = vpop.permute.xlu0 %8458
      %8460 = vrot.lane.b32.xlu0 %v8120, 110
      %v8461 = vpop.permute.xlu0 %8460
      %8462 = vrot.lane.b32.xlu0 %v8121, 110
      %v8463 = vpop.permute.xlu0 %8462
      %8464 = vrot.lane.b32.xlu0 %v8128, 110
      %v8465 = vpop.permute.xlu0 %8464
      %v8466 = vsel %vm1912, %v8459, %v8461
      %v8467 = vsel %vm1912, %v8461, %v8463
      %v8468 = vsel %vm1912, %v8463, %v8465
      %v8473 = vsel %vm8155, %v8457, 0
      %8475 = vmatprep.subr.bf16.mxu0 0
      %8476 = vmatpush1.bf16.msra.mxu0 0
      %8477 = vmatprep.subr.bf16.mxu0 0
      %8478 = vmatpush1.bf16.msra.mxu0 0
      %8479 = vmatprep.subr.bf16.mxu0 0
      %8480 = vmatpush1.bf16.msra.mxu0 0
      %8481 = vmatprep.subr.bf16.mxu0 0
      %8482 = vmatpush1.bf16.msra.mxu0 0
      %8483 = vmatprep.subr.bf16.mxu0 0
      %8484 = vmatpush1.bf16.msra.mxu0 0
      %8485 = vmatprep.subr.bf16.mxu0 0
      %8486 = vmatpush1.bf16.msra.mxu0 0
      %8487 = vmatprep.subr.bf16.mxu0 0
      %8488 = vmatpush1.bf16.msra.mxu0 0
      %8489 = vmatprep.subr.bf16.mxu0 %v8467
      %8490 = vmatpush1.bf16.msra.mxu0 %v8466
      %8491 = vmatprep.subr.bf16.mxu0 0
      %8492 = vmatpush2.bf16.msra.mxu0 0
      %8493 = vmatprep.subr.bf16.mxu0 0
      %8494 = vmatpush2.bf16.msra.mxu0 0
      %8495 = vmatprep.subr.bf16.mxu0 0
      %8496 = vmatpush2.bf16.msra.mxu0 0
      %8497 = vmatprep.subr.bf16.mxu0 0
      %8498 = vmatpush2.bf16.msra.mxu0 0
      %8499 = vmatprep.subr.bf16.mxu0 0
      %8500 = vmatpush2.bf16.msra.mxu0 0
      %8501 = vmatprep.subr.bf16.mxu0 0
      %8502 = vmatpush2.bf16.msra.mxu0 0
      %8503 = vmatprep.subr.bf16.mxu0 0
      %8504 = vmatpush2.bf16.msra.mxu0 0
      %8505 = vmatprep.subr.bf16.mxu0 0
      %8506 = vmatpush2.bf16.msra.mxu0 0
      %8507 = vmatprep.mubr.bf16.mxu0 0
      %8508 = vmatmul.mubr.bf16.gmra.mxu0 %v8473
      %v8509 = vpop.f32.mrf.mxu0
      %v8510 = vadd.f32 0.0, %v8509
      %v8511 = vpop.f32.mrf.mxu0
      %v8512 = vadd.f32 0.0, %v8511
      %v8513 = vpop.f32.mrf.mxu0
      %v8514 = vadd.f32 0.0, %v8513
      %v8515 = vpop.f32.mrf.mxu0
      %v8516 = vadd.f32 0.0, %v8515
      %8517 = vdwg.mxu0
      %8518 = vmatprep.subr.bf16.mxu0 0
      %8519 = vmatpush1.bf16.msra.mxu0 0
      %8520 = vmatprep.subr.bf16.mxu0 0
      %8521 = vmatpush1.bf16.msra.mxu0 0
      %8522 = vmatprep.subr.bf16.mxu0 0
      %8523 = vmatpush1.bf16.msra.mxu0 0
      %8524 = vmatprep.subr.bf16.mxu0 0
      %8525 = vmatpush1.bf16.msra.mxu0 0
      %8526 = vmatprep.subr.bf16.mxu0 0
      %8527 = vmatpush1.bf16.msra.mxu0 0
      %8528 = vmatprep.subr.bf16.mxu0 0
      %8529 = vmatpush1.bf16.msra.mxu0 0
      %8530 = vmatprep.subr.bf16.mxu0 0
      %8531 = vmatpush1.bf16.msra.mxu0 0
      %8532 = vmatprep.subr.bf16.mxu0 0
      %8533 = vmatpush1.bf16.msra.mxu0 %v8468
      %8534 = vmatprep.subr.bf16.mxu0 0
      %8535 = vmatpush2.bf16.msra.mxu0 0
      %8536 = vmatprep.subr.bf16.mxu0 0
      %8537 = vmatpush2.bf16.msra.mxu0 0
      %8538 = vmatprep.subr.bf16.mxu0 0
      %8539 = vmatpush2.bf16.msra.mxu0 0
      %8540 = vmatprep.subr.bf16.mxu0 0
      %8541 = vmatpush2.bf16.msra.mxu0 0
      %8542 = vmatprep.subr.bf16.mxu0 0
      %8543 = vmatpush2.bf16.msra.mxu0 0
      %8544 = vmatprep.subr.bf16.mxu0 0
      %8545 = vmatpush2.bf16.msra.mxu0 0
      %8546 = vmatprep.subr.bf16.mxu0 0
      %8547 = vmatpush2.bf16.msra.mxu0 0
      %8548 = vmatprep.subr.bf16.mxu0 0
      %8549 = vmatpush2.bf16.msra.mxu0 0
      %8550 = vmatprep.mubr.bf16.mxu0 0
      %8551 = vmatmul.mubr.bf16.gmra.mxu0 %v8473
      %v8552 = vpop.f32.mrf.mxu0
      %v8553 = vadd.f32 0.0, %v8552
      %v8554 = vpop.f32.mrf.mxu0
      %v8555 = vpop.f32.mrf.mxu0
      %v8556 = vadd.f32 0.0, %v8555
      %v8557 = vpop.f32.mrf.mxu0
      %8558 = vdwg.mxu0
      %v8559 = vadd.f32 %v8444, %v8510
      %v8560 = vadd.f32 %v8445, %v8512
      %v8561 = vadd.f32 %v8446, %v8553
      %v8562 = vadd.f32 %v8447, %v8514
      %v8563 = vadd.f32 %v8448, %v8516
      %v8564 = vadd.f32 %v8449, %v8556
      %s8565 = scalar_lea.vmem %s14, 32
      %v8566 = vld [vmem:[%s8565] sm:$0xf]
      %v8567 = vld [vmem:[%s8565 + $0x4] sm:$0xf]
      %v8570 = vunpack.c.l.b16 %v8566
      %v8571 = vunpack.c.l.b16 %v8567
      %v8572 = vpack.c.b16 %v8571, %v8570
      %8573 = vrot.lane.b32.xlu0 %v8125, 109
      %v8574 = vpop.permute.xlu0 %8573
      %8575 = vrot.lane.b32.xlu0 %v8120, 109
      %v8576 = vpop.permute.xlu0 %8575
      %8577 = vrot.lane.b32.xlu0 %v8121, 109
      %v8578 = vpop.permute.xlu0 %8577
      %8579 = vrot.lane.b32.xlu0 %v8128, 109
      %v8580 = vpop.permute.xlu0 %8579
      %v8581 = vsel %vm2305, %v8574, %v8576
      %v8582 = vsel %vm2305, %v8576, %v8578
      %v8583 = vsel %vm2305, %v8578, %v8580
      %v8588 = vsel %vm8155, %v8572, 0
      %8590 = vmatprep.subr.bf16.mxu0 0
      %8591 = vmatpush1.bf16.msra.mxu0 0
      %8592 = vmatprep.subr.bf16.mxu0 0
      %8593 = vmatpush1.bf16.msra.mxu0 0
      %8594 = vmatprep.subr.bf16.mxu0 0
      %8595 = vmatpush1.bf16.msra.mxu0 0
      %8596 = vmatprep.subr.bf16.mxu0 0
      %8597 = vmatpush1.bf16.msra.mxu0 0
      %8598 = vmatprep.subr.bf16.mxu0 0
      %8599 = vmatpush1.bf16.msra.mxu0 0
      %8600 = vmatprep.subr.bf16.mxu0 0
      %8601 = vmatpush1.bf16.msra.mxu0 0
      %8602 = vmatprep.subr.bf16.mxu0 0
      %8603 = vmatpush1.bf16.msra.mxu0 0
      %8604 = vmatprep.subr.bf16.mxu0 %v8582
      %8605 = vmatpush1.bf16.msra.mxu0 %v8581
      %8606 = vmatprep.subr.bf16.mxu0 0
      %8607 = vmatpush2.bf16.msra.mxu0 0
      %8608 = vmatprep.subr.bf16.mxu0 0
      %8609 = vmatpush2.bf16.msra.mxu0 0
      %8610 = vmatprep.subr.bf16.mxu0 0
      %8611 = vmatpush2.bf16.msra.mxu0 0
      %8612 = vmatprep.subr.bf16.mxu0 0
      %8613 = vmatpush2.bf16.msra.mxu0 0
      %8614 = vmatprep.subr.bf16.mxu0 0
      %8615 = vmatpush2.bf16.msra.mxu0 0
      %8616 = vmatprep.subr.bf16.mxu0 0
      %8617 = vmatpush2.bf16.msra.mxu0 0
      %8618 = vmatprep.subr.bf16.mxu0 0
      %8619 = vmatpush2.bf16.msra.mxu0 0
      %8620 = vmatprep.subr.bf16.mxu0 0
      %8621 = vmatpush2.bf16.msra.mxu0 0
      %8622 = vmatprep.mubr.bf16.mxu0 0
      %8623 = vmatmul.mubr.bf16.gmra.mxu0 %v8588
      %v8624 = vpop.f32.mrf.mxu0
      %v8625 = vadd.f32 0.0, %v8624
      %v8626 = vpop.f32.mrf.mxu0
      %v8627 = vadd.f32 0.0, %v8626
      %v8628 = vpop.f32.mrf.mxu0
      %v8629 = vadd.f32 0.0, %v8628
      %v8630 = vpop.f32.mrf.mxu0
      %v8631 = vadd.f32 0.0, %v8630
      %8632 = vdwg.mxu0
      %8633 = vmatprep.subr.bf16.mxu0 0
      %8634 = vmatpush1.bf16.msra.mxu0 0
      %8635 = vmatprep.subr.bf16.mxu0 0
      %8636 = vmatpush1.bf16.msra.mxu0 0
      %8637 = vmatprep.subr.bf16.mxu0 0
      %8638 = vmatpush1.bf16.msra.mxu0 0
      %8639 = vmatprep.subr.bf16.mxu0 0
      %8640 = vmatpush1.bf16.msra.mxu0 0
      %8641 = vmatprep.subr.bf16.mxu0 0
      %8642 = vmatpush1.bf16.msra.mxu0 0
      %8643 = vmatprep.subr.bf16.mxu0 0
      %8644 = vmatpush1.bf16.msra.mxu0 0
      %8645 = vmatprep.subr.bf16.mxu0 0
      %8646 = vmatpush1.bf16.msra.mxu0 0
      %8647 = vmatprep.subr.bf16.mxu0 0
      %8648 = vmatpush1.bf16.msra.mxu0 %v8583
      %8649 = vmatprep.subr.bf16.mxu0 0
      %8650 = vmatpush2.bf16.msra.mxu0 0
      %8651 = vmatprep.subr.bf16.mxu0 0
      %8652 = vmatpush2.bf16.msra.mxu0 0
      %8653 = vmatprep.subr.bf16.mxu0 0
      %8654 = vmatpush2.bf16.msra.mxu0 0
      %8655 = vmatprep.subr.bf16.mxu0 0
      %8656 = vmatpush2.bf16.msra.mxu0 0
      %8657 = vmatprep.subr.bf16.mxu0 0
      %8658 = vmatpush2.bf16.msra.mxu0 0
      %8659 = vmatprep.subr.bf16.mxu0 0
      %8660 = vmatpush2.bf16.msra.mxu0 0
      %8661 = vmatprep.subr.bf16.mxu0 0
      %8662 = vmatpush2.bf16.msra.mxu0 0
      %8663 = vmatprep.subr.bf16.mxu0 0
      %8664 = vmatpush2.bf16.msra.mxu0 0
      %8665 = vmatprep.mubr.bf16.mxu0 0
      %8666 = vmatmul.mubr.bf16.gmra.mxu0 %v8588
      %v8667 = vpop.f32.mrf.mxu0
      %v8668 = vadd.f32 0.0, %v8667
      %v8669 = vpop.f32.mrf.mxu0
      %v8670 = vpop.f32.mrf.mxu0
      %v8671 = vadd.f32 0.0, %v8670
      %v8672 = vpop.f32.mrf.mxu0
      %8673 = vdwg.mxu0
      %v8674 = vadd.f32 %v8559, %v8625
      %v8675 = vadd.f32 %v8560, %v8627
      %v8676 = vadd.f32 %v8561, %v8668
      %v8677 = vadd.f32 %v8562, %v8629
      %v8678 = vadd.f32 %v8563, %v8631
      %v8679 = vadd.f32 %v8564, %v8671
      %s8680 = scalar_lea.vmem %s14, 40
      %v8681 = vld [vmem:[%s8680] sm:$0xf]
      %v8682 = vld [vmem:[%s8680 + $0x4] sm:$0xf]
      %v8685 = vunpack.c.l.b16 %v8681
      %v8686 = vunpack.c.l.b16 %v8682
      %v8687 = vpack.c.b16 %v8686, %v8685
      %8688 = vrot.lane.b32.xlu0 %v8125, 108
      %v8689 = vpop.permute.xlu0 %8688
      %8690 = vrot.lane.b32.xlu0 %v8120, 108
      %v8691 = vpop.permute.xlu0 %8690
      %8692 = vrot.lane.b32.xlu0 %v8121, 108
      %v8693 = vpop.permute.xlu0 %8692
      %8694 = vrot.lane.b32.xlu0 %v8128, 108
      %v8695 = vpop.permute.xlu0 %8694
      %v8696 = vsel %vm2698, %v8689, %v8691
      %v8697 = vsel %vm2698, %v8691, %v8693
      %v8698 = vsel %vm2698, %v8693, %v8695
      %v8703 = vsel %vm8155, %v8687, 0
      %8705 = vmatprep.subr.bf16.mxu0 0
      %8706 = vmatpush1.bf16.msra.mxu0 0
      %8707 = vmatprep.subr.bf16.mxu0 0
      %8708 = vmatpush1.bf16.msra.mxu0 0
      %8709 = vmatprep.subr.bf16.mxu0 0
      %8710 = vmatpush1.bf16.msra.mxu0 0
      %8711 = vmatprep.subr.bf16.mxu0 0
      %8712 = vmatpush1.bf16.msra.mxu0 0
      %8713 = vmatprep.subr.bf16.mxu0 0
      %8714 = vmatpush1.bf16.msra.mxu0 0
      %8715 = vmatprep.subr.bf16.mxu0 0
      %8716 = vmatpush1.bf16.msra.mxu0 0
      %8717 = vmatprep.subr.bf16.mxu0 0
      %8718 = vmatpush1.bf16.msra.mxu0 0
      %8719 = vmatprep.subr.bf16.mxu0 %v8697
      %8720 = vmatpush1.bf16.msra.mxu0 %v8696
      %8721 = vmatprep.subr.bf16.mxu0 0
      %8722 = vmatpush2.bf16.msra.mxu0 0
      %8723 = vmatprep.subr.bf16.mxu0 0
      %8724 = vmatpush2.bf16.msra.mxu0 0
      %8725 = vmatprep.subr.bf16.mxu0 0
      %8726 = vmatpush2.bf16.msra.mxu0 0
      %8727 = vmatprep.subr.bf16.mxu0 0
      %8728 = vmatpush2.bf16.msra.mxu0 0
      %8729 = vmatprep.subr.bf16.mxu0 0
      %8730 = vmatpush2.bf16.msra.mxu0 0
      %8731 = vmatprep.subr.bf16.mxu0 0
      %8732 = vmatpush2.bf16.msra.mxu0 0
      %8733 = vmatprep.subr.bf16.mxu0 0
      %8734 = vmatpush2.bf16.msra.mxu0 0
      %8735 = vmatprep.subr.bf16.mxu0 0
      %8736 = vmatpush2.bf16.msra.mxu0 0
      %8737 = vmatprep.mubr.bf16.mxu0 0
      %8738 = vmatmul.mubr.bf16.gmra.mxu0 %v8703
      %v8739 = vpop.f32.mrf.mxu0
      %v8740 = vadd.f32 0.0, %v8739
      %v8741 = vpop.f32.mrf.mxu0
      %v8742 = vadd.f32 0.0, %v8741
      %v8743 = vpop.f32.mrf.mxu0
      %v8744 = vadd.f32 0.0, %v8743
      %v8745 = vpop.f32.mrf.mxu0
      %v8746 = vadd.f32 0.0, %v8745
      %8747 = vdwg.mxu0
      %8748 = vmatprep.subr.bf16.mxu0 0
      %8749 = vmatpush1.bf16.msra.mxu0 0
      %8750 = vmatprep.subr.bf16.mxu0 0
      %8751 = vmatpush1.bf16.msra.mxu0 0
      %8752 = vmatprep.subr.bf16.mxu0 0
      %8753 = vmatpush1.bf16.msra.mxu0 0
      %8754 = vmatprep.subr.bf16.mxu0 0
      %8755 = vmatpush1.bf16.msra.mxu0 0
      %8756 = vmatprep.subr.bf16.mxu0 0
      %8757 = vmatpush1.bf16.msra.mxu0 0
      %8758 = vmatprep.subr.bf16.mxu0 0
      %8759 = vmatpush1.bf16.msra.mxu0 0
      %8760 = vmatprep.subr.bf16.mxu0 0
      %8761 = vmatpush1.bf16.msra.mxu0 0
      %8762 = vmatprep.subr.bf16.mxu0 0
      %8763 = vmatpush1.bf16.msra.mxu0 %v8698
      %8764 = vmatprep.subr.bf16.mxu0 0
      %8765 = vmatpush2.bf16.msra.mxu0 0
      %8766 = vmatprep.subr.bf16.mxu0 0
      %8767 = vmatpush2.bf16.msra.mxu0 0
      %8768 = vmatprep.subr.bf16.mxu0 0
      %8769 = vmatpush2.bf16.msra.mxu0 0
      %8770 = vmatprep.subr.bf16.mxu0 0
      %8771 = vmatpush2.bf16.msra.mxu0 0
      %8772 = vmatprep.subr.bf16.mxu0 0
      %8773 = vmatpush2.bf16.msra.mxu0 0
      %8774 = vmatprep.subr.bf16.mxu0 0
      %8775 = vmatpush2.bf16.msra.mxu0 0
      %8776 = vmatprep.subr.bf16.mxu0 0
      %8777 = vmatpush2.bf16.msra.mxu0 0
      %8778 = vmatprep.subr.bf16.mxu0 0
      %8779 = vmatpush2.bf16.msra.mxu0 0
      %8780 = vmatprep.mubr.bf16.mxu0 0
      %8781 = vmatmul.mubr.bf16.gmra.mxu0 %v8703
      %v8782 = vpop.f32.mrf.mxu0
      %v8783 = vadd.f32 0.0, %v8782
      %v8784 = vpop.f32.mrf.mxu0
      %v8785 = vpop.f32.mrf.mxu0
      %v8786 = vadd.f32 0.0, %v8785
      %v8787 = vpop.f32.mrf.mxu0
      %8788 = vdwg.mxu0
      %v8789 = vadd.f32 %v8674, %v8740
      %v8790 = vadd.f32 %v8675, %v8742
      %v8791 = vadd.f32 %v8676, %v8783
      %v8792 = vadd.f32 %v8677, %v8744
      %v8793 = vadd.f32 %v8678, %v8746
      %v8794 = vadd.f32 %v8679, %v8786
      %s8795 = scalar_lea.vmem %s14, 48
      %v8796 = vld [vmem:[%s8795] sm:$0xf]
      %v8797 = vld [vmem:[%s8795 + $0x4] sm:$0xf]
      %v8800 = vunpack.c.l.b16 %v8796
      %v8801 = vunpack.c.l.b16 %v8797
      %v8802 = vpack.c.b16 %v8801, %v8800
      %8803 = vrot.lane.b32.xlu0 %v8125, 92
      %v8804 = vpop.permute.xlu0 %8803
      %8805 = vrot.lane.b32.xlu0 %v8120, 92
      %v8806 = vpop.permute.xlu0 %8805
      %8807 = vrot.lane.b32.xlu0 %v8121, 92
      %v8808 = vpop.permute.xlu0 %8807
      %8809 = vrot.lane.b32.xlu0 %v8128, 92
      %v8810 = vpop.permute.xlu0 %8809
      %v8811 = vsel %vm3091, %v8804, %v8806
      %v8812 = vsel %vm3091, %v8806, %v8808
      %v8813 = vsel %vm3091, %v8808, %v8810
      %v8818 = vsel %vm8155, %v8802, 0
      %8820 = vmatprep.subr.bf16.mxu0 0
      %8821 = vmatpush1.bf16.msra.mxu0 0
      %8822 = vmatprep.subr.bf16.mxu0 0
      %8823 = vmatpush1.bf16.msra.mxu0 0
      %8824 = vmatprep.subr.bf16.mxu0 0
      %8825 = vmatpush1.bf16.msra.mxu0 0
      %8826 = vmatprep.subr.bf16.mxu0 0
      %8827 = vmatpush1.bf16.msra.mxu0 0
      %8828 = vmatprep.subr.bf16.mxu0 0
      %8829 = vmatpush1.bf16.msra.mxu0 0
      %8830 = vmatprep.subr.bf16.mxu0 0
      %8831 = vmatpush1.bf16.msra.mxu0 0
      %8832 = vmatprep.subr.bf16.mxu0 0
      %8833 = vmatpush1.bf16.msra.mxu0 0
      %8834 = vmatprep.subr.bf16.mxu0 %v8812
      %8835 = vmatpush1.bf16.msra.mxu0 %v8811
      %8836 = vmatprep.subr.bf16.mxu0 0
      %8837 = vmatpush2.bf16.msra.mxu0 0
      %8838 = vmatprep.subr.bf16.mxu0 0
      %8839 = vmatpush2.bf16.msra.mxu0 0
      %8840 = vmatprep.subr.bf16.mxu0 0
      %8841 = vmatpush2.bf16.msra.mxu0 0
      %8842 = vmatprep.subr.bf16.mxu0 0
      %8843 = vmatpush2.bf16.msra.mxu0 0
      %8844 = vmatprep.subr.bf16.mxu0 0
      %8845 = vmatpush2.bf16.msra.mxu0 0
      %8846 = vmatprep.subr.bf16.mxu0 0
      %8847 = vmatpush2.bf16.msra.mxu0 0
      %8848 = vmatprep.subr.bf16.mxu0 0
      %8849 = vmatpush2.bf16.msra.mxu0 0
      %8850 = vmatprep.subr.bf16.mxu0 0
      %8851 = vmatpush2.bf16.msra.mxu0 0
      %8852 = vmatprep.mubr.bf16.mxu0 0
      %8853 = vmatmul.mubr.bf16.gmra.mxu0 %v8818
      %v8854 = vpop.f32.mrf.mxu0
      %v8855 = vadd.f32 0.0, %v8854
      %v8856 = vpop.f32.mrf.mxu0
      %v8857 = vadd.f32 0.0, %v8856
      %v8858 = vpop.f32.mrf.mxu0
      %v8859 = vadd.f32 0.0, %v8858
      %v8860 = vpop.f32.mrf.mxu0
      %v8861 = vadd.f32 0.0, %v8860
      %8862 = vdwg.mxu0
      %8863 = vmatprep.subr.bf16.mxu0 0
      %8864 = vmatpush1.bf16.msra.mxu0 0
      %8865 = vmatprep.subr.bf16.mxu0 0
      %8866 = vmatpush1.bf16.msra.mxu0 0
      %8867 = vmatprep.subr.bf16.mxu0 0
      %8868 = vmatpush1.bf16.msra.mxu0 0
      %8869 = vmatprep.subr.bf16.mxu0 0
      %8870 = vmatpush1.bf16.msra.mxu0 0
      %8871 = vmatprep.subr.bf16.mxu0 0
      %8872 = vmatpush1.bf16.msra.mxu0 0
      %8873 = vmatprep.subr.bf16.mxu0 0
      %8874 = vmatpush1.bf16.msra.mxu0 0
      %8875 = vmatprep.subr.bf16.mxu0 0
      %8876 = vmatpush1.bf16.msra.mxu0 0
      %8877 = vmatprep.subr.bf16.mxu0 0
      %8878 = vmatpush1.bf16.msra.mxu0 %v8813
      %8879 = vmatprep.subr.bf16.mxu0 0
      %8880 = vmatpush2.bf16.msra.mxu0 0
      %8881 = vmatprep.subr.bf16.mxu0 0
      %8882 = vmatpush2.bf16.msra.mxu0 0
      %8883 = vmatprep.subr.bf16.mxu0 0
      %8884 = vmatpush2.bf16.msra.mxu0 0
      %8885 = vmatprep.subr.bf16.mxu0 0
      %8886 = vmatpush2.bf16.msra.mxu0 0
      %8887 = vmatprep.subr.bf16.mxu0 0
      %8888 = vmatpush2.bf16.msra.mxu0 0
      %8889 = vmatprep.subr.bf16.mxu0 0
      %8890 = vmatpush2.bf16.msra.mxu0 0
      %8891 = vmatprep.subr.bf16.mxu0 0
      %8892 = vmatpush2.bf16.msra.mxu0 0
      %8893 = vmatprep.subr.bf16.mxu0 0
      %8894 = vmatpush2.bf16.msra.mxu0 0
      %8895 = vmatprep.mubr.bf16.mxu0 0
      %8896 = vmatmul.mubr.bf16.gmra.mxu0 %v8818
      %v8897 = vpop.f32.mrf.mxu0
      %v8898 = vadd.f32 0.0, %v8897
      %v8899 = vpop.f32.mrf.mxu0
      %v8900 = vpop.f32.mrf.mxu0
      %v8901 = vadd.f32 0.0, %v8900
      %v8902 = vpop.f32.mrf.mxu0
      %8903 = vdwg.mxu0
      %v8904 = vadd.f32 %v8789, %v8855
      %v8905 = vadd.f32 %v8790, %v8857
      %v8906 = vadd.f32 %v8791, %v8898
      %v8907 = vadd.f32 %v8792, %v8859
      %v8908 = vadd.f32 %v8793, %v8861
      %v8909 = vadd.f32 %v8794, %v8901
      %s8910 = scalar_lea.vmem %s14, 56
      %v8911 = vld [vmem:[%s8910] sm:$0xf]
      %v8912 = vld [vmem:[%s8910 + $0x4] sm:$0xf]
      %v8915 = vunpack.c.l.b16 %v8911
      %v8916 = vunpack.c.l.b16 %v8912
      %v8917 = vpack.c.b16 %v8916, %v8915
      %8918 = vrot.lane.b32.xlu0 %v8125, 91
      %v8919 = vpop.permute.xlu0 %8918
      %8920 = vrot.lane.b32.xlu0 %v8120, 91
      %v8921 = vpop.permute.xlu0 %8920
      %8922 = vrot.lane.b32.xlu0 %v8121, 91
      %v8923 = vpop.permute.xlu0 %8922
      %8924 = vrot.lane.b32.xlu0 %v8128, 91
      %v8925 = vpop.permute.xlu0 %8924
      %v8926 = vsel %vm3484, %v8919, %v8921
      %v8927 = vsel %vm3484, %v8921, %v8923
      %v8928 = vsel %vm3484, %v8923, %v8925
      %v8933 = vsel %vm8155, %v8917, 0
      %8935 = vmatprep.subr.bf16.mxu0 0
      %8936 = vmatpush1.bf16.msra.mxu0 0
      %8937 = vmatprep.subr.bf16.mxu0 0
      %8938 = vmatpush1.bf16.msra.mxu0 0
      %8939 = vmatprep.subr.bf16.mxu0 0
      %8940 = vmatpush1.bf16.msra.mxu0 0
      %8941 = vmatprep.subr.bf16.mxu0 0
      %8942 = vmatpush1.bf16.msra.mxu0 0
      %8943 = vmatprep.subr.bf16.mxu0 0
      %8944 = vmatpush1.bf16.msra.mxu0 0
      %8945 = vmatprep.subr.bf16.mxu0 0
      %8946 = vmatpush1.bf16.msra.mxu0 0
      %8947 = vmatprep.subr.bf16.mxu0 0
      %8948 = vmatpush1.bf16.msra.mxu0 0
      %8949 = vmatprep.subr.bf16.mxu0 %v8927
      %8950 = vmatpush1.bf16.msra.mxu0 %v8926
      %8951 = vmatprep.subr.bf16.mxu0 0
      %8952 = vmatpush2.bf16.msra.mxu0 0
      %8953 = vmatprep.subr.bf16.mxu0 0
      %8954 = vmatpush2.bf16.msra.mxu0 0
      %8955 = vmatprep.subr.bf16.mxu0 0
      %8956 = vmatpush2.bf16.msra.mxu0 0
      %8957 = vmatprep.subr.bf16.mxu0 0
      %8958 = vmatpush2.bf16.msra.mxu0 0
      %8959 = vmatprep.subr.bf16.mxu0 0
      %8960 = vmatpush2.bf16.msra.mxu0 0
      %8961 = vmatprep.subr.bf16.mxu0 0
      %8962 = vmatpush2.bf16.msra.mxu0 0
      %8963 = vmatprep.subr.bf16.mxu0 0
      %8964 = vmatpush2.bf16.msra.mxu0 0
      %8965 = vmatprep.subr.bf16.mxu0 0
      %8966 = vmatpush2.bf16.msra.mxu0 0
      %8967 = vmatprep.mubr.bf16.mxu0 0
      %8968 = vmatmul.mubr.bf16.gmra.mxu0 %v8933
      %v8969 = vpop.f32.mrf.mxu0
      %v8970 = vadd.f32 0.0, %v8969
      %v8971 = vpop.f32.mrf.mxu0
      %v8972 = vadd.f32 0.0, %v8971
      %v8973 = vpop.f32.mrf.mxu0
      %v8974 = vadd.f32 0.0, %v8973
      %v8975 = vpop.f32.mrf.mxu0
      %v8976 = vadd.f32 0.0, %v8975
      %8977 = vdwg.mxu0
      %8978 = vmatprep.subr.bf16.mxu0 0
      %8979 = vmatpush1.bf16.msra.mxu0 0
      %8980 = vmatprep.subr.bf16.mxu0 0
      %8981 = vmatpush1.bf16.msra.mxu0 0
      %8982 = vmatprep.subr.bf16.mxu0 0
      %8983 = vmatpush1.bf16.msra.mxu0 0
      %8984 = vmatprep.subr.bf16.mxu0 0
      %8985 = vmatpush1.bf16.msra.mxu0 0
      %8986 = vmatprep.subr.bf16.mxu0 0
      %8987 = vmatpush1.bf16.msra.mxu0 0
      %8988 = vmatprep.subr.bf16.mxu0 0
      %8989 = vmatpush1.bf16.msra.mxu0 0
      %8990 = vmatprep.subr.bf16.mxu0 0
      %8991 = vmatpush1.bf16.msra.mxu0 0
      %8992 = vmatprep.subr.bf16.mxu0 0
      %8993 = vmatpush1.bf16.msra.mxu0 %v8928
      %8994 = vmatprep.subr.bf16.mxu0 0
      %8995 = vmatpush2.bf16.msra.mxu0 0
      %8996 = vmatprep.subr.bf16.mxu0 0
      %8997 = vmatpush2.bf16.msra.mxu0 0
      %8998 = vmatprep.subr.bf16.mxu0 0
      %8999 = vmatpush2.bf16.msra.mxu0 0
      %9000 = vmatprep.subr.bf16.mxu0 0
      %9001 = vmatpush2.bf16.msra.mxu0 0
      %9002 = vmatprep.subr.bf16.mxu0 0
      %9003 = vmatpush2.bf16.msra.mxu0 0
      %9004 = vmatprep.subr.bf16.mxu0 0
      %9005 = vmatpush2.bf16.msra.mxu0 0
      %9006 = vmatprep.subr.bf16.mxu0 0
      %9007 = vmatpush2.bf16.msra.mxu0 0
      %9008 = vmatprep.subr.bf16.mxu0 0
      %9009 = vmatpush2.bf16.msra.mxu0 0
      %9010 = vmatprep.mubr.bf16.mxu0 0
      %9011 = vmatmul.mubr.bf16.gmra.mxu0 %v8933
      %v9012 = vpop.f32.mrf.mxu0
      %v9013 = vadd.f32 0.0, %v9012
      %v9014 = vpop.f32.mrf.mxu0
      %v9015 = vpop.f32.mrf.mxu0
      %v9016 = vadd.f32 0.0, %v9015
      %v9017 = vpop.f32.mrf.mxu0
      %9018 = vdwg.mxu0
      %v9019 = vadd.f32 %v8904, %v8970
      %v9020 = vadd.f32 %v8905, %v8972
      %v9021 = vadd.f32 %v8906, %v9013
      %v9022 = vadd.f32 %v8907, %v8974
      %v9023 = vadd.f32 %v8908, %v8976
      %v9024 = vadd.f32 %v8909, %v9016
      %s9025 = scalar_lea.vmem %s14, 64
      %v9026 = vld [vmem:[%s9025] sm:$0xf]
      %v9027 = vld [vmem:[%s9025 + $0x4] sm:$0xf]
      %v9030 = vunpack.c.l.b16 %v9026
      %v9031 = vunpack.c.l.b16 %v9027
      %v9032 = vpack.c.b16 %v9031, %v9030
      %9033 = vrot.lane.b32.xlu0 %v8125, 90
      %v9034 = vpop.permute.xlu0 %9033
      %9035 = vrot.lane.b32.xlu0 %v8120, 90
      %v9036 = vpop.permute.xlu0 %9035
      %9037 = vrot.lane.b32.xlu0 %v8121, 90
      %v9038 = vpop.permute.xlu0 %9037
      %9039 = vrot.lane.b32.xlu0 %v8128, 90
      %v9040 = vpop.permute.xlu0 %9039
      %v9041 = vsel %vm3877, %v9034, %v9036
      %v9042 = vsel %vm3877, %v9036, %v9038
      %v9043 = vsel %vm3877, %v9038, %v9040
      %v9048 = vsel %vm8155, %v9032, 0
      %9050 = vmatprep.subr.bf16.mxu0 0
      %9051 = vmatpush1.bf16.msra.mxu0 0
      %9052 = vmatprep.subr.bf16.mxu0 0
      %9053 = vmatpush1.bf16.msra.mxu0 0
      %9054 = vmatprep.subr.bf16.mxu0 0
      %9055 = vmatpush1.bf16.msra.mxu0 0
      %9056 = vmatprep.subr.bf16.mxu0 0
      %9057 = vmatpush1.bf16.msra.mxu0 0
      %9058 = vmatprep.subr.bf16.mxu0 0
      %9059 = vmatpush1.bf16.msra.mxu0 0
      %9060 = vmatprep.subr.bf16.mxu0 0
      %9061 = vmatpush1.bf16.msra.mxu0 0
      %9062 = vmatprep.subr.bf16.mxu0 0
      %9063 = vmatpush1.bf16.msra.mxu0 0
      %9064 = vmatprep.subr.bf16.mxu0 %v9042
      %9065 = vmatpush1.bf16.msra.mxu0 %v9041
      %9066 = vmatprep.subr.bf16.mxu0 0
      %9067 = vmatpush2.bf16.msra.mxu0 0
      %9068 = vmatprep.subr.bf16.mxu0 0
      %9069 = vmatpush2.bf16.msra.mxu0 0
      %9070 = vmatprep.subr.bf16.mxu0 0
      %9071 = vmatpush2.bf16.msra.mxu0 0
      %9072 = vmatprep.subr.bf16.mxu0 0
      %9073 = vmatpush2.bf16.msra.mxu0 0
      %9074 = vmatprep.subr.bf16.mxu0 0
      %9075 = vmatpush2.bf16.msra.mxu0 0
      %9076 = vmatprep.subr.bf16.mxu0 0
      %9077 = vmatpush2.bf16.msra.mxu0 0
      %9078 = vmatprep.subr.bf16.mxu0 0
      %9079 = vmatpush2.bf16.msra.mxu0 0
      %9080 = vmatprep.subr.bf16.mxu0 0
      %9081 = vmatpush2.bf16.msra.mxu0 0
      %9082 = vmatprep.mubr.bf16.mxu0 0
      %9083 = vmatmul.mubr.bf16.gmra.mxu0 %v9048
      %v9084 = vpop.f32.mrf.mxu0
      %v9085 = vadd.f32 0.0, %v9084
      %v9086 = vpop.f32.mrf.mxu0
      %v9087 = vadd.f32 0.0, %v9086
      %v9088 = vpop.f32.mrf.mxu0
      %v9089 = vadd.f32 0.0, %v9088
      %v9090 = vpop.f32.mrf.mxu0
      %v9091 = vadd.f32 0.0, %v9090
      %9092 = vdwg.mxu0
      %9093 = vmatprep.subr.bf16.mxu0 0
      %9094 = vmatpush1.bf16.msra.mxu0 0
      %9095 = vmatprep.subr.bf16.mxu0 0
      %9096 = vmatpush1.bf16.msra.mxu0 0
      %9097 = vmatprep.subr.bf16.mxu0 0
      %9098 = vmatpush1.bf16.msra.mxu0 0
      %9099 = vmatprep.subr.bf16.mxu0 0
      %9100 = vmatpush1.bf16.msra.mxu0 0
      %9101 = vmatprep.subr.bf16.mxu0 0
      %9102 = vmatpush1.bf16.msra.mxu0 0
      %9103 = vmatprep.subr.bf16.mxu0 0
      %9104 = vmatpush1.bf16.msra.mxu0 0
      %9105 = vmatprep.subr.bf16.mxu0 0
      %9106 = vmatpush1.bf16.msra.mxu0 0
      %9107 = vmatprep.subr.bf16.mxu0 0
      %9108 = vmatpush1.bf16.msra.mxu0 %v9043
      %9109 = vmatprep.subr.bf16.mxu0 0
      %9110 = vmatpush2.bf16.msra.mxu0 0
      %9111 = vmatprep.subr.bf16.mxu0 0
      %9112 = vmatpush2.bf16.msra.mxu0 0
      %9113 = vmatprep.subr.bf16.mxu0 0
      %9114 = vmatpush2.bf16.msra.mxu0 0
      %9115 = vmatprep.subr.bf16.mxu0 0
      %9116 = vmatpush2.bf16.msra.mxu0 0
      %9117 = vmatprep.subr.bf16.mxu0 0
      %9118 = vmatpush2.bf16.msra.mxu0 0
      %9119 = vmatprep.subr.bf16.mxu0 0
      %9120 = vmatpush2.bf16.msra.mxu0 0
      %9121 = vmatprep.subr.bf16.mxu0 0
      %9122 = vmatpush2.bf16.msra.mxu0 0
      %9123 = vmatprep.subr.bf16.mxu0 0
      %9124 = vmatpush2.bf16.msra.mxu0 0
      %9125 = vmatprep.mubr.bf16.mxu0 0
      %9126 = vmatmul.mubr.bf16.gmra.mxu0 %v9048
      %v9127 = vpop.f32.mrf.mxu0
      %v9128 = vadd.f32 0.0, %v9127
      %v9129 = vpop.f32.mrf.mxu0
      %v9130 = vpop.f32.mrf.mxu0
      %v9131 = vadd.f32 0.0, %v9130
      %v9132 = vpop.f32.mrf.mxu0
      %9133 = vdwg.mxu0
      %v9134 = vadd.f32 %v9019, %v9085
      %v9135 = vadd.f32 %v9020, %v9087
      %v9136 = vadd.f32 %v9021, %v9128
      %v9137 = vadd.f32 %v9022, %v9089
      %v9138 = vadd.f32 %v9023, %v9091
      %v9139 = vadd.f32 %v9024, %v9131
      %v9140 = vld [vmem:[%s15] sm:$0xff]
      %v9141 = vld [vmem:[%s15 + $0x8] sm:$0xff]
      %9143 = vset.pattern.permute.xlu0 0
      %9144 = vperm.xlu0 %9143, %v9140
      %v9145 = vpop.permute.xlu0 %9144
      %9148 = vset.pattern.permute.xlu0 0
      %9149 = vperm.xlu0 %9148, %v9141
      %v9150 = vpop.permute.xlu0 %9149
      %v9152 = vadd.f32 %v9134, %v9145
      %v9153 = vadd.f32 %v9135, %v9145
      %v9154 = vadd.f32 %v9136, %v9145
      %v9155 = vadd.f32 %v9137, %v9150
      %v9156 = vadd.f32 %v9138, %v9150
      %v9157 = vadd.f32 %v9139, %v9150
      %9158 = vmatprep.subr.mxu0 0.0
      %9159 = vmatpush1.msra.mxu0 %v719
      %9160 = vmatprep.subr.mxu0 0.0
      %9161 = vmatpush1.msra.mxu0 %v718
      %9162 = vmatprep.subr.mxu0 0.0
      %9163 = vmatpush1.msra.mxu0 %v717
      %9164 = vmatprep.subr.mxu0 0.0
      %9165 = vmatpush1.msra.mxu0 %v716
      %9166 = vmatprep.subr.mxu0 0.0
      %9167 = vmatpush1.msra.mxu0 %v715
      %9168 = vmatprep.subr.mxu0 0.0
      %9169 = vmatpush1.msra.mxu0 %v714
      %9170 = vmatprep.subr.mxu0 0.0
      %9171 = vmatpush1.msra.mxu0 %v713
      %9172 = vmatprep.subr.mxu0 0.0
      %9173 = vmatpush1.msra.mxu0 %v712
      %9174 = vmatprep.subr.mxu0 0.0
      %9175 = vmatpush1.msra.mxu0 %v711
      %9176 = vmatprep.subr.mxu0 0.0
      %9177 = vmatpush1.msra.mxu0 %v710
      %9178 = vmatprep.subr.mxu0 0.0
      %9179 = vmatpush1.msra.mxu0 %v709
      %9180 = vmatprep.subr.mxu0 0.0
      %9181 = vmatpush1.msra.mxu0 %v708
      %9182 = vmatprep.subr.mxu0 0.0
      %9183 = vmatpush1.msra.mxu0 %v707
      %9184 = vmatprep.subr.mxu0 0.0
      %9185 = vmatpush1.msra.mxu0 %v706
      %9186 = vmatprep.subr.mxu0 0.0
      %9187 = vmatpush1.msra.mxu0 %v705
      %9188 = vmatprep.subr.mxu0 0.0
      %9189 = vmatpush1.msra.mxu0 %v704
      %9190 = vmatprep.subr.mxu0 0.0
      %9191 = vmatpush2.msra.mxu0 %v735
      %9192 = vmatprep.subr.mxu0 0.0
      %9193 = vmatpush2.msra.mxu0 %v734
      %9194 = vmatprep.subr.mxu0 0.0
      %9195 = vmatpush2.msra.mxu0 %v733
      %9196 = vmatprep.subr.mxu0 0.0
      %9197 = vmatpush2.msra.mxu0 %v732
      %9198 = vmatprep.subr.mxu0 0.0
      %9199 = vmatpush2.msra.mxu0 %v731
      %9200 = vmatprep.subr.mxu0 0.0
      %9201 = vmatpush2.msra.mxu0 %v730
      %9202 = vmatprep.subr.mxu0 0.0
      %9203 = vmatpush2.msra.mxu0 %v729
      %9204 = vmatprep.subr.mxu0 0.0
      %9205 = vmatpush2.msra.mxu0 %v728
      %9206 = vmatprep.subr.mxu0 0.0
      %9207 = vmatpush2.msra.mxu0 %v727
      %9208 = vmatprep.subr.mxu0 0.0
      %9209 = vmatpush2.msra.mxu0 %v726
      %9210 = vmatprep.subr.mxu0 0.0
      %9211 = vmatpush2.msra.mxu0 %v725
      %9212 = vmatprep.subr.mxu0 0.0
      %9213 = vmatpush2.msra.mxu0 %v724
      %9214 = vmatprep.subr.mxu0 0.0
      %9215 = vmatpush2.msra.mxu0 %v723
      %9216 = vmatprep.subr.mxu0 0.0
      %9217 = vmatpush2.msra.mxu0 %v722
      %9218 = vmatprep.subr.mxu0 0.0
      %9219 = vmatpush2.msra.mxu0 %v721
      %9220 = vmatprep.subr.mxu0 0.0
      %9221 = vmatpush2.msra.mxu0 %v720
      %9222 = vmatprep.mubr.f32.mxu0 %v9153
      %9223 = vmatmul.mubr.f32.gmra.mxu0 %v9152
      %v9224 = vpop.f32.mrf.mxu0
      %v9225 = vadd.f32 0.0, %v9224
      %v9226 = vpop.f32.mrf.mxu0
      %9227 = vmatprep.mubr.f32.mxu0 %v9156
      %9228 = vmatmul.mubr.f32.gmra.mxu0 %v9155
      %v9229 = vpop.f32.mrf.mxu0
      %v9230 = vadd.f32 0.0, %v9229
      %v9231 = vpop.f32.mrf.mxu0
      %9232 = vdwg.mxu0
      %9233 = vmatprep.subr.mxu0 0.0
      %9234 = vmatpush1.msra.mxu0 %v751
      %9235 = vmatprep.subr.mxu0 0.0
      %9236 = vmatpush1.msra.mxu0 %v750
      %9237 = vmatprep.subr.mxu0 0.0
      %9238 = vmatpush1.msra.mxu0 %v749
      %9239 = vmatprep.subr.mxu0 0.0
      %9240 = vmatpush1.msra.mxu0 %v748
      %9241 = vmatprep.subr.mxu0 0.0
      %9242 = vmatpush1.msra.mxu0 %v747
      %9243 = vmatprep.subr.mxu0 0.0
      %9244 = vmatpush1.msra.mxu0 %v746
      %9245 = vmatprep.subr.mxu0 0.0
      %9246 = vmatpush1.msra.mxu0 %v745
      %9247 = vmatprep.subr.mxu0 0.0
      %9248 = vmatpush1.msra.mxu0 %v744
      %9249 = vmatprep.subr.mxu0 0.0
      %9250 = vmatpush1.msra.mxu0 %v743
      %9251 = vmatprep.subr.mxu0 0.0
      %9252 = vmatpush1.msra.mxu0 %v742
      %9253 = vmatprep.subr.mxu0 0.0
      %9254 = vmatpush1.msra.mxu0 %v741
      %9255 = vmatprep.subr.mxu0 0.0
      %9256 = vmatpush1.msra.mxu0 %v740
      %9257 = vmatprep.subr.mxu0 0.0
      %9258 = vmatpush1.msra.mxu0 %v739
      %9259 = vmatprep.subr.mxu0 0.0
      %9260 = vmatpush1.msra.mxu0 %v738
      %9261 = vmatprep.subr.mxu0 0.0
      %9262 = vmatpush1.msra.mxu0 %v737
      %9263 = vmatprep.subr.mxu0 0.0
      %9264 = vmatpush1.msra.mxu0 %v736
      %9265 = vmatprep.subr.mxu0 0.0
      %9266 = vmatpush2.msra.mxu0 0.0
      %9267 = vmatprep.subr.mxu0 0.0
      %9268 = vmatpush2.msra.mxu0 0.0
      %9269 = vmatprep.subr.mxu0 0.0
      %9270 = vmatpush2.msra.mxu0 0.0
      %9271 = vmatprep.subr.mxu0 0.0
      %9272 = vmatpush2.msra.mxu0 0.0
      %9273 = vmatprep.subr.mxu0 0.0
      %9274 = vmatpush2.msra.mxu0 0.0
      %9275 = vmatprep.subr.mxu0 0.0
      %9276 = vmatpush2.msra.mxu0 0.0
      %9277 = vmatprep.subr.mxu0 0.0
      %9278 = vmatpush2.msra.mxu0 0.0
      %9279 = vmatprep.subr.mxu0 0.0
      %9280 = vmatpush2.msra.mxu0 0.0
      %9281 = vmatprep.subr.mxu0 0.0
      %9282 = vmatpush2.msra.mxu0 0.0
      %9283 = vmatprep.subr.mxu0 0.0
      %9284 = vmatpush2.msra.mxu0 0.0
      %9285 = vmatprep.subr.mxu0 0.0
      %9286 = vmatpush2.msra.mxu0 0.0
      %9287 = vmatprep.subr.mxu0 0.0
      %9288 = vmatpush2.msra.mxu0 0.0
      %9289 = vmatprep.subr.mxu0 0.0
      %9290 = vmatpush2.msra.mxu0 0.0
      %9291 = vmatprep.subr.mxu0 0.0
      %9292 = vmatpush2.msra.mxu0 0.0
      %9293 = vmatprep.subr.mxu0 0.0
      %9294 = vmatpush2.msra.mxu0 0.0
      %9295 = vmatprep.subr.mxu0 0.0
      %9296 = vmatpush2.msra.mxu0 0.0
      %9297 = vmatprep.mubr.f32.mxu0 0.0
      %9298 = vmatmul.mubr.f32.gmra.mxu0 %v9154
      %v9299 = vpop.f32.mrf.mxu0
      %v9300 = vadd.f32 %v9225, %v9299
      %v9301 = vpop.f32.mrf.mxu0
      %9302 = vmatprep.mubr.f32.mxu0 0.0
      %9303 = vmatmul.mubr.f32.gmra.mxu0 %v9157
      %v9304 = vpop.f32.mrf.mxu0
      %v9305 = vadd.f32 %v9230, %v9304
      %v9306 = vpop.f32.mrf.mxu0
      %9307 = vdwg.mxu0
      %v9308 = vld [vmem:[%s18] sm:$0xff]
      %v9309 = vld [vmem:[%s18 + $0x8] sm:$0xff]
      %v9311 = vsel %vm8155, %v9308, 0
      %v9314 = vsel %vm8155, %v9309, 0
      %9316 = vmatprep.subr.mxu0 0.0
      %9317 = vmatpush1.msra.mxu0 0.0
      %9318 = vmatprep.subr.mxu0 0.0
      %9319 = vmatpush1.msra.mxu0 0.0
      %9320 = vmatprep.subr.mxu0 0.0
      %9321 = vmatpush1.msra.mxu0 0.0
      %9322 = vmatprep.subr.mxu0 0.0
      %9323 = vmatpush1.msra.mxu0 0.0
      %9324 = vmatprep.subr.mxu0 0.0
      %9325 = vmatpush1.msra.mxu0 0.0
      %9326 = vmatprep.subr.mxu0 0.0
      %9327 = vmatpush1.msra.mxu0 0.0
      %9328 = vmatprep.subr.mxu0 0.0
      %9329 = vmatpush1.msra.mxu0 0.0
      %9330 = vmatprep.subr.mxu0 0.0
      %9331 = vmatpush1.msra.mxu0 0.0
      %9332 = vmatprep.subr.mxu0 0.0
      %9333 = vmatpush1.msra.mxu0 0.0
      %9334 = vmatprep.subr.mxu0 0.0
      %9335 = vmatpush1.msra.mxu0 0.0
      %9336 = vmatprep.subr.mxu0 0.0
      %9337 = vmatpush1.msra.mxu0 0.0
      %9338 = vmatprep.subr.mxu0 0.0
      %9339 = vmatpush1.msra.mxu0 0.0
      %9340 = vmatprep.subr.mxu0 0.0
      %9341 = vmatpush1.msra.mxu0 0.0
      %9342 = vmatprep.subr.mxu0 0.0
      %9343 = vmatpush1.msra.mxu0 0.0
      %9344 = vmatprep.subr.mxu0 0.0
      %9345 = vmatpush1.msra.mxu0 %v9305
      %9346 = vmatprep.subr.mxu0 0.0
      %9347 = vmatpush1.msra.mxu0 %v9300
      %9348 = vmatprep.subr.mxu0 0.0
      %9349 = vmatpush2.msra.mxu0 0.0
      %9350 = vmatprep.subr.mxu0 0.0
      %9351 = vmatpush2.msra.mxu0 0.0
      %9352 = vmatprep.subr.mxu0 0.0
      %9353 = vmatpush2.msra.mxu0 0.0
      %9354 = vmatprep.subr.mxu0 0.0
      %9355 = vmatpush2.msra.mxu0 0.0
      %9356 = vmatprep.subr.mxu0 0.0
      %9357 = vmatpush2.msra.mxu0 0.0
      %9358 = vmatprep.subr.mxu0 0.0
      %9359 = vmatpush2.msra.mxu0 0.0
      %9360 = vmatprep.subr.mxu0 0.0
      %9361 = vmatpush2.msra.mxu0 0.0
      %9362 = vmatprep.subr.mxu0 0.0
      %9363 = vmatpush2.msra.mxu0 0.0
      %9364 = vmatprep.subr.mxu0 0.0
      %9365 = vmatpush2.msra.mxu0 0.0
      %9366 = vmatprep.subr.mxu0 0.0
      %9367 = vmatpush2.msra.mxu0 0.0
      %9368 = vmatprep.subr.mxu0 0.0
      %9369 = vmatpush2.msra.mxu0 0.0
      %9370 = vmatprep.subr.mxu0 0.0
      %9371 = vmatpush2.msra.mxu0 0.0
      %9372 = vmatprep.subr.mxu0 0.0
      %9373 = vmatpush2.msra.mxu0 0.0
      %9374 = vmatprep.subr.mxu0 0.0
      %9375 = vmatpush2.msra.mxu0 0.0
      %9376 = vmatprep.subr.mxu0 0.0
      %9377 = vmatpush2.msra.mxu0 0.0
      %9378 = vmatprep.subr.mxu0 0.0
      %9379 = vmatpush2.msra.mxu0 0.0
      %9380 = vmatprep.mubr.f32.mxu0 0.0
      %9381 = vmatmul.mubr.f32.gmra.mxu0 %v9311
      %v9382 = vpop.f32.mrf.mxu0
      %v9383 = vadd.f32 0.0, %v9382
      %v9384 = vpop.f32.mrf.mxu0
      %9385 = vmatprep.mubr.f32.mxu0 0.0
      %9386 = vmatmul.mubr.f32.gmra.mxu0 %v9314
      %v9387 = vpop.f32.mrf.mxu0
      %v9388 = vadd.f32 0.0, %v9387
      %v9389 = vpop.f32.mrf.mxu0
      %9390 = vdwg.mxu0
      %9392 = vset.pattern.permute.xlu0 0
      %9393 = vperm.xlu0 %9392, %v9383
      %v9394 = vpop.permute.xlu0 %9393
      %9397 = vset.pattern.permute.xlu0 0
      %9398 = vperm.xlu0 %9397, %v9388
      %v9399 = vpop.permute.xlu0 %9398
      %v9401 = vsub.f32 %v9152, %v9394
      %v9402 = vsub.f32 %v9153, %v9394
      %v9403 = vsub.f32 %v9154, %v9394
      %v9404 = vsub.f32 %v9155, %v9399
      %v9405 = vsub.f32 %v9156, %v9399
      %v9406 = vsub.f32 %v9157, %v9399
      %v9407 = vmul.f32 %v9401, %v9401
      %v9408 = vmul.f32 %v9402, %v9402
      %v9409 = vmul.f32 %v9403, %v9403
      %v9410 = vmul.f32 %v9404, %v9404
      %v9411 = vmul.f32 %v9405, %v9405
      %v9412 = vmul.f32 %v9406, %v9406
      %9413 = vmatprep.subr.mxu0 0.0
      %9414 = vmatpush1.msra.mxu0 %v719
      %9415 = vmatprep.subr.mxu0 0.0
      %9416 = vmatpush1.msra.mxu0 %v718
      %9417 = vmatprep.subr.mxu0 0.0
      %9418 = vmatpush1.msra.mxu0 %v717
      %9419 = vmatprep.subr.mxu0 0.0
      %9420 = vmatpush1.msra.mxu0 %v716
      %9421 = vmatprep.subr.mxu0 0.0
      %9422 = vmatpush1.msra.mxu0 %v715
      %9423 = vmatprep.subr.mxu0 0.0
      %9424 = vmatpush1.msra.mxu0 %v714
      %9425 = vmatprep.subr.mxu0 0.0
      %9426 = vmatpush1.msra.mxu0 %v713
      %9427 = vmatprep.subr.mxu0 0.0
      %9428 = vmatpush1.msra.mxu0 %v712
      %9429 = vmatprep.subr.mxu0 0.0
      %9430 = vmatpush1.msra.mxu0 %v711
      %9431 = vmatprep.subr.mxu0 0.0
      %9432 = vmatpush1.msra.mxu0 %v710
      %9433 = vmatprep.subr.mxu0 0.0
      %9434 = vmatpush1.msra.mxu0 %v709
      %9435 = vmatprep.subr.mxu0 0.0
      %9436 = vmatpush1.msra.mxu0 %v708
      %9437 = vmatprep.subr.mxu0 0.0
      %9438 = vmatpush1.msra.mxu0 %v707
      %9439 = vmatprep.subr.mxu0 0.0
      %9440 = vmatpush1.msra.mxu0 %v706
      %9441 = vmatprep.subr.mxu0 0.0
      %9442 = vmatpush1.msra.mxu0 %v705
      %9443 = vmatprep.subr.mxu0 0.0
      %9444 = vmatpush1.msra.mxu0 %v704
      %9445 = vmatprep.subr.mxu0 0.0
      %9446 = vmatpush2.msra.mxu0 %v735
      %9447 = vmatprep.subr.mxu0 0.0
      %9448 = vmatpush2.msra.mxu0 %v734
      %9449 = vmatprep.subr.mxu0 0.0
      %9450 = vmatpush2.msra.mxu0 %v733
      %9451 = vmatprep.subr.mxu0 0.0
      %9452 = vmatpush2.msra.mxu0 %v732
      %9453 = vmatprep.subr.mxu0 0.0
      %9454 = vmatpush2.msra.mxu0 %v731
      %9455 = vmatprep.subr.mxu0 0.0
      %9456 = vmatpush2.msra.mxu0 %v730
      %9457 = vmatprep.subr.mxu0 0.0
      %9458 = vmatpush2.msra.mxu0 %v729
      %9459 = vmatprep.subr.mxu0 0.0
      %9460 = vmatpush2.msra.mxu0 %v728
      %9461 = vmatprep.subr.mxu0 0.0
      %9462 = vmatpush2.msra.mxu0 %v727
      %9463 = vmatprep.subr.mxu0 0.0
      %9464 = vmatpush2.msra.mxu0 %v726
      %9465 = vmatprep.subr.mxu0 0.0
      %9466 = vmatpush2.msra.mxu0 %v725
      %9467 = vmatprep.subr.mxu0 0.0
      %9468 = vmatpush2.msra.mxu0 %v724
      %9469 = vmatprep.subr.mxu0 0.0
      %9470 = vmatpush2.msra.mxu0 %v723
      %9471 = vmatprep.subr.mxu0 0.0
      %9472 = vmatpush2.msra.mxu0 %v722
      %9473 = vmatprep.subr.mxu0 0.0
      %9474 = vmatpush2.msra.mxu0 %v721
      %9475 = vmatprep.subr.mxu0 0.0
      %9476 = vmatpush2.msra.mxu0 %v720
      %9477 = vmatprep.mubr.f32.mxu0 %v9408
      %9478 = vmatmul.mubr.f32.gmra.mxu0 %v9407
      %v9479 = vpop.f32.mrf.mxu0
      %v9480 = vadd.f32 0.0, %v9479
      %v9481 = vpop.f32.mrf.mxu0
      %9482 = vmatprep.mubr.f32.mxu0 %v9411
      %9483 = vmatmul.mubr.f32.gmra.mxu0 %v9410
      %v9484 = vpop.f32.mrf.mxu0
      %v9485 = vadd.f32 0.0, %v9484
      %v9486 = vpop.f32.mrf.mxu0
      %9487 = vdwg.mxu0
      %9488 = vmatprep.subr.mxu0 0.0
      %9489 = vmatpush1.msra.mxu0 %v751
      %9490 = vmatprep.subr.mxu0 0.0
      %9491 = vmatpush1.msra.mxu0 %v750
      %9492 = vmatprep.subr.mxu0 0.0
      %9493 = vmatpush1.msra.mxu0 %v749
      %9494 = vmatprep.subr.mxu0 0.0
      %9495 = vmatpush1.msra.mxu0 %v748
      %9496 = vmatprep.subr.mxu0 0.0
      %9497 = vmatpush1.msra.mxu0 %v747
      %9498 = vmatprep.subr.mxu0 0.0
      %9499 = vmatpush1.msra.mxu0 %v746
      %9500 = vmatprep.subr.mxu0 0.0
      %9501 = vmatpush1.msra.mxu0 %v745
      %9502 = vmatprep.subr.mxu0 0.0
      %9503 = vmatpush1.msra.mxu0 %v744
      %9504 = vmatprep.subr.mxu0 0.0
      %9505 = vmatpush1.msra.mxu0 %v743
      %9506 = vmatprep.subr.mxu0 0.0
      %9507 = vmatpush1.msra.mxu0 %v742
      %9508 = vmatprep.subr.mxu0 0.0
      %9509 = vmatpush1.msra.mxu0 %v741
      %9510 = vmatprep.subr.mxu0 0.0
      %9511 = vmatpush1.msra.mxu0 %v740
      %9512 = vmatprep.subr.mxu0 0.0
      %9513 = vmatpush1.msra.mxu0 %v739
      %9514 = vmatprep.subr.mxu0 0.0
      %9515 = vmatpush1.msra.mxu0 %v738
      %9516 = vmatprep.subr.mxu0 0.0
      %9517 = vmatpush1.msra.mxu0 %v737
      %9518 = vmatprep.subr.mxu0 0.0
      %9519 = vmatpush1.msra.mxu0 %v736
      %9520 = vmatprep.subr.mxu0 0.0
      %9521 = vmatpush2.msra.mxu0 0.0
      %9522 = vmatprep.subr.mxu0 0.0
      %9523 = vmatpush2.msra.mxu0 0.0
      %9524 = vmatprep.subr.mxu0 0.0
      %9525 = vmatpush2.msra.mxu0 0.0
      %9526 = vmatprep.subr.mxu0 0.0
      %9527 = vmatpush2.msra.mxu0 0.0
      %9528 = vmatprep.subr.mxu0 0.0
      %9529 = vmatpush2.msra.mxu0 0.0
      %9530 = vmatprep.subr.mxu0 0.0
      %9531 = vmatpush2.msra.mxu0 0.0
      %9532 = vmatprep.subr.mxu0 0.0
      %9533 = vmatpush2.msra.mxu0 0.0
      %9534 = vmatprep.subr.mxu0 0.0
      %9535 = vmatpush2.msra.mxu0 0.0
      %9536 = vmatprep.subr.mxu0 0.0
      %9537 = vmatpush2.msra.mxu0 0.0
      %9538 = vmatprep.subr.mxu0 0.0
      %9539 = vmatpush2.msra.mxu0 0.0
      %9540 = vmatprep.subr.mxu0 0.0
      %9541 = vmatpush2.msra.mxu0 0.0
      %9542 = vmatprep.subr.mxu0 0.0
      %9543 = vmatpush2.msra.mxu0 0.0
      %9544 = vmatprep.subr.mxu0 0.0
      %9545 = vmatpush2.msra.mxu0 0.0
      %9546 = vmatprep.subr.mxu0 0.0
      %9547 = vmatpush2.msra.mxu0 0.0
      %9548 = vmatprep.subr.mxu0 0.0
      %9549 = vmatpush2.msra.mxu0 0.0
      %9550 = vmatprep.subr.mxu0 0.0
      %9551 = vmatpush2.msra.mxu0 0.0
      %9552 = vmatprep.mubr.f32.mxu0 0.0
      %9553 = vmatmul.mubr.f32.gmra.mxu0 %v9409
      %v9554 = vpop.f32.mrf.mxu0
      %v9555 = vadd.f32 %v9480, %v9554
      %v9556 = vpop.f32.mrf.mxu0
      %9557 = vmatprep.mubr.f32.mxu0 0.0
      %9558 = vmatmul.mubr.f32.gmra.mxu0 %v9412
      %v9559 = vpop.f32.mrf.mxu0
      %v9560 = vadd.f32 %v9485, %v9559
      %v9561 = vpop.f32.mrf.mxu0
      %9562 = vdwg.mxu0
      %9563 = vmatprep.subr.mxu0 0.0
      %9564 = vmatpush1.msra.mxu0 0.0
      %9565 = vmatprep.subr.mxu0 0.0
      %9566 = vmatpush1.msra.mxu0 0.0
      %9567 = vmatprep.subr.mxu0 0.0
      %9568 = vmatpush1.msra.mxu0 0.0
      %9569 = vmatprep.subr.mxu0 0.0
      %9570 = vmatpush1.msra.mxu0 0.0
      %9571 = vmatprep.subr.mxu0 0.0
      %9572 = vmatpush1.msra.mxu0 0.0
      %9573 = vmatprep.subr.mxu0 0.0
      %9574 = vmatpush1.msra.mxu0 0.0
      %9575 = vmatprep.subr.mxu0 0.0
      %9576 = vmatpush1.msra.mxu0 0.0
      %9577 = vmatprep.subr.mxu0 0.0
      %9578 = vmatpush1.msra.mxu0 0.0
      %9579 = vmatprep.subr.mxu0 0.0
      %9580 = vmatpush1.msra.mxu0 0.0
      %9581 = vmatprep.subr.mxu0 0.0
      %9582 = vmatpush1.msra.mxu0 0.0
      %9583 = vmatprep.subr.mxu0 0.0
      %9584 = vmatpush1.msra.mxu0 0.0
      %9585 = vmatprep.subr.mxu0 0.0
      %9586 = vmatpush1.msra.mxu0 0.0
      %9587 = vmatprep.subr.mxu0 0.0
      %9588 = vmatpush1.msra.mxu0 0.0
      %9589 = vmatprep.subr.mxu0 0.0
      %9590 = vmatpush1.msra.mxu0 0.0
      %9591 = vmatprep.subr.mxu0 0.0
      %9592 = vmatpush1.msra.mxu0 %v9560
      %9593 = vmatprep.subr.mxu0 0.0
      %9594 = vmatpush1.msra.mxu0 %v9555
      %9595 = vmatprep.subr.mxu0 0.0
      %9596 = vmatpush2.msra.mxu0 0.0
      %9597 = vmatprep.subr.mxu0 0.0
      %9598 = vmatpush2.msra.mxu0 0.0
      %9599 = vmatprep.subr.mxu0 0.0
      %9600 = vmatpush2.msra.mxu0 0.0
      %9601 = vmatprep.subr.mxu0 0.0
      %9602 = vmatpush2.msra.mxu0 0.0
      %9603 = vmatprep.subr.mxu0 0.0
      %9604 = vmatpush2.msra.mxu0 0.0
      %9605 = vmatprep.subr.mxu0 0.0
      %9606 = vmatpush2.msra.mxu0 0.0
      %9607 = vmatprep.subr.mxu0 0.0
      %9608 = vmatpush2.msra.mxu0 0.0
      %9609 = vmatprep.subr.mxu0 0.0
      %9610 = vmatpush2.msra.mxu0 0.0
      %9611 = vmatprep.subr.mxu0 0.0
      %9612 = vmatpush2.msra.mxu0 0.0
      %9613 = vmatprep.subr.mxu0 0.0
      %9614 = vmatpush2.msra.mxu0 0.0
      %9615 = vmatprep.subr.mxu0 0.0
      %9616 = vmatpush2.msra.mxu0 0.0
      %9617 = vmatprep.subr.mxu0 0.0
      %9618 = vmatpush2.msra.mxu0 0.0
      %9619 = vmatprep.subr.mxu0 0.0
      %9620 = vmatpush2.msra.mxu0 0.0
      %9621 = vmatprep.subr.mxu0 0.0
      %9622 = vmatpush2.msra.mxu0 0.0
      %9623 = vmatprep.subr.mxu0 0.0
      %9624 = vmatpush2.msra.mxu0 0.0
      %9625 = vmatprep.subr.mxu0 0.0
      %9626 = vmatpush2.msra.mxu0 0.0
      %9627 = vmatprep.mubr.f32.mxu0 0.0
      %9628 = vmatmul.mubr.f32.gmra.mxu0 %v9311
      %v9629 = vpop.f32.mrf.mxu0
      %v9630 = vadd.f32 0.0, %v9629
      %v9631 = vpop.f32.mrf.mxu0
      %9632 = vmatprep.mubr.f32.mxu0 0.0
      %9633 = vmatmul.mubr.f32.gmra.mxu0 %v9314
      %v9634 = vpop.f32.mrf.mxu0
      %v9635 = vadd.f32 0.0, %v9634
      %v9636 = vpop.f32.mrf.mxu0
      %9637 = vdwg.mxu0
      %v9638 = vadd.f32 %v9630, 1e-05
      %v9639 = vadd.f32 %v9635, 1e-05
      %v9640 = vrsqrt.pop %v9638
      %v9641 = vrsqrt.pop %v9639
      %v9642 = vld [vmem:[%s16] sm:$0xff]
      %v9643 = vld [vmem:[%s16 + $0x8] sm:$0xff]
      %v9644 = vmul.f32 %v9640, %v9642
      %v9645 = vmul.f32 %v9641, %v9643
      %9647 = vset.pattern.permute.xlu0 0
      %9648 = vperm.xlu0 %9647, %v9644
      %v9649 = vpop.permute.xlu0 %9648
      %9652 = vset.pattern.permute.xlu0 0
      %9653 = vperm.xlu0 %9652, %v9645
      %v9654 = vpop.permute.xlu0 %9653
      %v9656 = vmul.f32 %v9401, %v9649
      %v9657 = vmul.f32 %v9402, %v9649
      %v9658 = vmul.f32 %v9403, %v9649
      %v9659 = vmul.f32 %v9404, %v9654
      %v9660 = vmul.f32 %v9405, %v9654
      %v9661 = vmul.f32 %v9406, %v9654
      %v9662 = vld [vmem:[%s17] sm:$0xff]
      %v9663 = vld [vmem:[%s17 + $0x8] sm:$0xff]
      %9665 = vset.pattern.permute.xlu0 0
      %9666 = vperm.xlu0 %9665, %v9662
      %v9667 = vpop.permute.xlu0 %9666
      %9670 = vset.pattern.permute.xlu0 0
      %9671 = vperm.xlu0 %9670, %v9663
      %v9672 = vpop.permute.xlu0 %9671
      %v9674 = vadd.f32 %v9656, %v9667
      %v9675 = vadd.f32 %v9657, %v9667
      %v9676 = vadd.f32 %v9658, %v9667
      %v9677 = vadd.f32 %v9659, %v9672
      %v9678 = vadd.f32 %v9660, %v9672
      %v9679 = vadd.f32 %v9661, %v9672
      %v9680 = vadd.f32 %v5834, %v5855
      %v9681 = vadd.f32 %v5835, %v5856
      %v9682 = vadd.f32 %v5836, %v5857
      %v9683 = vadd.f32 %v9680, %v8033
      %v9684 = vadd.f32 %v9681, %v8034
      %v9685 = vadd.f32 %v9682, %v8035
      %v9686 = vadd.f32 %v9683, %v9674
      %v9687 = vadd.f32 %v9684, %v9675
      %v9688 = vadd.f32 %v9685, %v9676
      %v9689 = vtanh.pop %v9686
      %v9690 = vtanh.pop %v9687
      %v9691 = vtanh.pop %v9688
      %v9692 = vtanh.pop %v9677
      %v9693 = vtanh.pop %v9678
      %v9694 = vtanh.pop %v9679
      %v9695 = vmul.f32 %v9689, %v9692
      %v9696 = vmul.f32 %v9690, %v9693
      %v9697 = vmul.f32 %v9691, %v9694
      %9698 = vst [vmem:[%s691] sm:$0xff] %v9695
      %9699 = vst [vmem:[%s691 + $0x8] sm:$0xff] %v9696
      %9700 = vst [vmem:[%s691 + $0x10] sm:$0xff] %v9697
      %9701 = vst [vmem:[%s696] sm:$0xff] %v5961
      %9702 = vst [vmem:[%s696 + $0x8] sm:$0xff] %v5962
      %9703 = vst [vmem:[%s696 + $0x10] sm:$0xff] %v5963
      %9704 = vst [vmem:[%s701] sm:$0xff] %v8105
      %9705 = vst [vmem:[%s701 + $0x8] sm:$0xff] %v8106
      %9706 = vst [vmem:[%s701 + $0x10] sm:$0xff] %v8107
      %p9707 = scmp.lt.s32.totalorder %s33, 1
      %s9708 = scalar_select %p9707, %s33, 1
      %s9709 = smul.addr %s9708, 3
      %s9710 = smul.addr %s9709, 8
      %s9711 = scalar_lea.vmem %s19, %s9710
      %p9712 = scmp.lt.s32.totalorder %s33, 1
      %s9713 = scalar_select %p9712, %s33, 1
      %s9714 = smul.addr %s9713, 3
      %s9715 = smul.addr %s9714, 8
      %s9716 = scalar_lea.vmem %s20, %s9715
      %p9717 = scmp.lt.s32.totalorder %s33, 1
      %s9718 = scalar_select %p9717, %s33, 1
      %s9719 = smul.addr %s9718, 3
      %s9720 = smul.addr %s9719, 8
      %s9721 = scalar_lea.vmem %s21, %s9720
      // Predicated region
      $region97: #{causal_lstm_cell.1} parent=95 // pred_check
        %p9722 = pneg %p460
      $region98: #{causal_lstm_cell.1} parent=95 // pred_check_branch
        %9724 = sbr.rel (%p9722) target = $region100
      $region99: #{causal_lstm_cell.1} parent=95 // pred_region
        _
      $region100: #{causal_lstm_cell.1} parent=95 // pred_fallthru
        _
      // Predicated region
      $region101: #{causal_lstm_cell.1} parent=95 // pred_check
        %p9725 = pneg %p486
      $region102: #{causal_lstm_cell.1} parent=95 // pred_check_branch
        %9727 = sbr.rel (%p9725) target = $region104
      $region103: #{causal_lstm_cell.1} parent=95 // pred_region
        _
      $region104: #{causal_lstm_cell.1} parent=95 // pred_fallthru
        _
      // Predicated region
      $region105: #{causal_lstm_cell.1} parent=95 // pred_check
        %p9728 = pneg %p512
      $region106: #{causal_lstm_cell.1} parent=95 // pred_check_branch
        %9730 = sbr.rel (%p9728) target = $region108
      $region107: #{causal_lstm_cell.1} parent=95 // pred_region
        _
      $region108: #{causal_lstm_cell.1} parent=95 // pred_fallthru
        _
    $region96: #{causal_lstm_cell.1} parent=5 // pred_fallthru
      _
    %p9731 = scmp.le.s32.totalorder 2, %s28
    // Predicated region
    $region109: #{causal_lstm_cell.1} parent=5 // pred_check
      %p9732 = pneg %p9731
    $region110: #{causal_lstm_cell.1} parent=5 // pred_check_branch
      %9734 = sbr.rel (%p9732) target = $region112
    $region111: #{causal_lstm_cell.1} parent=5 // pred_region
      %s9735 = ssub.s32 %s28, 2
      // Predicated region
      $region113: #{causal_lstm_cell.1} parent=111 // pred_check
        %p9736 = pneg %p466
      $region114: #{causal_lstm_cell.1} parent=111 // pred_check_branch
        %9738 = sbr.rel (%p9736) target = $region116
      $region115: #{causal_lstm_cell.1} parent=111 // pred_region
        %p9739 = scmp.lt.s32.totalorder %s34, 1
        %s9740 = scalar_select %p9739, %s34, 1
        %s9741 = smul.addr %s9740, 3
        %s9742 = smul.addr %s9741, 8
        %s9743 = scalar_lea.vmem %s19, %s9742
      $region116: #{causal_lstm_cell.1} parent=111 // pred_fallthru
        _
      // Predicated region
      $region117: #{causal_lstm_cell.1} parent=111 // pred_check
        %p9744 = pneg %p492
      $region118: #{causal_lstm_cell.1} parent=111 // pred_check_branch
        %9746 = sbr.rel (%p9744) target = $region120
      $region119: #{causal_lstm_cell.1} parent=111 // pred_region
        %p9747 = scmp.lt.s32.totalorder %s34, 1
        %s9748 = scalar_select %p9747, %s34, 1
        %s9749 = smul.addr %s9748, 3
        %s9750 = smul.addr %s9749, 8
        %s9751 = scalar_lea.vmem %s20, %s9750
      $region120: #{causal_lstm_cell.1} parent=111 // pred_fallthru
        _
      // Predicated region
      $region121: #{causal_lstm_cell.1} parent=111 // pred_check
        %p9752 = pneg %p518
      $region122: #{causal_lstm_cell.1} parent=111 // pred_check_branch
        %9754 = sbr.rel (%p9752) target = $region124
      $region123: #{causal_lstm_cell.1} parent=111 // pred_region
        %p9755 = scmp.lt.s32.totalorder %s34, 1
        %s9756 = scalar_select %p9755, %s34, 1
        %s9757 = smul.addr %s9756, 3
        %s9758 = smul.addr %s9757, 8
        %s9759 = scalar_lea.vmem %s21, %s9758
      $region124: #{causal_lstm_cell.1} parent=111 // pred_fallthru
        _
    $region112: #{causal_lstm_cell.1} parent=5 // pred_fallthru
      _
  $region6: #{causal_lstm_cell.1} parent=0 // loop_footer
    %s32 = sadd.s32 1, %s28
  $region7: #{causal_lstm_cell.1} parent=0 // loop_footer_branch
    %27 = sbr.rel target = $region3
  $region8: #{causal_lstm_cell.1} parent=0 // loop_exit
    _

</llo_original>
